<compile_context>
chip_gen: v7x
topology: tpu7x:2x2x1
jax: 0.10.0
libtpu: 0.0.40
codegen_flags: <defaults>
</compile_context>

<pallas_src>
from functools import partial

import jax
import jax.numpy as jnp
from jax.experimental import pallas as pl
from jax.experimental.pallas import tpu as pltpu

MAX_AGENTS = 5
_KQ = 32                                  # key / query / relation width
_VD = 64                                  # value width
_SLAB = MAX_AGENTS * MAX_AGENTS * _VD     # 25 pairs x 64 lanes = 1600
_OUT_PAD = 128                            # lane-dense output width


def _round_up(x, m):
    return ((x + m - 1) // m) * m


_SLAB_PAD = _round_up(_SLAB, 128)         # 1664 (13 vregs, aligned slab slices)


# ---- elementwise helpers (exact division; only Mosaic-safe ops) --------------

def _erf(x):
    # Abramowitz & Stegun 7.1.26, |err| <= 1.5e-7 (matches exact nn.GELU()).
    a1, a2, a3, a4, a5 = (0.254829592, -0.284496736, 1.421413741,
                          -1.453152027, 1.061405429)
    p = 0.3275911
    s = jnp.where(x >= 0, 1.0, -1.0)
    ax = jnp.abs(x)
    t = 1.0 / (1.0 + p * ax)
    poly = ((((a5 * t + a4) * t + a3) * t + a2) * t + a1) * t
    return s * (1.0 - poly * jnp.exp(-ax * ax))


def _gelu(x):
    return 0.5 * x * (1.0 + _erf(x * 0.7071067811865476))


def _sigmoid(x):
    return 1.0 / (1.0 + jnp.exp(-x))


# ---- the kernel --------------------------------------------------------------

def _light_meta_kernel(x_ref, wp_ref, bp_ref, ma_ref, r_ref, g_ref, me_ref,
                       e25_ref, fold_ref, w13_ref, b13_ref, w24_ref, b24_ref,
                       out_ref, *, out_dim):
    f32 = jnp.float32
    bf16 = jnp.bfloat16

    xb = x_ref[...]                                            # (BB, in) bf16

    # Fused projection -> [EQ_rep | EK_rep | V_rep] (each _SLAB_PAD lanes).
    proj = jnp.dot(xb, wp_ref[...], preferred_element_type=f32) + bp_ref[...]
    eq = proj[:, :_SLAB_PAD]                                   # [q_i|rq_i]/sqrt32
    ek = proj[:, _SLAB_PAD:2 * _SLAB_PAD]                      # [k_j|rq_j]
    vrep = proj[:, 2 * _SLAB_PAD:]                             # v_j per pair

    # Agent-presence masses via MXU block-ones reduction, then threshold.
    amass = jnp.dot(jnp.abs(xb), ma_ref[...], preferred_element_type=f32)
    masks5 = (amass > 0.1).astype(f32)                         # (BB, 5)
    mask_sum = jnp.sum(masks5, axis=-1, keepdims=True)         # (BB, 1)

    # Lane-packed pairwise scores (p = 5*i + j): one VPU multiply + one
    # constant-weight MXU reduction instead of 50 XLU lane-reduces.
    prod = (eq * ek).astype(bf16)                              # (BB, 1664)
    scores = jnp.dot(prod, r_ref[...], preferred_element_type=f32)   # (BB, 25)

    # Softmax over each 5-lane group: per-row max (stability-only shift),
    # exp on the dense tile, MXU group-sum broadcast, EUP reciprocal.
    m = jnp.max(scores, axis=-1, keepdims=True)                # (BB, 1)
    e = jnp.exp(scores - m)                                    # (BB, 25)
    denom = jnp.dot(e, g_ref[...], preferred_element_type=f32)  # group sums, bcast
    probs25 = e * pl.reciprocal(denom, approx=True)            # (BB, 25)

    # Weight by the query agent's presence mask (expanded 5 -> 25 on the MXU),
    # expand pair weights to value width, multiply the value slab, fold back.
    mask25 = jnp.dot(masks5.astype(bf16), me_ref[...],
                     preferred_element_type=f32)               # (BB, 25)
    w = (probs25 * mask25).astype(bf16)                        # (BB, 25)
    w_exp = jnp.dot(w, e25_ref[...], preferred_element_type=f32)     # (BB, 1664)
    prodv = (w_exp * vrep).astype(bf16)
    pooled_num = jnp.dot(prodv, fold_ref[...],
                         preferred_element_type=f32)           # (BB, 64)
    pooled = pooled_num / (mask_sum + 1e-8)                    # exact divide

    # Fused heads: [post_attention | value_head].
    h = _gelu(jnp.dot(pooled.astype(bf16), w13_ref[...],
                      preferred_element_type=f32) + b13_ref[...])     # (BB, 128)
    raw = jnp.dot(h.astype(bf16), w24_ref[...],
                  preferred_element_type=f32) + b24_ref[...]          # (BB, 128)

    # Lane-dense output slab: lanes [0, out_dim) = probs, lane out_dim = value,
    # remaining lanes = raw (= 0 because w24/b24 are zero-padded).
    col = jax.lax.broadcasted_iota(jnp.int32, raw.shape, 1)
    out_ref[...] = jnp.where(col < out_dim, 0.5 * _sigmoid(raw) + 0.25, raw)


# ---- parameter fusion & wrapper ----------------------------------------------

def _fuse_params(params, out_dim):
    (wk, bk, wq, bq, wv, bv, wr, br,
     w1, b1, w2, b2, w3, b3, w4, b4) = params
    A = MAX_AGENTS
    agent_dim = wk.shape[0]
    inv = 1.0 / (32.0 ** 0.5)

    # relation(query(x)) == x @ (wq @ wr) + (bq @ wr + br)
    wrq = wq @ wr
    brq = bq @ wr + br

    # Extended per-agent projections (attention scale folded into the query side).
    eqw = jnp.concatenate([wq, wrq], axis=1) * inv            # (agent_dim, 64)
    eqb = jnp.concatenate([bq, brq], axis=1) * inv            # (1, 64)
    ekw = jnp.concatenate([wk, wrq], axis=1)                  # (agent_dim, 64)
    ekb = jnp.concatenate([bk, brq], axis=1)                  # (1, 64)

    def blockdiag(w):
        fi, fo = w.shape
        out = jnp.zeros((A * fi, A * fo), jnp.float32)
        for a in range(A):
            out = out.at[a * fi:(a + 1) * fi, a * fo:(a + 1) * fo].set(w)
        return out

    def pad_cols(a, width):
        return jnp.pad(a, ((0, 0), (0, width - a.shape[1])))

    # Replicated projection slabs. Pair p = 5*i + j occupies lanes [64p, 64p+64).
    #   EQ_rep block p depends only on agent i; EK_rep / V_rep only on agent j.
    eq_sec = pad_cols(blockdiag(jnp.tile(eqw, (1, A))), _SLAB_PAD)
    ek_sec = pad_cols(jnp.tile(blockdiag(ekw), (1, A)), _SLAB_PAD)
    v_sec = pad_cols(jnp.tile(blockdiag(wv), (1, A)), _SLAB_PAD)
    wp = jnp.concatenate([eq_sec, ek_sec, v_sec], axis=1)      # (in, 3*1664)
    bp = jnp.concatenate(
        [pad_cols(jnp.tile(eqb, (1, A * A)), _SLAB_PAD),
         pad_cols(jnp.tile(ekb, (1, A * A)), _SLAB_PAD),
         pad_cols(jnp.tile(bv, (1, A * A)), _SLAB_PAD)], axis=1)

    # Constant 0/1 matrices (MXU offload of reductions & broadcasts).
    ma = jnp.kron(jnp.eye(A), jnp.ones((agent_dim, 1)))        # (in, 5)   mass
    r = jnp.pad(jnp.kron(jnp.eye(A * A), jnp.ones((_VD, 1))),
                ((0, _SLAB_PAD - _SLAB), (0, 0)))              # (1664, 25) scores
    g = jnp.kron(jnp.eye(A), jnp.ones((A, A)))                 # (25, 25)  group sum
    me = jnp.kron(jnp.eye(A), jnp.ones((1, A)))                # (5, 25)   mask exp
    e25 = jnp.pad(jnp.kron(jnp.eye(A * A), jnp.ones((1, _VD))),
                  ((0, 0), (0, _SLAB_PAD - _SLAB)))            # (25, 1664) expand
    fold = jnp.pad(jnp.tile(jnp.eye(_VD), (A * A, 1)),
                   ((0, _SLAB_PAD - _SLAB), (0, 0)))           # (1664, 64) fold

    # Fused heads: [post_attention[0] | value_head[0]] and the zero-padded
    # block-diagonal [post_attention[2] | value_head[2]] -> 128 lane-dense cols.
    w13 = jnp.concatenate([w1, w3], axis=1)                    # (64, 128)
    b13 = jnp.concatenate([b1, b3], axis=1)                    # (1, 128)
    w24 = jnp.zeros((2 * _VD, _OUT_PAD), jnp.float32)
    w24 = w24.at[:_VD, :out_dim].set(w2)
    w24 = w24.at[_VD:, out_dim:out_dim + 1].set(w4)
    b24 = jnp.zeros((1, _OUT_PAD), jnp.float32)
    b24 = b24.at[:, :out_dim].set(b2)
    b24 = b24.at[:, out_dim:out_dim + 1].set(b4)

    bf = lambda a: a.astype(jnp.bfloat16)
    fp = lambda a: a.astype(jnp.float32)
    return (bf(wp), fp(bp), bf(ma), bf(r), fp(g), bf(me), bf(e25), bf(fold),
            bf(w13), fp(b13), bf(w24), fp(b24))


def light_meta_forward(x, params, block_b=256):
    """x: (B, input_dim) float32.  params: flat tuple of 16 arrays."""
    if x.ndim == 1:
        x = x[None, :]
    x = x.astype(jnp.float32)
    B, input_dim = x.shape
    out_dim = params[10].shape[1]          # w2: (64, output_dim)

    consts = _fuse_params(params, out_dim)

    # Batch tile: multiple of 8; capped at ceil(B/2) so the grid has >= 2 steps
    # whenever possible (lets the "parallel" axis split across v7x's two TCs).
    bb = _round_up(max(8, min(block_b, -(-B // 2))), 8)
    b_pad = _round_up(B, bb)
    if b_pad != B:
        x = jnp.pad(x, ((0, b_pad - B), (0, 0)))
    xb = x.astype(jnp.bfloat16)

    in_specs = [pl.BlockSpec((bb, input_dim), lambda b: (b, 0))]
    in_specs += [pl.BlockSpec(c.shape, lambda b: (0, 0)) for c in consts]

    out = pl.pallas_call(
        partial(_light_meta_kernel, out_dim=out_dim),
        out_shape=jax.ShapeDtypeStruct((b_pad, _OUT_PAD), jnp.float32),
        grid=(b_pad // bb,),
        in_specs=in_specs,
        out_specs=pl.BlockSpec((bb, _OUT_PAD), lambda b: (b, 0)),
        compiler_params=pltpu.CompilerParams(
            dimension_semantics=("parallel",),
            vmem_limit_bytes=48 * 1024 * 1024),
    )(xb, *consts)

    return out[:B, :out_dim], out[:B, out_dim:out_dim + 1]


# ---- pure-JAX reference (mirrors the PyTorch module step by step) -------------

def light_meta_reference(x, params):
    (wk, bk, wq, bq, wv, bv, wr, br,
     w1, b1, w2, b2, w3, b3, w4, b4) = params
    if x.ndim == 1:
        x = x[None, :]
    B = x.shape[0]
    agent_dim = wk.shape[0]
    agents = x.reshape(B, MAX_AGENTS, agent_dim).astype(jnp.float32)
    keys = agents @ wk + bk
    queries = agents @ wq + bq
    values = agents @ wv + bv
    attn = jnp.einsum("bid,bjd->bij", queries, keys) / (32.0 ** 0.5)
    rq = queries @ wr + br
    attn = attn + jnp.einsum("bid,bjd->bij", rq, rq) / (32.0 ** 0.5)
    attn = jax.nn.softmax(attn, axis=-1)
    context = jnp.einsum("bij,bjd->bid", attn, values)
    mask = (jnp.sum(jnp.abs(agents), axis=-1, keepdims=True) > 0.1
            ).astype(jnp.float32)
    pooled = jnp.sum(context * mask, axis=1) / (jnp.sum(mask, axis=1) + 1e-8)
    h = jax.nn.gelu(pooled @ w1 + b1, approximate=False)
    probs = 0.5 * jax.nn.sigmoid(h @ w2 + b2) + 0.25
    hv = jax.nn.gelu(pooled @ w3 + b3, approximate=False)
    value = hv @ w4 + b4
    return probs, value


def init_params(key, input_dim, output_dim):
    """Deterministic PyTorch-Linear-style init. Weights stored as (in, out)."""
    agent_dim = input_dim // MAX_AGENTS

    def linear(k, fan_in, fan_out):
        kw, kb = jax.random.split(k)
        bound = 1.0 / (fan_in ** 0.5)
        w = jax.random.uniform(kw, (fan_in, fan_out), jnp.float32, -bound, bound)
        b = jax.random.uniform(kb, (1, fan_out), jnp.float32, -bound, bound)
        return w, b

    ks = jax.random.split(key, 8)
    wk, bk = linear(ks[0], agent_dim, 32)   # key_transform
    wq, bq = linear(ks[1], agent_dim, 32)   # query_transform
    wv, bv = linear(ks[2], agent_dim, 64)   # value_transform
    wr, br = linear(ks[3], 32, 32)          # agent_relation
    w1, b1 = linear(ks[4], 64, 64)          # post_attention[0]
    w2, b2 = linear(ks[5], 64, output_dim)  # post_attention[2]
    w3, b3 = linear(ks[6], 64, 64)          # value_head[0]
    w4, b4 = linear(ks[7], 64, 1)           # value_head[2]
    return (wk, bk, wq, bq, wv, bv, wr, br,
            w1, b1, w2, b2, w3, b3, w4, b4)


if __name__ == "__main__":
    AGENT_DIM = 8
    INPUT_DIM = MAX_AGENTS * AGENT_DIM      # 40
    OUTPUT_DIM = 4
    BATCH = 2

    key = jax.random.PRNGKey(0)
    kx, kp, kx2 = jax.random.split(key, 3)
    params = init_params(kp, INPUT_DIM, OUTPUT_DIM)

    fwd = jax.jit(light_meta_forward, static_argnames=("block_b",))

    # Small demo batch (exercises the batch-padding path: 2 -> tile of 8).
    x = jax.random.normal(kx, (BATCH, INPUT_DIM), jnp.float32)
    action_probs, value = fwd(x, params)
    jax.block_until_ready((action_probs, value))
    assert action_probs.shape == (BATCH, OUTPUT_DIM)
    assert value.shape == (BATCH, 1)

    ref_p, ref_v = light_meta_reference(x, params)
    assert jnp.allclose(action_probs, ref_p, rtol=1e-2, atol=1e-2)
    assert jnp.allclose(value, ref_v, rtol=1e-2, atol=1e-2)

    # Ragged batch with multiple grid steps (37 rows, 16-row tiles -> 3 steps).
    x2 = jax.random.normal(kx2, (37, INPUT_DIM), jnp.float32)
    p2, v2 = fwd(x2, params, block_b=16)
    jax.block_until_ready((p2, v2))
    rp2, rv2 = light_meta_reference(x2, params)
    assert p2.shape == (37, OUTPUT_DIM) and v2.shape == (37, 1)
    assert jnp.allclose(p2, rp2, rtol=1e-2, atol=1e-2)
    assert jnp.allclose(v2, rv2, rtol=1e-2, atol=1e-2)

    print("KERNEL_OK")
</pallas_src>

<mosaic_0001>
module attributes {stable_mosaic.version = 11 : i64} {
  func.func @_light_meta_kernel(%arg0: i32, %arg1: memref<8x40xbf16, #tpu.memory_space<vmem>>, %arg2: memref<40x4992xbf16, #tpu.memory_space<vmem>>, %arg3: memref<1x4992xf32, #tpu.memory_space<vmem>>, %arg4: memref<40x5xbf16, #tpu.memory_space<vmem>>, %arg5: memref<1664x25xbf16, #tpu.memory_space<vmem>>, %arg6: memref<25x25xf32, #tpu.memory_space<vmem>>, %arg7: memref<5x25xbf16, #tpu.memory_space<vmem>>, %arg8: memref<25x1664xbf16, #tpu.memory_space<vmem>>, %arg9: memref<1664x64xbf16, #tpu.memory_space<vmem>>, %arg10: memref<64x128xbf16, #tpu.memory_space<vmem>>, %arg11: memref<1x128xf32, #tpu.memory_space<vmem>>, %arg12: memref<128x128xbf16, #tpu.memory_space<vmem>>, %arg13: memref<1x128xf32, #tpu.memory_space<vmem>>, %arg14: memref<8x128xf32, #tpu.memory_space<vmem>>) attributes {dimension_semantics = [#tpu.dimension_semantics<parallel>], iteration_bounds = array<i64: 1>, scalar_prefetch = 0 : i64, scratch_operands = 0 : i64, tpu.core_type = #tpu.core_type<tc>, window_params = [{transform_indices = @transform_0, window_bounds = array<i64: 8, 40>}, {pipeline_mode = #tpu.pipeline_mode<synchronous>, transform_indices = @transform_1, window_bounds = array<i64: 40, 4992>}, {pipeline_mode = #tpu.pipeline_mode<synchronous>, transform_indices = @transform_2, window_bounds = array<i64: 1, 4992>}, {pipeline_mode = #tpu.pipeline_mode<synchronous>, transform_indices = @transform_3, window_bounds = array<i64: 40, 5>}, {pipeline_mode = #tpu.pipeline_mode<synchronous>, transform_indices = @transform_4, window_bounds = array<i64: 1664, 25>}, {pipeline_mode = #tpu.pipeline_mode<synchronous>, transform_indices = @transform_5, window_bounds = array<i64: 25, 25>}, {pipeline_mode = #tpu.pipeline_mode<synchronous>, transform_indices = @transform_6, window_bounds = array<i64: 5, 25>}, {pipeline_mode = #tpu.pipeline_mode<synchronous>, transform_indices = @transform_7, window_bounds = array<i64: 25, 1664>}, {pipeline_mode = #tpu.pipeline_mode<synchronous>, transform_indices = @transform_8, window_bounds = array<i64: 1664, 64>}, {pipeline_mode = #tpu.pipeline_mode<synchronous>, transform_indices = @transform_9, window_bounds = array<i64: 64, 128>}, {pipeline_mode = #tpu.pipeline_mode<synchronous>, transform_indices = @transform_10, window_bounds = array<i64: 1, 128>}, {pipeline_mode = #tpu.pipeline_mode<synchronous>, transform_indices = @transform_11, window_bounds = array<i64: 128, 128>}, {pipeline_mode = #tpu.pipeline_mode<synchronous>, transform_indices = @transform_12, window_bounds = array<i64: 1, 128>}, {transform_indices = @transform_13, window_bounds = array<i64: 8, 128>}]} {
    %c0 = arith.constant 0 : index
    %c0_0 = arith.constant 0 : index
    %0 = vector.load %arg1[%c0, %c0_0] : memref<8x40xbf16, #tpu.memory_space<vmem>>, vector<8x40xbf16>
    %c0_1 = arith.constant 0 : index
    %c0_2 = arith.constant 0 : index
    %1 = vector.load %arg2[%c0_1, %c0_2] : memref<40x4992xbf16, #tpu.memory_space<vmem>>, vector<40x4992xbf16>
    %cst = arith.constant dense<0.000000e+00> : vector<8x4992xf32>
    %2 = tpu.matmul %0, %1, %cst {dimension_numbers = #tpu.dot_dimension_numbers<[1], [0], [0], [1], [0, 0, 1, 1], [], []>} : vector<8x40xbf16>, vector<40x4992xbf16>, vector<8x4992xf32> -> vector<8x4992xf32>
    %c0_3 = arith.constant 0 : index
    %c0_4 = arith.constant 0 : index
    %3 = vector.load %arg3[%c0_3, %c0_4] : memref<1x4992xf32, #tpu.memory_space<vmem>>, vector<1x4992xf32>
    %4 = vector.broadcast %3 : vector<1x4992xf32> to vector<8x4992xf32>
    %5 = arith.addf %2, %4 : vector<8x4992xf32>
    %6 = vector.extract_strided_slice %5 {offsets = [0, 0], sizes = [8, 1664], strides = [1, 1]} : vector<8x4992xf32> to vector<8x1664xf32>
    %7 = vector.extract_strided_slice %5 {offsets = [0, 1664], sizes = [8, 1664], strides = [1, 1]} : vector<8x4992xf32> to vector<8x1664xf32>
    %8 = vector.extract_strided_slice %5 {offsets = [0, 3328], sizes = [8, 1664], strides = [1, 1]} : vector<8x4992xf32> to vector<8x1664xf32>
    %9 = math.absf %0 : vector<8x40xbf16>
    %c0_5 = arith.constant 0 : index
    %c0_6 = arith.constant 0 : index
    %10 = vector.load %arg4[%c0_5, %c0_6] : memref<40x5xbf16, #tpu.memory_space<vmem>>, vector<40x5xbf16>
    %cst_7 = arith.constant dense<0.000000e+00> : vector<8x5xf32>
    %11 = tpu.matmul %9, %10, %cst_7 {dimension_numbers = #tpu.dot_dimension_numbers<[1], [0], [0], [1], [0, 0, 1, 1], [], []>} : vector<8x40xbf16>, vector<40x5xbf16>, vector<8x5xf32> -> vector<8x5xf32>
    %cst_8 = arith.constant 1.000000e-01 : f32
    %12 = vector.broadcast %cst_8 : f32 to vector<8x5xf32>
    %13 = arith.cmpf ogt, %11, %12 : vector<8x5xf32>
    %14 = arith.extui %13 : vector<8x5xi1> to vector<8x5xi32>
    %15 = arith.sitofp %14 : vector<8x5xi32> to vector<8x5xf32>
    %cst_9 = arith.constant dense<0.000000e+00> : vector<8xf32>
    %16 = vector.multi_reduction <add>, %15, %cst_9 [1] : vector<8x5xf32> to vector<8xf32>
    %17 = vector.shape_cast %16 : vector<8xf32> to vector<8x1xf32>
    %18 = arith.mulf %6, %7 : vector<8x1664xf32>
    %19 = arith.truncf %18 : vector<8x1664xf32> to vector<8x1664xbf16>
    %c0_10 = arith.constant 0 : index
    %c0_11 = arith.constant 0 : index
    %20 = vector.load %arg5[%c0_10, %c0_11] : memref<1664x25xbf16, #tpu.memory_space<vmem>>, vector<1664x25xbf16>
    %cst_12 = arith.constant dense<0.000000e+00> : vector<8x25xf32>
    %21 = tpu.matmul %19, %20, %cst_12 {dimension_numbers = #tpu.dot_dimension_numbers<[1], [0], [0], [1], [0, 0, 1, 1], [], []>} : vector<8x1664xbf16>, vector<1664x25xbf16>, vector<8x25xf32> -> vector<8x25xf32>
    %cst_13 = arith.constant dense<0xFF800000> : vector<8xf32>
    %22 = vector.multi_reduction <maximumf>, %21, %cst_13 [1] : vector<8x25xf32> to vector<8xf32>
    %23 = vector.shape_cast %22 : vector<8xf32> to vector<8x1xf32>
    %24 = vector.broadcast %23 : vector<8x1xf32> to vector<8x25xf32>
    %25 = arith.subf %21, %24 : vector<8x25xf32>
    %26 = math.exp %25 : vector<8x25xf32>
    %c0_14 = arith.constant 0 : index
    %c0_15 = arith.constant 0 : index
    %27 = vector.load %arg6[%c0_14, %c0_15] : memref<25x25xf32, #tpu.memory_space<vmem>>, vector<25x25xf32>
    %cst_16 = arith.constant dense<0.000000e+00> : vector<8x25xf32>
    %28 = tpu.matmul %26, %27, %cst_16 {dimension_numbers = #tpu.dot_dimension_numbers<[1], [0], [0], [1], [0, 0, 1, 1], [], []>} : vector<8x25xf32>, vector<25x25xf32>, vector<8x25xf32> -> vector<8x25xf32>
    %29 = tpu.reciprocal %28 {approx = true} : vector<8x25xf32> -> vector<8x25xf32>
    %30 = arith.mulf %26, %29 : vector<8x25xf32>
    %31 = arith.truncf %15 : vector<8x5xf32> to vector<8x5xbf16>
    %c0_17 = arith.constant 0 : index
    %c0_18 = arith.constant 0 : index
    %32 = vector.load %arg7[%c0_17, %c0_18] : memref<5x25xbf16, #tpu.memory_space<vmem>>, vector<5x25xbf16>
    %cst_19 = arith.constant dense<0.000000e+00> : vector<8x25xf32>
    %33 = tpu.matmul %31, %32, %cst_19 {dimension_numbers = #tpu.dot_dimension_numbers<[1], [0], [0], [1], [0, 0, 1, 1], [], []>} : vector<8x5xbf16>, vector<5x25xbf16>, vector<8x25xf32> -> vector<8x25xf32>
    %34 = arith.mulf %30, %33 : vector<8x25xf32>
    %35 = arith.truncf %34 : vector<8x25xf32> to vector<8x25xbf16>
    %c0_20 = arith.constant 0 : index
    %c0_21 = arith.constant 0 : index
    %36 = vector.load %arg8[%c0_20, %c0_21] : memref<25x1664xbf16, #tpu.memory_space<vmem>>, vector<25x1664xbf16>
    %cst_22 = arith.constant dense<0.000000e+00> : vector<8x1664xf32>
    %37 = tpu.matmul %35, %36, %cst_22 {dimension_numbers = #tpu.dot_dimension_numbers<[1], [0], [0], [1], [0, 0, 1, 1], [], []>} : vector<8x25xbf16>, vector<25x1664xbf16>, vector<8x1664xf32> -> vector<8x1664xf32>
    %38 = arith.mulf %37, %8 : vector<8x1664xf32>
    %39 = arith.truncf %38 : vector<8x1664xf32> to vector<8x1664xbf16>
    %c0_23 = arith.constant 0 : index
    %c0_24 = arith.constant 0 : index
    %40 = vector.load %arg9[%c0_23, %c0_24] : memref<1664x64xbf16, #tpu.memory_space<vmem>>, vector<1664x64xbf16>
    %cst_25 = arith.constant dense<0.000000e+00> : vector<8x64xf32>
    %41 = tpu.matmul %39, %40, %cst_25 {dimension_numbers = #tpu.dot_dimension_numbers<[1], [0], [0], [1], [0, 0, 1, 1], [], []>} : vector<8x1664xbf16>, vector<1664x64xbf16>, vector<8x64xf32> -> vector<8x64xf32>
    %cst_26 = arith.constant 9.99999993E-9 : f32
    %42 = vector.broadcast %cst_26 : f32 to vector<8x1xf32>
    %43 = arith.addf %17, %42 : vector<8x1xf32>
    %44 = vector.broadcast %43 : vector<8x1xf32> to vector<8x64xf32>
    %45 = arith.divf %41, %44 : vector<8x64xf32>
    %46 = arith.truncf %45 : vector<8x64xf32> to vector<8x64xbf16>
    %c0_27 = arith.constant 0 : index
    %c0_28 = arith.constant 0 : index
    %47 = vector.load %arg10[%c0_27, %c0_28] : memref<64x128xbf16, #tpu.memory_space<vmem>>, vector<64x128xbf16>
    %cst_29 = arith.constant dense<0.000000e+00> : vector<8x128xf32>
    %48 = tpu.matmul %46, %47, %cst_29 {dimension_numbers = #tpu.dot_dimension_numbers<[1], [0], [0], [1], [0, 0, 1, 1], [], []>} : vector<8x64xbf16>, vector<64x128xbf16>, vector<8x128xf32> -> vector<8x128xf32>
    %c0_30 = arith.constant 0 : index
    %c0_31 = arith.constant 0 : index
    %49 = vector.load %arg11[%c0_30, %c0_31] : memref<1x128xf32, #tpu.memory_space<vmem>>, vector<1x128xf32>
    %50 = vector.broadcast %49 : vector<1x128xf32> to vector<8x128xf32>
    %51 = arith.addf %48, %50 : vector<8x128xf32>
    %cst_32 = arith.constant 5.000000e-01 : f32
    %52 = vector.broadcast %cst_32 : f32 to vector<8x128xf32>
    %53 = arith.mulf %52, %51 : vector<8x128xf32>
    %cst_33 = arith.constant 0.707106769 : f32
    %54 = vector.broadcast %cst_33 : f32 to vector<8x128xf32>
    %55 = arith.mulf %51, %54 : vector<8x128xf32>
    %cst_34 = arith.constant 0.000000e+00 : f32
    %56 = vector.broadcast %cst_34 : f32 to vector<8x128xf32>
    %57 = arith.cmpf oge, %55, %56 : vector<8x128xf32>
    %cst_35 = arith.constant 1.000000e+00 : f32
    %cst_36 = arith.constant -1.000000e+00 : f32
    %58 = vector.broadcast %cst_35 : f32 to vector<8x128xf32>
    %59 = vector.broadcast %cst_36 : f32 to vector<8x128xf32>
    %60 = arith.select %57, %58, %59 : vector<8x128xi1>, vector<8x128xf32>
    %61 = math.absf %55 : vector<8x128xf32>
    %cst_37 = arith.constant 0.327591091 : f32
    %62 = vector.broadcast %cst_37 : f32 to vector<8x128xf32>
    %63 = arith.mulf %62, %61 : vector<8x128xf32>
    %cst_38 = arith.constant 1.000000e+00 : f32
    %64 = vector.broadcast %cst_38 : f32 to vector<8x128xf32>
    %65 = arith.addf %64, %63 : vector<8x128xf32>
    %cst_39 = arith.constant 1.000000e+00 : f32
    %66 = vector.broadcast %cst_39 : f32 to vector<8x128xf32>
    %67 = arith.divf %66, %65 : vector<8x128xf32>
    %cst_40 = arith.constant 1.06140542 : f32
    %68 = vector.broadcast %cst_40 : f32 to vector<8x128xf32>
    %69 = arith.mulf %68, %67 : vector<8x128xf32>
    %cst_41 = arith.constant -1.45315206 : f32
    %70 = vector.broadcast %cst_41 : f32 to vector<8x128xf32>
    %71 = arith.addf %69, %70 : vector<8x128xf32>
    %72 = arith.mulf %71, %67 : vector<8x128xf32>
    %cst_42 = arith.constant 1.42141378 : f32
    %73 = vector.broadcast %cst_42 : f32 to vector<8x128xf32>
    %74 = arith.addf %72, %73 : vector<8x128xf32>
    %75 = arith.mulf %74, %67 : vector<8x128xf32>
    %cst_43 = arith.constant -0.284496725 : f32
    %76 = vector.broadcast %cst_43 : f32 to vector<8x128xf32>
    %77 = arith.addf %75, %76 : vector<8x128xf32>
    %78 = arith.mulf %77, %67 : vector<8x128xf32>
    %cst_44 = arith.constant 0.254829586 : f32
    %79 = vector.broadcast %cst_44 : f32 to vector<8x128xf32>
    %80 = arith.addf %78, %79 : vector<8x128xf32>
    %81 = arith.mulf %80, %67 : vector<8x128xf32>
    %cst_45 = arith.constant 0.000000e+00 : f32
    %82 = vector.broadcast %cst_45 : f32 to vector<8x128xf32>
    %83 = arith.subf %82, %61 : vector<8x128xf32>
    %84 = arith.mulf %83, %61 : vector<8x128xf32>
    %85 = math.exp %84 : vector<8x128xf32>
    %86 = arith.mulf %81, %85 : vector<8x128xf32>
    %cst_46 = arith.constant 1.000000e+00 : f32
    %87 = vector.broadcast %cst_46 : f32 to vector<8x128xf32>
    %88 = arith.subf %87, %86 : vector<8x128xf32>
    %89 = arith.mulf %60, %88 : vector<8x128xf32>
    %cst_47 = arith.constant 1.000000e+00 : f32
    %90 = vector.broadcast %cst_47 : f32 to vector<8x128xf32>
    %91 = arith.addf %90, %89 : vector<8x128xf32>
    %92 = arith.mulf %53, %91 : vector<8x128xf32>
    %93 = arith.truncf %92 : vector<8x128xf32> to vector<8x128xbf16>
    %c0_48 = arith.constant 0 : index
    %c0_49 = arith.constant 0 : index
    %94 = vector.load %arg12[%c0_48, %c0_49] : memref<128x128xbf16, #tpu.memory_space<vmem>>, vector<128x128xbf16>
    %cst_50 = arith.constant dense<0.000000e+00> : vector<8x128xf32>
    %95 = tpu.matmul %93, %94, %cst_50 {dimension_numbers = #tpu.dot_dimension_numbers<[1], [0], [0], [1], [0, 0, 1, 1], [], []>} : vector<8x128xbf16>, vector<128x128xbf16>, vector<8x128xf32> -> vector<8x128xf32>
    %c0_51 = arith.constant 0 : index
    %c0_52 = arith.constant 0 : index
    %96 = vector.load %arg13[%c0_51, %c0_52] : memref<1x128xf32, #tpu.memory_space<vmem>>, vector<1x128xf32>
    %97 = vector.broadcast %96 : vector<1x128xf32> to vector<8x128xf32>
    %98 = arith.addf %95, %97 : vector<8x128xf32>
    %99 = tpu.iota {dimensions = array<i32: 1>} : vector<8x128xi32>
    %c4_i32 = arith.constant 4 : i32
    %100 = vector.broadcast %c4_i32 : i32 to vector<8x128xi32>
    %101 = arith.cmpi slt, %99, %100 : vector<8x128xi32>
    %cst_53 = arith.constant 0.000000e+00 : f32
    %102 = vector.broadcast %cst_53 : f32 to vector<8x128xf32>
    %103 = arith.subf %102, %98 : vector<8x128xf32>
    %104 = math.exp %103 : vector<8x128xf32>
    %cst_54 = arith.constant 1.000000e+00 : f32
    %105 = vector.broadcast %cst_54 : f32 to vector<8x128xf32>
    %106 = arith.addf %105, %104 : vector<8x128xf32>
    %cst_55 = arith.constant 1.000000e+00 : f32
    %107 = vector.broadcast %cst_55 : f32 to vector<8x128xf32>
    %108 = arith.divf %107, %106 : vector<8x128xf32>
    %cst_56 = arith.constant 5.000000e-01 : f32
    %109 = vector.broadcast %cst_56 : f32 to vector<8x128xf32>
    %110 = arith.mulf %109, %108 : vector<8x128xf32>
    %cst_57 = arith.constant 2.500000e-01 : f32
    %111 = vector.broadcast %cst_57 : f32 to vector<8x128xf32>
    %112 = arith.addf %110, %111 : vector<8x128xf32>
    %113 = arith.select %101, %112, %98 : vector<8x128xi1>, vector<8x128xf32>
    %c0_58 = arith.constant 0 : index
    %c0_59 = arith.constant 0 : index
    %114 = vector.load %arg14[%c0_58, %c0_59] : memref<8x128xf32, #tpu.memory_space<vmem>>, vector<8x128xf32>
    tpu.vector_store %arg14[%c0_58, %c0_59], %113 {strides = array<i32>} : memref<8x128xf32, #tpu.memory_space<vmem>>, vector<8x128xf32>,
    return
  }
  func.func @transform_0(%arg0: i32) -> (i32, i32) {
    %c0_i32 = arith.constant 0 : i32
    %c0_i32_0 = arith.constant 0 : i32
    return %arg0, %c0_i32 : i32, i32
  }
  func.func @transform_1(%arg0: i32) -> (i32, i32) {
    %c0_i32 = arith.constant 0 : i32
    %c0_i32_0 = arith.constant 0 : i32
    %c0_i32_1 = arith.constant 0 : i32
    return %c0_i32, %c0_i32_0 : i32, i32
  }
  func.func @transform_2(%arg0: i32) -> (i32, i32) {
    %c0_i32 = arith.constant 0 : i32
    %c0_i32_0 = arith.constant 0 : i32
    %c0_i32_1 = arith.constant 0 : i32
    return %c0_i32, %c0_i32_0 : i32, i32
  }
  func.func @transform_3(%arg0: i32) -> (i32, i32) {
    %c0_i32 = arith.constant 0 : i32
    %c0_i32_0 = arith.constant 0 : i32
    %c0_i32_1 = arith.constant 0 : i32
    return %c0_i32, %c0_i32_0 : i32, i32
  }
  func.func @transform_4(%arg0: i32) -> (i32, i32) {
    %c0_i32 = arith.constant 0 : i32
    %c0_i32_0 = arith.constant 0 : i32
    %c0_i32_1 = arith.constant 0 : i32
    return %c0_i32, %c0_i32_0 : i32, i32
  }
  func.func @transform_5(%arg0: i32) -> (i32, i32) {
    %c0_i32 = arith.constant 0 : i32
    %c0_i32_0 = arith.constant 0 : i32
    %c0_i32_1 = arith.constant 0 : i32
    return %c0_i32, %c0_i32_0 : i32, i32
  }
  func.func @transform_6(%arg0: i32) -> (i32, i32) {
    %c0_i32 = arith.constant 0 : i32
    %c0_i32_0 = arith.constant 0 : i32
    %c0_i32_1 = arith.constant 0 : i32
    return %c0_i32, %c0_i32_0 : i32, i32
  }
  func.func @transform_7(%arg0: i32) -> (i32, i32) {
    %c0_i32 = arith.constant 0 : i32
    %c0_i32_0 = arith.constant 0 : i32
    %c0_i32_1 = arith.constant 0 : i32
    return %c0_i32, %c0_i32_0 : i32, i32
  }
  func.func @transform_8(%arg0: i32) -> (i32, i32) {
    %c0_i32 = arith.constant 0 : i32
    %c0_i32_0 = arith.constant 0 : i32
    %c0_i32_1 = arith.constant 0 : i32
    return %c0_i32, %c0_i32_0 : i32, i32
  }
  func.func @transform_9(%arg0: i32) -> (i32, i32) {
    %c0_i32 = arith.constant 0 : i32
    %c0_i32_0 = arith.constant 0 : i32
    %c0_i32_1 = arith.constant 0 : i32
    return %c0_i32, %c0_i32_0 : i32, i32
  }
  func.func @transform_10(%arg0: i32) -> (i32, i32) {
    %c0_i32 = arith.constant 0 : i32
    %c0_i32_0 = arith.constant 0 : i32
    %c0_i32_1 = arith.constant 0 : i32
    return %c0_i32, %c0_i32_0 : i32, i32
  }
  func.func @transform_11(%arg0: i32) -> (i32, i32) {
    %c0_i32 = arith.constant 0 : i32
    %c0_i32_0 = arith.constant 0 : i32
    %c0_i32_1 = arith.constant 0 : i32
    return %c0_i32, %c0_i32_0 : i32, i32
  }
  func.func @transform_12(%arg0: i32) -> (i32, i32) {
    %c0_i32 = arith.constant 0 : i32
    %c0_i32_0 = arith.constant 0 : i32
    %c0_i32_1 = arith.constant 0 : i32
    return %c0_i32, %c0_i32_0 : i32, i32
  }
  func.func @transform_13(%arg0: i32) -> (i32, i32) {
    %c0_i32 = arith.constant 0 : i32
    %c0_i32_0 = arith.constant 0 : i32
    return %arg0, %c0_i32 : i32, i32
  }
}

</mosaic_0001>

<llo_original>
// kernel: tile.2
$region0: #{tile.2}
  %s0 = inlined_call_operand.vmem [shape: bf16[40,5,320], index: 0, kind: input, shape index: {}]
  %s1 = inlined_call_operand.vmem [shape: bf16[40,1600], index: 1, kind: output, shape index: {}]
  $region1: #{tile.2} parent=0
    #allocation0 [shape = 'u8[266240]{0}', space=vmem, size = 0x41000, scoped, tag = 'scoped mem for output reshape']
    #allocation1 [shape = 'u8[491520]{0}', space=vmem, size = 0x78000, scoped, tag = 'scoped mem for input reshape']
    %s3 = smul.u32 4, 2
    %s4 = sshllo.u32 0, %s3
    %s5 = smul.addr 4, 119
    %s6 = scalar_lea.vmem %s0, %s5
    %s7 = sshrl.u32 %s4, 1
    %s8 = sor.u32 %s4, %s7
    %s9 = sand.u32 %s8, 85
    %s10 = sshrl.u32 %s9, 1
    %s11 = sor.u32 %s9, %s10
    %s12 = sand.u32 51, %s11
    %s13 = sshrl.u32 %s12, 2
    %s14 = sor.u32 %s12, %s13
    %s15 = sand.u32 15, %s14
    %v16 = vld [vmem:[%s6] sm:%s15]
    %v17 = vunpack.c.l.bf16 %v16
    %v18 = vunpack.c.h.bf16 %v16
    %s19 = scalar_lea.vmem [#allocation1], 952
    %20 = vst [vmem:[%s19] sm:%s4] %v17
    %s21 = smul.addr 4, 118
    %s22 = scalar_lea.vmem %s0, %s21
    %s23 = sshrl.u32 %s4, 1
    %s24 = sor.u32 %s4, %s23
    %s25 = sand.u32 %s24, 85
    %s26 = sshrl.u32 %s25, 1
    %s27 = sor.u32 %s25, %s26
    %s28 = sand.u32 51, %s27
    %s29 = sshrl.u32 %s28, 2
    %s30 = sor.u32 %s28, %s29
    %s31 = sand.u32 15, %s30
    %v32 = vld [vmem:[%s22] sm:%s31]
    %v33 = vunpack.c.l.bf16 %v32
    %v34 = vunpack.c.h.bf16 %v32
    %s35 = scalar_lea.vmem [#allocation1], 944
    %36 = vst [vmem:[%s35] sm:%s4] %v33
    %s37 = smul.addr 4, 117
    %s38 = scalar_lea.vmem %s0, %s37
    %s39 = sshrl.u32 %s4, 1
    %s40 = sor.u32 %s4, %s39
    %s41 = sand.u32 %s40, 85
    %s42 = sshrl.u32 %s41, 1
    %s43 = sor.u32 %s41, %s42
    %s44 = sand.u32 51, %s43
    %s45 = sshrl.u32 %s44, 2
    %s46 = sor.u32 %s44, %s45
    %s47 = sand.u32 15, %s46
    %v48 = vld [vmem:[%s38] sm:%s47]
    %v49 = vunpack.c.l.bf16 %v48
    %v50 = vunpack.c.h.bf16 %v48
    %s51 = scalar_lea.vmem [#allocation1], 936
    %52 = vst [vmem:[%s51] sm:%s4] %v49
    %s53 = smul.addr 4, 116
    %s54 = scalar_lea.vmem %s0, %s53
    %s55 = sshrl.u32 %s4, 1
    %s56 = sor.u32 %s4, %s55
    %s57 = sand.u32 %s56, 85
    %s58 = sshrl.u32 %s57, 1
    %s59 = sor.u32 %s57, %s58
    %s60 = sand.u32 51, %s59
    %s61 = sshrl.u32 %s60, 2
    %s62 = sor.u32 %s60, %s61
    %s63 = sand.u32 15, %s62
    %v64 = vld [vmem:[%s54] sm:%s63]
    %v65 = vunpack.c.l.bf16 %v64
    %v66 = vunpack.c.h.bf16 %v64
    %s67 = scalar_lea.vmem [#allocation1], 928
    %68 = vst [vmem:[%s67] sm:%s4] %v65
    %s69 = smul.addr 4, 115
    %s70 = scalar_lea.vmem %s0, %s69
    %s71 = sshrl.u32 %s4, 1
    %s72 = sor.u32 %s4, %s71
    %s73 = sand.u32 %s72, 85
    %s74 = sshrl.u32 %s73, 1
    %s75 = sor.u32 %s73, %s74
    %s76 = sand.u32 51, %s75
    %s77 = sshrl.u32 %s76, 2
    %s78 = sor.u32 %s76, %s77
    %s79 = sand.u32 15, %s78
    %v80 = vld [vmem:[%s70] sm:%s79]
    %v81 = vunpack.c.l.bf16 %v80
    %v82 = vunpack.c.h.bf16 %v80
    %s83 = scalar_lea.vmem [#allocation1], 920
    %84 = vst [vmem:[%s83] sm:%s4] %v81
    %s85 = smul.addr 4, 114
    %s86 = scalar_lea.vmem %s0, %s85
    %s87 = sshrl.u32 %s4, 1
    %s88 = sor.u32 %s4, %s87
    %s89 = sand.u32 %s88, 85
    %s90 = sshrl.u32 %s89, 1
    %s91 = sor.u32 %s89, %s90
    %s92 = sand.u32 51, %s91
    %s93 = sshrl.u32 %s92, 2
    %s94 = sor.u32 %s92, %s93
    %s95 = sand.u32 15, %s94
    %v96 = vld [vmem:[%s86] sm:%s95]
    %v97 = vunpack.c.l.bf16 %v96
    %v98 = vunpack.c.h.bf16 %v96
    %s99 = scalar_lea.vmem [#allocation1], 912
    %100 = vst [vmem:[%s99] sm:%s4] %v97
    %s101 = smul.addr 4, 113
    %s102 = scalar_lea.vmem %s0, %s101
    %s103 = sshrl.u32 %s4, 1
    %s104 = sor.u32 %s4, %s103
    %s105 = sand.u32 %s104, 85
    %s106 = sshrl.u32 %s105, 1
    %s107 = sor.u32 %s105, %s106
    %s108 = sand.u32 51, %s107
    %s109 = sshrl.u32 %s108, 2
    %s110 = sor.u32 %s108, %s109
    %s111 = sand.u32 15, %s110
    %v112 = vld [vmem:[%s102] sm:%s111]
    %v113 = vunpack.c.l.bf16 %v112
    %v114 = vunpack.c.h.bf16 %v112
    %s115 = scalar_lea.vmem [#allocation1], 904
    %116 = vst [vmem:[%s115] sm:%s4] %v113
    %s117 = smul.addr 4, 112
    %s118 = scalar_lea.vmem %s0, %s117
    %s119 = sshrl.u32 %s4, 1
    %s120 = sor.u32 %s4, %s119
    %s121 = sand.u32 %s120, 85
    %s122 = sshrl.u32 %s121, 1
    %s123 = sor.u32 %s121, %s122
    %s124 = sand.u32 51, %s123
    %s125 = sshrl.u32 %s124, 2
    %s126 = sor.u32 %s124, %s125
    %s127 = sand.u32 15, %s126
    %v128 = vld [vmem:[%s118] sm:%s127]
    %v129 = vunpack.c.l.bf16 %v128
    %v130 = vunpack.c.h.bf16 %v128
    %s131 = scalar_lea.vmem [#allocation1], 896
    %132 = vst [vmem:[%s131] sm:%s4] %v129
    %s133 = smul.addr 4, 111
    %s134 = scalar_lea.vmem %s0, %s133
    %s135 = sshrl.u32 %s4, 1
    %s136 = sor.u32 %s4, %s135
    %s137 = sand.u32 %s136, 85
    %s138 = sshrl.u32 %s137, 1
    %s139 = sor.u32 %s137, %s138
    %s140 = sand.u32 51, %s139
    %s141 = sshrl.u32 %s140, 2
    %s142 = sor.u32 %s140, %s141
    %s143 = sand.u32 15, %s142
    %v144 = vld [vmem:[%s134] sm:%s143]
    %v145 = vunpack.c.l.bf16 %v144
    %v146 = vunpack.c.h.bf16 %v144
    %s147 = scalar_lea.vmem [#allocation1], 888
    %148 = vst [vmem:[%s147] sm:%s4] %v145
    %s149 = smul.addr 4, 110
    %s150 = scalar_lea.vmem %s0, %s149
    %s151 = sshrl.u32 %s4, 1
    %s152 = sor.u32 %s4, %s151
    %s153 = sand.u32 %s152, 85
    %s154 = sshrl.u32 %s153, 1
    %s155 = sor.u32 %s153, %s154
    %s156 = sand.u32 51, %s155
    %s157 = sshrl.u32 %s156, 2
    %s158 = sor.u32 %s156, %s157
    %s159 = sand.u32 15, %s158
    %v160 = vld [vmem:[%s150] sm:%s159]
    %v161 = vunpack.c.l.bf16 %v160
    %v162 = vunpack.c.h.bf16 %v160
    %s163 = scalar_lea.vmem [#allocation1], 880
    %164 = vst [vmem:[%s163] sm:%s4] %v161
    %s165 = smul.addr 4, 109
    %s166 = scalar_lea.vmem %s0, %s165
    %s167 = sshrl.u32 %s4, 1
    %s168 = sor.u32 %s4, %s167
    %s169 = sand.u32 %s168, 85
    %s170 = sshrl.u32 %s169, 1
    %s171 = sor.u32 %s169, %s170
    %s172 = sand.u32 51, %s171
    %s173 = sshrl.u32 %s172, 2
    %s174 = sor.u32 %s172, %s173
    %s175 = sand.u32 15, %s174
    %v176 = vld [vmem:[%s166] sm:%s175]
    %v177 = vunpack.c.l.bf16 %v176
    %v178 = vunpack.c.h.bf16 %v176
    %s179 = scalar_lea.vmem [#allocation1], 872
    %180 = vst [vmem:[%s179] sm:%s4] %v177
    %s181 = smul.addr 4, 108
    %s182 = scalar_lea.vmem %s0, %s181
    %s183 = sshrl.u32 %s4, 1
    %s184 = sor.u32 %s4, %s183
    %s185 = sand.u32 %s184, 85
    %s186 = sshrl.u32 %s185, 1
    %s187 = sor.u32 %s185, %s186
    %s188 = sand.u32 51, %s187
    %s189 = sshrl.u32 %s188, 2
    %s190 = sor.u32 %s188, %s189
    %s191 = sand.u32 15, %s190
    %v192 = vld [vmem:[%s182] sm:%s191]
    %v193 = vunpack.c.l.bf16 %v192
    %v194 = vunpack.c.h.bf16 %v192
    %s195 = scalar_lea.vmem [#allocation1], 864
    %196 = vst [vmem:[%s195] sm:%s4] %v193
    %s197 = smul.addr 4, 107
    %s198 = scalar_lea.vmem %s0, %s197
    %s199 = sshrl.u32 %s4, 1
    %s200 = sor.u32 %s4, %s199
    %s201 = sand.u32 %s200, 85
    %s202 = sshrl.u32 %s201, 1
    %s203 = sor.u32 %s201, %s202
    %s204 = sand.u32 51, %s203
    %s205 = sshrl.u32 %s204, 2
    %s206 = sor.u32 %s204, %s205
    %s207 = sand.u32 15, %s206
    %v208 = vld [vmem:[%s198] sm:%s207]
    %v209 = vunpack.c.l.bf16 %v208
    %v210 = vunpack.c.h.bf16 %v208
    %s211 = scalar_lea.vmem [#allocation1], 856
    %212 = vst [vmem:[%s211] sm:%s4] %v209
    %s213 = smul.addr 4, 106
    %s214 = scalar_lea.vmem %s0, %s213
    %s215 = sshrl.u32 %s4, 1
    %s216 = sor.u32 %s4, %s215
    %s217 = sand.u32 %s216, 85
    %s218 = sshrl.u32 %s217, 1
    %s219 = sor.u32 %s217, %s218
    %s220 = sand.u32 51, %s219
    %s221 = sshrl.u32 %s220, 2
    %s222 = sor.u32 %s220, %s221
    %s223 = sand.u32 15, %s222
    %v224 = vld [vmem:[%s214] sm:%s223]
    %v225 = vunpack.c.l.bf16 %v224
    %v226 = vunpack.c.h.bf16 %v224
    %s227 = scalar_lea.vmem [#allocation1], 848
    %228 = vst [vmem:[%s227] sm:%s4] %v225
    %s229 = smul.addr 4, 105
    %s230 = scalar_lea.vmem %s0, %s229
    %s231 = sshrl.u32 %s4, 1
    %s232 = sor.u32 %s4, %s231
    %s233 = sand.u32 %s232, 85
    %s234 = sshrl.u32 %s233, 1
    %s235 = sor.u32 %s233, %s234
    %s236 = sand.u32 51, %s235
    %s237 = sshrl.u32 %s236, 2
    %s238 = sor.u32 %s236, %s237
    %s239 = sand.u32 15, %s238
    %v240 = vld [vmem:[%s230] sm:%s239]
    %v241 = vunpack.c.l.bf16 %v240
    %v242 = vunpack.c.h.bf16 %v240
    %s243 = scalar_lea.vmem [#allocation1], 840
    %244 = vst [vmem:[%s243] sm:%s4] %v241
    %s245 = smul.addr 4, 104
    %s246 = scalar_lea.vmem %s0, %s245
    %s247 = sshrl.u32 %s4, 1
    %s248 = sor.u32 %s4, %s247
    %s249 = sand.u32 %s248, 85
    %s250 = sshrl.u32 %s249, 1
    %s251 = sor.u32 %s249, %s250
    %s252 = sand.u32 51, %s251
    %s253 = sshrl.u32 %s252, 2
    %s254 = sor.u32 %s252, %s253
    %s255 = sand.u32 15, %s254
    %v256 = vld [vmem:[%s246] sm:%s255]
    %v257 = vunpack.c.l.bf16 %v256
    %v258 = vunpack.c.h.bf16 %v256
    %s259 = scalar_lea.vmem [#allocation1], 832
    %260 = vst [vmem:[%s259] sm:%s4] %v257
    %s261 = smul.addr 4, 103
    %s262 = scalar_lea.vmem %s0, %s261
    %s263 = sshrl.u32 %s4, 1
    %s264 = sor.u32 %s4, %s263
    %s265 = sand.u32 %s264, 85
    %s266 = sshrl.u32 %s265, 1
    %s267 = sor.u32 %s265, %s266
    %s268 = sand.u32 51, %s267
    %s269 = sshrl.u32 %s268, 2
    %s270 = sor.u32 %s268, %s269
    %s271 = sand.u32 15, %s270
    %v272 = vld [vmem:[%s262] sm:%s271]
    %v273 = vunpack.c.l.bf16 %v272
    %v274 = vunpack.c.h.bf16 %v272
    %s275 = scalar_lea.vmem [#allocation1], 824
    %276 = vst [vmem:[%s275] sm:%s4] %v273
    %s277 = smul.addr 4, 102
    %s278 = scalar_lea.vmem %s0, %s277
    %s279 = sshrl.u32 %s4, 1
    %s280 = sor.u32 %s4, %s279
    %s281 = sand.u32 %s280, 85
    %s282 = sshrl.u32 %s281, 1
    %s283 = sor.u32 %s281, %s282
    %s284 = sand.u32 51, %s283
    %s285 = sshrl.u32 %s284, 2
    %s286 = sor.u32 %s284, %s285
    %s287 = sand.u32 15, %s286
    %v288 = vld [vmem:[%s278] sm:%s287]
    %v289 = vunpack.c.l.bf16 %v288
    %v290 = vunpack.c.h.bf16 %v288
    %s291 = scalar_lea.vmem [#allocation1], 816
    %292 = vst [vmem:[%s291] sm:%s4] %v289
    %s293 = smul.addr 4, 101
    %s294 = scalar_lea.vmem %s0, %s293
    %s295 = sshrl.u32 %s4, 1
    %s296 = sor.u32 %s4, %s295
    %s297 = sand.u32 %s296, 85
    %s298 = sshrl.u32 %s297, 1
    %s299 = sor.u32 %s297, %s298
    %s300 = sand.u32 51, %s299
    %s301 = sshrl.u32 %s300, 2
    %s302 = sor.u32 %s300, %s301
    %s303 = sand.u32 15, %s302
    %v304 = vld [vmem:[%s294] sm:%s303]
    %v305 = vunpack.c.l.bf16 %v304
    %v306 = vunpack.c.h.bf16 %v304
    %s307 = scalar_lea.vmem [#allocation1], 808
    %308 = vst [vmem:[%s307] sm:%s4] %v305
    %s309 = smul.addr 4, 100
    %s310 = scalar_lea.vmem %s0, %s309
    %s311 = sshrl.u32 %s4, 1
    %s312 = sor.u32 %s4, %s311
    %s313 = sand.u32 %s312, 85
    %s314 = sshrl.u32 %s313, 1
    %s315 = sor.u32 %s313, %s314
    %s316 = sand.u32 51, %s315
    %s317 = sshrl.u32 %s316, 2
    %s318 = sor.u32 %s316, %s317
    %s319 = sand.u32 15, %s318
    %v320 = vld [vmem:[%s310] sm:%s319]
    %v321 = vunpack.c.l.bf16 %v320
    %v322 = vunpack.c.h.bf16 %v320
    %s323 = scalar_lea.vmem [#allocation1], 800
    %324 = vst [vmem:[%s323] sm:%s4] %v321
    %s325 = smul.addr 4, 99
    %s326 = scalar_lea.vmem %s0, %s325
    %s327 = sshrl.u32 %s4, 1
    %s328 = sor.u32 %s4, %s327
    %s329 = sand.u32 %s328, 85
    %s330 = sshrl.u32 %s329, 1
    %s331 = sor.u32 %s329, %s330
    %s332 = sand.u32 51, %s331
    %s333 = sshrl.u32 %s332, 2
    %s334 = sor.u32 %s332, %s333
    %s335 = sand.u32 15, %s334
    %v336 = vld [vmem:[%s326] sm:%s335]
    %v337 = vunpack.c.l.bf16 %v336
    %v338 = vunpack.c.h.bf16 %v336
    %s339 = scalar_lea.vmem [#allocation1], 792
    %340 = vst [vmem:[%s339] sm:%s4] %v337
    %s341 = smul.addr 4, 98
    %s342 = scalar_lea.vmem %s0, %s341
    %s343 = sshrl.u32 %s4, 1
    %s344 = sor.u32 %s4, %s343
    %s345 = sand.u32 %s344, 85
    %s346 = sshrl.u32 %s345, 1
    %s347 = sor.u32 %s345, %s346
    %s348 = sand.u32 51, %s347
    %s349 = sshrl.u32 %s348, 2
    %s350 = sor.u32 %s348, %s349
    %s351 = sand.u32 15, %s350
    %v352 = vld [vmem:[%s342] sm:%s351]
    %v353 = vunpack.c.l.bf16 %v352
    %v354 = vunpack.c.h.bf16 %v352
    %s355 = scalar_lea.vmem [#allocation1], 784
    %356 = vst [vmem:[%s355] sm:%s4] %v353
    %s357 = smul.addr 4, 97
    %s358 = scalar_lea.vmem %s0, %s357
    %s359 = sshrl.u32 %s4, 1
    %s360 = sor.u32 %s4, %s359
    %s361 = sand.u32 %s360, 85
    %s362 = sshrl.u32 %s361, 1
    %s363 = sor.u32 %s361, %s362
    %s364 = sand.u32 51, %s363
    %s365 = sshrl.u32 %s364, 2
    %s366 = sor.u32 %s364, %s365
    %s367 = sand.u32 15, %s366
    %v368 = vld [vmem:[%s358] sm:%s367]
    %v369 = vunpack.c.l.bf16 %v368
    %v370 = vunpack.c.h.bf16 %v368
    %s371 = scalar_lea.vmem [#allocation1], 776
    %372 = vst [vmem:[%s371] sm:%s4] %v369
    %s373 = smul.addr 4, 96
    %s374 = scalar_lea.vmem %s0, %s373
    %s375 = sshrl.u32 %s4, 1
    %s376 = sor.u32 %s4, %s375
    %s377 = sand.u32 %s376, 85
    %s378 = sshrl.u32 %s377, 1
    %s379 = sor.u32 %s377, %s378
    %s380 = sand.u32 51, %s379
    %s381 = sshrl.u32 %s380, 2
    %s382 = sor.u32 %s380, %s381
    %s383 = sand.u32 15, %s382
    %v384 = vld [vmem:[%s374] sm:%s383]
    %v385 = vunpack.c.l.bf16 %v384
    %v386 = vunpack.c.h.bf16 %v384
    %s387 = scalar_lea.vmem [#allocation1], 768
    %388 = vst [vmem:[%s387] sm:%s4] %v385
    %s389 = smul.addr 4, 95
    %s390 = scalar_lea.vmem %s0, %s389
    %s391 = sshrl.u32 %s4, 1
    %s392 = sor.u32 %s4, %s391
    %s393 = sand.u32 %s392, 85
    %s394 = sshrl.u32 %s393, 1
    %s395 = sor.u32 %s393, %s394
    %s396 = sand.u32 51, %s395
    %s397 = sshrl.u32 %s396, 2
    %s398 = sor.u32 %s396, %s397
    %s399 = sand.u32 15, %s398
    %v400 = vld [vmem:[%s390] sm:%s399]
    %v401 = vunpack.c.l.bf16 %v400
    %v402 = vunpack.c.h.bf16 %v400
    %s403 = scalar_lea.vmem [#allocation1], 760
    %404 = vst [vmem:[%s403] sm:%s4] %v401
    %s405 = smul.addr 4, 94
    %s406 = scalar_lea.vmem %s0, %s405
    %s407 = sshrl.u32 %s4, 1
    %s408 = sor.u32 %s4, %s407
    %s409 = sand.u32 %s408, 85
    %s410 = sshrl.u32 %s409, 1
    %s411 = sor.u32 %s409, %s410
    %s412 = sand.u32 51, %s411
    %s413 = sshrl.u32 %s412, 2
    %s414 = sor.u32 %s412, %s413
    %s415 = sand.u32 15, %s414
    %v416 = vld [vmem:[%s406] sm:%s415]
    %v417 = vunpack.c.l.bf16 %v416
    %v418 = vunpack.c.h.bf16 %v416
    %s419 = scalar_lea.vmem [#allocation1], 752
    %420 = vst [vmem:[%s419] sm:%s4] %v417
    %s421 = smul.addr 4, 93
    %s422 = scalar_lea.vmem %s0, %s421
    %s423 = sshrl.u32 %s4, 1
    %s424 = sor.u32 %s4, %s423
    %s425 = sand.u32 %s424, 85
    %s426 = sshrl.u32 %s425, 1
    %s427 = sor.u32 %s425, %s426
    %s428 = sand.u32 51, %s427
    %s429 = sshrl.u32 %s428, 2
    %s430 = sor.u32 %s428, %s429
    %s431 = sand.u32 15, %s430
    %v432 = vld [vmem:[%s422] sm:%s431]
    %v433 = vunpack.c.l.bf16 %v432
    %v434 = vunpack.c.h.bf16 %v432
    %s435 = scalar_lea.vmem [#allocation1], 744
    %436 = vst [vmem:[%s435] sm:%s4] %v433
    %s437 = smul.addr 4, 92
    %s438 = scalar_lea.vmem %s0, %s437
    %s439 = sshrl.u32 %s4, 1
    %s440 = sor.u32 %s4, %s439
    %s441 = sand.u32 %s440, 85
    %s442 = sshrl.u32 %s441, 1
    %s443 = sor.u32 %s441, %s442
    %s444 = sand.u32 51, %s443
    %s445 = sshrl.u32 %s444, 2
    %s446 = sor.u32 %s444, %s445
    %s447 = sand.u32 15, %s446
    %v448 = vld [vmem:[%s438] sm:%s447]
    %v449 = vunpack.c.l.bf16 %v448
    %v450 = vunpack.c.h.bf16 %v448
    %s451 = scalar_lea.vmem [#allocation1], 736
    %452 = vst [vmem:[%s451] sm:%s4] %v449
    %s453 = smul.addr 4, 91
    %s454 = scalar_lea.vmem %s0, %s453
    %s455 = sshrl.u32 %s4, 1
    %s456 = sor.u32 %s4, %s455
    %s457 = sand.u32 %s456, 85
    %s458 = sshrl.u32 %s457, 1
    %s459 = sor.u32 %s457, %s458
    %s460 = sand.u32 51, %s459
    %s461 = sshrl.u32 %s460, 2
    %s462 = sor.u32 %s460, %s461
    %s463 = sand.u32 15, %s462
    %v464 = vld [vmem:[%s454] sm:%s463]
    %v465 = vunpack.c.l.bf16 %v464
    %v466 = vunpack.c.h.bf16 %v464
    %s467 = scalar_lea.vmem [#allocation1], 728
    %468 = vst [vmem:[%s467] sm:%s4] %v465
    %s469 = smul.addr 4, 90
    %s470 = scalar_lea.vmem %s0, %s469
    %s471 = sshrl.u32 %s4, 1
    %s472 = sor.u32 %s4, %s471
    %s473 = sand.u32 %s472, 85
    %s474 = sshrl.u32 %s473, 1
    %s475 = sor.u32 %s473, %s474
    %s476 = sand.u32 51, %s475
    %s477 = sshrl.u32 %s476, 2
    %s478 = sor.u32 %s476, %s477
    %s479 = sand.u32 15, %s478
    %v480 = vld [vmem:[%s470] sm:%s479]
    %v481 = vunpack.c.l.bf16 %v480
    %v482 = vunpack.c.h.bf16 %v480
    %s483 = scalar_lea.vmem [#allocation1], 720
    %484 = vst [vmem:[%s483] sm:%s4] %v481
    %s485 = smul.addr 4, 89
    %s486 = scalar_lea.vmem %s0, %s485
    %s487 = sshrl.u32 %s4, 1
    %s488 = sor.u32 %s4, %s487
    %s489 = sand.u32 %s488, 85
    %s490 = sshrl.u32 %s489, 1
    %s491 = sor.u32 %s489, %s490
    %s492 = sand.u32 51, %s491
    %s493 = sshrl.u32 %s492, 2
    %s494 = sor.u32 %s492, %s493
    %s495 = sand.u32 15, %s494
    %v496 = vld [vmem:[%s486] sm:%s495]
    %v497 = vunpack.c.l.bf16 %v496
    %v498 = vunpack.c.h.bf16 %v496
    %s499 = scalar_lea.vmem [#allocation1], 712
    %500 = vst [vmem:[%s499] sm:%s4] %v497
    %s501 = smul.addr 4, 88
    %s502 = scalar_lea.vmem %s0, %s501
    %s503 = sshrl.u32 %s4, 1
    %s504 = sor.u32 %s4, %s503
    %s505 = sand.u32 %s504, 85
    %s506 = sshrl.u32 %s505, 1
    %s507 = sor.u32 %s505, %s506
    %s508 = sand.u32 51, %s507
    %s509 = sshrl.u32 %s508, 2
    %s510 = sor.u32 %s508, %s509
    %s511 = sand.u32 15, %s510
    %v512 = vld [vmem:[%s502] sm:%s511]
    %v513 = vunpack.c.l.bf16 %v512
    %v514 = vunpack.c.h.bf16 %v512
    %s515 = scalar_lea.vmem [#allocation1], 704
    %516 = vst [vmem:[%s515] sm:%s4] %v513
    %s517 = smul.addr 4, 87
    %s518 = scalar_lea.vmem %s0, %s517
    %s519 = sshrl.u32 %s4, 1
    %s520 = sor.u32 %s4, %s519
    %s521 = sand.u32 %s520, 85
    %s522 = sshrl.u32 %s521, 1
    %s523 = sor.u32 %s521, %s522
    %s524 = sand.u32 51, %s523
    %s525 = sshrl.u32 %s524, 2
    %s526 = sor.u32 %s524, %s525
    %s527 = sand.u32 15, %s526
    %v528 = vld [vmem:[%s518] sm:%s527]
    %v529 = vunpack.c.l.bf16 %v528
    %v530 = vunpack.c.h.bf16 %v528
    %s531 = scalar_lea.vmem [#allocation1], 696
    %532 = vst [vmem:[%s531] sm:%s4] %v529
    %s533 = smul.addr 4, 86
    %s534 = scalar_lea.vmem %s0, %s533
    %s535 = sshrl.u32 %s4, 1
    %s536 = sor.u32 %s4, %s535
    %s537 = sand.u32 %s536, 85
    %s538 = sshrl.u32 %s537, 1
    %s539 = sor.u32 %s537, %s538
    %s540 = sand.u32 51, %s539
    %s541 = sshrl.u32 %s540, 2
    %s542 = sor.u32 %s540, %s541
    %s543 = sand.u32 15, %s542
    %v544 = vld [vmem:[%s534] sm:%s543]
    %v545 = vunpack.c.l.bf16 %v544
    %v546 = vunpack.c.h.bf16 %v544
    %s547 = scalar_lea.vmem [#allocation1], 688
    %548 = vst [vmem:[%s547] sm:%s4] %v545
    %s549 = smul.addr 4, 85
    %s550 = scalar_lea.vmem %s0, %s549
    %s551 = sshrl.u32 %s4, 1
    %s552 = sor.u32 %s4, %s551
    %s553 = sand.u32 %s552, 85
    %s554 = sshrl.u32 %s553, 1
    %s555 = sor.u32 %s553, %s554
    %s556 = sand.u32 51, %s555
    %s557 = sshrl.u32 %s556, 2
    %s558 = sor.u32 %s556, %s557
    %s559 = sand.u32 15, %s558
    %v560 = vld [vmem:[%s550] sm:%s559]
    %v561 = vunpack.c.l.bf16 %v560
    %v562 = vunpack.c.h.bf16 %v560
    %s563 = scalar_lea.vmem [#allocation1], 680
    %564 = vst [vmem:[%s563] sm:%s4] %v561
    %s565 = smul.addr 4, 84
    %s566 = scalar_lea.vmem %s0, %s565
    %s567 = sshrl.u32 %s4, 1
    %s568 = sor.u32 %s4, %s567
    %s569 = sand.u32 %s568, 85
    %s570 = sshrl.u32 %s569, 1
    %s571 = sor.u32 %s569, %s570
    %s572 = sand.u32 51, %s571
    %s573 = sshrl.u32 %s572, 2
    %s574 = sor.u32 %s572, %s573
    %s575 = sand.u32 15, %s574
    %v576 = vld [vmem:[%s566] sm:%s575]
    %v577 = vunpack.c.l.bf16 %v576
    %v578 = vunpack.c.h.bf16 %v576
    %s579 = scalar_lea.vmem [#allocation1], 672
    %580 = vst [vmem:[%s579] sm:%s4] %v577
    %s581 = smul.addr 4, 83
    %s582 = scalar_lea.vmem %s0, %s581
    %s583 = sshrl.u32 %s4, 1
    %s584 = sor.u32 %s4, %s583
    %s585 = sand.u32 %s584, 85
    %s586 = sshrl.u32 %s585, 1
    %s587 = sor.u32 %s585, %s586
    %s588 = sand.u32 51, %s587
    %s589 = sshrl.u32 %s588, 2
    %s590 = sor.u32 %s588, %s589
    %s591 = sand.u32 15, %s590
    %v592 = vld [vmem:[%s582] sm:%s591]
    %v593 = vunpack.c.l.bf16 %v592
    %v594 = vunpack.c.h.bf16 %v592
    %s595 = scalar_lea.vmem [#allocation1], 664
    %596 = vst [vmem:[%s595] sm:%s4] %v593
    %s597 = smul.addr 4, 82
    %s598 = scalar_lea.vmem %s0, %s597
    %s599 = sshrl.u32 %s4, 1
    %s600 = sor.u32 %s4, %s599
    %s601 = sand.u32 %s600, 85
    %s602 = sshrl.u32 %s601, 1
    %s603 = sor.u32 %s601, %s602
    %s604 = sand.u32 51, %s603
    %s605 = sshrl.u32 %s604, 2
    %s606 = sor.u32 %s604, %s605
    %s607 = sand.u32 15, %s606
    %v608 = vld [vmem:[%s598] sm:%s607]
    %v609 = vunpack.c.l.bf16 %v608
    %v610 = vunpack.c.h.bf16 %v608
    %s611 = scalar_lea.vmem [#allocation1], 656
    %612 = vst [vmem:[%s611] sm:%s4] %v609
    %s613 = smul.addr 4, 81
    %s614 = scalar_lea.vmem %s0, %s613
    %s615 = sshrl.u32 %s4, 1
    %s616 = sor.u32 %s4, %s615
    %s617 = sand.u32 %s616, 85
    %s618 = sshrl.u32 %s617, 1
    %s619 = sor.u32 %s617, %s618
    %s620 = sand.u32 51, %s619
    %s621 = sshrl.u32 %s620, 2
    %s622 = sor.u32 %s620, %s621
    %s623 = sand.u32 15, %s622
    %v624 = vld [vmem:[%s614] sm:%s623]
    %v625 = vunpack.c.l.bf16 %v624
    %v626 = vunpack.c.h.bf16 %v624
    %s627 = scalar_lea.vmem [#allocation1], 648
    %628 = vst [vmem:[%s627] sm:%s4] %v625
    %s629 = smul.addr 4, 80
    %s630 = scalar_lea.vmem %s0, %s629
    %s631 = sshrl.u32 %s4, 1
    %s632 = sor.u32 %s4, %s631
    %s633 = sand.u32 %s632, 85
    %s634 = sshrl.u32 %s633, 1
    %s635 = sor.u32 %s633, %s634
    %s636 = sand.u32 51, %s635
    %s637 = sshrl.u32 %s636, 2
    %s638 = sor.u32 %s636, %s637
    %s639 = sand.u32 15, %s638
    %v640 = vld [vmem:[%s630] sm:%s639]
    %v641 = vunpack.c.l.bf16 %v640
    %v642 = vunpack.c.h.bf16 %v640
    %s643 = scalar_lea.vmem [#allocation1], 640
    %644 = vst [vmem:[%s643] sm:%s4] %v641
    %s645 = smul.addr 4, 79
    %s646 = scalar_lea.vmem %s0, %s645
    %s647 = sshrl.u32 %s4, 1
    %s648 = sor.u32 %s4, %s647
    %s649 = sand.u32 %s648, 85
    %s650 = sshrl.u32 %s649, 1
    %s651 = sor.u32 %s649, %s650
    %s652 = sand.u32 51, %s651
    %s653 = sshrl.u32 %s652, 2
    %s654 = sor.u32 %s652, %s653
    %s655 = sand.u32 15, %s654
    %v656 = vld [vmem:[%s646] sm:%s655]
    %v657 = vunpack.c.l.bf16 %v656
    %v658 = vunpack.c.h.bf16 %v656
    %s659 = scalar_lea.vmem [#allocation1], 632
    %660 = vst [vmem:[%s659] sm:%s4] %v657
    %s661 = smul.addr 4, 78
    %s662 = scalar_lea.vmem %s0, %s661
    %s663 = sshrl.u32 %s4, 1
    %s664 = sor.u32 %s4, %s663
    %s665 = sand.u32 %s664, 85
    %s666 = sshrl.u32 %s665, 1
    %s667 = sor.u32 %s665, %s666
    %s668 = sand.u32 51, %s667
    %s669 = sshrl.u32 %s668, 2
    %s670 = sor.u32 %s668, %s669
    %s671 = sand.u32 15, %s670
    %v672 = vld [vmem:[%s662] sm:%s671]
    %v673 = vunpack.c.l.bf16 %v672
    %v674 = vunpack.c.h.bf16 %v672
    %s675 = scalar_lea.vmem [#allocation1], 624
    %676 = vst [vmem:[%s675] sm:%s4] %v673
    %s677 = smul.addr 4, 77
    %s678 = scalar_lea.vmem %s0, %s677
    %s679 = sshrl.u32 %s4, 1
    %s680 = sor.u32 %s4, %s679
    %s681 = sand.u32 %s680, 85
    %s682 = sshrl.u32 %s681, 1
    %s683 = sor.u32 %s681, %s682
    %s684 = sand.u32 51, %s683
    %s685 = sshrl.u32 %s684, 2
    %s686 = sor.u32 %s684, %s685
    %s687 = sand.u32 15, %s686
    %v688 = vld [vmem:[%s678] sm:%s687]
    %v689 = vunpack.c.l.bf16 %v688
    %v690 = vunpack.c.h.bf16 %v688
    %s691 = scalar_lea.vmem [#allocation1], 616
    %692 = vst [vmem:[%s691] sm:%s4] %v689
    %s693 = smul.addr 4, 76
    %s694 = scalar_lea.vmem %s0, %s693
    %s695 = sshrl.u32 %s4, 1
    %s696 = sor.u32 %s4, %s695
    %s697 = sand.u32 %s696, 85
    %s698 = sshrl.u32 %s697, 1
    %s699 = sor.u32 %s697, %s698
    %s700 = sand.u32 51, %s699
    %s701 = sshrl.u32 %s700, 2
    %s702 = sor.u32 %s700, %s701
    %s703 = sand.u32 15, %s702
    %v704 = vld [vmem:[%s694] sm:%s703]
    %v705 = vunpack.c.l.bf16 %v704
    %v706 = vunpack.c.h.bf16 %v704
    %s707 = scalar_lea.vmem [#allocation1], 608
    %708 = vst [vmem:[%s707] sm:%s4] %v705
    %s709 = smul.addr 4, 75
    %s710 = scalar_lea.vmem %s0, %s709
    %s711 = sshrl.u32 %s4, 1
    %s712 = sor.u32 %s4, %s711
    %s713 = sand.u32 %s712, 85
    %s714 = sshrl.u32 %s713, 1
    %s715 = sor.u32 %s713, %s714
    %s716 = sand.u32 51, %s715
    %s717 = sshrl.u32 %s716, 2
    %s718 = sor.u32 %s716, %s717
    %s719 = sand.u32 15, %s718
    %v720 = vld [vmem:[%s710] sm:%s719]
    %v721 = vunpack.c.l.bf16 %v720
    %v722 = vunpack.c.h.bf16 %v720
    %s723 = scalar_lea.vmem [#allocation1], 600
    %724 = vst [vmem:[%s723] sm:%s4] %v721
    %s725 = smul.addr 4, 74
    %s726 = scalar_lea.vmem %s0, %s725
    %s727 = sshrl.u32 %s4, 1
    %s728 = sor.u32 %s4, %s727
    %s729 = sand.u32 %s728, 85
    %s730 = sshrl.u32 %s729, 1
    %s731 = sor.u32 %s729, %s730
    %s732 = sand.u32 51, %s731
    %s733 = sshrl.u32 %s732, 2
    %s734 = sor.u32 %s732, %s733
    %s735 = sand.u32 15, %s734
    %v736 = vld [vmem:[%s726] sm:%s735]
    %v737 = vunpack.c.l.bf16 %v736
    %v738 = vunpack.c.h.bf16 %v736
    %s739 = scalar_lea.vmem [#allocation1], 592
    %740 = vst [vmem:[%s739] sm:%s4] %v737
    %s741 = smul.addr 4, 73
    %s742 = scalar_lea.vmem %s0, %s741
    %s743 = sshrl.u32 %s4, 1
    %s744 = sor.u32 %s4, %s743
    %s745 = sand.u32 %s744, 85
    %s746 = sshrl.u32 %s745, 1
    %s747 = sor.u32 %s745, %s746
    %s748 = sand.u32 51, %s747
    %s749 = sshrl.u32 %s748, 2
    %s750 = sor.u32 %s748, %s749
    %s751 = sand.u32 15, %s750
    %v752 = vld [vmem:[%s742] sm:%s751]
    %v753 = vunpack.c.l.bf16 %v752
    %v754 = vunpack.c.h.bf16 %v752
    %s755 = scalar_lea.vmem [#allocation1], 584
    %756 = vst [vmem:[%s755] sm:%s4] %v753
    %s757 = smul.addr 4, 72
    %s758 = scalar_lea.vmem %s0, %s757
    %s759 = sshrl.u32 %s4, 1
    %s760 = sor.u32 %s4, %s759
    %s761 = sand.u32 %s760, 85
    %s762 = sshrl.u32 %s761, 1
    %s763 = sor.u32 %s761, %s762
    %s764 = sand.u32 51, %s763
    %s765 = sshrl.u32 %s764, 2
    %s766 = sor.u32 %s764, %s765
    %s767 = sand.u32 15, %s766
    %v768 = vld [vmem:[%s758] sm:%s767]
    %v769 = vunpack.c.l.bf16 %v768
    %v770 = vunpack.c.h.bf16 %v768
    %s771 = scalar_lea.vmem [#allocation1], 576
    %772 = vst [vmem:[%s771] sm:%s4] %v769
    %s773 = smul.addr 4, 71
    %s774 = scalar_lea.vmem %s0, %s773
    %s775 = sshrl.u32 %s4, 1
    %s776 = sor.u32 %s4, %s775
    %s777 = sand.u32 %s776, 85
    %s778 = sshrl.u32 %s777, 1
    %s779 = sor.u32 %s777, %s778
    %s780 = sand.u32 51, %s779
    %s781 = sshrl.u32 %s780, 2
    %s782 = sor.u32 %s780, %s781
    %s783 = sand.u32 15, %s782
    %v784 = vld [vmem:[%s774] sm:%s783]
    %v785 = vunpack.c.l.bf16 %v784
    %v786 = vunpack.c.h.bf16 %v784
    %s787 = scalar_lea.vmem [#allocation1], 568
    %788 = vst [vmem:[%s787] sm:%s4] %v785
    %s789 = smul.addr 4, 70
    %s790 = scalar_lea.vmem %s0, %s789
    %s791 = sshrl.u32 %s4, 1
    %s792 = sor.u32 %s4, %s791
    %s793 = sand.u32 %s792, 85
    %s794 = sshrl.u32 %s793, 1
    %s795 = sor.u32 %s793, %s794
    %s796 = sand.u32 51, %s795
    %s797 = sshrl.u32 %s796, 2
    %s798 = sor.u32 %s796, %s797
    %s799 = sand.u32 15, %s798
    %v800 = vld [vmem:[%s790] sm:%s799]
    %v801 = vunpack.c.l.bf16 %v800
    %v802 = vunpack.c.h.bf16 %v800
    %s803 = scalar_lea.vmem [#allocation1], 560
    %804 = vst [vmem:[%s803] sm:%s4] %v801
    %s805 = smul.addr 4, 69
    %s806 = scalar_lea.vmem %s0, %s805
    %s807 = sshrl.u32 %s4, 1
    %s808 = sor.u32 %s4, %s807
    %s809 = sand.u32 %s808, 85
    %s810 = sshrl.u32 %s809, 1
    %s811 = sor.u32 %s809, %s810
    %s812 = sand.u32 51, %s811
    %s813 = sshrl.u32 %s812, 2
    %s814 = sor.u32 %s812, %s813
    %s815 = sand.u32 15, %s814
    %v816 = vld [vmem:[%s806] sm:%s815]
    %v817 = vunpack.c.l.bf16 %v816
    %v818 = vunpack.c.h.bf16 %v816
    %s819 = scalar_lea.vmem [#allocation1], 552
    %820 = vst [vmem:[%s819] sm:%s4] %v817
    %s821 = smul.addr 4, 68
    %s822 = scalar_lea.vmem %s0, %s821
    %s823 = sshrl.u32 %s4, 1
    %s824 = sor.u32 %s4, %s823
    %s825 = sand.u32 %s824, 85
    %s826 = sshrl.u32 %s825, 1
    %s827 = sor.u32 %s825, %s826
    %s828 = sand.u32 51, %s827
    %s829 = sshrl.u32 %s828, 2
    %s830 = sor.u32 %s828, %s829
    %s831 = sand.u32 15, %s830
    %v832 = vld [vmem:[%s822] sm:%s831]
    %v833 = vunpack.c.l.bf16 %v832
    %v834 = vunpack.c.h.bf16 %v832
    %s835 = scalar_lea.vmem [#allocation1], 544
    %836 = vst [vmem:[%s835] sm:%s4] %v833
    %s837 = smul.addr 4, 67
    %s838 = scalar_lea.vmem %s0, %s837
    %s839 = sshrl.u32 %s4, 1
    %s840 = sor.u32 %s4, %s839
    %s841 = sand.u32 %s840, 85
    %s842 = sshrl.u32 %s841, 1
    %s843 = sor.u32 %s841, %s842
    %s844 = sand.u32 51, %s843
    %s845 = sshrl.u32 %s844, 2
    %s846 = sor.u32 %s844, %s845
    %s847 = sand.u32 15, %s846
    %v848 = vld [vmem:[%s838] sm:%s847]
    %v849 = vunpack.c.l.bf16 %v848
    %v850 = vunpack.c.h.bf16 %v848
    %s851 = scalar_lea.vmem [#allocation1], 536
    %852 = vst [vmem:[%s851] sm:%s4] %v849
    %s853 = smul.addr 4, 66
    %s854 = scalar_lea.vmem %s0, %s853
    %s855 = sshrl.u32 %s4, 1
    %s856 = sor.u32 %s4, %s855
    %s857 = sand.u32 %s856, 85
    %s858 = sshrl.u32 %s857, 1
    %s859 = sor.u32 %s857, %s858
    %s860 = sand.u32 51, %s859
    %s861 = sshrl.u32 %s860, 2
    %s862 = sor.u32 %s860, %s861
    %s863 = sand.u32 15, %s862
    %v864 = vld [vmem:[%s854] sm:%s863]
    %v865 = vunpack.c.l.bf16 %v864
    %v866 = vunpack.c.h.bf16 %v864
    %s867 = scalar_lea.vmem [#allocation1], 528
    %868 = vst [vmem:[%s867] sm:%s4] %v865
    %s869 = smul.addr 4, 65
    %s870 = scalar_lea.vmem %s0, %s869
    %s871 = sshrl.u32 %s4, 1
    %s872 = sor.u32 %s4, %s871
    %s873 = sand.u32 %s872, 85
    %s874 = sshrl.u32 %s873, 1
    %s875 = sor.u32 %s873, %s874
    %s876 = sand.u32 51, %s875
    %s877 = sshrl.u32 %s876, 2
    %s878 = sor.u32 %s876, %s877
    %s879 = sand.u32 15, %s878
    %v880 = vld [vmem:[%s870] sm:%s879]
    %v881 = vunpack.c.l.bf16 %v880
    %v882 = vunpack.c.h.bf16 %v880
    %s883 = scalar_lea.vmem [#allocation1], 520
    %884 = vst [vmem:[%s883] sm:%s4] %v881
    %s885 = smul.addr 4, 64
    %s886 = scalar_lea.vmem %s0, %s885
    %s887 = sshrl.u32 %s4, 1
    %s888 = sor.u32 %s4, %s887
    %s889 = sand.u32 %s888, 85
    %s890 = sshrl.u32 %s889, 1
    %s891 = sor.u32 %s889, %s890
    %s892 = sand.u32 51, %s891
    %s893 = sshrl.u32 %s892, 2
    %s894 = sor.u32 %s892, %s893
    %s895 = sand.u32 15, %s894
    %v896 = vld [vmem:[%s886] sm:%s895]
    %v897 = vunpack.c.l.bf16 %v896
    %v898 = vunpack.c.h.bf16 %v896
    %s899 = scalar_lea.vmem [#allocation1], 512
    %900 = vst [vmem:[%s899] sm:%s4] %v897
    %s901 = smul.addr 4, 63
    %s902 = scalar_lea.vmem %s0, %s901
    %s903 = sshrl.u32 %s4, 1
    %s904 = sor.u32 %s4, %s903
    %s905 = sand.u32 %s904, 85
    %s906 = sshrl.u32 %s905, 1
    %s907 = sor.u32 %s905, %s906
    %s908 = sand.u32 51, %s907
    %s909 = sshrl.u32 %s908, 2
    %s910 = sor.u32 %s908, %s909
    %s911 = sand.u32 15, %s910
    %v912 = vld [vmem:[%s902] sm:%s911]
    %v913 = vunpack.c.l.bf16 %v912
    %v914 = vunpack.c.h.bf16 %v912
    %s915 = scalar_lea.vmem [#allocation1], 504
    %916 = vst [vmem:[%s915] sm:%s4] %v913
    %s917 = smul.addr 4, 62
    %s918 = scalar_lea.vmem %s0, %s917
    %s919 = sshrl.u32 %s4, 1
    %s920 = sor.u32 %s4, %s919
    %s921 = sand.u32 %s920, 85
    %s922 = sshrl.u32 %s921, 1
    %s923 = sor.u32 %s921, %s922
    %s924 = sand.u32 51, %s923
    %s925 = sshrl.u32 %s924, 2
    %s926 = sor.u32 %s924, %s925
    %s927 = sand.u32 15, %s926
    %v928 = vld [vmem:[%s918] sm:%s927]
    %v929 = vunpack.c.l.bf16 %v928
    %v930 = vunpack.c.h.bf16 %v928
    %s931 = scalar_lea.vmem [#allocation1], 496
    %932 = vst [vmem:[%s931] sm:%s4] %v929
    %s933 = smul.addr 4, 61
    %s934 = scalar_lea.vmem %s0, %s933
    %s935 = sshrl.u32 %s4, 1
    %s936 = sor.u32 %s4, %s935
    %s937 = sand.u32 %s936, 85
    %s938 = sshrl.u32 %s937, 1
    %s939 = sor.u32 %s937, %s938
    %s940 = sand.u32 51, %s939
    %s941 = sshrl.u32 %s940, 2
    %s942 = sor.u32 %s940, %s941
    %s943 = sand.u32 15, %s942
    %v944 = vld [vmem:[%s934] sm:%s943]
    %v945 = vunpack.c.l.bf16 %v944
    %v946 = vunpack.c.h.bf16 %v944
    %s947 = scalar_lea.vmem [#allocation1], 488
    %948 = vst [vmem:[%s947] sm:%s4] %v945
    %s949 = smul.addr 4, 60
    %s950 = scalar_lea.vmem %s0, %s949
    %s951 = sshrl.u32 %s4, 1
    %s952 = sor.u32 %s4, %s951
    %s953 = sand.u32 %s952, 85
    %s954 = sshrl.u32 %s953, 1
    %s955 = sor.u32 %s953, %s954
    %s956 = sand.u32 51, %s955
    %s957 = sshrl.u32 %s956, 2
    %s958 = sor.u32 %s956, %s957
    %s959 = sand.u32 15, %s958
    %v960 = vld [vmem:[%s950] sm:%s959]
    %v961 = vunpack.c.l.bf16 %v960
    %v962 = vunpack.c.h.bf16 %v960
    %s963 = scalar_lea.vmem [#allocation1], 480
    %964 = vst [vmem:[%s963] sm:%s4] %v961
    %s965 = smul.addr 4, 59
    %s966 = scalar_lea.vmem %s0, %s965
    %s967 = sshrl.u32 %s4, 1
    %s968 = sor.u32 %s4, %s967
    %s969 = sand.u32 %s968, 85
    %s970 = sshrl.u32 %s969, 1
    %s971 = sor.u32 %s969, %s970
    %s972 = sand.u32 51, %s971
    %s973 = sshrl.u32 %s972, 2
    %s974 = sor.u32 %s972, %s973
    %s975 = sand.u32 15, %s974
    %v976 = vld [vmem:[%s966] sm:%s975]
    %v977 = vunpack.c.l.bf16 %v976
    %v978 = vunpack.c.h.bf16 %v976
    %s979 = scalar_lea.vmem [#allocation1], 472
    %980 = vst [vmem:[%s979] sm:%s4] %v977
    %s981 = smul.addr 4, 58
    %s982 = scalar_lea.vmem %s0, %s981
    %s983 = sshrl.u32 %s4, 1
    %s984 = sor.u32 %s4, %s983
    %s985 = sand.u32 %s984, 85
    %s986 = sshrl.u32 %s985, 1
    %s987 = sor.u32 %s985, %s986
    %s988 = sand.u32 51, %s987
    %s989 = sshrl.u32 %s988, 2
    %s990 = sor.u32 %s988, %s989
    %s991 = sand.u32 15, %s990
    %v992 = vld [vmem:[%s982] sm:%s991]
    %v993 = vunpack.c.l.bf16 %v992
    %v994 = vunpack.c.h.bf16 %v992
    %s995 = scalar_lea.vmem [#allocation1], 464
    %996 = vst [vmem:[%s995] sm:%s4] %v993
    %s997 = smul.addr 4, 57
    %s998 = scalar_lea.vmem %s0, %s997
    %s999 = sshrl.u32 %s4, 1
    %s1000 = sor.u32 %s4, %s999
    %s1001 = sand.u32 %s1000, 85
    %s1002 = sshrl.u32 %s1001, 1
    %s1003 = sor.u32 %s1001, %s1002
    %s1004 = sand.u32 51, %s1003
    %s1005 = sshrl.u32 %s1004, 2
    %s1006 = sor.u32 %s1004, %s1005
    %s1007 = sand.u32 15, %s1006
    %v1008 = vld [vmem:[%s998] sm:%s1007]
    %v1009 = vunpack.c.l.bf16 %v1008
    %v1010 = vunpack.c.h.bf16 %v1008
    %s1011 = scalar_lea.vmem [#allocation1], 456
    %1012 = vst [vmem:[%s1011] sm:%s4] %v1009
    %s1013 = smul.addr 4, 56
    %s1014 = scalar_lea.vmem %s0, %s1013
    %s1015 = sshrl.u32 %s4, 1
    %s1016 = sor.u32 %s4, %s1015
    %s1017 = sand.u32 %s1016, 85
    %s1018 = sshrl.u32 %s1017, 1
    %s1019 = sor.u32 %s1017, %s1018
    %s1020 = sand.u32 51, %s1019
    %s1021 = sshrl.u32 %s1020, 2
    %s1022 = sor.u32 %s1020, %s1021
    %s1023 = sand.u32 15, %s1022
    %v1024 = vld [vmem:[%s1014] sm:%s1023]
    %v1025 = vunpack.c.l.bf16 %v1024
    %v1026 = vunpack.c.h.bf16 %v1024
    %s1027 = scalar_lea.vmem [#allocation1], 448
    %1028 = vst [vmem:[%s1027] sm:%s4] %v1025
    %s1029 = smul.addr 4, 55
    %s1030 = scalar_lea.vmem %s0, %s1029
    %s1031 = sshrl.u32 %s4, 1
    %s1032 = sor.u32 %s4, %s1031
    %s1033 = sand.u32 %s1032, 85
    %s1034 = sshrl.u32 %s1033, 1
    %s1035 = sor.u32 %s1033, %s1034
    %s1036 = sand.u32 51, %s1035
    %s1037 = sshrl.u32 %s1036, 2
    %s1038 = sor.u32 %s1036, %s1037
    %s1039 = sand.u32 15, %s1038
    %v1040 = vld [vmem:[%s1030] sm:%s1039]
    %v1041 = vunpack.c.l.bf16 %v1040
    %v1042 = vunpack.c.h.bf16 %v1040
    %s1043 = scalar_lea.vmem [#allocation1], 440
    %1044 = vst [vmem:[%s1043] sm:%s4] %v1041
    %s1045 = smul.addr 4, 54
    %s1046 = scalar_lea.vmem %s0, %s1045
    %s1047 = sshrl.u32 %s4, 1
    %s1048 = sor.u32 %s4, %s1047
    %s1049 = sand.u32 %s1048, 85
    %s1050 = sshrl.u32 %s1049, 1
    %s1051 = sor.u32 %s1049, %s1050
    %s1052 = sand.u32 51, %s1051
    %s1053 = sshrl.u32 %s1052, 2
    %s1054 = sor.u32 %s1052, %s1053
    %s1055 = sand.u32 15, %s1054
    %v1056 = vld [vmem:[%s1046] sm:%s1055]
    %v1057 = vunpack.c.l.bf16 %v1056
    %v1058 = vunpack.c.h.bf16 %v1056
    %s1059 = scalar_lea.vmem [#allocation1], 432
    %1060 = vst [vmem:[%s1059] sm:%s4] %v1057
    %s1061 = smul.addr 4, 53
    %s1062 = scalar_lea.vmem %s0, %s1061
    %s1063 = sshrl.u32 %s4, 1
    %s1064 = sor.u32 %s4, %s1063
    %s1065 = sand.u32 %s1064, 85
    %s1066 = sshrl.u32 %s1065, 1
    %s1067 = sor.u32 %s1065, %s1066
    %s1068 = sand.u32 51, %s1067
    %s1069 = sshrl.u32 %s1068, 2
    %s1070 = sor.u32 %s1068, %s1069
    %s1071 = sand.u32 15, %s1070
    %v1072 = vld [vmem:[%s1062] sm:%s1071]
    %v1073 = vunpack.c.l.bf16 %v1072
    %v1074 = vunpack.c.h.bf16 %v1072
    %s1075 = scalar_lea.vmem [#allocation1], 424
    %1076 = vst [vmem:[%s1075] sm:%s4] %v1073
    %s1077 = smul.addr 4, 52
    %s1078 = scalar_lea.vmem %s0, %s1077
    %s1079 = sshrl.u32 %s4, 1
    %s1080 = sor.u32 %s4, %s1079
    %s1081 = sand.u32 %s1080, 85
    %s1082 = sshrl.u32 %s1081, 1
    %s1083 = sor.u32 %s1081, %s1082
    %s1084 = sand.u32 51, %s1083
    %s1085 = sshrl.u32 %s1084, 2
    %s1086 = sor.u32 %s1084, %s1085
    %s1087 = sand.u32 15, %s1086
    %v1088 = vld [vmem:[%s1078] sm:%s1087]
    %v1089 = vunpack.c.l.bf16 %v1088
    %v1090 = vunpack.c.h.bf16 %v1088
    %s1091 = scalar_lea.vmem [#allocation1], 416
    %1092 = vst [vmem:[%s1091] sm:%s4] %v1089
    %s1093 = smul.addr 4, 51
    %s1094 = scalar_lea.vmem %s0, %s1093
    %s1095 = sshrl.u32 %s4, 1
    %s1096 = sor.u32 %s4, %s1095
    %s1097 = sand.u32 %s1096, 85
    %s1098 = sshrl.u32 %s1097, 1
    %s1099 = sor.u32 %s1097, %s1098
    %s1100 = sand.u32 51, %s1099
    %s1101 = sshrl.u32 %s1100, 2
    %s1102 = sor.u32 %s1100, %s1101
    %s1103 = sand.u32 15, %s1102
    %v1104 = vld [vmem:[%s1094] sm:%s1103]
    %v1105 = vunpack.c.l.bf16 %v1104
    %v1106 = vunpack.c.h.bf16 %v1104
    %s1107 = scalar_lea.vmem [#allocation1], 408
    %1108 = vst [vmem:[%s1107] sm:%s4] %v1105
    %s1109 = smul.addr 4, 50
    %s1110 = scalar_lea.vmem %s0, %s1109
    %s1111 = sshrl.u32 %s4, 1
    %s1112 = sor.u32 %s4, %s1111
    %s1113 = sand.u32 %s1112, 85
    %s1114 = sshrl.u32 %s1113, 1
    %s1115 = sor.u32 %s1113, %s1114
    %s1116 = sand.u32 51, %s1115
    %s1117 = sshrl.u32 %s1116, 2
    %s1118 = sor.u32 %s1116, %s1117
    %s1119 = sand.u32 15, %s1118
    %v1120 = vld [vmem:[%s1110] sm:%s1119]
    %v1121 = vunpack.c.l.bf16 %v1120
    %v1122 = vunpack.c.h.bf16 %v1120
    %s1123 = scalar_lea.vmem [#allocation1], 400
    %1124 = vst [vmem:[%s1123] sm:%s4] %v1121
    %s1125 = smul.addr 4, 49
    %s1126 = scalar_lea.vmem %s0, %s1125
    %s1127 = sshrl.u32 %s4, 1
    %s1128 = sor.u32 %s4, %s1127
    %s1129 = sand.u32 %s1128, 85
    %s1130 = sshrl.u32 %s1129, 1
    %s1131 = sor.u32 %s1129, %s1130
    %s1132 = sand.u32 51, %s1131
    %s1133 = sshrl.u32 %s1132, 2
    %s1134 = sor.u32 %s1132, %s1133
    %s1135 = sand.u32 15, %s1134
    %v1136 = vld [vmem:[%s1126] sm:%s1135]
    %v1137 = vunpack.c.l.bf16 %v1136
    %v1138 = vunpack.c.h.bf16 %v1136
    %s1139 = scalar_lea.vmem [#allocation1], 392
    %1140 = vst [vmem:[%s1139] sm:%s4] %v1137
    %s1141 = smul.addr 4, 48
    %s1142 = scalar_lea.vmem %s0, %s1141
    %s1143 = sshrl.u32 %s4, 1
    %s1144 = sor.u32 %s4, %s1143
    %s1145 = sand.u32 %s1144, 85
    %s1146 = sshrl.u32 %s1145, 1
    %s1147 = sor.u32 %s1145, %s1146
    %s1148 = sand.u32 51, %s1147
    %s1149 = sshrl.u32 %s1148, 2
    %s1150 = sor.u32 %s1148, %s1149
    %s1151 = sand.u32 15, %s1150
    %v1152 = vld [vmem:[%s1142] sm:%s1151]
    %v1153 = vunpack.c.l.bf16 %v1152
    %v1154 = vunpack.c.h.bf16 %v1152
    %s1155 = scalar_lea.vmem [#allocation1], 384
    %1156 = vst [vmem:[%s1155] sm:%s4] %v1153
    %s1157 = smul.addr 4, 47
    %s1158 = scalar_lea.vmem %s0, %s1157
    %s1159 = sshrl.u32 %s4, 1
    %s1160 = sor.u32 %s4, %s1159
    %s1161 = sand.u32 %s1160, 85
    %s1162 = sshrl.u32 %s1161, 1
    %s1163 = sor.u32 %s1161, %s1162
    %s1164 = sand.u32 51, %s1163
    %s1165 = sshrl.u32 %s1164, 2
    %s1166 = sor.u32 %s1164, %s1165
    %s1167 = sand.u32 15, %s1166
    %v1168 = vld [vmem:[%s1158] sm:%s1167]
    %v1169 = vunpack.c.l.bf16 %v1168
    %v1170 = vunpack.c.h.bf16 %v1168
    %s1171 = scalar_lea.vmem [#allocation1], 376
    %1172 = vst [vmem:[%s1171] sm:%s4] %v1169
    %s1173 = smul.addr 4, 46
    %s1174 = scalar_lea.vmem %s0, %s1173
    %s1175 = sshrl.u32 %s4, 1
    %s1176 = sor.u32 %s4, %s1175
    %s1177 = sand.u32 %s1176, 85
    %s1178 = sshrl.u32 %s1177, 1
    %s1179 = sor.u32 %s1177, %s1178
    %s1180 = sand.u32 51, %s1179
    %s1181 = sshrl.u32 %s1180, 2
    %s1182 = sor.u32 %s1180, %s1181
    %s1183 = sand.u32 15, %s1182
    %v1184 = vld [vmem:[%s1174] sm:%s1183]
    %v1185 = vunpack.c.l.bf16 %v1184
    %v1186 = vunpack.c.h.bf16 %v1184
    %s1187 = scalar_lea.vmem [#allocation1], 368
    %1188 = vst [vmem:[%s1187] sm:%s4] %v1185
    %s1189 = smul.addr 4, 45
    %s1190 = scalar_lea.vmem %s0, %s1189
    %s1191 = sshrl.u32 %s4, 1
    %s1192 = sor.u32 %s4, %s1191
    %s1193 = sand.u32 %s1192, 85
    %s1194 = sshrl.u32 %s1193, 1
    %s1195 = sor.u32 %s1193, %s1194
    %s1196 = sand.u32 51, %s1195
    %s1197 = sshrl.u32 %s1196, 2
    %s1198 = sor.u32 %s1196, %s1197
    %s1199 = sand.u32 15, %s1198
    %v1200 = vld [vmem:[%s1190] sm:%s1199]
    %v1201 = vunpack.c.l.bf16 %v1200
    %v1202 = vunpack.c.h.bf16 %v1200
    %s1203 = scalar_lea.vmem [#allocation1], 360
    %1204 = vst [vmem:[%s1203] sm:%s4] %v1201
    %s1205 = smul.addr 4, 44
    %s1206 = scalar_lea.vmem %s0, %s1205
    %s1207 = sshrl.u32 %s4, 1
    %s1208 = sor.u32 %s4, %s1207
    %s1209 = sand.u32 %s1208, 85
    %s1210 = sshrl.u32 %s1209, 1
    %s1211 = sor.u32 %s1209, %s1210
    %s1212 = sand.u32 51, %s1211
    %s1213 = sshrl.u32 %s1212, 2
    %s1214 = sor.u32 %s1212, %s1213
    %s1215 = sand.u32 15, %s1214
    %v1216 = vld [vmem:[%s1206] sm:%s1215]
    %v1217 = vunpack.c.l.bf16 %v1216
    %v1218 = vunpack.c.h.bf16 %v1216
    %s1219 = scalar_lea.vmem [#allocation1], 352
    %1220 = vst [vmem:[%s1219] sm:%s4] %v1217
    %s1221 = smul.addr 4, 43
    %s1222 = scalar_lea.vmem %s0, %s1221
    %s1223 = sshrl.u32 %s4, 1
    %s1224 = sor.u32 %s4, %s1223
    %s1225 = sand.u32 %s1224, 85
    %s1226 = sshrl.u32 %s1225, 1
    %s1227 = sor.u32 %s1225, %s1226
    %s1228 = sand.u32 51, %s1227
    %s1229 = sshrl.u32 %s1228, 2
    %s1230 = sor.u32 %s1228, %s1229
    %s1231 = sand.u32 15, %s1230
    %v1232 = vld [vmem:[%s1222] sm:%s1231]
    %v1233 = vunpack.c.l.bf16 %v1232
    %v1234 = vunpack.c.h.bf16 %v1232
    %s1235 = scalar_lea.vmem [#allocation1], 344
    %1236 = vst [vmem:[%s1235] sm:%s4] %v1233
    %s1237 = smul.addr 4, 42
    %s1238 = scalar_lea.vmem %s0, %s1237
    %s1239 = sshrl.u32 %s4, 1
    %s1240 = sor.u32 %s4, %s1239
    %s1241 = sand.u32 %s1240, 85
    %s1242 = sshrl.u32 %s1241, 1
    %s1243 = sor.u32 %s1241, %s1242
    %s1244 = sand.u32 51, %s1243
    %s1245 = sshrl.u32 %s1244, 2
    %s1246 = sor.u32 %s1244, %s1245
    %s1247 = sand.u32 15, %s1246
    %v1248 = vld [vmem:[%s1238] sm:%s1247]
    %v1249 = vunpack.c.l.bf16 %v1248
    %v1250 = vunpack.c.h.bf16 %v1248
    %s1251 = scalar_lea.vmem [#allocation1], 336
    %1252 = vst [vmem:[%s1251] sm:%s4] %v1249
    %s1253 = smul.addr 4, 41
    %s1254 = scalar_lea.vmem %s0, %s1253
    %s1255 = sshrl.u32 %s4, 1
    %s1256 = sor.u32 %s4, %s1255
    %s1257 = sand.u32 %s1256, 85
    %s1258 = sshrl.u32 %s1257, 1
    %s1259 = sor.u32 %s1257, %s1258
    %s1260 = sand.u32 51, %s1259
    %s1261 = sshrl.u32 %s1260, 2
    %s1262 = sor.u32 %s1260, %s1261
    %s1263 = sand.u32 15, %s1262
    %v1264 = vld [vmem:[%s1254] sm:%s1263]
    %v1265 = vunpack.c.l.bf16 %v1264
    %v1266 = vunpack.c.h.bf16 %v1264
    %s1267 = scalar_lea.vmem [#allocation1], 328
    %1268 = vst [vmem:[%s1267] sm:%s4] %v1265
    %s1269 = smul.addr 4, 40
    %s1270 = scalar_lea.vmem %s0, %s1269
    %s1271 = sshrl.u32 %s4, 1
    %s1272 = sor.u32 %s4, %s1271
    %s1273 = sand.u32 %s1272, 85
    %s1274 = sshrl.u32 %s1273, 1
    %s1275 = sor.u32 %s1273, %s1274
    %s1276 = sand.u32 51, %s1275
    %s1277 = sshrl.u32 %s1276, 2
    %s1278 = sor.u32 %s1276, %s1277
    %s1279 = sand.u32 15, %s1278
    %v1280 = vld [vmem:[%s1270] sm:%s1279]
    %v1281 = vunpack.c.l.bf16 %v1280
    %v1282 = vunpack.c.h.bf16 %v1280
    %s1283 = scalar_lea.vmem [#allocation1], 320
    %1284 = vst [vmem:[%s1283] sm:%s4] %v1281
    %s1285 = smul.addr 4, 39
    %s1286 = scalar_lea.vmem %s0, %s1285
    %s1287 = sshrl.u32 %s4, 1
    %s1288 = sor.u32 %s4, %s1287
    %s1289 = sand.u32 %s1288, 85
    %s1290 = sshrl.u32 %s1289, 1
    %s1291 = sor.u32 %s1289, %s1290
    %s1292 = sand.u32 51, %s1291
    %s1293 = sshrl.u32 %s1292, 2
    %s1294 = sor.u32 %s1292, %s1293
    %s1295 = sand.u32 15, %s1294
    %v1296 = vld [vmem:[%s1286] sm:%s1295]
    %v1297 = vunpack.c.l.bf16 %v1296
    %v1298 = vunpack.c.h.bf16 %v1296
    %s1299 = scalar_lea.vmem [#allocation1], 312
    %1300 = vst [vmem:[%s1299] sm:%s4] %v1297
    %s1301 = smul.addr 4, 38
    %s1302 = scalar_lea.vmem %s0, %s1301
    %s1303 = sshrl.u32 %s4, 1
    %s1304 = sor.u32 %s4, %s1303
    %s1305 = sand.u32 %s1304, 85
    %s1306 = sshrl.u32 %s1305, 1
    %s1307 = sor.u32 %s1305, %s1306
    %s1308 = sand.u32 51, %s1307
    %s1309 = sshrl.u32 %s1308, 2
    %s1310 = sor.u32 %s1308, %s1309
    %s1311 = sand.u32 15, %s1310
    %v1312 = vld [vmem:[%s1302] sm:%s1311]
    %v1313 = vunpack.c.l.bf16 %v1312
    %v1314 = vunpack.c.h.bf16 %v1312
    %s1315 = scalar_lea.vmem [#allocation1], 304
    %1316 = vst [vmem:[%s1315] sm:%s4] %v1313
    %s1317 = smul.addr 4, 37
    %s1318 = scalar_lea.vmem %s0, %s1317
    %s1319 = sshrl.u32 %s4, 1
    %s1320 = sor.u32 %s4, %s1319
    %s1321 = sand.u32 %s1320, 85
    %s1322 = sshrl.u32 %s1321, 1
    %s1323 = sor.u32 %s1321, %s1322
    %s1324 = sand.u32 51, %s1323
    %s1325 = sshrl.u32 %s1324, 2
    %s1326 = sor.u32 %s1324, %s1325
    %s1327 = sand.u32 15, %s1326
    %v1328 = vld [vmem:[%s1318] sm:%s1327]
    %v1329 = vunpack.c.l.bf16 %v1328
    %v1330 = vunpack.c.h.bf16 %v1328
    %s1331 = scalar_lea.vmem [#allocation1], 296
    %1332 = vst [vmem:[%s1331] sm:%s4] %v1329
    %s1333 = smul.addr 4, 36
    %s1334 = scalar_lea.vmem %s0, %s1333
    %s1335 = sshrl.u32 %s4, 1
    %s1336 = sor.u32 %s4, %s1335
    %s1337 = sand.u32 %s1336, 85
    %s1338 = sshrl.u32 %s1337, 1
    %s1339 = sor.u32 %s1337, %s1338
    %s1340 = sand.u32 51, %s1339
    %s1341 = sshrl.u32 %s1340, 2
    %s1342 = sor.u32 %s1340, %s1341
    %s1343 = sand.u32 15, %s1342
    %v1344 = vld [vmem:[%s1334] sm:%s1343]
    %v1345 = vunpack.c.l.bf16 %v1344
    %v1346 = vunpack.c.h.bf16 %v1344
    %s1347 = scalar_lea.vmem [#allocation1], 288
    %1348 = vst [vmem:[%s1347] sm:%s4] %v1345
    %s1349 = smul.addr 4, 35
    %s1350 = scalar_lea.vmem %s0, %s1349
    %s1351 = sshrl.u32 %s4, 1
    %s1352 = sor.u32 %s4, %s1351
    %s1353 = sand.u32 %s1352, 85
    %s1354 = sshrl.u32 %s1353, 1
    %s1355 = sor.u32 %s1353, %s1354
    %s1356 = sand.u32 51, %s1355
    %s1357 = sshrl.u32 %s1356, 2
    %s1358 = sor.u32 %s1356, %s1357
    %s1359 = sand.u32 15, %s1358
    %v1360 = vld [vmem:[%s1350] sm:%s1359]
    %v1361 = vunpack.c.l.bf16 %v1360
    %v1362 = vunpack.c.h.bf16 %v1360
    %s1363 = scalar_lea.vmem [#allocation1], 280
    %1364 = vst [vmem:[%s1363] sm:%s4] %v1361
    %s1365 = smul.addr 4, 34
    %s1366 = scalar_lea.vmem %s0, %s1365
    %s1367 = sshrl.u32 %s4, 1
    %s1368 = sor.u32 %s4, %s1367
    %s1369 = sand.u32 %s1368, 85
    %s1370 = sshrl.u32 %s1369, 1
    %s1371 = sor.u32 %s1369, %s1370
    %s1372 = sand.u32 51, %s1371
    %s1373 = sshrl.u32 %s1372, 2
    %s1374 = sor.u32 %s1372, %s1373
    %s1375 = sand.u32 15, %s1374
    %v1376 = vld [vmem:[%s1366] sm:%s1375]
    %v1377 = vunpack.c.l.bf16 %v1376
    %v1378 = vunpack.c.h.bf16 %v1376
    %s1379 = scalar_lea.vmem [#allocation1], 272
    %1380 = vst [vmem:[%s1379] sm:%s4] %v1377
    %s1381 = smul.addr 4, 33
    %s1382 = scalar_lea.vmem %s0, %s1381
    %s1383 = sshrl.u32 %s4, 1
    %s1384 = sor.u32 %s4, %s1383
    %s1385 = sand.u32 %s1384, 85
    %s1386 = sshrl.u32 %s1385, 1
    %s1387 = sor.u32 %s1385, %s1386
    %s1388 = sand.u32 51, %s1387
    %s1389 = sshrl.u32 %s1388, 2
    %s1390 = sor.u32 %s1388, %s1389
    %s1391 = sand.u32 15, %s1390
    %v1392 = vld [vmem:[%s1382] sm:%s1391]
    %v1393 = vunpack.c.l.bf16 %v1392
    %v1394 = vunpack.c.h.bf16 %v1392
    %s1395 = scalar_lea.vmem [#allocation1], 264
    %1396 = vst [vmem:[%s1395] sm:%s4] %v1393
    %s1397 = smul.addr 4, 32
    %s1398 = scalar_lea.vmem %s0, %s1397
    %s1399 = sshrl.u32 %s4, 1
    %s1400 = sor.u32 %s4, %s1399
    %s1401 = sand.u32 %s1400, 85
    %s1402 = sshrl.u32 %s1401, 1
    %s1403 = sor.u32 %s1401, %s1402
    %s1404 = sand.u32 51, %s1403
    %s1405 = sshrl.u32 %s1404, 2
    %s1406 = sor.u32 %s1404, %s1405
    %s1407 = sand.u32 15, %s1406
    %v1408 = vld [vmem:[%s1398] sm:%s1407]
    %v1409 = vunpack.c.l.bf16 %v1408
    %v1410 = vunpack.c.h.bf16 %v1408
    %s1411 = scalar_lea.vmem [#allocation1], 256
    %1412 = vst [vmem:[%s1411] sm:%s4] %v1409
    %s1413 = smul.addr 4, 31
    %s1414 = scalar_lea.vmem %s0, %s1413
    %s1415 = sshrl.u32 %s4, 1
    %s1416 = sor.u32 %s4, %s1415
    %s1417 = sand.u32 %s1416, 85
    %s1418 = sshrl.u32 %s1417, 1
    %s1419 = sor.u32 %s1417, %s1418
    %s1420 = sand.u32 51, %s1419
    %s1421 = sshrl.u32 %s1420, 2
    %s1422 = sor.u32 %s1420, %s1421
    %s1423 = sand.u32 15, %s1422
    %v1424 = vld [vmem:[%s1414] sm:%s1423]
    %v1425 = vunpack.c.l.bf16 %v1424
    %v1426 = vunpack.c.h.bf16 %v1424
    %s1427 = scalar_lea.vmem [#allocation1], 248
    %1428 = vst [vmem:[%s1427] sm:%s4] %v1425
    %s1429 = smul.addr 4, 30
    %s1430 = scalar_lea.vmem %s0, %s1429
    %s1431 = sshrl.u32 %s4, 1
    %s1432 = sor.u32 %s4, %s1431
    %s1433 = sand.u32 %s1432, 85
    %s1434 = sshrl.u32 %s1433, 1
    %s1435 = sor.u32 %s1433, %s1434
    %s1436 = sand.u32 51, %s1435
    %s1437 = sshrl.u32 %s1436, 2
    %s1438 = sor.u32 %s1436, %s1437
    %s1439 = sand.u32 15, %s1438
    %v1440 = vld [vmem:[%s1430] sm:%s1439]
    %v1441 = vunpack.c.l.bf16 %v1440
    %v1442 = vunpack.c.h.bf16 %v1440
    %s1443 = scalar_lea.vmem [#allocation1], 240
    %1444 = vst [vmem:[%s1443] sm:%s4] %v1441
    %s1445 = smul.addr 4, 29
    %s1446 = scalar_lea.vmem %s0, %s1445
    %s1447 = sshrl.u32 %s4, 1
    %s1448 = sor.u32 %s4, %s1447
    %s1449 = sand.u32 %s1448, 85
    %s1450 = sshrl.u32 %s1449, 1
    %s1451 = sor.u32 %s1449, %s1450
    %s1452 = sand.u32 51, %s1451
    %s1453 = sshrl.u32 %s1452, 2
    %s1454 = sor.u32 %s1452, %s1453
    %s1455 = sand.u32 15, %s1454
    %v1456 = vld [vmem:[%s1446] sm:%s1455]
    %v1457 = vunpack.c.l.bf16 %v1456
    %v1458 = vunpack.c.h.bf16 %v1456
    %s1459 = scalar_lea.vmem [#allocation1], 232
    %1460 = vst [vmem:[%s1459] sm:%s4] %v1457
    %s1461 = smul.addr 4, 28
    %s1462 = scalar_lea.vmem %s0, %s1461
    %s1463 = sshrl.u32 %s4, 1
    %s1464 = sor.u32 %s4, %s1463
    %s1465 = sand.u32 %s1464, 85
    %s1466 = sshrl.u32 %s1465, 1
    %s1467 = sor.u32 %s1465, %s1466
    %s1468 = sand.u32 51, %s1467
    %s1469 = sshrl.u32 %s1468, 2
    %s1470 = sor.u32 %s1468, %s1469
    %s1471 = sand.u32 15, %s1470
    %v1472 = vld [vmem:[%s1462] sm:%s1471]
    %v1473 = vunpack.c.l.bf16 %v1472
    %v1474 = vunpack.c.h.bf16 %v1472
    %s1475 = scalar_lea.vmem [#allocation1], 224
    %1476 = vst [vmem:[%s1475] sm:%s4] %v1473
    %s1477 = smul.addr 4, 27
    %s1478 = scalar_lea.vmem %s0, %s1477
    %s1479 = sshrl.u32 %s4, 1
    %s1480 = sor.u32 %s4, %s1479
    %s1481 = sand.u32 %s1480, 85
    %s1482 = sshrl.u32 %s1481, 1
    %s1483 = sor.u32 %s1481, %s1482
    %s1484 = sand.u32 51, %s1483
    %s1485 = sshrl.u32 %s1484, 2
    %s1486 = sor.u32 %s1484, %s1485
    %s1487 = sand.u32 15, %s1486
    %v1488 = vld [vmem:[%s1478] sm:%s1487]
    %v1489 = vunpack.c.l.bf16 %v1488
    %v1490 = vunpack.c.h.bf16 %v1488
    %s1491 = scalar_lea.vmem [#allocation1], 216
    %1492 = vst [vmem:[%s1491] sm:%s4] %v1489
    %s1493 = smul.addr 4, 26
    %s1494 = scalar_lea.vmem %s0, %s1493
    %s1495 = sshrl.u32 %s4, 1
    %s1496 = sor.u32 %s4, %s1495
    %s1497 = sand.u32 %s1496, 85
    %s1498 = sshrl.u32 %s1497, 1
    %s1499 = sor.u32 %s1497, %s1498
    %s1500 = sand.u32 51, %s1499
    %s1501 = sshrl.u32 %s1500, 2
    %s1502 = sor.u32 %s1500, %s1501
    %s1503 = sand.u32 15, %s1502
    %v1504 = vld [vmem:[%s1494] sm:%s1503]
    %v1505 = vunpack.c.l.bf16 %v1504
    %v1506 = vunpack.c.h.bf16 %v1504
    %s1507 = scalar_lea.vmem [#allocation1], 208
    %1508 = vst [vmem:[%s1507] sm:%s4] %v1505
    %s1509 = smul.addr 4, 25
    %s1510 = scalar_lea.vmem %s0, %s1509
    %s1511 = sshrl.u32 %s4, 1
    %s1512 = sor.u32 %s4, %s1511
    %s1513 = sand.u32 %s1512, 85
    %s1514 = sshrl.u32 %s1513, 1
    %s1515 = sor.u32 %s1513, %s1514
    %s1516 = sand.u32 51, %s1515
    %s1517 = sshrl.u32 %s1516, 2
    %s1518 = sor.u32 %s1516, %s1517
    %s1519 = sand.u32 15, %s1518
    %v1520 = vld [vmem:[%s1510] sm:%s1519]
    %v1521 = vunpack.c.l.bf16 %v1520
    %v1522 = vunpack.c.h.bf16 %v1520
    %s1523 = scalar_lea.vmem [#allocation1], 200
    %1524 = vst [vmem:[%s1523] sm:%s4] %v1521
    %s1525 = smul.addr 4, 24
    %s1526 = scalar_lea.vmem %s0, %s1525
    %s1527 = sshrl.u32 %s4, 1
    %s1528 = sor.u32 %s4, %s1527
    %s1529 = sand.u32 %s1528, 85
    %s1530 = sshrl.u32 %s1529, 1
    %s1531 = sor.u32 %s1529, %s1530
    %s1532 = sand.u32 51, %s1531
    %s1533 = sshrl.u32 %s1532, 2
    %s1534 = sor.u32 %s1532, %s1533
    %s1535 = sand.u32 15, %s1534
    %v1536 = vld [vmem:[%s1526] sm:%s1535]
    %v1537 = vunpack.c.l.bf16 %v1536
    %v1538 = vunpack.c.h.bf16 %v1536
    %s1539 = scalar_lea.vmem [#allocation1], 192
    %1540 = vst [vmem:[%s1539] sm:%s4] %v1537
    %s1541 = smul.addr 4, 23
    %s1542 = scalar_lea.vmem %s0, %s1541
    %s1543 = sshrl.u32 %s4, 1
    %s1544 = sor.u32 %s4, %s1543
    %s1545 = sand.u32 %s1544, 85
    %s1546 = sshrl.u32 %s1545, 1
    %s1547 = sor.u32 %s1545, %s1546
    %s1548 = sand.u32 51, %s1547
    %s1549 = sshrl.u32 %s1548, 2
    %s1550 = sor.u32 %s1548, %s1549
    %s1551 = sand.u32 15, %s1550
    %v1552 = vld [vmem:[%s1542] sm:%s1551]
    %v1553 = vunpack.c.l.bf16 %v1552
    %v1554 = vunpack.c.h.bf16 %v1552
    %s1555 = scalar_lea.vmem [#allocation1], 184
    %1556 = vst [vmem:[%s1555] sm:%s4] %v1553
    %s1557 = smul.addr 4, 22
    %s1558 = scalar_lea.vmem %s0, %s1557
    %s1559 = sshrl.u32 %s4, 1
    %s1560 = sor.u32 %s4, %s1559
    %s1561 = sand.u32 %s1560, 85
    %s1562 = sshrl.u32 %s1561, 1
    %s1563 = sor.u32 %s1561, %s1562
    %s1564 = sand.u32 51, %s1563
    %s1565 = sshrl.u32 %s1564, 2
    %s1566 = sor.u32 %s1564, %s1565
    %s1567 = sand.u32 15, %s1566
    %v1568 = vld [vmem:[%s1558] sm:%s1567]
    %v1569 = vunpack.c.l.bf16 %v1568
    %v1570 = vunpack.c.h.bf16 %v1568
    %s1571 = scalar_lea.vmem [#allocation1], 176
    %1572 = vst [vmem:[%s1571] sm:%s4] %v1569
    %s1573 = smul.addr 4, 21
    %s1574 = scalar_lea.vmem %s0, %s1573
    %s1575 = sshrl.u32 %s4, 1
    %s1576 = sor.u32 %s4, %s1575
    %s1577 = sand.u32 %s1576, 85
    %s1578 = sshrl.u32 %s1577, 1
    %s1579 = sor.u32 %s1577, %s1578
    %s1580 = sand.u32 51, %s1579
    %s1581 = sshrl.u32 %s1580, 2
    %s1582 = sor.u32 %s1580, %s1581
    %s1583 = sand.u32 15, %s1582
    %v1584 = vld [vmem:[%s1574] sm:%s1583]
    %v1585 = vunpack.c.l.bf16 %v1584
    %v1586 = vunpack.c.h.bf16 %v1584
    %s1587 = scalar_lea.vmem [#allocation1], 168
    %1588 = vst [vmem:[%s1587] sm:%s4] %v1585
    %s1589 = smul.addr 4, 20
    %s1590 = scalar_lea.vmem %s0, %s1589
    %s1591 = sshrl.u32 %s4, 1
    %s1592 = sor.u32 %s4, %s1591
    %s1593 = sand.u32 %s1592, 85
    %s1594 = sshrl.u32 %s1593, 1
    %s1595 = sor.u32 %s1593, %s1594
    %s1596 = sand.u32 51, %s1595
    %s1597 = sshrl.u32 %s1596, 2
    %s1598 = sor.u32 %s1596, %s1597
    %s1599 = sand.u32 15, %s1598
    %v1600 = vld [vmem:[%s1590] sm:%s1599]
    %v1601 = vunpack.c.l.bf16 %v1600
    %v1602 = vunpack.c.h.bf16 %v1600
    %s1603 = scalar_lea.vmem [#allocation1], 160
    %1604 = vst [vmem:[%s1603] sm:%s4] %v1601
    %s1605 = smul.addr 4, 19
    %s1606 = scalar_lea.vmem %s0, %s1605
    %s1607 = sshrl.u32 %s4, 1
    %s1608 = sor.u32 %s4, %s1607
    %s1609 = sand.u32 %s1608, 85
    %s1610 = sshrl.u32 %s1609, 1
    %s1611 = sor.u32 %s1609, %s1610
    %s1612 = sand.u32 51, %s1611
    %s1613 = sshrl.u32 %s1612, 2
    %s1614 = sor.u32 %s1612, %s1613
    %s1615 = sand.u32 15, %s1614
    %v1616 = vld [vmem:[%s1606] sm:%s1615]
    %v1617 = vunpack.c.l.bf16 %v1616
    %v1618 = vunpack.c.h.bf16 %v1616
    %s1619 = scalar_lea.vmem [#allocation1], 152
    %1620 = vst [vmem:[%s1619] sm:%s4] %v1617
    %s1621 = smul.addr 4, 18
    %s1622 = scalar_lea.vmem %s0, %s1621
    %s1623 = sshrl.u32 %s4, 1
    %s1624 = sor.u32 %s4, %s1623
    %s1625 = sand.u32 %s1624, 85
    %s1626 = sshrl.u32 %s1625, 1
    %s1627 = sor.u32 %s1625, %s1626
    %s1628 = sand.u32 51, %s1627
    %s1629 = sshrl.u32 %s1628, 2
    %s1630 = sor.u32 %s1628, %s1629
    %s1631 = sand.u32 15, %s1630
    %v1632 = vld [vmem:[%s1622] sm:%s1631]
    %v1633 = vunpack.c.l.bf16 %v1632
    %v1634 = vunpack.c.h.bf16 %v1632
    %s1635 = scalar_lea.vmem [#allocation1], 144
    %1636 = vst [vmem:[%s1635] sm:%s4] %v1633
    %s1637 = smul.addr 4, 17
    %s1638 = scalar_lea.vmem %s0, %s1637
    %s1639 = sshrl.u32 %s4, 1
    %s1640 = sor.u32 %s4, %s1639
    %s1641 = sand.u32 %s1640, 85
    %s1642 = sshrl.u32 %s1641, 1
    %s1643 = sor.u32 %s1641, %s1642
    %s1644 = sand.u32 51, %s1643
    %s1645 = sshrl.u32 %s1644, 2
    %s1646 = sor.u32 %s1644, %s1645
    %s1647 = sand.u32 15, %s1646
    %v1648 = vld [vmem:[%s1638] sm:%s1647]
    %v1649 = vunpack.c.l.bf16 %v1648
    %v1650 = vunpack.c.h.bf16 %v1648
    %s1651 = scalar_lea.vmem [#allocation1], 136
    %1652 = vst [vmem:[%s1651] sm:%s4] %v1649
    %s1653 = smul.addr 4, 16
    %s1654 = scalar_lea.vmem %s0, %s1653
    %s1655 = sshrl.u32 %s4, 1
    %s1656 = sor.u32 %s4, %s1655
    %s1657 = sand.u32 %s1656, 85
    %s1658 = sshrl.u32 %s1657, 1
    %s1659 = sor.u32 %s1657, %s1658
    %s1660 = sand.u32 51, %s1659
    %s1661 = sshrl.u32 %s1660, 2
    %s1662 = sor.u32 %s1660, %s1661
    %s1663 = sand.u32 15, %s1662
    %v1664 = vld [vmem:[%s1654] sm:%s1663]
    %v1665 = vunpack.c.l.bf16 %v1664
    %v1666 = vunpack.c.h.bf16 %v1664
    %s1667 = scalar_lea.vmem [#allocation1], 128
    %1668 = vst [vmem:[%s1667] sm:%s4] %v1665
    %s1669 = smul.addr 4, 15
    %s1670 = scalar_lea.vmem %s0, %s1669
    %s1671 = sshrl.u32 %s4, 1
    %s1672 = sor.u32 %s4, %s1671
    %s1673 = sand.u32 %s1672, 85
    %s1674 = sshrl.u32 %s1673, 1
    %s1675 = sor.u32 %s1673, %s1674
    %s1676 = sand.u32 51, %s1675
    %s1677 = sshrl.u32 %s1676, 2
    %s1678 = sor.u32 %s1676, %s1677
    %s1679 = sand.u32 15, %s1678
    %v1680 = vld [vmem:[%s1670] sm:%s1679]
    %v1681 = vunpack.c.l.bf16 %v1680
    %v1682 = vunpack.c.h.bf16 %v1680
    %s1683 = scalar_lea.vmem [#allocation1], 120
    %1684 = vst [vmem:[%s1683] sm:%s4] %v1681
    %s1685 = smul.addr 4, 14
    %s1686 = scalar_lea.vmem %s0, %s1685
    %s1687 = sshrl.u32 %s4, 1
    %s1688 = sor.u32 %s4, %s1687
    %s1689 = sand.u32 %s1688, 85
    %s1690 = sshrl.u32 %s1689, 1
    %s1691 = sor.u32 %s1689, %s1690
    %s1692 = sand.u32 51, %s1691
    %s1693 = sshrl.u32 %s1692, 2
    %s1694 = sor.u32 %s1692, %s1693
    %s1695 = sand.u32 15, %s1694
    %v1696 = vld [vmem:[%s1686] sm:%s1695]
    %v1697 = vunpack.c.l.bf16 %v1696
    %v1698 = vunpack.c.h.bf16 %v1696
    %s1699 = scalar_lea.vmem [#allocation1], 112
    %1700 = vst [vmem:[%s1699] sm:%s4] %v1697
    %s1701 = smul.addr 4, 13
    %s1702 = scalar_lea.vmem %s0, %s1701
    %s1703 = sshrl.u32 %s4, 1
    %s1704 = sor.u32 %s4, %s1703
    %s1705 = sand.u32 %s1704, 85
    %s1706 = sshrl.u32 %s1705, 1
    %s1707 = sor.u32 %s1705, %s1706
    %s1708 = sand.u32 51, %s1707
    %s1709 = sshrl.u32 %s1708, 2
    %s1710 = sor.u32 %s1708, %s1709
    %s1711 = sand.u32 15, %s1710
    %v1712 = vld [vmem:[%s1702] sm:%s1711]
    %v1713 = vunpack.c.l.bf16 %v1712
    %v1714 = vunpack.c.h.bf16 %v1712
    %s1715 = scalar_lea.vmem [#allocation1], 104
    %1716 = vst [vmem:[%s1715] sm:%s4] %v1713
    %s1717 = smul.addr 4, 12
    %s1718 = scalar_lea.vmem %s0, %s1717
    %s1719 = sshrl.u32 %s4, 1
    %s1720 = sor.u32 %s4, %s1719
    %s1721 = sand.u32 %s1720, 85
    %s1722 = sshrl.u32 %s1721, 1
    %s1723 = sor.u32 %s1721, %s1722
    %s1724 = sand.u32 51, %s1723
    %s1725 = sshrl.u32 %s1724, 2
    %s1726 = sor.u32 %s1724, %s1725
    %s1727 = sand.u32 15, %s1726
    %v1728 = vld [vmem:[%s1718] sm:%s1727]
    %v1729 = vunpack.c.l.bf16 %v1728
    %v1730 = vunpack.c.h.bf16 %v1728
    %s1731 = scalar_lea.vmem [#allocation1], 96
    %1732 = vst [vmem:[%s1731] sm:%s4] %v1729
    %s1733 = smul.addr 4, 11
    %s1734 = scalar_lea.vmem %s0, %s1733
    %s1735 = sshrl.u32 %s4, 1
    %s1736 = sor.u32 %s4, %s1735
    %s1737 = sand.u32 %s1736, 85
    %s1738 = sshrl.u32 %s1737, 1
    %s1739 = sor.u32 %s1737, %s1738
    %s1740 = sand.u32 51, %s1739
    %s1741 = sshrl.u32 %s1740, 2
    %s1742 = sor.u32 %s1740, %s1741
    %s1743 = sand.u32 15, %s1742
    %v1744 = vld [vmem:[%s1734] sm:%s1743]
    %v1745 = vunpack.c.l.bf16 %v1744
    %v1746 = vunpack.c.h.bf16 %v1744
    %s1747 = scalar_lea.vmem [#allocation1], 88
    %1748 = vst [vmem:[%s1747] sm:%s4] %v1745
    %s1749 = smul.addr 4, 10
    %s1750 = scalar_lea.vmem %s0, %s1749
    %s1751 = sshrl.u32 %s4, 1
    %s1752 = sor.u32 %s4, %s1751
    %s1753 = sand.u32 %s1752, 85
    %s1754 = sshrl.u32 %s1753, 1
    %s1755 = sor.u32 %s1753, %s1754
    %s1756 = sand.u32 51, %s1755
    %s1757 = sshrl.u32 %s1756, 2
    %s1758 = sor.u32 %s1756, %s1757
    %s1759 = sand.u32 15, %s1758
    %v1760 = vld [vmem:[%s1750] sm:%s1759]
    %v1761 = vunpack.c.l.bf16 %v1760
    %v1762 = vunpack.c.h.bf16 %v1760
    %s1763 = scalar_lea.vmem [#allocation1], 80
    %1764 = vst [vmem:[%s1763] sm:%s4] %v1761
    %s1765 = smul.addr 4, 9
    %s1766 = scalar_lea.vmem %s0, %s1765
    %s1767 = sshrl.u32 %s4, 1
    %s1768 = sor.u32 %s4, %s1767
    %s1769 = sand.u32 %s1768, 85
    %s1770 = sshrl.u32 %s1769, 1
    %s1771 = sor.u32 %s1769, %s1770
    %s1772 = sand.u32 51, %s1771
    %s1773 = sshrl.u32 %s1772, 2
    %s1774 = sor.u32 %s1772, %s1773
    %s1775 = sand.u32 15, %s1774
    %v1776 = vld [vmem:[%s1766] sm:%s1775]
    %v1777 = vunpack.c.l.bf16 %v1776
    %v1778 = vunpack.c.h.bf16 %v1776
    %s1779 = scalar_lea.vmem [#allocation1], 72
    %1780 = vst [vmem:[%s1779] sm:%s4] %v1777
    %s1781 = smul.addr 4, 8
    %s1782 = scalar_lea.vmem %s0, %s1781
    %s1783 = sshrl.u32 %s4, 1
    %s1784 = sor.u32 %s4, %s1783
    %s1785 = sand.u32 %s1784, 85
    %s1786 = sshrl.u32 %s1785, 1
    %s1787 = sor.u32 %s1785, %s1786
    %s1788 = sand.u32 51, %s1787
    %s1789 = sshrl.u32 %s1788, 2
    %s1790 = sor.u32 %s1788, %s1789
    %s1791 = sand.u32 15, %s1790
    %v1792 = vld [vmem:[%s1782] sm:%s1791]
    %v1793 = vunpack.c.l.bf16 %v1792
    %v1794 = vunpack.c.h.bf16 %v1792
    %s1795 = scalar_lea.vmem [#allocation1], 64
    %1796 = vst [vmem:[%s1795] sm:%s4] %v1793
    %s1797 = smul.addr 4, 7
    %s1798 = scalar_lea.vmem %s0, %s1797
    %s1799 = sshrl.u32 %s4, 1
    %s1800 = sor.u32 %s4, %s1799
    %s1801 = sand.u32 %s1800, 85
    %s1802 = sshrl.u32 %s1801, 1
    %s1803 = sor.u32 %s1801, %s1802
    %s1804 = sand.u32 51, %s1803
    %s1805 = sshrl.u32 %s1804, 2
    %s1806 = sor.u32 %s1804, %s1805
    %s1807 = sand.u32 15, %s1806
    %v1808 = vld [vmem:[%s1798] sm:%s1807]
    %v1809 = vunpack.c.l.bf16 %v1808
    %v1810 = vunpack.c.h.bf16 %v1808
    %s1811 = scalar_lea.vmem [#allocation1], 56
    %1812 = vst [vmem:[%s1811] sm:%s4] %v1809
    %s1813 = smul.addr 4, 6
    %s1814 = scalar_lea.vmem %s0, %s1813
    %s1815 = sshrl.u32 %s4, 1
    %s1816 = sor.u32 %s4, %s1815
    %s1817 = sand.u32 %s1816, 85
    %s1818 = sshrl.u32 %s1817, 1
    %s1819 = sor.u32 %s1817, %s1818
    %s1820 = sand.u32 51, %s1819
    %s1821 = sshrl.u32 %s1820, 2
    %s1822 = sor.u32 %s1820, %s1821
    %s1823 = sand.u32 15, %s1822
    %v1824 = vld [vmem:[%s1814] sm:%s1823]
    %v1825 = vunpack.c.l.bf16 %v1824
    %v1826 = vunpack.c.h.bf16 %v1824
    %s1827 = scalar_lea.vmem [#allocation1], 48
    %1828 = vst [vmem:[%s1827] sm:%s4] %v1825
    %s1829 = smul.addr 4, 5
    %s1830 = scalar_lea.vmem %s0, %s1829
    %s1831 = sshrl.u32 %s4, 1
    %s1832 = sor.u32 %s4, %s1831
    %s1833 = sand.u32 %s1832, 85
    %s1834 = sshrl.u32 %s1833, 1
    %s1835 = sor.u32 %s1833, %s1834
    %s1836 = sand.u32 51, %s1835
    %s1837 = sshrl.u32 %s1836, 2
    %s1838 = sor.u32 %s1836, %s1837
    %s1839 = sand.u32 15, %s1838
    %v1840 = vld [vmem:[%s1830] sm:%s1839]
    %v1841 = vunpack.c.l.bf16 %v1840
    %v1842 = vunpack.c.h.bf16 %v1840
    %s1843 = scalar_lea.vmem [#allocation1], 40
    %1844 = vst [vmem:[%s1843] sm:%s4] %v1841
    %s1845 = smul.addr 4, 4
    %s1846 = scalar_lea.vmem %s0, %s1845
    %s1847 = sshrl.u32 %s4, 1
    %s1848 = sor.u32 %s4, %s1847
    %s1849 = sand.u32 %s1848, 85
    %s1850 = sshrl.u32 %s1849, 1
    %s1851 = sor.u32 %s1849, %s1850
    %s1852 = sand.u32 51, %s1851
    %s1853 = sshrl.u32 %s1852, 2
    %s1854 = sor.u32 %s1852, %s1853
    %s1855 = sand.u32 15, %s1854
    %v1856 = vld [vmem:[%s1846] sm:%s1855]
    %v1857 = vunpack.c.l.bf16 %v1856
    %v1858 = vunpack.c.h.bf16 %v1856
    %s1859 = scalar_lea.vmem [#allocation1], 32
    %1860 = vst [vmem:[%s1859] sm:%s4] %v1857
    %s1861 = smul.addr 4, 3
    %s1862 = scalar_lea.vmem %s0, %s1861
    %s1863 = sshrl.u32 %s4, 1
    %s1864 = sor.u32 %s4, %s1863
    %s1865 = sand.u32 %s1864, 85
    %s1866 = sshrl.u32 %s1865, 1
    %s1867 = sor.u32 %s1865, %s1866
    %s1868 = sand.u32 51, %s1867
    %s1869 = sshrl.u32 %s1868, 2
    %s1870 = sor.u32 %s1868, %s1869
    %s1871 = sand.u32 15, %s1870
    %v1872 = vld [vmem:[%s1862] sm:%s1871]
    %v1873 = vunpack.c.l.bf16 %v1872
    %v1874 = vunpack.c.h.bf16 %v1872
    %s1875 = scalar_lea.vmem [#allocation1], 24
    %1876 = vst [vmem:[%s1875] sm:%s4] %v1873
    %s1877 = smul.addr 4, 2
    %s1878 = scalar_lea.vmem %s0, %s1877
    %s1879 = sshrl.u32 %s4, 1
    %s1880 = sor.u32 %s4, %s1879
    %s1881 = sand.u32 %s1880, 85
    %s1882 = sshrl.u32 %s1881, 1
    %s1883 = sor.u32 %s1881, %s1882
    %s1884 = sand.u32 51, %s1883
    %s1885 = sshrl.u32 %s1884, 2
    %s1886 = sor.u32 %s1884, %s1885
    %s1887 = sand.u32 15, %s1886
    %v1888 = vld [vmem:[%s1878] sm:%s1887]
    %v1889 = vunpack.c.l.bf16 %v1888
    %v1890 = vunpack.c.h.bf16 %v1888
    %s1891 = scalar_lea.vmem [#allocation1], 16
    %1892 = vst [vmem:[%s1891] sm:%s4] %v1889
    %s1893 = scalar_lea.vmem %s0, 4
    %s1894 = sshrl.u32 %s4, 1
    %s1895 = sor.u32 %s4, %s1894
    %s1896 = sand.u32 %s1895, 85
    %s1897 = sshrl.u32 %s1896, 1
    %s1898 = sor.u32 %s1896, %s1897
    %s1899 = sand.u32 51, %s1898
    %s1900 = sshrl.u32 %s1899, 2
    %s1901 = sor.u32 %s1899, %s1900
    %s1902 = sand.u32 15, %s1901
    %v1903 = vld [vmem:[%s1893] sm:%s1902]
    %v1904 = vunpack.c.l.bf16 %v1903
    %v1905 = vunpack.c.h.bf16 %v1903
    %s1906 = scalar_lea.vmem [#allocation1], 8
    %1907 = vst [vmem:[%s1906] sm:%s4] %v1904
    %s1908 = sshrl.u32 %s4, 1
    %s1909 = sor.u32 %s4, %s1908
    %s1910 = sand.u32 %s1909, 85
    %s1911 = sshrl.u32 %s1910, 1
    %s1912 = sor.u32 %s1910, %s1911
    %s1913 = sand.u32 51, %s1912
    %s1914 = sshrl.u32 %s1913, 2
    %s1915 = sor.u32 %s1913, %s1914
    %s1916 = sand.u32 15, %s1915
    %v1917 = vld [vmem:[%s0] sm:%s1916]
    %v1918 = vunpack.c.l.bf16 %v1917
    %v1919 = vunpack.c.h.bf16 %v1917
    %1920 = vst [vmem:[#allocation1] sm:%s4] %v1918
    %s1921 = scalar_lea.vmem [#allocation1], 16
    %v1922 = vld [vmem:[%s1921] ss:$2 sm:$0x7]
    %vm1923 = vcmask 523264
    %s1924 = scalar_lea.vmem [#allocation0], 16
    %1925 = vst.msk [vmem:[%s1924] ss:$40 sm:$0x7] %vm1923, %v1922
    %s1926 = scalar_lea.vmem [#allocation1], 40
    %v1927 = vld [vmem:[%s1926] ss:$2 sm:$0x7]
    %vm1928 = vcmask 523264
    %s1929 = scalar_lea.vmem [#allocation0], 17
    %1930 = vst.msk [vmem:[%s1929] ss:$40 sm:$0x7] %vm1928, %v1927
    %s1931 = scalar_lea.vmem [#allocation1], 64
    %v1932 = vld [vmem:[%s1931] ss:$2 sm:$0x7]
    %vm1933 = vcmask 523264
    %s1934 = scalar_lea.vmem [#allocation0], 18
    %1935 = vst.msk [vmem:[%s1934] ss:$40 sm:$0x7] %vm1933, %v1932
    %s1936 = scalar_lea.vmem [#allocation1], 88
    %v1937 = vld [vmem:[%s1936] ss:$2 sm:$0x7]
    %vm1938 = vcmask 523264
    %s1939 = scalar_lea.vmem [#allocation0], 19
    %1940 = vst.msk [vmem:[%s1939] ss:$40 sm:$0x7] %vm1938, %v1937
    %s1941 = scalar_lea.vmem [#allocation1], 112
    %v1942 = vld [vmem:[%s1941] ss:$2 sm:$0x7]
    %vm1943 = vcmask 523264
    %s1944 = scalar_lea.vmem [#allocation0], 20
    %1945 = vst.msk [vmem:[%s1944] ss:$40 sm:$0x7] %vm1943, %v1942
    %s1946 = scalar_lea.vmem [#allocation1], 136
    %v1947 = vld [vmem:[%s1946] ss:$2 sm:$0x7]
    %vm1948 = vcmask 523264
    %s1949 = scalar_lea.vmem [#allocation0], 21
    %1950 = vst.msk [vmem:[%s1949] ss:$40 sm:$0x7] %vm1948, %v1947
    %s1951 = scalar_lea.vmem [#allocation1], 160
    %v1952 = vld [vmem:[%s1951] ss:$2 sm:$0x7]
    %vm1953 = vcmask 523264
    %s1954 = scalar_lea.vmem [#allocation0], 22
    %1955 = vst.msk [vmem:[%s1954] ss:$40 sm:$0x7] %vm1953, %v1952
    %s1956 = scalar_lea.vmem [#allocation1], 184
    %v1957 = vld [vmem:[%s1956] ss:$2 sm:$0x7]
    %vm1958 = vcmask 523264
    %s1959 = scalar_lea.vmem [#allocation0], 23
    %1960 = vst.msk [vmem:[%s1959] ss:$40 sm:$0x7] %vm1958, %v1957
    %s1961 = scalar_lea.vmem [#allocation1], 208
    %v1962 = vld [vmem:[%s1961] ss:$2 sm:$0x7]
    %vm1963 = vcmask 523264
    %s1964 = scalar_lea.vmem [#allocation0], 120
    %1965 = vst.msk [vmem:[%s1964] ss:$40 sm:$0x7] %vm1963, %v1962
    %s1966 = scalar_lea.vmem [#allocation1], 232
    %v1967 = vld [vmem:[%s1966] ss:$2 sm:$0x7]
    %vm1968 = vcmask 523264
    %s1969 = scalar_lea.vmem [#allocation0], 121
    %1970 = vst.msk [vmem:[%s1969] ss:$40 sm:$0x7] %vm1968, %v1967
    %s1971 = scalar_lea.vmem [#allocation1], 256
    %v1972 = vld [vmem:[%s1971] ss:$2 sm:$0x7]
    %vm1973 = vcmask 523264
    %s1974 = scalar_lea.vmem [#allocation0], 122
    %1975 = vst.msk [vmem:[%s1974] ss:$40 sm:$0x7] %vm1973, %v1972
    %s1976 = scalar_lea.vmem [#allocation1], 280
    %v1977 = vld [vmem:[%s1976] ss:$2 sm:$0x7]
    %vm1978 = vcmask 523264
    %s1979 = scalar_lea.vmem [#allocation0], 123
    %1980 = vst.msk [vmem:[%s1979] ss:$40 sm:$0x7] %vm1978, %v1977
    %s1981 = scalar_lea.vmem [#allocation1], 304
    %v1982 = vld [vmem:[%s1981] ss:$2 sm:$0x7]
    %vm1983 = vcmask 523264
    %s1984 = scalar_lea.vmem [#allocation0], 124
    %1985 = vst.msk [vmem:[%s1984] ss:$40 sm:$0x7] %vm1983, %v1982
    %s1986 = scalar_lea.vmem [#allocation1], 328
    %v1987 = vld [vmem:[%s1986] ss:$2 sm:$0x7]
    %vm1988 = vcmask 523264
    %s1989 = scalar_lea.vmem [#allocation0], 125
    %1990 = vst.msk [vmem:[%s1989] ss:$40 sm:$0x7] %vm1988, %v1987
    %s1991 = scalar_lea.vmem [#allocation1], 352
    %v1992 = vld [vmem:[%s1991] ss:$2 sm:$0x7]
    %vm1993 = vcmask 523264
    %s1994 = scalar_lea.vmem [#allocation0], 126
    %1995 = vst.msk [vmem:[%s1994] ss:$40 sm:$0x7] %vm1993, %v1992
    %s1996 = scalar_lea.vmem [#allocation1], 376
    %v1997 = vld [vmem:[%s1996] ss:$2 sm:$0x7]
    %vm1998 = vcmask 523264
    %s1999 = scalar_lea.vmem [#allocation0], 127
    %2000 = vst.msk [vmem:[%s1999] ss:$40 sm:$0x7] %vm1998, %v1997
    %s2001 = scalar_lea.vmem [#allocation1], 400
    %v2002 = vld [vmem:[%s2001] ss:$2 sm:$0x7]
    %vm2003 = vcmask 523264
    %s2004 = scalar_lea.vmem [#allocation0], 224
    %2005 = vst.msk [vmem:[%s2004] ss:$40 sm:$0x7] %vm2003, %v2002
    %s2006 = scalar_lea.vmem [#allocation1], 424
    %v2007 = vld [vmem:[%s2006] ss:$2 sm:$0x7]
    %vm2008 = vcmask 523264
    %s2009 = scalar_lea.vmem [#allocation0], 225
    %2010 = vst.msk [vmem:[%s2009] ss:$40 sm:$0x7] %vm2008, %v2007
    %s2011 = scalar_lea.vmem [#allocation1], 448
    %v2012 = vld [vmem:[%s2011] ss:$2 sm:$0x7]
    %vm2013 = vcmask 523264
    %s2014 = scalar_lea.vmem [#allocation0], 226
    %2015 = vst.msk [vmem:[%s2014] ss:$40 sm:$0x7] %vm2013, %v2012
    %s2016 = scalar_lea.vmem [#allocation1], 472
    %v2017 = vld [vmem:[%s2016] ss:$2 sm:$0x7]
    %vm2018 = vcmask 523264
    %s2019 = scalar_lea.vmem [#allocation0], 227
    %2020 = vst.msk [vmem:[%s2019] ss:$40 sm:$0x7] %vm2018, %v2017
    %s2021 = scalar_lea.vmem [#allocation1], 496
    %v2022 = vld [vmem:[%s2021] ss:$2 sm:$0x7]
    %vm2023 = vcmask 523264
    %s2024 = scalar_lea.vmem [#allocation0], 228
    %2025 = vst.msk [vmem:[%s2024] ss:$40 sm:$0x7] %vm2023, %v2022
    %s2026 = scalar_lea.vmem [#allocation1], 520
    %v2027 = vld [vmem:[%s2026] ss:$2 sm:$0x7]
    %vm2028 = vcmask 523264
    %s2029 = scalar_lea.vmem [#allocation0], 229
    %2030 = vst.msk [vmem:[%s2029] ss:$40 sm:$0x7] %vm2028, %v2027
    %s2031 = scalar_lea.vmem [#allocation1], 544
    %v2032 = vld [vmem:[%s2031] ss:$2 sm:$0x7]
    %vm2033 = vcmask 523264
    %s2034 = scalar_lea.vmem [#allocation0], 230
    %2035 = vst.msk [vmem:[%s2034] ss:$40 sm:$0x7] %vm2033, %v2032
    %s2036 = scalar_lea.vmem [#allocation1], 568
    %v2037 = vld [vmem:[%s2036] ss:$2 sm:$0x7]
    %vm2038 = vcmask 523264
    %s2039 = scalar_lea.vmem [#allocation0], 231
    %2040 = vst.msk [vmem:[%s2039] ss:$40 sm:$0x7] %vm2038, %v2037
    %s2041 = scalar_lea.vmem [#allocation1], 592
    %v2042 = vld [vmem:[%s2041] ss:$2 sm:$0x7]
    %vm2043 = vcmask 523264
    %s2044 = scalar_lea.vmem [#allocation0], 328
    %2045 = vst.msk [vmem:[%s2044] ss:$40 sm:$0x7] %vm2043, %v2042
    %s2046 = scalar_lea.vmem [#allocation1], 616
    %v2047 = vld [vmem:[%s2046] ss:$2 sm:$0x7]
    %vm2048 = vcmask 523264
    %s2049 = scalar_lea.vmem [#allocation0], 329
    %2050 = vst.msk [vmem:[%s2049] ss:$40 sm:$0x7] %vm2048, %v2047
    %s2051 = scalar_lea.vmem [#allocation1], 640
    %v2052 = vld [vmem:[%s2051] ss:$2 sm:$0x7]
    %vm2053 = vcmask 523264
    %s2054 = scalar_lea.vmem [#allocation0], 330
    %2055 = vst.msk [vmem:[%s2054] ss:$40 sm:$0x7] %vm2053, %v2052
    %s2056 = scalar_lea.vmem [#allocation1], 664
    %v2057 = vld [vmem:[%s2056] ss:$2 sm:$0x7]
    %vm2058 = vcmask 523264
    %s2059 = scalar_lea.vmem [#allocation0], 331
    %2060 = vst.msk [vmem:[%s2059] ss:$40 sm:$0x7] %vm2058, %v2057
    %s2061 = scalar_lea.vmem [#allocation1], 688
    %v2062 = vld [vmem:[%s2061] ss:$2 sm:$0x7]
    %vm2063 = vcmask 523264
    %s2064 = scalar_lea.vmem [#allocation0], 332
    %2065 = vst.msk [vmem:[%s2064] ss:$40 sm:$0x7] %vm2063, %v2062
    %s2066 = scalar_lea.vmem [#allocation1], 712
    %v2067 = vld [vmem:[%s2066] ss:$2 sm:$0x7]
    %vm2068 = vcmask 523264
    %s2069 = scalar_lea.vmem [#allocation0], 333
    %2070 = vst.msk [vmem:[%s2069] ss:$40 sm:$0x7] %vm2068, %v2067
    %s2071 = scalar_lea.vmem [#allocation1], 736
    %v2072 = vld [vmem:[%s2071] ss:$2 sm:$0x7]
    %vm2073 = vcmask 523264
    %s2074 = scalar_lea.vmem [#allocation0], 334
    %2075 = vst.msk [vmem:[%s2074] ss:$40 sm:$0x7] %vm2073, %v2072
    %s2076 = scalar_lea.vmem [#allocation1], 760
    %v2077 = vld [vmem:[%s2076] ss:$2 sm:$0x7]
    %vm2078 = vcmask 523264
    %s2079 = scalar_lea.vmem [#allocation0], 335
    %2080 = vst.msk [vmem:[%s2079] ss:$40 sm:$0x7] %vm2078, %v2077
    %s2081 = scalar_lea.vmem [#allocation1], 784
    %v2082 = vld [vmem:[%s2081] ss:$2 sm:$0x7]
    %vm2083 = vcmask 523264
    %s2084 = scalar_lea.vmem [#allocation0], 432
    %2085 = vst.msk [vmem:[%s2084] ss:$40 sm:$0x7] %vm2083, %v2082
    %s2086 = scalar_lea.vmem [#allocation1], 808
    %v2087 = vld [vmem:[%s2086] ss:$2 sm:$0x7]
    %vm2088 = vcmask 523264
    %s2089 = scalar_lea.vmem [#allocation0], 433
    %2090 = vst.msk [vmem:[%s2089] ss:$40 sm:$0x7] %vm2088, %v2087
    %s2091 = scalar_lea.vmem [#allocation1], 832
    %v2092 = vld [vmem:[%s2091] ss:$2 sm:$0x7]
    %vm2093 = vcmask 523264
    %s2094 = scalar_lea.vmem [#allocation0], 434
    %2095 = vst.msk [vmem:[%s2094] ss:$40 sm:$0x7] %vm2093, %v2092
    %s2096 = scalar_lea.vmem [#allocation1], 856
    %v2097 = vld [vmem:[%s2096] ss:$2 sm:$0x7]
    %vm2098 = vcmask 523264
    %s2099 = scalar_lea.vmem [#allocation0], 435
    %2100 = vst.msk [vmem:[%s2099] ss:$40 sm:$0x7] %vm2098, %v2097
    %s2101 = scalar_lea.vmem [#allocation1], 880
    %v2102 = vld [vmem:[%s2101] ss:$2 sm:$0x7]
    %vm2103 = vcmask 523264
    %s2104 = scalar_lea.vmem [#allocation0], 436
    %2105 = vst.msk [vmem:[%s2104] ss:$40 sm:$0x7] %vm2103, %v2102
    %s2106 = scalar_lea.vmem [#allocation1], 904
    %v2107 = vld [vmem:[%s2106] ss:$2 sm:$0x7]
    %vm2108 = vcmask 523264
    %s2109 = scalar_lea.vmem [#allocation0], 437
    %2110 = vst.msk [vmem:[%s2109] ss:$40 sm:$0x7] %vm2108, %v2107
    %s2111 = scalar_lea.vmem [#allocation1], 928
    %v2112 = vld [vmem:[%s2111] ss:$2 sm:$0x7]
    %vm2113 = vcmask 523264
    %s2114 = scalar_lea.vmem [#allocation0], 438
    %2115 = vst.msk [vmem:[%s2114] ss:$40 sm:$0x7] %vm2113, %v2112
    %s2116 = scalar_lea.vmem [#allocation1], 952
    %v2117 = vld [vmem:[%s2116] ss:$2 sm:$0x7]
    %vm2118 = vcmask 523264
    %s2119 = scalar_lea.vmem [#allocation0], 439
    %2120 = vst.msk [vmem:[%s2119] ss:$40 sm:$0x7] %vm2118, %v2117
    %v2121 = vld [vmem:[#allocation1] ss:$2 sm:$0x7]
    %2122 = vst [vmem:[#allocation0] ss:$40 sm:$0x7] %v2121
    %s2123 = scalar_lea.vmem [#allocation1], 8
    %v2124 = vld [vmem:[%s2123] ss:$2 sm:$0x7]
    %s2125 = scalar_lea.vmem [#allocation0], 8
    %2126 = vst [vmem:[%s2125] ss:$40 sm:$0x7] %v2124
    %s2127 = scalar_lea.vmem [#allocation1], 24
    %v2128 = vld [vmem:[%s2127] ss:$2 sm:$0x7]
    %s2129 = scalar_lea.vmem [#allocation0], 1
    %2130 = vst [vmem:[%s2129] ss:$40 sm:$0x7] %v2128
    %s2131 = scalar_lea.vmem [#allocation1], 32
    %v2132 = vld [vmem:[%s2131] ss:$2 sm:$0x7]
    %s2133 = scalar_lea.vmem [#allocation0], 9
    %2134 = vst [vmem:[%s2133] ss:$40 sm:$0x7] %v2132
    %s2135 = scalar_lea.vmem [#allocation1], 48
    %v2136 = vld [vmem:[%s2135] ss:$2 sm:$0x7]
    %s2137 = scalar_lea.vmem [#allocation0], 2
    %2138 = vst [vmem:[%s2137] ss:$40 sm:$0x7] %v2136
    %s2139 = scalar_lea.vmem [#allocation1], 56
    %v2140 = vld [vmem:[%s2139] ss:$2 sm:$0x7]
    %s2141 = scalar_lea.vmem [#allocation0], 10
    %2142 = vst [vmem:[%s2141] ss:$40 sm:$0x7] %v2140
    %s2143 = scalar_lea.vmem [#allocation1], 72
    %v2144 = vld [vmem:[%s2143] ss:$2 sm:$0x7]
    %s2145 = scalar_lea.vmem [#allocation0], 3
    %2146 = vst [vmem:[%s2145] ss:$40 sm:$0x7] %v2144
    %s2147 = scalar_lea.vmem [#allocation1], 80
    %v2148 = vld [vmem:[%s2147] ss:$2 sm:$0x7]
    %s2149 = scalar_lea.vmem [#allocation0], 11
    %2150 = vst [vmem:[%s2149] ss:$40 sm:$0x7] %v2148
    %s2151 = scalar_lea.vmem [#allocation1], 96
    %v2152 = vld [vmem:[%s2151] ss:$2 sm:$0x7]
    %s2153 = scalar_lea.vmem [#allocation0], 4
    %2154 = vst [vmem:[%s2153] ss:$40 sm:$0x7] %v2152
    %s2155 = scalar_lea.vmem [#allocation1], 104
    %v2156 = vld [vmem:[%s2155] ss:$2 sm:$0x7]
    %s2157 = scalar_lea.vmem [#allocation0], 12
    %2158 = vst [vmem:[%s2157] ss:$40 sm:$0x7] %v2156
    %s2159 = scalar_lea.vmem [#allocation1], 120
    %v2160 = vld [vmem:[%s2159] ss:$2 sm:$0x7]
    %s2161 = scalar_lea.vmem [#allocation0], 5
    %2162 = vst [vmem:[%s2161] ss:$40 sm:$0x7] %v2160
    %s2163 = scalar_lea.vmem [#allocation1], 128
    %v2164 = vld [vmem:[%s2163] ss:$2 sm:$0x7]
    %s2165 = scalar_lea.vmem [#allocation0], 13
    %2166 = vst [vmem:[%s2165] ss:$40 sm:$0x7] %v2164
    %s2167 = scalar_lea.vmem [#allocation1], 144
    %v2168 = vld [vmem:[%s2167] ss:$2 sm:$0x7]
    %s2169 = scalar_lea.vmem [#allocation0], 6
    %2170 = vst [vmem:[%s2169] ss:$40 sm:$0x7] %v2168
    %s2171 = scalar_lea.vmem [#allocation1], 152
    %v2172 = vld [vmem:[%s2171] ss:$2 sm:$0x7]
    %s2173 = scalar_lea.vmem [#allocation0], 14
    %2174 = vst [vmem:[%s2173] ss:$40 sm:$0x7] %v2172
    %s2175 = scalar_lea.vmem [#allocation1], 168
    %v2176 = vld [vmem:[%s2175] ss:$2 sm:$0x7]
    %s2177 = scalar_lea.vmem [#allocation0], 7
    %2178 = vst [vmem:[%s2177] ss:$40 sm:$0x7] %v2176
    %s2179 = scalar_lea.vmem [#allocation1], 176
    %v2180 = vld [vmem:[%s2179] ss:$2 sm:$0x7]
    %s2181 = scalar_lea.vmem [#allocation0], 15
    %2182 = vst [vmem:[%s2181] ss:$40 sm:$0x7] %v2180
    %s2183 = scalar_lea.vmem [#allocation1], 192
    %v2184 = vld [vmem:[%s2183] ss:$2 sm:$0x7]
    %s2185 = scalar_lea.vmem [#allocation0], 104
    %2186 = vst [vmem:[%s2185] ss:$40 sm:$0x7] %v2184
    %s2187 = scalar_lea.vmem [#allocation1], 200
    %v2188 = vld [vmem:[%s2187] ss:$2 sm:$0x7]
    %s2189 = scalar_lea.vmem [#allocation0], 112
    %2190 = vst [vmem:[%s2189] ss:$40 sm:$0x7] %v2188
    %s2191 = scalar_lea.vmem [#allocation1], 216
    %v2192 = vld [vmem:[%s2191] ss:$2 sm:$0x7]
    %s2193 = scalar_lea.vmem [#allocation0], 105
    %2194 = vst [vmem:[%s2193] ss:$40 sm:$0x7] %v2192
    %s2195 = scalar_lea.vmem [#allocation1], 224
    %v2196 = vld [vmem:[%s2195] ss:$2 sm:$0x7]
    %s2197 = scalar_lea.vmem [#allocation0], 113
    %2198 = vst [vmem:[%s2197] ss:$40 sm:$0x7] %v2196
    %s2199 = scalar_lea.vmem [#allocation1], 240
    %v2200 = vld [vmem:[%s2199] ss:$2 sm:$0x7]
    %s2201 = scalar_lea.vmem [#allocation0], 106
    %2202 = vst [vmem:[%s2201] ss:$40 sm:$0x7] %v2200
    %s2203 = scalar_lea.vmem [#allocation1], 248
    %v2204 = vld [vmem:[%s2203] ss:$2 sm:$0x7]
    %s2205 = scalar_lea.vmem [#allocation0], 114
    %2206 = vst [vmem:[%s2205] ss:$40 sm:$0x7] %v2204
    %s2207 = scalar_lea.vmem [#allocation1], 264
    %v2208 = vld [vmem:[%s2207] ss:$2 sm:$0x7]
    %s2209 = scalar_lea.vmem [#allocation0], 107
    %2210 = vst [vmem:[%s2209] ss:$40 sm:$0x7] %v2208
    %s2211 = scalar_lea.vmem [#allocation1], 272
    %v2212 = vld [vmem:[%s2211] ss:$2 sm:$0x7]
    %s2213 = scalar_lea.vmem [#allocation0], 115
    %2214 = vst [vmem:[%s2213] ss:$40 sm:$0x7] %v2212
    %s2215 = scalar_lea.vmem [#allocation1], 288
    %v2216 = vld [vmem:[%s2215] ss:$2 sm:$0x7]
    %s2217 = scalar_lea.vmem [#allocation0], 108
    %2218 = vst [vmem:[%s2217] ss:$40 sm:$0x7] %v2216
    %s2219 = scalar_lea.vmem [#allocation1], 296
    %v2220 = vld [vmem:[%s2219] ss:$2 sm:$0x7]
    %s2221 = scalar_lea.vmem [#allocation0], 116
    %2222 = vst [vmem:[%s2221] ss:$40 sm:$0x7] %v2220
    %s2223 = scalar_lea.vmem [#allocation1], 312
    %v2224 = vld [vmem:[%s2223] ss:$2 sm:$0x7]
    %s2225 = scalar_lea.vmem [#allocation0], 109
    %2226 = vst [vmem:[%s2225] ss:$40 sm:$0x7] %v2224
    %s2227 = scalar_lea.vmem [#allocation1], 320
    %v2228 = vld [vmem:[%s2227] ss:$2 sm:$0x7]
    %s2229 = scalar_lea.vmem [#allocation0], 117
    %2230 = vst [vmem:[%s2229] ss:$40 sm:$0x7] %v2228
    %s2231 = scalar_lea.vmem [#allocation1], 336
    %v2232 = vld [vmem:[%s2231] ss:$2 sm:$0x7]
    %s2233 = scalar_lea.vmem [#allocation0], 110
    %2234 = vst [vmem:[%s2233] ss:$40 sm:$0x7] %v2232
    %s2235 = scalar_lea.vmem [#allocation1], 344
    %v2236 = vld [vmem:[%s2235] ss:$2 sm:$0x7]
    %s2237 = scalar_lea.vmem [#allocation0], 118
    %2238 = vst [vmem:[%s2237] ss:$40 sm:$0x7] %v2236
    %s2239 = scalar_lea.vmem [#allocation1], 360
    %v2240 = vld [vmem:[%s2239] ss:$2 sm:$0x7]
    %s2241 = scalar_lea.vmem [#allocation0], 111
    %2242 = vst [vmem:[%s2241] ss:$40 sm:$0x7] %v2240
    %s2243 = scalar_lea.vmem [#allocation1], 368
    %v2244 = vld [vmem:[%s2243] ss:$2 sm:$0x7]
    %s2245 = scalar_lea.vmem [#allocation0], 119
    %2246 = vst [vmem:[%s2245] ss:$40 sm:$0x7] %v2244
    %s2247 = scalar_lea.vmem [#allocation1], 384
    %v2248 = vld [vmem:[%s2247] ss:$2 sm:$0x7]
    %s2249 = scalar_lea.vmem [#allocation0], 208
    %2250 = vst [vmem:[%s2249] ss:$40 sm:$0x7] %v2248
    %s2251 = scalar_lea.vmem [#allocation1], 392
    %v2252 = vld [vmem:[%s2251] ss:$2 sm:$0x7]
    %s2253 = scalar_lea.vmem [#allocation0], 216
    %2254 = vst [vmem:[%s2253] ss:$40 sm:$0x7] %v2252
    %s2255 = scalar_lea.vmem [#allocation1], 408
    %v2256 = vld [vmem:[%s2255] ss:$2 sm:$0x7]
    %s2257 = scalar_lea.vmem [#allocation0], 209
    %2258 = vst [vmem:[%s2257] ss:$40 sm:$0x7] %v2256
    %s2259 = scalar_lea.vmem [#allocation1], 416
    %v2260 = vld [vmem:[%s2259] ss:$2 sm:$0x7]
    %s2261 = scalar_lea.vmem [#allocation0], 217
    %2262 = vst [vmem:[%s2261] ss:$40 sm:$0x7] %v2260
    %s2263 = scalar_lea.vmem [#allocation1], 432
    %v2264 = vld [vmem:[%s2263] ss:$2 sm:$0x7]
    %s2265 = scalar_lea.vmem [#allocation0], 210
    %2266 = vst [vmem:[%s2265] ss:$40 sm:$0x7] %v2264
    %s2267 = scalar_lea.vmem [#allocation1], 440
    %v2268 = vld [vmem:[%s2267] ss:$2 sm:$0x7]
    %s2269 = scalar_lea.vmem [#allocation0], 218
    %2270 = vst [vmem:[%s2269] ss:$40 sm:$0x7] %v2268
    %s2271 = scalar_lea.vmem [#allocation1], 456
    %v2272 = vld [vmem:[%s2271] ss:$2 sm:$0x7]
    %s2273 = scalar_lea.vmem [#allocation0], 211
    %2274 = vst [vmem:[%s2273] ss:$40 sm:$0x7] %v2272
    %s2275 = scalar_lea.vmem [#allocation1], 464
    %v2276 = vld [vmem:[%s2275] ss:$2 sm:$0x7]
    %s2277 = scalar_lea.vmem [#allocation0], 219
    %2278 = vst [vmem:[%s2277] ss:$40 sm:$0x7] %v2276
    %s2279 = scalar_lea.vmem [#allocation1], 480
    %v2280 = vld [vmem:[%s2279] ss:$2 sm:$0x7]
    %s2281 = scalar_lea.vmem [#allocation0], 212
    %2282 = vst [vmem:[%s2281] ss:$40 sm:$0x7] %v2280
    %s2283 = scalar_lea.vmem [#allocation1], 488
    %v2284 = vld [vmem:[%s2283] ss:$2 sm:$0x7]
    %s2285 = scalar_lea.vmem [#allocation0], 220
    %2286 = vst [vmem:[%s2285] ss:$40 sm:$0x7] %v2284
    %s2287 = scalar_lea.vmem [#allocation1], 504
    %v2288 = vld [vmem:[%s2287] ss:$2 sm:$0x7]
    %s2289 = scalar_lea.vmem [#allocation0], 213
    %2290 = vst [vmem:[%s2289] ss:$40 sm:$0x7] %v2288
    %s2291 = scalar_lea.vmem [#allocation1], 512
    %v2292 = vld [vmem:[%s2291] ss:$2 sm:$0x7]
    %s2293 = scalar_lea.vmem [#allocation0], 221
    %2294 = vst [vmem:[%s2293] ss:$40 sm:$0x7] %v2292
    %s2295 = scalar_lea.vmem [#allocation1], 528
    %v2296 = vld [vmem:[%s2295] ss:$2 sm:$0x7]
    %s2297 = scalar_lea.vmem [#allocation0], 214
    %2298 = vst [vmem:[%s2297] ss:$40 sm:$0x7] %v2296
    %s2299 = scalar_lea.vmem [#allocation1], 536
    %v2300 = vld [vmem:[%s2299] ss:$2 sm:$0x7]
    %s2301 = scalar_lea.vmem [#allocation0], 222
    %2302 = vst [vmem:[%s2301] ss:$40 sm:$0x7] %v2300
    %s2303 = scalar_lea.vmem [#allocation1], 552
    %v2304 = vld [vmem:[%s2303] ss:$2 sm:$0x7]
    %s2305 = scalar_lea.vmem [#allocation0], 215
    %2306 = vst [vmem:[%s2305] ss:$40 sm:$0x7] %v2304
    %s2307 = scalar_lea.vmem [#allocation1], 560
    %v2308 = vld [vmem:[%s2307] ss:$2 sm:$0x7]
    %s2309 = scalar_lea.vmem [#allocation0], 223
    %2310 = vst [vmem:[%s2309] ss:$40 sm:$0x7] %v2308
    %s2311 = scalar_lea.vmem [#allocation1], 576
    %v2312 = vld [vmem:[%s2311] ss:$2 sm:$0x7]
    %s2313 = scalar_lea.vmem [#allocation0], 312
    %2314 = vst [vmem:[%s2313] ss:$40 sm:$0x7] %v2312
    %s2315 = scalar_lea.vmem [#allocation1], 584
    %v2316 = vld [vmem:[%s2315] ss:$2 sm:$0x7]
    %s2317 = scalar_lea.vmem [#allocation0], 320
    %2318 = vst [vmem:[%s2317] ss:$40 sm:$0x7] %v2316
    %s2319 = scalar_lea.vmem [#allocation1], 600
    %v2320 = vld [vmem:[%s2319] ss:$2 sm:$0x7]
    %s2321 = scalar_lea.vmem [#allocation0], 313
    %2322 = vst [vmem:[%s2321] ss:$40 sm:$0x7] %v2320
    %s2323 = scalar_lea.vmem [#allocation1], 608
    %v2324 = vld [vmem:[%s2323] ss:$2 sm:$0x7]
    %s2325 = scalar_lea.vmem [#allocation0], 321
    %2326 = vst [vmem:[%s2325] ss:$40 sm:$0x7] %v2324
    %s2327 = scalar_lea.vmem [#allocation1], 624
    %v2328 = vld [vmem:[%s2327] ss:$2 sm:$0x7]
    %s2329 = scalar_lea.vmem [#allocation0], 314
    %2330 = vst [vmem:[%s2329] ss:$40 sm:$0x7] %v2328
    %s2331 = scalar_lea.vmem [#allocation1], 632
    %v2332 = vld [vmem:[%s2331] ss:$2 sm:$0x7]
    %s2333 = scalar_lea.vmem [#allocation0], 322
    %2334 = vst [vmem:[%s2333] ss:$40 sm:$0x7] %v2332
    %s2335 = scalar_lea.vmem [#allocation1], 648
    %v2336 = vld [vmem:[%s2335] ss:$2 sm:$0x7]
    %s2337 = scalar_lea.vmem [#allocation0], 315
    %2338 = vst [vmem:[%s2337] ss:$40 sm:$0x7] %v2336
    %s2339 = scalar_lea.vmem [#allocation1], 656
    %v2340 = vld [vmem:[%s2339] ss:$2 sm:$0x7]
    %s2341 = scalar_lea.vmem [#allocation0], 323
    %2342 = vst [vmem:[%s2341] ss:$40 sm:$0x7] %v2340
    %s2343 = scalar_lea.vmem [#allocation1], 672
    %v2344 = vld [vmem:[%s2343] ss:$2 sm:$0x7]
    %s2345 = scalar_lea.vmem [#allocation0], 316
    %2346 = vst [vmem:[%s2345] ss:$40 sm:$0x7] %v2344
    %s2347 = scalar_lea.vmem [#allocation1], 680
    %v2348 = vld [vmem:[%s2347] ss:$2 sm:$0x7]
    %s2349 = scalar_lea.vmem [#allocation0], 324
    %2350 = vst [vmem:[%s2349] ss:$40 sm:$0x7] %v2348
    %s2351 = scalar_lea.vmem [#allocation1], 696
    %v2352 = vld [vmem:[%s2351] ss:$2 sm:$0x7]
    %s2353 = scalar_lea.vmem [#allocation0], 317
    %2354 = vst [vmem:[%s2353] ss:$40 sm:$0x7] %v2352
    %s2355 = scalar_lea.vmem [#allocation1], 704
    %v2356 = vld [vmem:[%s2355] ss:$2 sm:$0x7]
    %s2357 = scalar_lea.vmem [#allocation0], 325
    %2358 = vst [vmem:[%s2357] ss:$40 sm:$0x7] %v2356
    %s2359 = scalar_lea.vmem [#allocation1], 720
    %v2360 = vld [vmem:[%s2359] ss:$2 sm:$0x7]
    %s2361 = scalar_lea.vmem [#allocation0], 318
    %2362 = vst [vmem:[%s2361] ss:$40 sm:$0x7] %v2360
    %s2363 = scalar_lea.vmem [#allocation1], 728
    %v2364 = vld [vmem:[%s2363] ss:$2 sm:$0x7]
    %s2365 = scalar_lea.vmem [#allocation0], 326
    %2366 = vst [vmem:[%s2365] ss:$40 sm:$0x7] %v2364
    %s2367 = scalar_lea.vmem [#allocation1], 744
    %v2368 = vld [vmem:[%s2367] ss:$2 sm:$0x7]
    %s2369 = scalar_lea.vmem [#allocation0], 319
    %2370 = vst [vmem:[%s2369] ss:$40 sm:$0x7] %v2368
    %s2371 = scalar_lea.vmem [#allocation1], 752
    %v2372 = vld [vmem:[%s2371] ss:$2 sm:$0x7]
    %s2373 = scalar_lea.vmem [#allocation0], 327
    %2374 = vst [vmem:[%s2373] ss:$40 sm:$0x7] %v2372
    %s2375 = scalar_lea.vmem [#allocation1], 768
    %v2376 = vld [vmem:[%s2375] ss:$2 sm:$0x7]
    %s2377 = scalar_lea.vmem [#allocation0], 416
    %2378 = vst [vmem:[%s2377] ss:$40 sm:$0x7] %v2376
    %s2379 = scalar_lea.vmem [#allocation1], 776
    %v2380 = vld [vmem:[%s2379] ss:$2 sm:$0x7]
    %s2381 = scalar_lea.vmem [#allocation0], 424
    %2382 = vst [vmem:[%s2381] ss:$40 sm:$0x7] %v2380
    %s2383 = scalar_lea.vmem [#allocation1], 792
    %v2384 = vld [vmem:[%s2383] ss:$2 sm:$0x7]
    %s2385 = scalar_lea.vmem [#allocation0], 417
    %2386 = vst [vmem:[%s2385] ss:$40 sm:$0x7] %v2384
    %s2387 = scalar_lea.vmem [#allocation1], 800
    %v2388 = vld [vmem:[%s2387] ss:$2 sm:$0x7]
    %s2389 = scalar_lea.vmem [#allocation0], 425
    %2390 = vst [vmem:[%s2389] ss:$40 sm:$0x7] %v2388
    %s2391 = scalar_lea.vmem [#allocation1], 816
    %v2392 = vld [vmem:[%s2391] ss:$2 sm:$0x7]
    %s2393 = scalar_lea.vmem [#allocation0], 418
    %2394 = vst [vmem:[%s2393] ss:$40 sm:$0x7] %v2392
    %s2395 = scalar_lea.vmem [#allocation1], 824
    %v2396 = vld [vmem:[%s2395] ss:$2 sm:$0x7]
    %s2397 = scalar_lea.vmem [#allocation0], 426
    %2398 = vst [vmem:[%s2397] ss:$40 sm:$0x7] %v2396
    %s2399 = scalar_lea.vmem [#allocation1], 840
    %v2400 = vld [vmem:[%s2399] ss:$2 sm:$0x7]
    %s2401 = scalar_lea.vmem [#allocation0], 419
    %2402 = vst [vmem:[%s2401] ss:$40 sm:$0x7] %v2400
    %s2403 = scalar_lea.vmem [#allocation1], 848
    %v2404 = vld [vmem:[%s2403] ss:$2 sm:$0x7]
    %s2405 = scalar_lea.vmem [#allocation0], 427
    %2406 = vst [vmem:[%s2405] ss:$40 sm:$0x7] %v2404
    %s2407 = scalar_lea.vmem [#allocation1], 864
    %v2408 = vld [vmem:[%s2407] ss:$2 sm:$0x7]
    %s2409 = scalar_lea.vmem [#allocation0], 420
    %2410 = vst [vmem:[%s2409] ss:$40 sm:$0x7] %v2408
    %s2411 = scalar_lea.vmem [#allocation1], 872
    %v2412 = vld [vmem:[%s2411] ss:$2 sm:$0x7]
    %s2413 = scalar_lea.vmem [#allocation0], 428
    %2414 = vst [vmem:[%s2413] ss:$40 sm:$0x7] %v2412
    %s2415 = scalar_lea.vmem [#allocation1], 888
    %v2416 = vld [vmem:[%s2415] ss:$2 sm:$0x7]
    %s2417 = scalar_lea.vmem [#allocation0], 421
    %2418 = vst [vmem:[%s2417] ss:$40 sm:$0x7] %v2416
    %s2419 = scalar_lea.vmem [#allocation1], 896
    %v2420 = vld [vmem:[%s2419] ss:$2 sm:$0x7]
    %s2421 = scalar_lea.vmem [#allocation0], 429
    %2422 = vst [vmem:[%s2421] ss:$40 sm:$0x7] %v2420
    %s2423 = scalar_lea.vmem [#allocation1], 912
    %v2424 = vld [vmem:[%s2423] ss:$2 sm:$0x7]
    %s2425 = scalar_lea.vmem [#allocation0], 422
    %2426 = vst [vmem:[%s2425] ss:$40 sm:$0x7] %v2424
    %s2427 = scalar_lea.vmem [#allocation1], 920
    %v2428 = vld [vmem:[%s2427] ss:$2 sm:$0x7]
    %s2429 = scalar_lea.vmem [#allocation0], 430
    %2430 = vst [vmem:[%s2429] ss:$40 sm:$0x7] %v2428
    %s2431 = scalar_lea.vmem [#allocation1], 936
    %v2432 = vld [vmem:[%s2431] ss:$2 sm:$0x7]
    %s2433 = scalar_lea.vmem [#allocation0], 423
    %2434 = vst [vmem:[%s2433] ss:$40 sm:$0x7] %v2432
    %s2435 = scalar_lea.vmem [#allocation1], 944
    %v2436 = vld [vmem:[%s2435] ss:$2 sm:$0x7]
    %s2437 = scalar_lea.vmem [#allocation0], 431
    %2438 = vst [vmem:[%s2437] ss:$40 sm:$0x7] %v2436
    %s2439 = scalar_lea.vmem [#allocation1], 3
    %v2440 = vld [vmem:[%s2439] ss:$24 sm:$0xf]
    %s2441 = scalar_lea.vmem [#allocation1], 3
    %v2442 = vld [vmem:[%s2441] ss:$24 sm:$0xf0]
    %vm2443 = vcmask 1047556
    %v2444 = vsel %vm2443, %v2442, %v2440
    %s2445 = scalar_lea.vmem [#allocation1], 11
    %v2446 = vld [vmem:[%s2445] ss:$24 sm:$0xf]
    %s2447 = scalar_lea.vmem [#allocation1], 11
    %v2448 = vld [vmem:[%s2447] ss:$24 sm:$0xf0]
    %vm2449 = vcmask 1047556
    %v2450 = vsel %vm2449, %v2448, %v2446
    %vm2451 = vcmask 523264
    %v2452 = vsel %vm2451, %v2450, %v2444
    %2453 = vrot.lane.b32.xlu0 %v2452, 64
    %v2454 = vpop.permute.xlu0 %2453
    %vm2455 = vcmask 523264
    %s2456 = scalar_lea.vmem [#allocation0], 64
    %2457 = vst.msk [vmem:[%s2456] sm:$0xff] %vm2455, %v2454
    %vm2458 = vcmask 1048064
    %s2459 = scalar_lea.vmem [#allocation0], 64
    %2460 = vst.msk [vmem:[%s2459] sm:$0xff] %vm2458, %v2454
    %s2461 = scalar_lea.vmem [#allocation1], 9
    %v2462 = vld [vmem:[%s2461] ss:$24 sm:$0xf]
    %s2463 = scalar_lea.vmem [#allocation1], 9
    %v2464 = vld [vmem:[%s2463] ss:$24 sm:$0xf0]
    %vm2465 = vcmask 1047556
    %v2466 = vsel %vm2465, %v2464, %v2462
    %s2467 = scalar_lea.vmem [#allocation1], 17
    %v2468 = vld [vmem:[%s2467] ss:$24 sm:$0xf]
    %s2469 = scalar_lea.vmem [#allocation1], 17
    %v2470 = vld [vmem:[%s2469] ss:$24 sm:$0xf0]
    %vm2471 = vcmask 1047556
    %v2472 = vsel %vm2471, %v2470, %v2468
    %vm2473 = vcmask 523264
    %v2474 = vsel %vm2473, %v2472, %v2466
    %2475 = vrot.lane.b32.xlu0 %v2474, 64
    %v2476 = vpop.permute.xlu0 %2475
    %vm2477 = vcmask 523264
    %s2478 = scalar_lea.vmem [#allocation0], 32
    %2479 = vst.msk [vmem:[%s2478] sm:$0xff] %vm2477, %v2476
    %vm2480 = vcmask 1048064
    %s2481 = scalar_lea.vmem [#allocation0], 32
    %2482 = vst.msk [vmem:[%s2481] sm:$0xff] %vm2480, %v2476
    %s2483 = scalar_lea.vmem [#allocation1], 193
    %v2484 = vld [vmem:[%s2483] ss:$24 sm:$0xf]
    %s2485 = scalar_lea.vmem [#allocation1], 193
    %v2486 = vld [vmem:[%s2485] ss:$24 sm:$0xf0]
    %vm2487 = vcmask 1047556
    %v2488 = vsel %vm2487, %v2486, %v2484
    %s2489 = scalar_lea.vmem [#allocation1], 195
    %v2490 = vld [vmem:[%s2489] ss:$24 sm:$0xf]
    %s2491 = scalar_lea.vmem [#allocation1], 195
    %v2492 = vld [vmem:[%s2491] ss:$24 sm:$0xf0]
    %vm2493 = vcmask 1047556
    %v2494 = vsel %vm2493, %v2492, %v2490
    %vm2495 = vcmask 523264
    %v2496 = vsel %vm2495, %v2494, %v2488
    %2497 = vrot.lane.b32.xlu0 %v2496, 64
    %v2498 = vpop.permute.xlu0 %2497
    %vm2499 = vcmask 523264
    %s2500 = scalar_lea.vmem [#allocation0], 128
    %2501 = vst.msk [vmem:[%s2500] sm:$0xff] %vm2499, %v2498
    %vm2502 = vcmask 1048064
    %s2503 = scalar_lea.vmem [#allocation0], 160
    %2504 = vst.msk [vmem:[%s2503] sm:$0xff] %vm2502, %v2498
    %s2505 = scalar_lea.vmem [#allocation1], 587
    %v2506 = vld [vmem:[%s2505] ss:$24 sm:$0xf]
    %s2507 = scalar_lea.vmem [#allocation1], 587
    %v2508 = vld [vmem:[%s2507] ss:$24 sm:$0xf0]
    %vm2509 = vcmask 1047556
    %v2510 = vsel %vm2509, %v2508, %v2506
    %s2511 = scalar_lea.vmem [#allocation1], 201
    %v2512 = vld [vmem:[%s2511] ss:$24 sm:$0xf]
    %s2513 = scalar_lea.vmem [#allocation1], 201
    %v2514 = vld [vmem:[%s2513] ss:$24 sm:$0xf0]
    %vm2515 = vcmask 1047556
    %v2516 = vsel %vm2515, %v2514, %v2512
    %vm2517 = vcmask 523264
    %v2518 = vsel %vm2517, %v2516, %v2510
    %2519 = vrot.lane.b32.xlu0 %v2518, 64
    %v2520 = vpop.permute.xlu0 %2519
    %vm2521 = vcmask 523264
    %s2522 = scalar_lea.vmem [#allocation0], 384
    %2523 = vst.msk [vmem:[%s2522] sm:$0xff] %vm2521, %v2520
    %vm2524 = vcmask 1048064
    %s2525 = scalar_lea.vmem [#allocation0], 128
    %2526 = vst.msk [vmem:[%s2525] sm:$0xff] %vm2524, %v2520
    %s2527 = scalar_lea.vmem [#allocation1], 771
    %v2528 = vld [vmem:[%s2527] ss:$24 sm:$0xf]
    %s2529 = scalar_lea.vmem [#allocation1], 771
    %v2530 = vld [vmem:[%s2529] ss:$24 sm:$0xf0]
    %vm2531 = vcmask 1047556
    %v2532 = vsel %vm2531, %v2530, %v2528
    %s2533 = scalar_lea.vmem [#allocation1], 385
    %v2534 = vld [vmem:[%s2533] ss:$24 sm:$0xf]
    %s2535 = scalar_lea.vmem [#allocation1], 385
    %v2536 = vld [vmem:[%s2535] ss:$24 sm:$0xf0]
    %vm2537 = vcmask 1047556
    %v2538 = vsel %vm2537, %v2536, %v2534
    %vm2539 = vcmask 523264
    %v2540 = vsel %vm2539, %v2538, %v2532
    %2541 = vrot.lane.b32.xlu0 %v2540, 64
    %v2542 = vpop.permute.xlu0 %2541
    %vm2543 = vcmask 523264
    %s2544 = scalar_lea.vmem [#allocation0], 480
    %2545 = vst.msk [vmem:[%s2544] sm:$0xff] %vm2543, %v2542
    %vm2546 = vcmask 1048064
    %s2547 = scalar_lea.vmem [#allocation0], 224
    %2548 = vst.msk [vmem:[%s2547] sm:$0xff] %vm2546, %v2542
    %s2549 = scalar_lea.vmem [#allocation1], 777
    %v2550 = vld [vmem:[%s2549] ss:$24 sm:$0xf]
    %s2551 = scalar_lea.vmem [#allocation1], 777
    %v2552 = vld [vmem:[%s2551] ss:$24 sm:$0xf0]
    %vm2553 = vcmask 1047556
    %v2554 = vsel %vm2553, %v2552, %v2550
    %s2555 = scalar_lea.vmem [#allocation1], 595
    %v2556 = vld [vmem:[%s2555] ss:$24 sm:$0xf]
    %s2557 = scalar_lea.vmem [#allocation1], 595
    %v2558 = vld [vmem:[%s2557] ss:$24 sm:$0xf0]
    %vm2559 = vcmask 1047556
    %v2560 = vsel %vm2559, %v2558, %v2556
    %vm2561 = vcmask 523264
    %v2562 = vsel %vm2561, %v2560, %v2554
    %2563 = vrot.lane.b32.xlu0 %v2562, 64
    %v2564 = vpop.permute.xlu0 %2563
    %vm2565 = vcmask 523264
    %s2566 = scalar_lea.vmem [#allocation0], 448
    %2567 = vst.msk [vmem:[%s2566] sm:$0xff] %vm2565, %v2564
    %vm2568 = vcmask 1048064
    %s2569 = scalar_lea.vmem [#allocation0], 384
    %2570 = vst.msk [vmem:[%s2569] sm:$0xff] %vm2568, %v2564
    %s2571 = scalar_lea.vmem [#allocation1], 11
    %v2572 = vld [vmem:[%s2571] ss:$24 sm:$0xf]
    %s2573 = scalar_lea.vmem [#allocation1], 11
    %v2574 = vld [vmem:[%s2573] ss:$24 sm:$0xf0]
    %vm2575 = vcmask 1047556
    %v2576 = vsel %vm2575, %v2574, %v2572
    %s2577 = scalar_lea.vmem [#allocation1], 779
    %v2578 = vld [vmem:[%s2577] ss:$24 sm:$0xf]
    %s2579 = scalar_lea.vmem [#allocation1], 779
    %v2580 = vld [vmem:[%s2579] ss:$24 sm:$0xf0]
    %vm2581 = vcmask 1047556
    %v2582 = vsel %vm2581, %v2580, %v2578
    %vm2583 = vcmask 523264
    %v2584 = vsel %vm2583, %v2582, %v2576
    %2585 = vrot.lane.b32.xlu0 %v2584, 64
    %v2586 = vpop.permute.xlu0 %2585
    %vm2587 = vcmask 523264
    %s2588 = scalar_lea.vmem [#allocation0], 72
    %2589 = vst.msk [vmem:[%s2588] sm:$0xff] %vm2587, %v2586
    %vm2590 = vcmask 1048064
    %s2591 = scalar_lea.vmem [#allocation0], 480
    %2592 = vst.msk [vmem:[%s2591] sm:$0xff] %vm2590, %v2586
    %s2593 = scalar_lea.vmem [#allocation1], 195
    %v2594 = vld [vmem:[%s2593] ss:$24 sm:$0xf]
    %s2595 = scalar_lea.vmem [#allocation1], 195
    %v2596 = vld [vmem:[%s2595] ss:$24 sm:$0xf0]
    %vm2597 = vcmask 1047556
    %v2598 = vsel %vm2597, %v2596, %v2594
    %s2599 = scalar_lea.vmem [#allocation1], 785
    %v2600 = vld [vmem:[%s2599] ss:$24 sm:$0xf]
    %s2601 = scalar_lea.vmem [#allocation1], 785
    %v2602 = vld [vmem:[%s2601] ss:$24 sm:$0xf0]
    %vm2603 = vcmask 1047556
    %v2604 = vsel %vm2603, %v2602, %v2600
    %vm2605 = vcmask 523264
    %v2606 = vsel %vm2605, %v2604, %v2598
    %2607 = vrot.lane.b32.xlu0 %v2606, 64
    %v2608 = vpop.permute.xlu0 %2607
    %vm2609 = vcmask 523264
    %s2610 = scalar_lea.vmem [#allocation0], 168
    %2611 = vst.msk [vmem:[%s2610] sm:$0xff] %vm2609, %v2608
    %vm2612 = vcmask 1048064
    %s2613 = scalar_lea.vmem [#allocation0], 448
    %2614 = vst.msk [vmem:[%s2613] sm:$0xff] %vm2612, %v2608
    %s2615 = scalar_lea.vmem [#allocation1], 201
    %v2616 = vld [vmem:[%s2615] ss:$24 sm:$0xf]
    %s2617 = scalar_lea.vmem [#allocation1], 201
    %v2618 = vld [vmem:[%s2617] ss:$24 sm:$0xf0]
    %vm2619 = vcmask 1047556
    %v2620 = vsel %vm2619, %v2618, %v2616
    %s2621 = scalar_lea.vmem [#allocation1], 19
    %v2622 = vld [vmem:[%s2621] ss:$24 sm:$0xf]
    %s2623 = scalar_lea.vmem [#allocation1], 19
    %v2624 = vld [vmem:[%s2623] ss:$24 sm:$0xf0]
    %vm2625 = vcmask 1047556
    %v2626 = vsel %vm2625, %v2624, %v2622
    %vm2627 = vcmask 523264
    %v2628 = vsel %vm2627, %v2626, %v2620
    %2629 = vrot.lane.b32.xlu0 %v2628, 64
    %v2630 = vpop.permute.xlu0 %2629
    %vm2631 = vcmask 523264
    %s2632 = scalar_lea.vmem [#allocation0], 136
    %2633 = vst.msk [vmem:[%s2632] sm:$0xff] %vm2631, %v2630
    %vm2634 = vcmask 1048064
    %s2635 = scalar_lea.vmem [#allocation0], 72
    %2636 = vst.msk [vmem:[%s2635] sm:$0xff] %vm2634, %v2630
    %s2637 = scalar_lea.vmem [#allocation1], 385
    %v2638 = vld [vmem:[%s2637] ss:$24 sm:$0xf]
    %s2639 = scalar_lea.vmem [#allocation1], 385
    %v2640 = vld [vmem:[%s2639] ss:$24 sm:$0xf0]
    %vm2641 = vcmask 1047556
    %v2642 = vsel %vm2641, %v2640, %v2638
    %s2643 = scalar_lea.vmem [#allocation1], 203
    %v2644 = vld [vmem:[%s2643] ss:$24 sm:$0xf]
    %s2645 = scalar_lea.vmem [#allocation1], 203
    %v2646 = vld [vmem:[%s2645] ss:$24 sm:$0xf0]
    %vm2647 = vcmask 1047556
    %v2648 = vsel %vm2647, %v2646, %v2644
    %vm2649 = vcmask 523264
    %v2650 = vsel %vm2649, %v2648, %v2642
    %2651 = vrot.lane.b32.xlu0 %v2650, 64
    %v2652 = vpop.permute.xlu0 %2651
    %vm2653 = vcmask 523264
    %s2654 = scalar_lea.vmem [#allocation0], 232
    %2655 = vst.msk [vmem:[%s2654] sm:$0xff] %vm2653, %v2652
    %vm2656 = vcmask 1048064
    %s2657 = scalar_lea.vmem [#allocation0], 168
    %2658 = vst.msk [vmem:[%s2657] sm:$0xff] %vm2656, %v2652
    %s2659 = scalar_lea.vmem [#allocation1], 779
    %v2660 = vld [vmem:[%s2659] ss:$24 sm:$0xf]
    %s2661 = scalar_lea.vmem [#allocation1], 779
    %v2662 = vld [vmem:[%s2661] ss:$24 sm:$0xf0]
    %vm2663 = vcmask 1047556
    %v2664 = vsel %vm2663, %v2662, %v2660
    %s2665 = scalar_lea.vmem [#allocation1], 209
    %v2666 = vld [vmem:[%s2665] ss:$24 sm:$0xf]
    %s2667 = scalar_lea.vmem [#allocation1], 209
    %v2668 = vld [vmem:[%s2667] ss:$24 sm:$0xf0]
    %vm2669 = vcmask 1047556
    %v2670 = vsel %vm2669, %v2668, %v2666
    %vm2671 = vcmask 523264
    %v2672 = vsel %vm2671, %v2670, %v2664
    %2673 = vrot.lane.b32.xlu0 %v2672, 64
    %v2674 = vpop.permute.xlu0 %2673
    %vm2675 = vcmask 523264
    %s2676 = scalar_lea.vmem [#allocation0], 488
    %2677 = vst.msk [vmem:[%s2676] sm:$0xff] %vm2675, %v2674
    %vm2678 = vcmask 1048064
    %s2679 = scalar_lea.vmem [#allocation0], 136
    %2680 = vst.msk [vmem:[%s2679] sm:$0xff] %vm2678, %v2674
    %s2681 = scalar_lea.vmem [#allocation1], 203
    %v2682 = vld [vmem:[%s2681] ss:$24 sm:$0xf]
    %s2683 = scalar_lea.vmem [#allocation1], 203
    %v2684 = vld [vmem:[%s2683] ss:$24 sm:$0xf0]
    %vm2685 = vcmask 1047556
    %v2686 = vsel %vm2685, %v2684, %v2682
    %s2687 = scalar_lea.vmem [#allocation1], 387
    %v2688 = vld [vmem:[%s2687] ss:$24 sm:$0xf]
    %s2689 = scalar_lea.vmem [#allocation1], 387
    %v2690 = vld [vmem:[%s2689] ss:$24 sm:$0xf0]
    %vm2691 = vcmask 1047556
    %v2692 = vsel %vm2691, %v2690, %v2688
    %vm2693 = vcmask 523264
    %v2694 = vsel %vm2693, %v2692, %v2686
    %2695 = vrot.lane.b32.xlu0 %v2694, 64
    %v2696 = vpop.permute.xlu0 %2695
    %vm2697 = vcmask 523264
    %s2698 = scalar_lea.vmem [#allocation0], 176
    %2699 = vst.msk [vmem:[%s2698] sm:$0xff] %vm2697, %v2696
    %vm2700 = vcmask 1048064
    %s2701 = scalar_lea.vmem [#allocation0], 264
    %2702 = vst.msk [vmem:[%s2701] sm:$0xff] %vm2700, %v2696
    %s2703 = scalar_lea.vmem [#allocation1], 387
    %v2704 = vld [vmem:[%s2703] ss:$24 sm:$0xf]
    %s2705 = scalar_lea.vmem [#allocation1], 387
    %v2706 = vld [vmem:[%s2705] ss:$24 sm:$0xf0]
    %vm2707 = vcmask 1047556
    %v2708 = vsel %vm2707, %v2706, %v2704
    %s2709 = scalar_lea.vmem [#allocation1], 393
    %v2710 = vld [vmem:[%s2709] ss:$24 sm:$0xf]
    %s2711 = scalar_lea.vmem [#allocation1], 393
    %v2712 = vld [vmem:[%s2711] ss:$24 sm:$0xf0]
    %vm2713 = vcmask 1047556
    %v2714 = vsel %vm2713, %v2712, %v2710
    %vm2715 = vcmask 523264
    %v2716 = vsel %vm2715, %v2714, %v2708
    %2717 = vrot.lane.b32.xlu0 %v2716, 64
    %v2718 = vpop.permute.xlu0 %2717
    %vm2719 = vcmask 523264
    %s2720 = scalar_lea.vmem [#allocation0], 272
    %2721 = vst.msk [vmem:[%s2720] sm:$0xff] %vm2719, %v2718
    %vm2722 = vcmask 1048064
    %s2723 = scalar_lea.vmem [#allocation0], 232
    %2724 = vst.msk [vmem:[%s2723] sm:$0xff] %vm2722, %v2718
    %s2725 = scalar_lea.vmem [#allocation1], 393
    %v2726 = vld [vmem:[%s2725] ss:$24 sm:$0xf]
    %s2727 = scalar_lea.vmem [#allocation1], 393
    %v2728 = vld [vmem:[%s2727] ss:$24 sm:$0xf0]
    %vm2729 = vcmask 1047556
    %v2730 = vsel %vm2729, %v2728, %v2726
    %s2731 = scalar_lea.vmem [#allocation1], 577
    %v2732 = vld [vmem:[%s2731] ss:$24 sm:$0xf]
    %s2733 = scalar_lea.vmem [#allocation1], 577
    %v2734 = vld [vmem:[%s2733] ss:$24 sm:$0xf0]
    %vm2735 = vcmask 1047556
    %v2736 = vsel %vm2735, %v2734, %v2732
    %vm2737 = vcmask 523264
    %v2738 = vsel %vm2737, %v2736, %v2730
    %2739 = vrot.lane.b32.xlu0 %v2738, 64
    %v2740 = vpop.permute.xlu0 %2739
    %vm2741 = vcmask 523264
    %s2742 = scalar_lea.vmem [#allocation0], 240
    %2743 = vst.msk [vmem:[%s2742] sm:$0xff] %vm2741, %v2740
    %vm2744 = vcmask 1048064
    %s2745 = scalar_lea.vmem [#allocation0], 328
    %2746 = vst.msk [vmem:[%s2745] sm:$0xff] %vm2744, %v2740
    %s2747 = scalar_lea.vmem [#allocation1], 577
    %v2748 = vld [vmem:[%s2747] ss:$24 sm:$0xf]
    %s2749 = scalar_lea.vmem [#allocation1], 577
    %v2750 = vld [vmem:[%s2749] ss:$24 sm:$0xf0]
    %vm2751 = vcmask 1047556
    %v2752 = vsel %vm2751, %v2750, %v2748
    %s2753 = scalar_lea.vmem [#allocation1], 787
    %v2754 = vld [vmem:[%s2753] ss:$24 sm:$0xf]
    %s2755 = scalar_lea.vmem [#allocation1], 787
    %v2756 = vld [vmem:[%s2755] ss:$24 sm:$0xf0]
    %vm2757 = vcmask 1047556
    %v2758 = vsel %vm2757, %v2756, %v2754
    %vm2759 = vcmask 523264
    %v2760 = vsel %vm2759, %v2758, %v2752
    %2761 = vrot.lane.b32.xlu0 %v2760, 64
    %v2762 = vpop.permute.xlu0 %2761
    %vm2763 = vcmask 523264
    %s2764 = scalar_lea.vmem [#allocation0], 336
    %2765 = vst.msk [vmem:[%s2764] sm:$0xff] %vm2763, %v2762
    %vm2766 = vcmask 1048064
    %s2767 = scalar_lea.vmem [#allocation0], 488
    %2768 = vst.msk [vmem:[%s2767] sm:$0xff] %vm2766, %v2762
    %s2769 = scalar_lea.vmem [#allocation1], 1
    %v2770 = vld [vmem:[%s2769] ss:$24 sm:$0xf]
    %s2771 = scalar_lea.vmem [#allocation1], 1
    %v2772 = vld [vmem:[%s2771] ss:$24 sm:$0xf0]
    %vm2773 = vcmask 1047556
    %v2774 = vsel %vm2773, %v2772, %v2770
    %s2775 = scalar_lea.vmem [#allocation1], 1
    %v2776 = vld [vmem:[%s2775] ss:$24 sm:$0xf]
    %s2777 = scalar_lea.vmem [#allocation1], 1
    %v2778 = vld [vmem:[%s2777] ss:$24 sm:$0xf0]
    %vm2779 = vcmask 1047556
    %v2780 = vsel %vm2779, %v2778, %v2776
    %vm2781 = vcmask 523264
    %v2782 = vsel %vm2781, %v2780, %v2774
    %2783 = vrot.lane.b32.xlu0 %v2782, 64
    %v2784 = vpop.permute.xlu0 %2783
    %vm2785 = vcmask 523264
    %s2786 = scalar_lea.vmem [#allocation0], 24
    %2787 = vst.msk [vmem:[%s2786] sm:$0xff] %vm2785, %v2784
    %vm2788 = vcmask 1048064
    %s2789 = scalar_lea.vmem [#allocation0], 16
    %2790 = vst.msk [vmem:[%s2789] sm:$0xff] %vm2788, %v2784
    %s2791 = scalar_lea.vmem [#allocation1], 395
    %v2792 = vld [vmem:[%s2791] ss:$24 sm:$0xf]
    %s2793 = scalar_lea.vmem [#allocation1], 395
    %v2794 = vld [vmem:[%s2793] ss:$24 sm:$0xf0]
    %vm2795 = vcmask 1047556
    %v2796 = vsel %vm2795, %v2794, %v2792
    %s2797 = scalar_lea.vmem [#allocation1], 211
    %v2798 = vld [vmem:[%s2797] ss:$24 sm:$0xf]
    %s2799 = scalar_lea.vmem [#allocation1], 211
    %v2800 = vld [vmem:[%s2799] ss:$24 sm:$0xf0]
    %vm2801 = vcmask 1047556
    %v2802 = vsel %vm2801, %v2800, %v2798
    %vm2803 = vcmask 523264
    %v2804 = vsel %vm2803, %v2802, %v2796
    %2805 = vrot.lane.b32.xlu0 %v2804, 64
    %v2806 = vpop.permute.xlu0 %2805
    %vm2807 = vcmask 523264
    %s2808 = scalar_lea.vmem [#allocation0], 280
    %2809 = vst.msk [vmem:[%s2808] sm:$0xff] %vm2807, %v2806
    %vm2810 = vcmask 1048064
    %s2811 = scalar_lea.vmem [#allocation0], 176
    %2812 = vst.msk [vmem:[%s2811] sm:$0xff] %vm2810, %v2806
    %s2813 = scalar_lea.vmem [#allocation1], 579
    %v2814 = vld [vmem:[%s2813] ss:$24 sm:$0xf]
    %s2815 = scalar_lea.vmem [#allocation1], 579
    %v2816 = vld [vmem:[%s2815] ss:$24 sm:$0xf0]
    %vm2817 = vcmask 1047556
    %v2818 = vsel %vm2817, %v2816, %v2814
    %s2819 = scalar_lea.vmem [#allocation1], 395
    %v2820 = vld [vmem:[%s2819] ss:$24 sm:$0xf]
    %s2821 = scalar_lea.vmem [#allocation1], 395
    %v2822 = vld [vmem:[%s2821] ss:$24 sm:$0xf0]
    %vm2823 = vcmask 1047556
    %v2824 = vsel %vm2823, %v2822, %v2820
    %vm2825 = vcmask 523264
    %v2826 = vsel %vm2825, %v2824, %v2818
    %2827 = vrot.lane.b32.xlu0 %v2826, 64
    %v2828 = vpop.permute.xlu0 %2827
    %vm2829 = vcmask 523264
    %s2830 = scalar_lea.vmem [#allocation0], 376
    %2831 = vst.msk [vmem:[%s2830] sm:$0xff] %vm2829, %v2828
    %vm2832 = vcmask 1048064
    %s2833 = scalar_lea.vmem [#allocation0], 272
    %2834 = vst.msk [vmem:[%s2833] sm:$0xff] %vm2832, %v2828
    %s2835 = scalar_lea.vmem [#allocation1], 585
    %v2836 = vld [vmem:[%s2835] ss:$24 sm:$0xf]
    %s2837 = scalar_lea.vmem [#allocation1], 585
    %v2838 = vld [vmem:[%s2837] ss:$24 sm:$0xf0]
    %vm2839 = vcmask 1047556
    %v2840 = vsel %vm2839, %v2838, %v2836
    %s2841 = scalar_lea.vmem [#allocation1], 401
    %v2842 = vld [vmem:[%s2841] ss:$24 sm:$0xf]
    %s2843 = scalar_lea.vmem [#allocation1], 401
    %v2844 = vld [vmem:[%s2843] ss:$24 sm:$0xf0]
    %vm2845 = vcmask 1047556
    %v2846 = vsel %vm2845, %v2844, %v2842
    %vm2847 = vcmask 523264
    %v2848 = vsel %vm2847, %v2846, %v2840
    %2849 = vrot.lane.b32.xlu0 %v2848, 64
    %v2850 = vpop.permute.xlu0 %2849
    %vm2851 = vcmask 523264
    %s2852 = scalar_lea.vmem [#allocation0], 344
    %2853 = vst.msk [vmem:[%s2852] sm:$0xff] %vm2851, %v2850
    %vm2854 = vcmask 1048064
    %s2855 = scalar_lea.vmem [#allocation0], 240
    %2856 = vst.msk [vmem:[%s2855] sm:$0xff] %vm2854, %v2850
    %s2857 = scalar_lea.vmem [#allocation1], 769
    %v2858 = vld [vmem:[%s2857] ss:$24 sm:$0xf]
    %s2859 = scalar_lea.vmem [#allocation1], 769
    %v2860 = vld [vmem:[%s2859] ss:$24 sm:$0xf0]
    %vm2861 = vcmask 1047556
    %v2862 = vsel %vm2861, %v2860, %v2858
    %s2863 = scalar_lea.vmem [#allocation1], 579
    %v2864 = vld [vmem:[%s2863] ss:$24 sm:$0xf]
    %s2865 = scalar_lea.vmem [#allocation1], 579
    %v2866 = vld [vmem:[%s2865] ss:$24 sm:$0xf0]
    %vm2867 = vcmask 1047556
    %v2868 = vsel %vm2867, %v2866, %v2864
    %vm2869 = vcmask 523264
    %v2870 = vsel %vm2869, %v2868, %v2862
    %2871 = vrot.lane.b32.xlu0 %v2870, 64
    %v2872 = vpop.permute.xlu0 %2871
    %vm2873 = vcmask 523264
    %s2874 = scalar_lea.vmem [#allocation0], 440
    %2875 = vst.msk [vmem:[%s2874] sm:$0xff] %vm2873, %v2872
    %vm2876 = vcmask 1048064
    %s2877 = scalar_lea.vmem [#allocation0], 368
    %2878 = vst.msk [vmem:[%s2877] sm:$0xff] %vm2876, %v2872
    %s2879 = scalar_lea.vmem [#allocation1], 585
    %v2880 = vld [vmem:[%s2879] ss:$24 sm:$0xf]
    %s2881 = scalar_lea.vmem [#allocation1], 585
    %v2882 = vld [vmem:[%s2881] ss:$24 sm:$0xf0]
    %vm2883 = vcmask 1047556
    %v2884 = vsel %vm2883, %v2882, %v2880
    %2885 = vrot.lane.b32.xlu0 %v2884, 64
    %v2886 = vpop.permute.xlu0 %2885
    %vm2887 = vcmask 1048064
    %s2888 = scalar_lea.vmem [#allocation0], 336
    %2889 = vst.msk [vmem:[%s2888] sm:$0xff] %vm2887, %v2886
    %s2890 = scalar_lea.vmem [#allocation1], 769
    %v2891 = vld [vmem:[%s2890] ss:$24 sm:$0xf]
    %s2892 = scalar_lea.vmem [#allocation1], 769
    %v2893 = vld [vmem:[%s2892] ss:$24 sm:$0xf0]
    %vm2894 = vcmask 1047556
    %v2895 = vsel %vm2894, %v2893, %v2891
    %2896 = vrot.lane.b32.xlu0 %v2895, 64
    %v2897 = vpop.permute.xlu0 %2896
    %vm2898 = vcmask 1048064
    %s2899 = scalar_lea.vmem [#allocation0], 432
    %2900 = vst.msk [vmem:[%s2899] sm:$0xff] %vm2898, %v2897
    %s2901 = scalar_lea.vmem [#allocation1], 3
    %v2902 = vld [vmem:[%s2901] ss:$24 sm:$0xf]
    %s2903 = scalar_lea.vmem [#allocation1], 3
    %v2904 = vld [vmem:[%s2903] ss:$24 sm:$0xf0]
    %vm2905 = vcmask 1047556
    %v2906 = vsel %vm2905, %v2904, %v2902
    %2907 = vrot.lane.b32.xlu0 %v2906, 64
    %v2908 = vpop.permute.xlu0 %2907
    %vm2909 = vcmask 1048064
    %s2910 = scalar_lea.vmem [#allocation0], 56
    %2911 = vst.msk [vmem:[%s2910] sm:$0xff] %vm2909, %v2908
    %s2912 = scalar_lea.vmem [#allocation1], 9
    %v2913 = vld [vmem:[%s2912] ss:$24 sm:$0xf]
    %s2914 = scalar_lea.vmem [#allocation1], 9
    %v2915 = vld [vmem:[%s2914] ss:$24 sm:$0xf0]
    %vm2916 = vcmask 1047556
    %v2917 = vsel %vm2916, %v2915, %v2913
    %2918 = vrot.lane.b32.xlu0 %v2917, 64
    %v2919 = vpop.permute.xlu0 %2918
    %vm2920 = vcmask 1048064
    %s2921 = scalar_lea.vmem [#allocation0], 24
    %2922 = vst.msk [vmem:[%s2921] sm:$0xff] %vm2920, %v2919
    %s2923 = scalar_lea.vmem [#allocation1], 193
    %v2924 = vld [vmem:[%s2923] ss:$24 sm:$0xf]
    %s2925 = scalar_lea.vmem [#allocation1], 193
    %v2926 = vld [vmem:[%s2925] ss:$24 sm:$0xf0]
    %vm2927 = vcmask 1047556
    %v2928 = vsel %vm2927, %v2926, %v2924
    %2929 = vrot.lane.b32.xlu0 %v2928, 64
    %v2930 = vpop.permute.xlu0 %2929
    %vm2931 = vcmask 1048064
    %s2932 = scalar_lea.vmem [#allocation0], 120
    %2933 = vst.msk [vmem:[%s2932] sm:$0xff] %vm2931, %v2930
    %s2934 = scalar_lea.vmem [#allocation1], 403
    %v2935 = vld [vmem:[%s2934] ss:$24 sm:$0xf]
    %s2936 = scalar_lea.vmem [#allocation1], 403
    %v2937 = vld [vmem:[%s2936] ss:$24 sm:$0xf0]
    %vm2938 = vcmask 1047556
    %v2939 = vsel %vm2938, %v2937, %v2935
    %2940 = vrot.lane.b32.xlu0 %v2939, 64
    %v2941 = vpop.permute.xlu0 %2940
    %vm2942 = vcmask 1048064
    %s2943 = scalar_lea.vmem [#allocation0], 280
    %2944 = vst.msk [vmem:[%s2943] sm:$0xff] %vm2942, %v2941
    %s2945 = scalar_lea.vmem [#allocation1], 587
    %v2946 = vld [vmem:[%s2945] ss:$24 sm:$0xf]
    %s2947 = scalar_lea.vmem [#allocation1], 587
    %v2948 = vld [vmem:[%s2947] ss:$24 sm:$0xf0]
    %vm2949 = vcmask 1047556
    %v2950 = vsel %vm2949, %v2948, %v2946
    %2951 = vrot.lane.b32.xlu0 %v2950, 64
    %v2952 = vpop.permute.xlu0 %2951
    %vm2953 = vcmask 1048064
    %s2954 = scalar_lea.vmem [#allocation0], 376
    %2955 = vst.msk [vmem:[%s2954] sm:$0xff] %vm2953, %v2952
    %s2956 = scalar_lea.vmem [#allocation1], 593
    %v2957 = vld [vmem:[%s2956] ss:$24 sm:$0xf]
    %s2958 = scalar_lea.vmem [#allocation1], 593
    %v2959 = vld [vmem:[%s2958] ss:$24 sm:$0xf0]
    %vm2960 = vcmask 1047556
    %v2961 = vsel %vm2960, %v2959, %v2957
    %2962 = vrot.lane.b32.xlu0 %v2961, 64
    %v2963 = vpop.permute.xlu0 %2962
    %vm2964 = vcmask 1048064
    %s2965 = scalar_lea.vmem [#allocation0], 344
    %2966 = vst.msk [vmem:[%s2965] sm:$0xff] %vm2964, %v2963
    %s2967 = scalar_lea.vmem [#allocation1], 771
    %v2968 = vld [vmem:[%s2967] ss:$24 sm:$0xf]
    %s2969 = scalar_lea.vmem [#allocation1], 771
    %v2970 = vld [vmem:[%s2969] ss:$24 sm:$0xf0]
    %vm2971 = vcmask 1047556
    %v2972 = vsel %vm2971, %v2970, %v2968
    %2973 = vrot.lane.b32.xlu0 %v2972, 64
    %v2974 = vpop.permute.xlu0 %2973
    %vm2975 = vcmask 1048064
    %s2976 = scalar_lea.vmem [#allocation0], 472
    %2977 = vst.msk [vmem:[%s2976] sm:$0xff] %vm2975, %v2974
    %s2978 = scalar_lea.vmem [#allocation1], 777
    %v2979 = vld [vmem:[%s2978] ss:$24 sm:$0xf]
    %s2980 = scalar_lea.vmem [#allocation1], 777
    %v2981 = vld [vmem:[%s2980] ss:$24 sm:$0xf0]
    %vm2982 = vcmask 1047556
    %v2983 = vsel %vm2982, %v2981, %v2979
    %2984 = vrot.lane.b32.xlu0 %v2983, 64
    %v2985 = vpop.permute.xlu0 %2984
    %vm2986 = vcmask 1048064
    %s2987 = scalar_lea.vmem [#allocation0], 440
    %2988 = vst.msk [vmem:[%s2987] sm:$0xff] %vm2986, %v2985
    %s2990 = smul.u32 4, 2
    %s2991 = sshllo.u32 0, %s2990
    %s2992 = sshrl.u32 %s2990, 1
    %v2993 = vld [vmem:[#allocation0] sm:%s2991]
    %v2994 = vpack.c.bf16 0.0, %v2993
    %s2995 = sshllo.u32 0, %s2992
    %2996 = vst [vmem:[%s1] sm:%s2995] %v2994
    %s2997 = scalar_lea.vmem [#allocation0], 8
    %v2998 = vld [vmem:[%s2997] sm:%s2991]
    %v2999 = vpack.c.bf16 0.0, %v2998
    %s3000 = sshllo.u32 0, %s2992
    %s3001 = scalar_lea.vmem %s1, 4
    %3002 = vst [vmem:[%s3001] sm:%s3000] %v2999
    %s3003 = scalar_lea.vmem [#allocation0], 16
    %v3004 = vld [vmem:[%s3003] sm:%s2991]
    %v3005 = vpack.c.bf16 0.0, %v3004
    %s3006 = sshllo.u32 0, %s2992
    %s3007 = smul.addr 4, 2
    %s3008 = scalar_lea.vmem %s1, %s3007
    %3009 = vst [vmem:[%s3008] sm:%s3006] %v3005
    %s3010 = scalar_lea.vmem [#allocation0], 24
    %v3011 = vld [vmem:[%s3010] sm:%s2991]
    %v3012 = vpack.c.bf16 0.0, %v3011
    %s3013 = sshllo.u32 0, %s2992
    %s3014 = smul.addr 4, 3
    %s3015 = scalar_lea.vmem %s1, %s3014
    %3016 = vst [vmem:[%s3015] sm:%s3013] %v3012
    %s3017 = scalar_lea.vmem [#allocation0], 32
    %v3018 = vld [vmem:[%s3017] sm:%s2991]
    %v3019 = vpack.c.bf16 0.0, %v3018
    %s3020 = sshllo.u32 0, %s2992
    %s3021 = smul.addr 4, 4
    %s3022 = scalar_lea.vmem %s1, %s3021
    %3023 = vst [vmem:[%s3022] sm:%s3020] %v3019
    %s3024 = scalar_lea.vmem [#allocation0], 40
    %v3025 = vld [vmem:[%s3024] sm:%s2991]
    %v3026 = vpack.c.bf16 0.0, %v3025
    %s3027 = sshllo.u32 0, %s2992
    %s3028 = smul.addr 4, 5
    %s3029 = scalar_lea.vmem %s1, %s3028
    %3030 = vst [vmem:[%s3029] sm:%s3027] %v3026
    %s3031 = scalar_lea.vmem [#allocation0], 48
    %v3032 = vld [vmem:[%s3031] sm:%s2991]
    %v3033 = vpack.c.bf16 0.0, %v3032
    %s3034 = sshllo.u32 0, %s2992
    %s3035 = smul.addr 4, 6
    %s3036 = scalar_lea.vmem %s1, %s3035
    %3037 = vst [vmem:[%s3036] sm:%s3034] %v3033
    %s3038 = scalar_lea.vmem [#allocation0], 56
    %v3039 = vld [vmem:[%s3038] sm:%s2991]
    %v3040 = vpack.c.bf16 0.0, %v3039
    %s3041 = sshllo.u32 0, %s2992
    %s3042 = smul.addr 4, 7
    %s3043 = scalar_lea.vmem %s1, %s3042
    %3044 = vst [vmem:[%s3043] sm:%s3041] %v3040
    %s3045 = scalar_lea.vmem [#allocation0], 64
    %v3046 = vld [vmem:[%s3045] sm:%s2991]
    %v3047 = vpack.c.bf16 0.0, %v3046
    %s3048 = sshllo.u32 0, %s2992
    %s3049 = smul.addr 4, 8
    %s3050 = scalar_lea.vmem %s1, %s3049
    %3051 = vst [vmem:[%s3050] sm:%s3048] %v3047
    %s3052 = scalar_lea.vmem [#allocation0], 72
    %v3053 = vld [vmem:[%s3052] sm:%s2991]
    %v3054 = vpack.c.bf16 0.0, %v3053
    %s3055 = sshllo.u32 0, %s2992
    %s3056 = smul.addr 4, 9
    %s3057 = scalar_lea.vmem %s1, %s3056
    %3058 = vst [vmem:[%s3057] sm:%s3055] %v3054
    %s3059 = scalar_lea.vmem [#allocation0], 80
    %v3060 = vld [vmem:[%s3059] sm:%s2991]
    %v3061 = vpack.c.bf16 0.0, %v3060
    %s3062 = sshllo.u32 0, %s2992
    %s3063 = smul.addr 4, 10
    %s3064 = scalar_lea.vmem %s1, %s3063
    %3065 = vst [vmem:[%s3064] sm:%s3062] %v3061
    %s3066 = scalar_lea.vmem [#allocation0], 88
    %v3067 = vld [vmem:[%s3066] sm:%s2991]
    %v3068 = vpack.c.bf16 0.0, %v3067
    %s3069 = sshllo.u32 0, %s2992
    %s3070 = smul.addr 4, 11
    %s3071 = scalar_lea.vmem %s1, %s3070
    %3072 = vst [vmem:[%s3071] sm:%s3069] %v3068
    %s3073 = scalar_lea.vmem [#allocation0], 96
    %v3074 = vld [vmem:[%s3073] sm:%s2991]
    %v3075 = vpack.c.bf16 0.0, %v3074
    %s3076 = sshllo.u32 0, %s2992
    %s3077 = smul.addr 4, 12
    %s3078 = scalar_lea.vmem %s1, %s3077
    %3079 = vst [vmem:[%s3078] sm:%s3076] %v3075
    %s3080 = scalar_lea.vmem [#allocation0], 104
    %v3081 = vld [vmem:[%s3080] sm:%s2991]
    %v3082 = vpack.c.bf16 0.0, %v3081
    %s3083 = sshllo.u32 0, %s2992
    %s3084 = smul.addr 4, 13
    %s3085 = scalar_lea.vmem %s1, %s3084
    %3086 = vst [vmem:[%s3085] sm:%s3083] %v3082
    %s3087 = scalar_lea.vmem [#allocation0], 112
    %v3088 = vld [vmem:[%s3087] sm:%s2991]
    %v3089 = vpack.c.bf16 0.0, %v3088
    %s3090 = sshllo.u32 0, %s2992
    %s3091 = smul.addr 4, 14
    %s3092 = scalar_lea.vmem %s1, %s3091
    %3093 = vst [vmem:[%s3092] sm:%s3090] %v3089
    %s3094 = scalar_lea.vmem [#allocation0], 120
    %v3095 = vld [vmem:[%s3094] sm:%s2991]
    %v3096 = vpack.c.bf16 0.0, %v3095
    %s3097 = sshllo.u32 0, %s2992
    %s3098 = smul.addr 4, 15
    %s3099 = scalar_lea.vmem %s1, %s3098
    %3100 = vst [vmem:[%s3099] sm:%s3097] %v3096
    %s3101 = scalar_lea.vmem [#allocation0], 128
    %v3102 = vld [vmem:[%s3101] sm:%s2991]
    %v3103 = vpack.c.bf16 0.0, %v3102
    %s3104 = sshllo.u32 0, %s2992
    %s3105 = smul.addr 4, 16
    %s3106 = scalar_lea.vmem %s1, %s3105
    %3107 = vst [vmem:[%s3106] sm:%s3104] %v3103
    %s3108 = scalar_lea.vmem [#allocation0], 136
    %v3109 = vld [vmem:[%s3108] sm:%s2991]
    %v3110 = vpack.c.bf16 0.0, %v3109
    %s3111 = sshllo.u32 0, %s2992
    %s3112 = smul.addr 4, 17
    %s3113 = scalar_lea.vmem %s1, %s3112
    %3114 = vst [vmem:[%s3113] sm:%s3111] %v3110
    %s3115 = scalar_lea.vmem [#allocation0], 144
    %v3116 = vld [vmem:[%s3115] sm:%s2991]
    %v3117 = vpack.c.bf16 0.0, %v3116
    %s3118 = sshllo.u32 0, %s2992
    %s3119 = smul.addr 4, 18
    %s3120 = scalar_lea.vmem %s1, %s3119
    %3121 = vst [vmem:[%s3120] sm:%s3118] %v3117
    %s3122 = scalar_lea.vmem [#allocation0], 152
    %v3123 = vld [vmem:[%s3122] sm:%s2991]
    %v3124 = vpack.c.bf16 0.0, %v3123
    %s3125 = sshllo.u32 0, %s2992
    %s3126 = smul.addr 4, 19
    %s3127 = scalar_lea.vmem %s1, %s3126
    %3128 = vst [vmem:[%s3127] sm:%s3125] %v3124
    %s3129 = scalar_lea.vmem [#allocation0], 160
    %v3130 = vld [vmem:[%s3129] sm:%s2991]
    %v3131 = vpack.c.bf16 0.0, %v3130
    %s3132 = sshllo.u32 0, %s2992
    %s3133 = smul.addr 4, 20
    %s3134 = scalar_lea.vmem %s1, %s3133
    %3135 = vst [vmem:[%s3134] sm:%s3132] %v3131
    %s3136 = scalar_lea.vmem [#allocation0], 168
    %v3137 = vld [vmem:[%s3136] sm:%s2991]
    %v3138 = vpack.c.bf16 0.0, %v3137
    %s3139 = sshllo.u32 0, %s2992
    %s3140 = smul.addr 4, 21
    %s3141 = scalar_lea.vmem %s1, %s3140
    %3142 = vst [vmem:[%s3141] sm:%s3139] %v3138
    %s3143 = scalar_lea.vmem [#allocation0], 176
    %v3144 = vld [vmem:[%s3143] sm:%s2991]
    %v3145 = vpack.c.bf16 0.0, %v3144
    %s3146 = sshllo.u32 0, %s2992
    %s3147 = smul.addr 4, 22
    %s3148 = scalar_lea.vmem %s1, %s3147
    %3149 = vst [vmem:[%s3148] sm:%s3146] %v3145
    %s3150 = scalar_lea.vmem [#allocation0], 184
    %v3151 = vld [vmem:[%s3150] sm:%s2991]
    %v3152 = vpack.c.bf16 0.0, %v3151
    %s3153 = sshllo.u32 0, %s2992
    %s3154 = smul.addr 4, 23
    %s3155 = scalar_lea.vmem %s1, %s3154
    %3156 = vst [vmem:[%s3155] sm:%s3153] %v3152
    %s3157 = scalar_lea.vmem [#allocation0], 192
    %v3158 = vld [vmem:[%s3157] sm:%s2991]
    %v3159 = vpack.c.bf16 0.0, %v3158
    %s3160 = sshllo.u32 0, %s2992
    %s3161 = smul.addr 4, 24
    %s3162 = scalar_lea.vmem %s1, %s3161
    %3163 = vst [vmem:[%s3162] sm:%s3160] %v3159
    %s3164 = scalar_lea.vmem [#allocation0], 200
    %v3165 = vld [vmem:[%s3164] sm:%s2991]
    %v3166 = vpack.c.bf16 0.0, %v3165
    %s3167 = sshllo.u32 0, %s2992
    %s3168 = smul.addr 4, 25
    %s3169 = scalar_lea.vmem %s1, %s3168
    %3170 = vst [vmem:[%s3169] sm:%s3167] %v3166
    %s3171 = scalar_lea.vmem [#allocation0], 208
    %v3172 = vld [vmem:[%s3171] sm:%s2991]
    %v3173 = vpack.c.bf16 0.0, %v3172
    %s3174 = sshllo.u32 0, %s2992
    %s3175 = smul.addr 4, 26
    %s3176 = scalar_lea.vmem %s1, %s3175
    %3177 = vst [vmem:[%s3176] sm:%s3174] %v3173
    %s3178 = scalar_lea.vmem [#allocation0], 216
    %v3179 = vld [vmem:[%s3178] sm:%s2991]
    %v3180 = vpack.c.bf16 0.0, %v3179
    %s3181 = sshllo.u32 0, %s2992
    %s3182 = smul.addr 4, 27
    %s3183 = scalar_lea.vmem %s1, %s3182
    %3184 = vst [vmem:[%s3183] sm:%s3181] %v3180
    %s3185 = scalar_lea.vmem [#allocation0], 224
    %v3186 = vld [vmem:[%s3185] sm:%s2991]
    %v3187 = vpack.c.bf16 0.0, %v3186
    %s3188 = sshllo.u32 0, %s2992
    %s3189 = smul.addr 4, 28
    %s3190 = scalar_lea.vmem %s1, %s3189
    %3191 = vst [vmem:[%s3190] sm:%s3188] %v3187
    %s3192 = scalar_lea.vmem [#allocation0], 232
    %v3193 = vld [vmem:[%s3192] sm:%s2991]
    %v3194 = vpack.c.bf16 0.0, %v3193
    %s3195 = sshllo.u32 0, %s2992
    %s3196 = smul.addr 4, 29
    %s3197 = scalar_lea.vmem %s1, %s3196
    %3198 = vst [vmem:[%s3197] sm:%s3195] %v3194
    %s3199 = scalar_lea.vmem [#allocation0], 240
    %v3200 = vld [vmem:[%s3199] sm:%s2991]
    %v3201 = vpack.c.bf16 0.0, %v3200
    %s3202 = sshllo.u32 0, %s2992
    %s3203 = smul.addr 4, 30
    %s3204 = scalar_lea.vmem %s1, %s3203
    %3205 = vst [vmem:[%s3204] sm:%s3202] %v3201
    %s3206 = scalar_lea.vmem [#allocation0], 248
    %v3207 = vld [vmem:[%s3206] sm:%s2991]
    %v3208 = vpack.c.bf16 0.0, %v3207
    %s3209 = sshllo.u32 0, %s2992
    %s3210 = smul.addr 4, 31
    %s3211 = scalar_lea.vmem %s1, %s3210
    %3212 = vst [vmem:[%s3211] sm:%s3209] %v3208
    %s3213 = scalar_lea.vmem [#allocation0], 256
    %v3214 = vld [vmem:[%s3213] sm:%s2991]
    %v3215 = vpack.c.bf16 0.0, %v3214
    %s3216 = sshllo.u32 0, %s2992
    %s3217 = smul.addr 4, 32
    %s3218 = scalar_lea.vmem %s1, %s3217
    %3219 = vst [vmem:[%s3218] sm:%s3216] %v3215
    %s3220 = scalar_lea.vmem [#allocation0], 264
    %v3221 = vld [vmem:[%s3220] sm:%s2991]
    %v3222 = vpack.c.bf16 0.0, %v3221
    %s3223 = sshllo.u32 0, %s2992
    %s3224 = smul.addr 4, 33
    %s3225 = scalar_lea.vmem %s1, %s3224
    %3226 = vst [vmem:[%s3225] sm:%s3223] %v3222
    %s3227 = scalar_lea.vmem [#allocation0], 272
    %v3228 = vld [vmem:[%s3227] sm:%s2991]
    %v3229 = vpack.c.bf16 0.0, %v3228
    %s3230 = sshllo.u32 0, %s2992
    %s3231 = smul.addr 4, 34
    %s3232 = scalar_lea.vmem %s1, %s3231
    %3233 = vst [vmem:[%s3232] sm:%s3230] %v3229
    %s3234 = scalar_lea.vmem [#allocation0], 280
    %v3235 = vld [vmem:[%s3234] sm:%s2991]
    %v3236 = vpack.c.bf16 0.0, %v3235
    %s3237 = sshllo.u32 0, %s2992
    %s3238 = smul.addr 4, 35
    %s3239 = scalar_lea.vmem %s1, %s3238
    %3240 = vst [vmem:[%s3239] sm:%s3237] %v3236
    %s3241 = scalar_lea.vmem [#allocation0], 288
    %v3242 = vld [vmem:[%s3241] sm:%s2991]
    %v3243 = vpack.c.bf16 0.0, %v3242
    %s3244 = sshllo.u32 0, %s2992
    %s3245 = smul.addr 4, 36
    %s3246 = scalar_lea.vmem %s1, %s3245
    %3247 = vst [vmem:[%s3246] sm:%s3244] %v3243
    %s3248 = scalar_lea.vmem [#allocation0], 296
    %v3249 = vld [vmem:[%s3248] sm:%s2991]
    %v3250 = vpack.c.bf16 0.0, %v3249
    %s3251 = sshllo.u32 0, %s2992
    %s3252 = smul.addr 4, 37
    %s3253 = scalar_lea.vmem %s1, %s3252
    %3254 = vst [vmem:[%s3253] sm:%s3251] %v3250
    %s3255 = scalar_lea.vmem [#allocation0], 304
    %v3256 = vld [vmem:[%s3255] sm:%s2991]
    %v3257 = vpack.c.bf16 0.0, %v3256
    %s3258 = sshllo.u32 0, %s2992
    %s3259 = smul.addr 4, 38
    %s3260 = scalar_lea.vmem %s1, %s3259
    %3261 = vst [vmem:[%s3260] sm:%s3258] %v3257
    %s3262 = scalar_lea.vmem [#allocation0], 312
    %v3263 = vld [vmem:[%s3262] sm:%s2991]
    %v3264 = vpack.c.bf16 0.0, %v3263
    %s3265 = sshllo.u32 0, %s2992
    %s3266 = smul.addr 4, 39
    %s3267 = scalar_lea.vmem %s1, %s3266
    %3268 = vst [vmem:[%s3267] sm:%s3265] %v3264
    %s3269 = scalar_lea.vmem [#allocation0], 320
    %v3270 = vld [vmem:[%s3269] sm:%s2991]
    %v3271 = vpack.c.bf16 0.0, %v3270
    %s3272 = sshllo.u32 0, %s2992
    %s3273 = smul.addr 4, 40
    %s3274 = scalar_lea.vmem %s1, %s3273
    %3275 = vst [vmem:[%s3274] sm:%s3272] %v3271
    %s3276 = scalar_lea.vmem [#allocation0], 328
    %v3277 = vld [vmem:[%s3276] sm:%s2991]
    %v3278 = vpack.c.bf16 0.0, %v3277
    %s3279 = sshllo.u32 0, %s2992
    %s3280 = smul.addr 4, 41
    %s3281 = scalar_lea.vmem %s1, %s3280
    %3282 = vst [vmem:[%s3281] sm:%s3279] %v3278
    %s3283 = scalar_lea.vmem [#allocation0], 336
    %v3284 = vld [vmem:[%s3283] sm:%s2991]
    %v3285 = vpack.c.bf16 0.0, %v3284
    %s3286 = sshllo.u32 0, %s2992
    %s3287 = smul.addr 4, 42
    %s3288 = scalar_lea.vmem %s1, %s3287
    %3289 = vst [vmem:[%s3288] sm:%s3286] %v3285
    %s3290 = scalar_lea.vmem [#allocation0], 344
    %v3291 = vld [vmem:[%s3290] sm:%s2991]
    %v3292 = vpack.c.bf16 0.0, %v3291
    %s3293 = sshllo.u32 0, %s2992
    %s3294 = smul.addr 4, 43
    %s3295 = scalar_lea.vmem %s1, %s3294
    %3296 = vst [vmem:[%s3295] sm:%s3293] %v3292
    %s3297 = scalar_lea.vmem [#allocation0], 352
    %v3298 = vld [vmem:[%s3297] sm:%s2991]
    %v3299 = vpack.c.bf16 0.0, %v3298
    %s3300 = sshllo.u32 0, %s2992
    %s3301 = smul.addr 4, 44
    %s3302 = scalar_lea.vmem %s1, %s3301
    %3303 = vst [vmem:[%s3302] sm:%s3300] %v3299
    %s3304 = scalar_lea.vmem [#allocation0], 360
    %v3305 = vld [vmem:[%s3304] sm:%s2991]
    %v3306 = vpack.c.bf16 0.0, %v3305
    %s3307 = sshllo.u32 0, %s2992
    %s3308 = smul.addr 4, 45
    %s3309 = scalar_lea.vmem %s1, %s3308
    %3310 = vst [vmem:[%s3309] sm:%s3307] %v3306
    %s3311 = scalar_lea.vmem [#allocation0], 368
    %v3312 = vld [vmem:[%s3311] sm:%s2991]
    %v3313 = vpack.c.bf16 0.0, %v3312
    %s3314 = sshllo.u32 0, %s2992
    %s3315 = smul.addr 4, 46
    %s3316 = scalar_lea.vmem %s1, %s3315
    %3317 = vst [vmem:[%s3316] sm:%s3314] %v3313
    %s3318 = scalar_lea.vmem [#allocation0], 376
    %v3319 = vld [vmem:[%s3318] sm:%s2991]
    %v3320 = vpack.c.bf16 0.0, %v3319
    %s3321 = sshllo.u32 0, %s2992
    %s3322 = smul.addr 4, 47
    %s3323 = scalar_lea.vmem %s1, %s3322
    %3324 = vst [vmem:[%s3323] sm:%s3321] %v3320
    %s3325 = scalar_lea.vmem [#allocation0], 384
    %v3326 = vld [vmem:[%s3325] sm:%s2991]
    %v3327 = vpack.c.bf16 0.0, %v3326
    %s3328 = sshllo.u32 0, %s2992
    %s3329 = smul.addr 4, 48
    %s3330 = scalar_lea.vmem %s1, %s3329
    %3331 = vst [vmem:[%s3330] sm:%s3328] %v3327
    %s3332 = scalar_lea.vmem [#allocation0], 392
    %v3333 = vld [vmem:[%s3332] sm:%s2991]
    %v3334 = vpack.c.bf16 0.0, %v3333
    %s3335 = sshllo.u32 0, %s2992
    %s3336 = smul.addr 4, 49
    %s3337 = scalar_lea.vmem %s1, %s3336
    %3338 = vst [vmem:[%s3337] sm:%s3335] %v3334
    %s3339 = scalar_lea.vmem [#allocation0], 400
    %v3340 = vld [vmem:[%s3339] sm:%s2991]
    %v3341 = vpack.c.bf16 0.0, %v3340
    %s3342 = sshllo.u32 0, %s2992
    %s3343 = smul.addr 4, 50
    %s3344 = scalar_lea.vmem %s1, %s3343
    %3345 = vst [vmem:[%s3344] sm:%s3342] %v3341
    %s3346 = scalar_lea.vmem [#allocation0], 408
    %v3347 = vld [vmem:[%s3346] sm:%s2991]
    %v3348 = vpack.c.bf16 0.0, %v3347
    %s3349 = sshllo.u32 0, %s2992
    %s3350 = smul.addr 4, 51
    %s3351 = scalar_lea.vmem %s1, %s3350
    %3352 = vst [vmem:[%s3351] sm:%s3349] %v3348
    %s3353 = scalar_lea.vmem [#allocation0], 416
    %v3354 = vld [vmem:[%s3353] sm:%s2991]
    %v3355 = vpack.c.bf16 0.0, %v3354
    %s3356 = sshllo.u32 0, %s2992
    %s3357 = smul.addr 4, 52
    %s3358 = scalar_lea.vmem %s1, %s3357
    %3359 = vst [vmem:[%s3358] sm:%s3356] %v3355
    %s3360 = scalar_lea.vmem [#allocation0], 424
    %v3361 = vld [vmem:[%s3360] sm:%s2991]
    %v3362 = vpack.c.bf16 0.0, %v3361
    %s3363 = sshllo.u32 0, %s2992
    %s3364 = smul.addr 4, 53
    %s3365 = scalar_lea.vmem %s1, %s3364
    %3366 = vst [vmem:[%s3365] sm:%s3363] %v3362
    %s3367 = scalar_lea.vmem [#allocation0], 432
    %v3368 = vld [vmem:[%s3367] sm:%s2991]
    %v3369 = vpack.c.bf16 0.0, %v3368
    %s3370 = sshllo.u32 0, %s2992
    %s3371 = smul.addr 4, 54
    %s3372 = scalar_lea.vmem %s1, %s3371
    %3373 = vst [vmem:[%s3372] sm:%s3370] %v3369
    %s3374 = scalar_lea.vmem [#allocation0], 440
    %v3375 = vld [vmem:[%s3374] sm:%s2991]
    %v3376 = vpack.c.bf16 0.0, %v3375
    %s3377 = sshllo.u32 0, %s2992
    %s3378 = smul.addr 4, 55
    %s3379 = scalar_lea.vmem %s1, %s3378
    %3380 = vst [vmem:[%s3379] sm:%s3377] %v3376
    %s3381 = scalar_lea.vmem [#allocation0], 448
    %v3382 = vld [vmem:[%s3381] sm:%s2991]
    %v3383 = vpack.c.bf16 0.0, %v3382
    %s3384 = sshllo.u32 0, %s2992
    %s3385 = smul.addr 4, 56
    %s3386 = scalar_lea.vmem %s1, %s3385
    %3387 = vst [vmem:[%s3386] sm:%s3384] %v3383
    %s3388 = scalar_lea.vmem [#allocation0], 456
    %v3389 = vld [vmem:[%s3388] sm:%s2991]
    %v3390 = vpack.c.bf16 0.0, %v3389
    %s3391 = sshllo.u32 0, %s2992
    %s3392 = smul.addr 4, 57
    %s3393 = scalar_lea.vmem %s1, %s3392
    %3394 = vst [vmem:[%s3393] sm:%s3391] %v3390
    %s3395 = scalar_lea.vmem [#allocation0], 464
    %v3396 = vld [vmem:[%s3395] sm:%s2991]
    %v3397 = vpack.c.bf16 0.0, %v3396
    %s3398 = sshllo.u32 0, %s2992
    %s3399 = smul.addr 4, 58
    %s3400 = scalar_lea.vmem %s1, %s3399
    %3401 = vst [vmem:[%s3400] sm:%s3398] %v3397
    %s3402 = scalar_lea.vmem [#allocation0], 472
    %v3403 = vld [vmem:[%s3402] sm:%s2991]
    %v3404 = vpack.c.bf16 0.0, %v3403
    %s3405 = sshllo.u32 0, %s2992
    %s3406 = smul.addr 4, 59
    %s3407 = scalar_lea.vmem %s1, %s3406
    %3408 = vst [vmem:[%s3407] sm:%s3405] %v3404
    %s3409 = scalar_lea.vmem [#allocation0], 480
    %v3410 = vld [vmem:[%s3409] sm:%s2991]
    %v3411 = vpack.c.bf16 0.0, %v3410
    %s3412 = sshllo.u32 0, %s2992
    %s3413 = smul.addr 4, 60
    %s3414 = scalar_lea.vmem %s1, %s3413
    %3415 = vst [vmem:[%s3414] sm:%s3412] %v3411
    %s3416 = scalar_lea.vmem [#allocation0], 488
    %v3417 = vld [vmem:[%s3416] sm:%s2991]
    %v3418 = vpack.c.bf16 0.0, %v3417
    %s3419 = sshllo.u32 0, %s2992
    %s3420 = smul.addr 4, 61
    %s3421 = scalar_lea.vmem %s1, %s3420
    %3422 = vst [vmem:[%s3421] sm:%s3419] %v3418
    %s3423 = scalar_lea.vmem [#allocation0], 496
    %v3424 = vld [vmem:[%s3423] sm:%s2991]
    %v3425 = vpack.c.bf16 0.0, %v3424
    %s3426 = sshllo.u32 0, %s2992
    %s3427 = smul.addr 4, 62
    %s3428 = scalar_lea.vmem %s1, %s3427
    %3429 = vst [vmem:[%s3428] sm:%s3426] %v3425
    %s3430 = scalar_lea.vmem [#allocation0], 504
    %v3431 = vld [vmem:[%s3430] sm:%s2991]
    %v3432 = vpack.c.bf16 0.0, %v3431
    %s3433 = sshllo.u32 0, %s2992
    %s3434 = smul.addr 4, 63
    %s3435 = scalar_lea.vmem %s1, %s3434
    %3436 = vst [vmem:[%s3435] sm:%s3433] %v3432
    %s3437 = scalar_lea.vmem [#allocation0], 512
    %v3438 = vld [vmem:[%s3437] sm:%s2991]
    %v3439 = vpack.c.bf16 0.0, %v3438
    %s3440 = sshllo.u32 0, %s2992
    %s3441 = smul.addr 4, 64
    %s3442 = scalar_lea.vmem %s1, %s3441
    %3443 = vst [vmem:[%s3442] sm:%s3440] %v3439

// kernel: light_meta_forward.1
$region0: #{light_meta_forward.1}
  #allocation0 [shape = 'u32[]', space=smem, size = 0x4, offset = 0x4, fixed_abs, tag = 'smem constant byte address 0x4 - core index']
  #allocation1 [shape = 'u32[144,128]{1,0:T(1,128)}', space=vmem, size = 0x12000, scoped, tag = 'internal scratch']
  %s0 = inlined_call_operand.vmem [shape: bf16[8,40], index: 0, kind: input, shape index: {}]
  %s1 = inlined_call_operand.vmem [shape: bf16[40,4992], index: 1, kind: input, shape index: {}]
  %s2 = inlined_call_operand.vmem [shape: f32[1,4992], index: 2, kind: input, shape index: {}]
  %s3 = inlined_call_operand.vmem [shape: bf16[40,5], index: 3, kind: input, shape index: {}]
  %s4 = inlined_call_operand.vmem [shape: bf16[1664,25], index: 4, kind: input, shape index: {}]
  %s5 = inlined_call_operand.vmem [shape: f32[25,25], index: 5, kind: input, shape index: {}]
  %s6 = inlined_call_operand.vmem [shape: bf16[5,25], index: 6, kind: input, shape index: {}]
  %s7 = inlined_call_operand.vmem [shape: bf16[25,1664], index: 7, kind: input, shape index: {}]
  %s8 = inlined_call_operand.vmem [shape: bf16[1664,64], index: 8, kind: input, shape index: {}]
  %s9 = inlined_call_operand.vmem [shape: bf16[64,128], index: 9, kind: input, shape index: {}]
  %s10 = inlined_call_operand.vmem [shape: f32[1,128], index: 10, kind: input, shape index: {}]
  %s11 = inlined_call_operand.vmem [shape: bf16[128,128], index: 11, kind: input, shape index: {}]
  %s12 = inlined_call_operand.vmem [shape: f32[1,128], index: 12, kind: input, shape index: {}]
  %s13 = inlined_call_operand.vmem [shape: f32[8,128], index: 13, kind: output, shape index: {}]
  %s14 = sld [smem:[#allocation0]]
  $region62: #{light_meta_forward.1} parent=0
    _
  %s16 = ssub.s32 1, %s14
  %s17 = scalar_select 0, %s16, %s14
  // Predicated region
  $region2: #{light_meta_forward.1} parent=0 // pred_check
    _
  $region3: #{light_meta_forward.1} parent=0 // pred_check_branch
    %19 = sbr.rel (0) target = $region5
  $region4: #{light_meta_forward.1} parent=0 // pred_region
    _
  $region5: #{light_meta_forward.1} parent=0 // pred_fallthru
    _
  // Predicated region
  $region6: #{light_meta_forward.1} parent=0 // pred_check
    _
  $region7: #{light_meta_forward.1} parent=0 // pred_check_branch
    %21 = sbr.rel (0) target = $region9
  $region8: #{light_meta_forward.1} parent=0 // pred_region
    _
  $region9: #{light_meta_forward.1} parent=0 // pred_fallthru
    _
  // Predicated region
  $region10: #{light_meta_forward.1} parent=0 // pred_check
    _
  $region11: #{light_meta_forward.1} parent=0 // pred_check_branch
    %23 = sbr.rel (0) target = $region13
  $region12: #{light_meta_forward.1} parent=0 // pred_region
    _
  $region13: #{light_meta_forward.1} parent=0 // pred_fallthru
    _
  // Predicated region
  $region14: #{light_meta_forward.1} parent=0 // pred_check
    _
  $region15: #{light_meta_forward.1} parent=0 // pred_check_branch
    %25 = sbr.rel (0) target = $region17
  $region16: #{light_meta_forward.1} parent=0 // pred_region
    _
  $region17: #{light_meta_forward.1} parent=0 // pred_fallthru
    _
  // Predicated region
  $region18: #{light_meta_forward.1} parent=0 // pred_check
    _
  $region19: #{light_meta_forward.1} parent=0 // pred_check_branch
    %27 = sbr.rel (0) target = $region21
  $region20: #{light_meta_forward.1} parent=0 // pred_region
    _
  $region21: #{light_meta_forward.1} parent=0 // pred_fallthru
    _
  // Predicated region
  $region22: #{light_meta_forward.1} parent=0 // pred_check
    _
  $region23: #{light_meta_forward.1} parent=0 // pred_check_branch
    %29 = sbr.rel (0) target = $region25
  $region24: #{light_meta_forward.1} parent=0 // pred_region
    _
  $region25: #{light_meta_forward.1} parent=0 // pred_fallthru
    _
  // Predicated region
  $region26: #{light_meta_forward.1} parent=0 // pred_check
    _
  $region27: #{light_meta_forward.1} parent=0 // pred_check_branch
    %31 = sbr.rel (0) target = $region29
  $region28: #{light_meta_forward.1} parent=0 // pred_region
    _
  $region29: #{light_meta_forward.1} parent=0 // pred_fallthru
    _
  // Predicated region
  $region30: #{light_meta_forward.1} parent=0 // pred_check
    _
  $region31: #{light_meta_forward.1} parent=0 // pred_check_branch
    %33 = sbr.rel (0) target = $region33
  $region32: #{light_meta_forward.1} parent=0 // pred_region
    _
  $region33: #{light_meta_forward.1} parent=0 // pred_fallthru
    _
  // Predicated region
  $region34: #{light_meta_forward.1} parent=0 // pred_check
    _
  $region35: #{light_meta_forward.1} parent=0 // pred_check_branch
    %35 = sbr.rel (0) target = $region37
  $region36: #{light_meta_forward.1} parent=0 // pred_region
    _
  $region37: #{light_meta_forward.1} parent=0 // pred_fallthru
    _
  // Predicated region
  $region38: #{light_meta_forward.1} parent=0 // pred_check
    _
  $region39: #{light_meta_forward.1} parent=0 // pred_check_branch
    %37 = sbr.rel (0) target = $region41
  $region40: #{light_meta_forward.1} parent=0 // pred_region
    _
  $region41: #{light_meta_forward.1} parent=0 // pred_fallthru
    _
  // Predicated region
  $region42: #{light_meta_forward.1} parent=0 // pred_check
    _
  $region43: #{light_meta_forward.1} parent=0 // pred_check_branch
    %39 = sbr.rel (0) target = $region45
  $region44: #{light_meta_forward.1} parent=0 // pred_region
    _
  $region45: #{light_meta_forward.1} parent=0 // pred_fallthru
    _
  // Predicated region
  $region46: #{light_meta_forward.1} parent=0 // pred_check
    _
  $region47: #{light_meta_forward.1} parent=0 // pred_check_branch
    %41 = sbr.rel (0) target = $region49
  $region48: #{light_meta_forward.1} parent=0 // pred_region
    _
  $region49: #{light_meta_forward.1} parent=0 // pred_fallthru
    _
  // Predicated region
  $region50: #{light_meta_forward.1} parent=0 // pred_check
    _
  $region51: #{light_meta_forward.1} parent=0 // pred_check_branch
    %43 = sbr.rel (0) target = $region53
  $region52: #{light_meta_forward.1} parent=0 // pred_region
    _
  $region53: #{light_meta_forward.1} parent=0 // pred_fallthru
    _
  %v45 = vld [vmem:[%s0] sm:$0xf]
  %v46 = vld [vmem:[%s1] sm:$0xff]
  %v47 = vld [vmem:[%s1 + $0x8] sm:$0xff]
  %v48 = vld [vmem:[%s1 + $0x10] sm:$0xff]
  %v49 = vld [vmem:[%s1 + $0x18] sm:$0xff]
  %v50 = vld [vmem:[%s1 + $0x20] sm:$0xff]
  %v51 = vld [vmem:[%s1 + $0x28] sm:$0xff]
  %v52 = vld [vmem:[%s1 + $0x30] sm:$0xff]
  %v53 = vld [vmem:[%s1 + $0x38] sm:$0xff]
  %v54 = vld [vmem:[%s1 + $0x40] sm:$0xff]
  %v55 = vld [vmem:[%s1 + $0x48] sm:$0xff]
  %v56 = vld [vmem:[%s1 + $0x50] sm:$0xff]
  %v57 = vld [vmem:[%s1 + $0x58] sm:$0xff]
  %v58 = vld [vmem:[%s1 + $0x60] sm:$0xff]
  %v59 = vld [vmem:[%s1 + $0x68] sm:$0xff]
  %v60 = vld [vmem:[%s1 + $0x70] sm:$0xff]
  %v61 = vld [vmem:[%s1 + $0x78] sm:$0xff]
  %v62 = vld [vmem:[%s1 + $0x80] sm:$0xff]
  %v63 = vld [vmem:[%s1 + $0x88] sm:$0xff]
  %v64 = vld [vmem:[%s1 + $0x90] sm:$0xff]
  %v65 = vld [vmem:[%s1 + $0x98] sm:$0xf]
  %v66 = vld [vmem:[%s1 + $0x9c] sm:$0xff]
  %v67 = vld [vmem:[%s1 + $0xa4] sm:$0xff]
  %v68 = vld [vmem:[%s1 + $0xac] sm:$0xff]
  %v69 = vld [vmem:[%s1 + $0xb4] sm:$0xff]
  %v70 = vld [vmem:[%s1 + $0xbc] sm:$0xff]
  %v71 = vld [vmem:[%s1 + $0xc4] sm:$0xff]
  %v72 = vld [vmem:[%s1 + $0xcc] sm:$0xff]
  %v73 = vld [vmem:[%s1 + $0xd4] sm:$0xff]
  %v74 = vld [vmem:[%s1 + $0xdc] sm:$0xff]
  %v75 = vld [vmem:[%s1 + $0xe4] sm:$0xff]
  %v76 = vld [vmem:[%s1 + $0xec] sm:$0xff]
  %v77 = vld [vmem:[%s1 + $0xf4] sm:$0xff]
  %v78 = vld [vmem:[%s1 + $0xfc] sm:$0xff]
  %v79 = vld [vmem:[%s1 + $0x104] sm:$0xff]
  %v80 = vld [vmem:[%s1 + $0x10c] sm:$0xff]
  %v81 = vld [vmem:[%s1 + $0x114] sm:$0xff]
  %v82 = vld [vmem:[%s1 + $0x11c] sm:$0xff]
  %v83 = vld [vmem:[%s1 + $0x124] sm:$0xff]
  %v84 = vld [vmem:[%s1 + $0x12c] sm:$0xff]
  %v85 = vld [vmem:[%s1 + $0x134] sm:$0xf]
  %v86 = vld [vmem:[%s1 + $0x138] sm:$0xff]
  %v87 = vld [vmem:[%s1 + $0x140] sm:$0xff]
  %v88 = vld [vmem:[%s1 + $0x148] sm:$0xff]
  %v89 = vld [vmem:[%s1 + $0x150] sm:$0xff]
  %v90 = vld [vmem:[%s1 + $0x158] sm:$0xff]
  %v91 = vld [vmem:[%s1 + $0x160] sm:$0xff]
  %v92 = vld [vmem:[%s1 + $0x168] sm:$0xff]
  %v93 = vld [vmem:[%s1 + $0x170] sm:$0xff]
  %v94 = vld [vmem:[%s1 + $0x178] sm:$0xff]
  %v95 = vld [vmem:[%s1 + $0x180] sm:$0xff]
  %v96 = vld [vmem:[%s1 + $0x188] sm:$0xff]
  %v97 = vld [vmem:[%s1 + $0x190] sm:$0xff]
  %v98 = vld [vmem:[%s1 + $0x198] sm:$0xff]
  %v99 = vld [vmem:[%s1 + $0x1a0] sm:$0xff]
  %v100 = vld [vmem:[%s1 + $0x1a8] sm:$0xff]
  %v101 = vld [vmem:[%s1 + $0x1b0] sm:$0xff]
  %v102 = vld [vmem:[%s1 + $0x1b8] sm:$0xff]
  %v103 = vld [vmem:[%s1 + $0x1c0] sm:$0xff]
  %v104 = vld [vmem:[%s1 + $0x1c8] sm:$0xff]
  %v105 = vld [vmem:[%s1 + $0x1d0] sm:$0xf]
  %v106 = vld [vmem:[%s1 + $0x1d4] sm:$0xff]
  %v107 = vld [vmem:[%s1 + $0x1dc] sm:$0xff]
  %v108 = vld [vmem:[%s1 + $0x1e4] sm:$0xff]
  %v109 = vld [vmem:[%s1 + $0x1ec] sm:$0xff]
  %v110 = vld [vmem:[%s1 + $0x1f4] sm:$0xff]
  %v111 = vld [vmem:[%s1 + $0x1fc] sm:$0xff]
  %v112 = vld [vmem:[%s1 + $0x204] sm:$0xff]
  %v113 = vld [vmem:[%s1 + $0x20c] sm:$0xff]
  %v114 = vld [vmem:[%s1 + $0x214] sm:$0xff]
  %v115 = vld [vmem:[%s1 + $0x21c] sm:$0xff]
  %v116 = vld [vmem:[%s1 + $0x224] sm:$0xff]
  %v117 = vld [vmem:[%s1 + $0x22c] sm:$0xff]
  %v118 = vld [vmem:[%s1 + $0x234] sm:$0xff]
  %v119 = vld [vmem:[%s1 + $0x23c] sm:$0xff]
  %v120 = vld [vmem:[%s1 + $0x244] sm:$0xff]
  %v121 = vld [vmem:[%s1 + $0x24c] sm:$0xff]
  %v122 = vld [vmem:[%s1 + $0x254] sm:$0xff]
  %v123 = vld [vmem:[%s1 + $0x25c] sm:$0xff]
  %v124 = vld [vmem:[%s1 + $0x264] sm:$0xff]
  %v125 = vld [vmem:[%s1 + $0x26c] sm:$0xf]
  %v126 = vld [vmem:[%s1 + $0x270] sm:$0xff]
  %v127 = vld [vmem:[%s1 + $0x278] sm:$0xff]
  %v128 = vld [vmem:[%s1 + $0x280] sm:$0xff]
  %v129 = vld [vmem:[%s1 + $0x288] sm:$0xff]
  %v130 = vld [vmem:[%s1 + $0x290] sm:$0xff]
  %v131 = vld [vmem:[%s1 + $0x298] sm:$0xff]
  %v132 = vld [vmem:[%s1 + $0x2a0] sm:$0xff]
  %v133 = vld [vmem:[%s1 + $0x2a8] sm:$0xff]
  %v134 = vld [vmem:[%s1 + $0x2b0] sm:$0xff]
  %v135 = vld [vmem:[%s1 + $0x2b8] sm:$0xff]
  %v136 = vld [vmem:[%s1 + $0x2c0] sm:$0xff]
  %v137 = vld [vmem:[%s1 + $0x2c8] sm:$0xff]
  %v138 = vld [vmem:[%s1 + $0x2d0] sm:$0xff]
  %v139 = vld [vmem:[%s1 + $0x2d8] sm:$0xff]
  %v140 = vld [vmem:[%s1 + $0x2e0] sm:$0xff]
  %v141 = vld [vmem:[%s1 + $0x2e8] sm:$0xff]
  %v142 = vld [vmem:[%s1 + $0x2f0] sm:$0xff]
  %v143 = vld [vmem:[%s1 + $0x2f8] sm:$0xff]
  %v144 = vld [vmem:[%s1 + $0x300] sm:$0xff]
  %v145 = vld [vmem:[%s1 + $0x308] sm:$0xf]
  %v146 = vld [vmem:[%s2] sm:$0xff]
  %v147 = vld [vmem:[%s2 + $0x8] sm:$0xff]
  %v148 = vld [vmem:[%s2 + $0x10] sm:$0xff]
  %v149 = vld [vmem:[%s2 + $0x18] sm:$0xff]
  %v150 = vld [vmem:[%s2 + $0x20] sm:$0xff]
  %v156 = vlaneseq
  %v157 = vshrl.u32 %v156, 7
  %v158 = vsub.s32 0, %v157
  %v159 = vrot.slane %v146, %v158
  %v160 = vlaneseq
  %v161 = vshrl.u32 %v160, 7
  %v162 = vsub.s32 1, %v161
  %v163 = vrot.slane %v146, %v162
  %v164 = vlaneseq
  %v165 = vshrl.u32 %v164, 7
  %v166 = vsub.s32 2, %v165
  %v167 = vrot.slane %v146, %v166
  %v168 = vlaneseq
  %v169 = vshrl.u32 %v168, 7
  %v170 = vsub.s32 3, %v169
  %v171 = vrot.slane %v146, %v170
  %v172 = vlaneseq
  %v173 = vshrl.u32 %v172, 7
  %v174 = vsub.s32 4, %v173
  %v175 = vrot.slane %v146, %v174
  %v176 = vlaneseq
  %v177 = vshrl.u32 %v176, 7
  %v178 = vsub.s32 5, %v177
  %v179 = vrot.slane %v146, %v178
  %v180 = vlaneseq
  %v181 = vshrl.u32 %v180, 7
  %v182 = vsub.s32 6, %v181
  %v183 = vrot.slane %v146, %v182
  %v184 = vlaneseq
  %v185 = vshrl.u32 %v184, 7
  %v186 = vsub.s32 7, %v185
  %v187 = vrot.slane %v146, %v186
  %v188 = vlaneseq
  %v189 = vshrl.u32 %v188, 7
  %v190 = vsub.s32 0, %v189
  %v191 = vrot.slane %v147, %v190
  %v192 = vlaneseq
  %v193 = vshrl.u32 %v192, 7
  %v194 = vsub.s32 1, %v193
  %v195 = vrot.slane %v147, %v194
  %v196 = vlaneseq
  %v197 = vshrl.u32 %v196, 7
  %v198 = vsub.s32 2, %v197
  %v199 = vrot.slane %v147, %v198
  %v200 = vlaneseq
  %v201 = vshrl.u32 %v200, 7
  %v202 = vsub.s32 3, %v201
  %v203 = vrot.slane %v147, %v202
  %v204 = vlaneseq
  %v205 = vshrl.u32 %v204, 7
  %v206 = vsub.s32 4, %v205
  %v207 = vrot.slane %v147, %v206
  %v208 = vlaneseq
  %v209 = vshrl.u32 %v208, 7
  %v210 = vsub.s32 5, %v209
  %v211 = vrot.slane %v147, %v210
  %v212 = vlaneseq
  %v213 = vshrl.u32 %v212, 7
  %v214 = vsub.s32 6, %v213
  %v215 = vrot.slane %v147, %v214
  %v216 = vlaneseq
  %v217 = vshrl.u32 %v216, 7
  %v218 = vsub.s32 7, %v217
  %v219 = vrot.slane %v147, %v218
  %v220 = vlaneseq
  %v221 = vshrl.u32 %v220, 7
  %v222 = vsub.s32 0, %v221
  %v223 = vrot.slane %v148, %v222
  %v224 = vlaneseq
  %v225 = vshrl.u32 %v224, 7
  %v226 = vsub.s32 1, %v225
  %v227 = vrot.slane %v148, %v226
  %v228 = vlaneseq
  %v229 = vshrl.u32 %v228, 7
  %v230 = vsub.s32 2, %v229
  %v231 = vrot.slane %v148, %v230
  %v232 = vlaneseq
  %v233 = vshrl.u32 %v232, 7
  %v234 = vsub.s32 3, %v233
  %v235 = vrot.slane %v148, %v234
  %v236 = vlaneseq
  %v237 = vshrl.u32 %v236, 7
  %v238 = vsub.s32 4, %v237
  %v239 = vrot.slane %v148, %v238
  %v240 = vlaneseq
  %v241 = vshrl.u32 %v240, 7
  %v242 = vsub.s32 5, %v241
  %v243 = vrot.slane %v148, %v242
  %v244 = vlaneseq
  %v245 = vshrl.u32 %v244, 7
  %v246 = vsub.s32 6, %v245
  %v247 = vrot.slane %v148, %v246
  %v248 = vlaneseq
  %v249 = vshrl.u32 %v248, 7
  %v250 = vsub.s32 7, %v249
  %v251 = vrot.slane %v148, %v250
  %v252 = vlaneseq
  %v253 = vshrl.u32 %v252, 7
  %v254 = vsub.s32 0, %v253
  %v255 = vrot.slane %v149, %v254
  %v256 = vlaneseq
  %v257 = vshrl.u32 %v256, 7
  %v258 = vsub.s32 1, %v257
  %v259 = vrot.slane %v149, %v258
  %v260 = vlaneseq
  %v261 = vshrl.u32 %v260, 7
  %v262 = vsub.s32 2, %v261
  %v263 = vrot.slane %v149, %v262
  %v264 = vlaneseq
  %v265 = vshrl.u32 %v264, 7
  %v266 = vsub.s32 3, %v265
  %v267 = vrot.slane %v149, %v266
  %v268 = vlaneseq
  %v269 = vshrl.u32 %v268, 7
  %v270 = vsub.s32 4, %v269
  %v271 = vrot.slane %v149, %v270
  %v272 = vlaneseq
  %v273 = vshrl.u32 %v272, 7
  %v274 = vsub.s32 5, %v273
  %v275 = vrot.slane %v149, %v274
  %v276 = vlaneseq
  %v277 = vshrl.u32 %v276, 7
  %v278 = vsub.s32 6, %v277
  %v279 = vrot.slane %v149, %v278
  %v280 = vlaneseq
  %v281 = vshrl.u32 %v280, 7
  %v282 = vsub.s32 7, %v281
  %v283 = vrot.slane %v149, %v282
  %v284 = vlaneseq
  %v285 = vshrl.u32 %v284, 7
  %v286 = vsub.s32 0, %v285
  %v287 = vrot.slane %v150, %v286
  %v288 = vlaneseq
  %v289 = vshrl.u32 %v288, 7
  %v290 = vsub.s32 1, %v289
  %v291 = vrot.slane %v150, %v290
  %v292 = vlaneseq
  %v293 = vshrl.u32 %v292, 7
  %v294 = vsub.s32 2, %v293
  %v295 = vrot.slane %v150, %v294
  %v296 = vlaneseq
  %v297 = vshrl.u32 %v296, 7
  %v298 = vsub.s32 3, %v297
  %v299 = vrot.slane %v150, %v298
  %v300 = vlaneseq
  %v301 = vshrl.u32 %v300, 7
  %v302 = vsub.s32 4, %v301
  %v303 = vrot.slane %v150, %v302
  %v304 = vlaneseq
  %v305 = vshrl.u32 %v304, 7
  %v306 = vsub.s32 5, %v305
  %v307 = vrot.slane %v150, %v306
  %v308 = vlaneseq
  %v309 = vshrl.u32 %v308, 7
  %v310 = vsub.s32 6, %v309
  %v311 = vrot.slane %v150, %v310
  %v451 = vunpack.c.l.b16 %v46
  %v452 = vunpack.c.h.b16 %v46
  %v453 = vunpack.c.l.b16 %v47
  %v454 = vunpack.c.h.b16 %v47
  %v455 = vunpack.c.l.b16 %v48
  %v456 = vunpack.c.h.b16 %v48
  %v457 = vunpack.c.l.b16 %v49
  %v458 = vunpack.c.h.b16 %v49
  %v459 = vunpack.c.l.b16 %v50
  %v460 = vunpack.c.h.b16 %v50
  %v461 = vunpack.c.l.b16 %v51
  %v462 = vunpack.c.h.b16 %v51
  %v463 = vunpack.c.l.b16 %v52
  %v464 = vunpack.c.h.b16 %v52
  %v465 = vunpack.c.l.b16 %v53
  %v466 = vunpack.c.h.b16 %v53
  %v467 = vunpack.c.l.b16 %v54
  %v468 = vunpack.c.h.b16 %v54
  %v469 = vunpack.c.l.b16 %v55
  %v470 = vunpack.c.h.b16 %v55
  %v471 = vunpack.c.l.b16 %v56
  %v472 = vunpack.c.h.b16 %v56
  %v473 = vunpack.c.l.b16 %v57
  %v474 = vunpack.c.h.b16 %v57
  %v475 = vunpack.c.l.b16 %v58
  %v476 = vunpack.c.h.b16 %v58
  %v477 = vunpack.c.l.b16 %v59
  %v478 = vunpack.c.h.b16 %v59
  %v479 = vunpack.c.l.b16 %v60
  %v480 = vunpack.c.h.b16 %v60
  %v481 = vunpack.c.l.b16 %v61
  %v482 = vunpack.c.h.b16 %v61
  %v483 = vunpack.c.l.b16 %v62
  %v484 = vunpack.c.h.b16 %v62
  %v485 = vunpack.c.l.b16 %v63
  %v486 = vunpack.c.h.b16 %v63
  %v487 = vunpack.c.l.b16 %v64
  %v488 = vunpack.c.h.b16 %v64
  %v489 = vunpack.c.l.b16 %v65
  %v490 = vunpack.c.l.b16 %v66
  %v491 = vunpack.c.h.b16 %v66
  %v492 = vunpack.c.l.b16 %v67
  %v493 = vunpack.c.h.b16 %v67
  %v494 = vunpack.c.l.b16 %v68
  %v495 = vunpack.c.h.b16 %v68
  %v496 = vunpack.c.l.b16 %v69
  %v497 = vunpack.c.h.b16 %v69
  %v498 = vunpack.c.l.b16 %v70
  %v499 = vunpack.c.h.b16 %v70
  %v500 = vunpack.c.l.b16 %v71
  %v501 = vunpack.c.h.b16 %v71
  %v502 = vunpack.c.l.b16 %v72
  %v503 = vunpack.c.h.b16 %v72
  %v504 = vunpack.c.l.b16 %v73
  %v505 = vunpack.c.h.b16 %v73
  %v506 = vunpack.c.l.b16 %v74
  %v507 = vunpack.c.h.b16 %v74
  %v508 = vunpack.c.l.b16 %v75
  %v509 = vunpack.c.h.b16 %v75
  %v510 = vunpack.c.l.b16 %v76
  %v511 = vunpack.c.h.b16 %v76
  %v512 = vunpack.c.l.b16 %v77
  %v513 = vunpack.c.h.b16 %v77
  %v514 = vunpack.c.l.b16 %v78
  %v515 = vunpack.c.h.b16 %v78
  %v516 = vunpack.c.l.b16 %v79
  %v517 = vunpack.c.h.b16 %v79
  %v518 = vunpack.c.l.b16 %v80
  %v519 = vunpack.c.h.b16 %v80
  %v520 = vunpack.c.l.b16 %v81
  %v521 = vunpack.c.h.b16 %v81
  %v522 = vunpack.c.l.b16 %v82
  %v523 = vunpack.c.h.b16 %v82
  %v524 = vunpack.c.l.b16 %v83
  %v525 = vunpack.c.h.b16 %v83
  %v526 = vunpack.c.l.b16 %v84
  %v527 = vunpack.c.h.b16 %v84
  %v528 = vunpack.c.l.b16 %v85
  %v529 = vunpack.c.l.b16 %v86
  %v530 = vunpack.c.h.b16 %v86
  %v531 = vunpack.c.l.b16 %v87
  %v532 = vunpack.c.h.b16 %v87
  %v533 = vunpack.c.l.b16 %v88
  %v534 = vunpack.c.h.b16 %v88
  %v535 = vunpack.c.l.b16 %v89
  %v536 = vunpack.c.h.b16 %v89
  %v537 = vunpack.c.l.b16 %v90
  %v538 = vunpack.c.h.b16 %v90
  %v539 = vunpack.c.l.b16 %v91
  %v540 = vunpack.c.h.b16 %v91
  %v541 = vunpack.c.l.b16 %v92
  %v542 = vunpack.c.h.b16 %v92
  %v543 = vunpack.c.l.b16 %v93
  %v544 = vunpack.c.h.b16 %v93
  %v545 = vunpack.c.l.b16 %v94
  %v546 = vunpack.c.h.b16 %v94
  %v547 = vunpack.c.l.b16 %v95
  %v548 = vunpack.c.h.b16 %v95
  %v549 = vunpack.c.l.b16 %v96
  %v550 = vunpack.c.h.b16 %v96
  %v551 = vunpack.c.l.b16 %v97
  %v552 = vunpack.c.h.b16 %v97
  %v553 = vunpack.c.l.b16 %v98
  %v554 = vunpack.c.h.b16 %v98
  %v555 = vunpack.c.l.b16 %v99
  %v556 = vunpack.c.h.b16 %v99
  %v557 = vunpack.c.l.b16 %v100
  %v558 = vunpack.c.h.b16 %v100
  %v559 = vunpack.c.l.b16 %v101
  %v560 = vunpack.c.h.b16 %v101
  %v561 = vunpack.c.l.b16 %v102
  %v562 = vunpack.c.h.b16 %v102
  %v563 = vunpack.c.l.b16 %v103
  %v564 = vunpack.c.h.b16 %v103
  %v565 = vunpack.c.l.b16 %v104
  %v566 = vunpack.c.h.b16 %v104
  %v567 = vunpack.c.l.b16 %v105
  %v568 = vunpack.c.l.b16 %v106
  %v569 = vunpack.c.h.b16 %v106
  %v570 = vunpack.c.l.b16 %v107
  %v571 = vunpack.c.h.b16 %v107
  %v572 = vunpack.c.l.b16 %v108
  %v573 = vunpack.c.h.b16 %v108
  %v574 = vunpack.c.l.b16 %v109
  %v575 = vunpack.c.h.b16 %v109
  %v576 = vunpack.c.l.b16 %v110
  %v577 = vunpack.c.h.b16 %v110
  %v578 = vunpack.c.l.b16 %v111
  %v579 = vunpack.c.h.b16 %v111
  %v580 = vunpack.c.l.b16 %v112
  %v581 = vunpack.c.h.b16 %v112
  %v582 = vunpack.c.l.b16 %v113
  %v583 = vunpack.c.h.b16 %v113
  %v584 = vunpack.c.l.b16 %v114
  %v585 = vunpack.c.h.b16 %v114
  %v586 = vunpack.c.l.b16 %v115
  %v587 = vunpack.c.h.b16 %v115
  %v588 = vunpack.c.l.b16 %v116
  %v589 = vunpack.c.h.b16 %v116
  %v590 = vunpack.c.l.b16 %v117
  %v591 = vunpack.c.h.b16 %v117
  %v592 = vunpack.c.l.b16 %v118
  %v593 = vunpack.c.h.b16 %v118
  %v594 = vunpack.c.l.b16 %v119
  %v595 = vunpack.c.h.b16 %v119
  %v596 = vunpack.c.l.b16 %v120
  %v597 = vunpack.c.h.b16 %v120
  %v598 = vunpack.c.l.b16 %v121
  %v599 = vunpack.c.h.b16 %v121
  %v600 = vunpack.c.l.b16 %v122
  %v601 = vunpack.c.h.b16 %v122
  %v602 = vunpack.c.l.b16 %v123
  %v603 = vunpack.c.h.b16 %v123
  %v604 = vunpack.c.l.b16 %v124
  %v605 = vunpack.c.h.b16 %v124
  %v606 = vunpack.c.l.b16 %v125
  %v607 = vunpack.c.l.b16 %v126
  %v608 = vunpack.c.h.b16 %v126
  %v609 = vunpack.c.l.b16 %v127
  %v610 = vunpack.c.h.b16 %v127
  %v611 = vunpack.c.l.b16 %v128
  %v612 = vunpack.c.h.b16 %v128
  %v613 = vunpack.c.l.b16 %v129
  %v614 = vunpack.c.h.b16 %v129
  %v615 = vunpack.c.l.b16 %v130
  %v616 = vunpack.c.h.b16 %v130
  %v617 = vunpack.c.l.b16 %v131
  %v618 = vunpack.c.h.b16 %v131
  %v619 = vunpack.c.l.b16 %v132
  %v620 = vunpack.c.h.b16 %v132
  %v621 = vunpack.c.l.b16 %v133
  %v622 = vunpack.c.h.b16 %v133
  %v623 = vunpack.c.l.b16 %v134
  %v624 = vunpack.c.h.b16 %v134
  %v625 = vunpack.c.l.b16 %v135
  %v626 = vunpack.c.h.b16 %v135
  %v627 = vunpack.c.l.b16 %v136
  %v628 = vunpack.c.h.b16 %v136
  %v629 = vunpack.c.l.b16 %v137
  %v630 = vunpack.c.h.b16 %v137
  %v631 = vunpack.c.l.b16 %v138
  %v632 = vunpack.c.h.b16 %v138
  %v633 = vunpack.c.l.b16 %v139
  %v634 = vunpack.c.h.b16 %v139
  %v635 = vunpack.c.l.b16 %v140
  %v636 = vunpack.c.h.b16 %v140
  %v637 = vunpack.c.l.b16 %v141
  %v638 = vunpack.c.h.b16 %v141
  %v639 = vunpack.c.l.b16 %v142
  %v640 = vunpack.c.h.b16 %v142
  %v641 = vunpack.c.l.b16 %v143
  %v642 = vunpack.c.h.b16 %v143
  %v643 = vunpack.c.l.b16 %v144
  %v644 = vunpack.c.h.b16 %v144
  %v645 = vunpack.c.l.b16 %v145
  %v646 = vpack.c.b16 %v490, %v451
  %v647 = vpack.c.b16 %v491, %v452
  %v648 = vpack.c.b16 %v492, %v453
  %v649 = vpack.c.b16 %v493, %v454
  %v650 = vpack.c.b16 %v494, %v455
  %v651 = vpack.c.b16 %v495, %v456
  %v652 = vpack.c.b16 %v496, %v457
  %v653 = vpack.c.b16 %v497, %v458
  %v654 = vpack.c.b16 %v498, %v459
  %v655 = vpack.c.b16 %v499, %v460
  %v656 = vpack.c.b16 %v500, %v461
  %v657 = vpack.c.b16 %v501, %v462
  %v658 = vpack.c.b16 %v502, %v463
  %v659 = vpack.c.b16 %v503, %v464
  %v660 = vpack.c.b16 %v504, %v465
  %v661 = vpack.c.b16 %v505, %v466
  %v662 = vpack.c.b16 %v506, %v467
  %v663 = vpack.c.b16 %v507, %v468
  %v664 = vpack.c.b16 %v508, %v469
  %v665 = vpack.c.b16 %v509, %v470
  %v666 = vpack.c.b16 %v510, %v471
  %v667 = vpack.c.b16 %v511, %v472
  %v668 = vpack.c.b16 %v512, %v473
  %v669 = vpack.c.b16 %v513, %v474
  %v670 = vpack.c.b16 %v514, %v475
  %v671 = vpack.c.b16 %v515, %v476
  %v672 = vpack.c.b16 %v516, %v477
  %v673 = vpack.c.b16 %v517, %v478
  %v674 = vpack.c.b16 %v518, %v479
  %v675 = vpack.c.b16 %v519, %v480
  %v676 = vpack.c.b16 %v520, %v481
  %v677 = vpack.c.b16 %v521, %v482
  %v678 = vpack.c.b16 %v522, %v483
  %v679 = vpack.c.b16 %v523, %v484
  %v680 = vpack.c.b16 %v524, %v485
  %v681 = vpack.c.b16 %v525, %v486
  %v682 = vpack.c.b16 %v526, %v487
  %v683 = vpack.c.b16 %v527, %v488
  %v684 = vpack.c.b16 %v528, %v489
  %v685 = vpack.c.b16 %v568, %v529
  %v686 = vpack.c.b16 %v569, %v530
  %v687 = vpack.c.b16 %v570, %v531
  %v688 = vpack.c.b16 %v571, %v532
  %v689 = vpack.c.b16 %v572, %v533
  %v690 = vpack.c.b16 %v573, %v534
  %v691 = vpack.c.b16 %v574, %v535
  %v692 = vpack.c.b16 %v575, %v536
  %v693 = vpack.c.b16 %v576, %v537
  %v694 = vpack.c.b16 %v577, %v538
  %v695 = vpack.c.b16 %v578, %v539
  %v696 = vpack.c.b16 %v579, %v540
  %v697 = vpack.c.b16 %v580, %v541
  %v698 = vpack.c.b16 %v581, %v542
  %v699 = vpack.c.b16 %v582, %v543
  %v700 = vpack.c.b16 %v583, %v544
  %v701 = vpack.c.b16 %v584, %v545
  %v702 = vpack.c.b16 %v585, %v546
  %v703 = vpack.c.b16 %v586, %v547
  %v704 = vpack.c.b16 %v587, %v548
  %v705 = vpack.c.b16 %v588, %v549
  %v706 = vpack.c.b16 %v589, %v550
  %v707 = vpack.c.b16 %v590, %v551
  %v708 = vpack.c.b16 %v591, %v552
  %v709 = vpack.c.b16 %v592, %v553
  %v710 = vpack.c.b16 %v593, %v554
  %v711 = vpack.c.b16 %v594, %v555
  %v712 = vpack.c.b16 %v595, %v556
  %v713 = vpack.c.b16 %v596, %v557
  %v714 = vpack.c.b16 %v597, %v558
  %v715 = vpack.c.b16 %v598, %v559
  %v716 = vpack.c.b16 %v599, %v560
  %v717 = vpack.c.b16 %v600, %v561
  %v718 = vpack.c.b16 %v601, %v562
  %v719 = vpack.c.b16 %v602, %v563
  %v720 = vpack.c.b16 %v603, %v564
  %v721 = vpack.c.b16 %v604, %v565
  %v722 = vpack.c.b16 %v605, %v566
  %v723 = vpack.c.b16 %v606, %v567
  %v724 = vpack.c.b16 %v607, %v607
  %v725 = vpack.c.b16 %v608, %v608
  %v726 = vpack.c.b16 %v609, %v609
  %v727 = vpack.c.b16 %v610, %v610
  %v728 = vpack.c.b16 %v611, %v611
  %v729 = vpack.c.b16 %v612, %v612
  %v730 = vpack.c.b16 %v613, %v613
  %v731 = vpack.c.b16 %v614, %v614
  %v732 = vpack.c.b16 %v615, %v615
  %v733 = vpack.c.b16 %v616, %v616
  %v734 = vpack.c.b16 %v617, %v617
  %v735 = vpack.c.b16 %v618, %v618
  %v736 = vpack.c.b16 %v619, %v619
  %v737 = vpack.c.b16 %v620, %v620
  %v738 = vpack.c.b16 %v621, %v621
  %v739 = vpack.c.b16 %v622, %v622
  %v740 = vpack.c.b16 %v623, %v623
  %v741 = vpack.c.b16 %v624, %v624
  %v742 = vpack.c.b16 %v625, %v625
  %v743 = vpack.c.b16 %v626, %v626
  %v744 = vpack.c.b16 %v627, %v627
  %v745 = vpack.c.b16 %v628, %v628
  %v746 = vpack.c.b16 %v629, %v629
  %v747 = vpack.c.b16 %v630, %v630
  %v748 = vpack.c.b16 %v631, %v631
  %v749 = vpack.c.b16 %v632, %v632
  %v750 = vpack.c.b16 %v633, %v633
  %v751 = vpack.c.b16 %v634, %v634
  %v752 = vpack.c.b16 %v635, %v635
  %v753 = vpack.c.b16 %v636, %v636
  %v754 = vpack.c.b16 %v637, %v637
  %v755 = vpack.c.b16 %v638, %v638
  %v756 = vpack.c.b16 %v639, %v639
  %v757 = vpack.c.b16 %v640, %v640
  %v758 = vpack.c.b16 %v641, %v641
  %v759 = vpack.c.b16 %v642, %v642
  %v760 = vpack.c.b16 %v643, %v643
  %v761 = vpack.c.b16 %v644, %v644
  %v762 = vpack.c.b16 %v645, %v645
  %vm841 = vcmask 326656
  %v843 = vsel %vm841, %v45, 0
  %vm845 = vcmask 1043456
  %v847 = vsel %vm845, %v724, 0
  %v850 = vsel %vm845, %v725, 0
  %v853 = vsel %vm845, %v726, 0
  %v856 = vsel %vm845, %v727, 0
  %v859 = vsel %vm845, %v728, 0
  %v862 = vsel %vm845, %v729, 0
  %v865 = vsel %vm845, %v730, 0
  %v868 = vsel %vm845, %v731, 0
  %v871 = vsel %vm845, %v732, 0
  %v874 = vsel %vm845, %v733, 0
  %v877 = vsel %vm845, %v734, 0
  %v880 = vsel %vm845, %v735, 0
  %v883 = vsel %vm845, %v736, 0
  %v886 = vsel %vm845, %v737, 0
  %v889 = vsel %vm845, %v738, 0
  %v892 = vsel %vm845, %v739, 0
  %v895 = vsel %vm845, %v740, 0
  %v898 = vsel %vm845, %v741, 0
  %v901 = vsel %vm845, %v742, 0
  %v904 = vsel %vm845, %v743, 0
  %v907 = vsel %vm845, %v744, 0
  %v910 = vsel %vm845, %v745, 0
  %v913 = vsel %vm845, %v746, 0
  %v916 = vsel %vm845, %v747, 0
  %v919 = vsel %vm845, %v748, 0
  %v922 = vsel %vm845, %v749, 0
  %v925 = vsel %vm845, %v750, 0
  %v928 = vsel %vm845, %v751, 0
  %v931 = vsel %vm845, %v752, 0
  %v934 = vsel %vm845, %v753, 0
  %v937 = vsel %vm845, %v754, 0
  %v940 = vsel %vm845, %v755, 0
  %v943 = vsel %vm845, %v756, 0
  %v946 = vsel %vm845, %v757, 0
  %v949 = vsel %vm845, %v758, 0
  %v952 = vsel %vm845, %v759, 0
  %v955 = vsel %vm845, %v760, 0
  %v958 = vsel %vm845, %v761, 0
  %v961 = vsel %vm845, %v762, 0
  %963 = vmatprep.subr.bf16.mxu0 %v647
  %964 = vmatpush1.bf16.msra.mxu0 %v646
  %965 = vmatprep.subr.bf16.mxu0 %v686
  %966 = vmatpush1.bf16.msra.mxu0 %v685
  %967 = vmatprep.subr.bf16.mxu0 %v850
  %968 = vmatpush1.bf16.msra.mxu0 %v847
  %969 = vmatprep.subr.bf16.mxu0 0
  %970 = vmatpush1.bf16.msra.mxu0 0
  %971 = vmatprep.subr.bf16.mxu0 0
  %972 = vmatpush1.bf16.msra.mxu0 0
  %973 = vmatprep.subr.bf16.mxu0 0
  %974 = vmatpush1.bf16.msra.mxu0 0
  %975 = vmatprep.subr.bf16.mxu0 0
  %976 = vmatpush1.bf16.msra.mxu0 0
  %977 = vmatprep.subr.bf16.mxu0 0
  %978 = vmatpush1.bf16.msra.mxu0 0
  %979 = vmatprep.subr.bf16.mxu0 0
  %980 = vmatpush1.bf16.msra.mxu0 0
  %981 = vmatprep.subr.bf16.mxu0 0
  %982 = vmatpush1.bf16.msra.mxu0 0
  %983 = vmatprep.subr.bf16.mxu0 0
  %984 = vmatpush1.bf16.msra.mxu0 0
  %985 = vmatprep.subr.bf16.mxu0 0
  %986 = vmatpush1.bf16.msra.mxu0 0
  %987 = vmatprep.subr.bf16.mxu0 0
  %988 = vmatpush1.bf16.msra.mxu0 0
  %989 = vmatprep.subr.bf16.mxu0 0
  %990 = vmatpush1.bf16.msra.mxu0 0
  %991 = vmatprep.subr.bf16.mxu0 0
  %992 = vmatpush1.bf16.msra.mxu0 0
  %993 = vmatprep.subr.bf16.mxu0 0
  %994 = vmatpush1.bf16.msra.mxu0 0
  %995 = vmatprep.mubr.bf16.mxu0 0
  %996 = vmatmul.mubr.bf16.gmra.mrb[0].mxu0 %v843
  %v997 = vpop.f32.mrb[0].mxu0
  %v998 = vadd.f32 %v159, %v997
  %v999 = vpop.f32.mrb[0].mxu0
  %v1000 = vadd.f32 %v163, %v999
  %v1001 = vpop.f32.mrb[0].mxu0
  %v1002 = vpop.f32.mrb[0].mxu0
  %1003 = vdwg.mxu0
  %1004 = vmatprep.subr.bf16.mxu0 %v649
  %1005 = vmatpush1.bf16.msra.mxu0 %v648
  %1006 = vmatprep.subr.bf16.mxu0 %v688
  %1007 = vmatpush1.bf16.msra.mxu0 %v687
  %1008 = vmatprep.subr.bf16.mxu0 %v856
  %1009 = vmatpush1.bf16.msra.mxu0 %v853
  %1010 = vmatprep.subr.bf16.mxu0 0
  %1011 = vmatpush1.bf16.msra.mxu0 0
  %1012 = vmatprep.subr.bf16.mxu0 0
  %1013 = vmatpush1.bf16.msra.mxu0 0
  %1014 = vmatprep.subr.bf16.mxu0 0
  %1015 = vmatpush1.bf16.msra.mxu0 0
  %1016 = vmatprep.subr.bf16.mxu0 0
  %1017 = vmatpush1.bf16.msra.mxu0 0
  %1018 = vmatprep.subr.bf16.mxu0 0
  %1019 = vmatpush1.bf16.msra.mxu0 0
  %1020 = vmatprep.subr.bf16.mxu0 0
  %1021 = vmatpush1.bf16.msra.mxu0 0
  %1022 = vmatprep.subr.bf16.mxu0 0
  %1023 = vmatpush1.bf16.msra.mxu0 0
  %1024 = vmatprep.subr.bf16.mxu0 0
  %1025 = vmatpush1.bf16.msra.mxu0 0
  %1026 = vmatprep.subr.bf16.mxu0 0
  %1027 = vmatpush1.bf16.msra.mxu0 0
  %1028 = vmatprep.subr.bf16.mxu0 0
  %1029 = vmatpush1.bf16.msra.mxu0 0
  %1030 = vmatprep.subr.bf16.mxu0 0
  %1031 = vmatpush1.bf16.msra.mxu0 0
  %1032 = vmatprep.subr.bf16.mxu0 0
  %1033 = vmatpush1.bf16.msra.mxu0 0
  %1034 = vmatprep.subr.bf16.mxu0 0
  %1035 = vmatpush1.bf16.msra.mxu0 0
  %1036 = vmatprep.mubr.bf16.mxu0 0
  %1037 = vmatmul.mubr.bf16.gmra.mrb[0].mxu0 %v843
  %v1038 = vpop.f32.mrb[0].mxu0
  %v1039 = vadd.f32 %v167, %v1038
  %v1040 = vpop.f32.mrb[0].mxu0
  %v1041 = vadd.f32 %v171, %v1040
  %v1042 = vpop.f32.mrb[0].mxu0
  %v1043 = vpop.f32.mrb[0].mxu0
  %1044 = vdwg.mxu0
  %1045 = vmatprep.subr.bf16.mxu0 %v651
  %1046 = vmatpush1.bf16.msra.mxu0 %v650
  %1047 = vmatprep.subr.bf16.mxu0 %v690
  %1048 = vmatpush1.bf16.msra.mxu0 %v689
  %1049 = vmatprep.subr.bf16.mxu0 %v862
  %1050 = vmatpush1.bf16.msra.mxu0 %v859
  %1051 = vmatprep.subr.bf16.mxu0 0
  %1052 = vmatpush1.bf16.msra.mxu0 0
  %1053 = vmatprep.subr.bf16.mxu0 0
  %1054 = vmatpush1.bf16.msra.mxu0 0
  %1055 = vmatprep.subr.bf16.mxu0 0
  %1056 = vmatpush1.bf16.msra.mxu0 0
  %1057 = vmatprep.subr.bf16.mxu0 0
  %1058 = vmatpush1.bf16.msra.mxu0 0
  %1059 = vmatprep.subr.bf16.mxu0 0
  %1060 = vmatpush1.bf16.msra.mxu0 0
  %1061 = vmatprep.subr.bf16.mxu0 0
  %1062 = vmatpush1.bf16.msra.mxu0 0
  %1063 = vmatprep.subr.bf16.mxu0 0
  %1064 = vmatpush1.bf16.msra.mxu0 0
  %1065 = vmatprep.subr.bf16.mxu0 0
  %1066 = vmatpush1.bf16.msra.mxu0 0
  %1067 = vmatprep.subr.bf16.mxu0 0
  %1068 = vmatpush1.bf16.msra.mxu0 0
  %1069 = vmatprep.subr.bf16.mxu0 0
  %1070 = vmatpush1.bf16.msra.mxu0 0
  %1071 = vmatprep.subr.bf16.mxu0 0
  %1072 = vmatpush1.bf16.msra.mxu0 0
  %1073 = vmatprep.subr.bf16.mxu0 0
  %1074 = vmatpush1.bf16.msra.mxu0 0
  %1075 = vmatprep.subr.bf16.mxu0 0
  %1076 = vmatpush1.bf16.msra.mxu0 0
  %1077 = vmatprep.mubr.bf16.mxu0 0
  %1078 = vmatmul.mubr.bf16.gmra.mrb[0].mxu0 %v843
  %v1079 = vpop.f32.mrb[0].mxu0
  %v1080 = vadd.f32 %v175, %v1079
  %v1081 = vpop.f32.mrb[0].mxu0
  %v1082 = vadd.f32 %v179, %v1081
  %v1083 = vpop.f32.mrb[0].mxu0
  %v1084 = vpop.f32.mrb[0].mxu0
  %1085 = vdwg.mxu0
  %1086 = vmatprep.subr.bf16.mxu0 %v653
  %1087 = vmatpush1.bf16.msra.mxu0 %v652
  %1088 = vmatprep.subr.bf16.mxu0 %v692
  %1089 = vmatpush1.bf16.msra.mxu0 %v691
  %1090 = vmatprep.subr.bf16.mxu0 %v868
  %1091 = vmatpush1.bf16.msra.mxu0 %v865
  %1092 = vmatprep.subr.bf16.mxu0 0
  %1093 = vmatpush1.bf16.msra.mxu0 0
  %1094 = vmatprep.subr.bf16.mxu0 0
  %1095 = vmatpush1.bf16.msra.mxu0 0
  %1096 = vmatprep.subr.bf16.mxu0 0
  %1097 = vmatpush1.bf16.msra.mxu0 0
  %1098 = vmatprep.subr.bf16.mxu0 0
  %1099 = vmatpush1.bf16.msra.mxu0 0
  %1100 = vmatprep.subr.bf16.mxu0 0
  %1101 = vmatpush1.bf16.msra.mxu0 0
  %1102 = vmatprep.subr.bf16.mxu0 0
  %1103 = vmatpush1.bf16.msra.mxu0 0
  %1104 = vmatprep.subr.bf16.mxu0 0
  %1105 = vmatpush1.bf16.msra.mxu0 0
  %1106 = vmatprep.subr.bf16.mxu0 0
  %1107 = vmatpush1.bf16.msra.mxu0 0
  %1108 = vmatprep.subr.bf16.mxu0 0
  %1109 = vmatpush1.bf16.msra.mxu0 0
  %1110 = vmatprep.subr.bf16.mxu0 0
  %1111 = vmatpush1.bf16.msra.mxu0 0
  %1112 = vmatprep.subr.bf16.mxu0 0
  %1113 = vmatpush1.bf16.msra.mxu0 0
  %1114 = vmatprep.subr.bf16.mxu0 0
  %1115 = vmatpush1.bf16.msra.mxu0 0
  %1116 = vmatprep.subr.bf16.mxu0 0
  %1117 = vmatpush1.bf16.msra.mxu0 0
  %1118 = vmatprep.mubr.bf16.mxu0 0
  %1119 = vmatmul.mubr.bf16.gmra.mrb[0].mxu0 %v843
  %v1120 = vpop.f32.mrb[0].mxu0
  %v1121 = vadd.f32 %v183, %v1120
  %v1122 = vpop.f32.mrb[0].mxu0
  %v1123 = vadd.f32 %v187, %v1122
  %v1124 = vpop.f32.mrb[0].mxu0
  %v1125 = vpop.f32.mrb[0].mxu0
  %1126 = vdwg.mxu0
  %1127 = vmatprep.subr.bf16.mxu0 %v655
  %1128 = vmatpush1.bf16.msra.mxu0 %v654
  %1129 = vmatprep.subr.bf16.mxu0 %v694
  %1130 = vmatpush1.bf16.msra.mxu0 %v693
  %1131 = vmatprep.subr.bf16.mxu0 %v874
  %1132 = vmatpush1.bf16.msra.mxu0 %v871
  %1133 = vmatprep.subr.bf16.mxu0 0
  %1134 = vmatpush1.bf16.msra.mxu0 0
  %1135 = vmatprep.subr.bf16.mxu0 0
  %1136 = vmatpush1.bf16.msra.mxu0 0
  %1137 = vmatprep.subr.bf16.mxu0 0
  %1138 = vmatpush1.bf16.msra.mxu0 0
  %1139 = vmatprep.subr.bf16.mxu0 0
  %1140 = vmatpush1.bf16.msra.mxu0 0
  %1141 = vmatprep.subr.bf16.mxu0 0
  %1142 = vmatpush1.bf16.msra.mxu0 0
  %1143 = vmatprep.subr.bf16.mxu0 0
  %1144 = vmatpush1.bf16.msra.mxu0 0
  %1145 = vmatprep.subr.bf16.mxu0 0
  %1146 = vmatpush1.bf16.msra.mxu0 0
  %1147 = vmatprep.subr.bf16.mxu0 0
  %1148 = vmatpush1.bf16.msra.mxu0 0
  %1149 = vmatprep.subr.bf16.mxu0 0
  %1150 = vmatpush1.bf16.msra.mxu0 0
  %1151 = vmatprep.subr.bf16.mxu0 0
  %1152 = vmatpush1.bf16.msra.mxu0 0
  %1153 = vmatprep.subr.bf16.mxu0 0
  %1154 = vmatpush1.bf16.msra.mxu0 0
  %1155 = vmatprep.subr.bf16.mxu0 0
  %1156 = vmatpush1.bf16.msra.mxu0 0
  %1157 = vmatprep.subr.bf16.mxu0 0
  %1158 = vmatpush1.bf16.msra.mxu0 0
  %1159 = vmatprep.mubr.bf16.mxu0 0
  %1160 = vmatmul.mubr.bf16.gmra.mrb[0].mxu0 %v843
  %v1161 = vpop.f32.mrb[0].mxu0
  %v1162 = vadd.f32 %v191, %v1161
  %v1163 = vpop.f32.mrb[0].mxu0
  %v1164 = vadd.f32 %v195, %v1163
  %v1165 = vpop.f32.mrb[0].mxu0
  %v1166 = vpop.f32.mrb[0].mxu0
  %1167 = vdwg.mxu0
  %1168 = vmatprep.subr.bf16.mxu0 %v657
  %1169 = vmatpush1.bf16.msra.mxu0 %v656
  %1170 = vmatprep.subr.bf16.mxu0 %v696
  %1171 = vmatpush1.bf16.msra.mxu0 %v695
  %1172 = vmatprep.subr.bf16.mxu0 %v880
  %1173 = vmatpush1.bf16.msra.mxu0 %v877
  %1174 = vmatprep.subr.bf16.mxu0 0
  %1175 = vmatpush1.bf16.msra.mxu0 0
  %1176 = vmatprep.subr.bf16.mxu0 0
  %1177 = vmatpush1.bf16.msra.mxu0 0
  %1178 = vmatprep.subr.bf16.mxu0 0
  %1179 = vmatpush1.bf16.msra.mxu0 0
  %1180 = vmatprep.subr.bf16.mxu0 0
  %1181 = vmatpush1.bf16.msra.mxu0 0
  %1182 = vmatprep.subr.bf16.mxu0 0
  %1183 = vmatpush1.bf16.msra.mxu0 0
  %1184 = vmatprep.subr.bf16.mxu0 0
  %1185 = vmatpush1.bf16.msra.mxu0 0
  %1186 = vmatprep.subr.bf16.mxu0 0
  %1187 = vmatpush1.bf16.msra.mxu0 0
  %1188 = vmatprep.subr.bf16.mxu0 0
  %1189 = vmatpush1.bf16.msra.mxu0 0
  %1190 = vmatprep.subr.bf16.mxu0 0
  %1191 = vmatpush1.bf16.msra.mxu0 0
  %1192 = vmatprep.subr.bf16.mxu0 0
  %1193 = vmatpush1.bf16.msra.mxu0 0
  %1194 = vmatprep.subr.bf16.mxu0 0
  %1195 = vmatpush1.bf16.msra.mxu0 0
  %1196 = vmatprep.subr.bf16.mxu0 0
  %1197 = vmatpush1.bf16.msra.mxu0 0
  %1198 = vmatprep.subr.bf16.mxu0 0
  %1199 = vmatpush1.bf16.msra.mxu0 0
  %1200 = vmatprep.mubr.bf16.mxu0 0
  %1201 = vmatmul.mubr.bf16.gmra.mrb[0].mxu0 %v843
  %v1202 = vpop.f32.mrb[0].mxu0
  %v1203 = vadd.f32 %v199, %v1202
  %v1204 = vpop.f32.mrb[0].mxu0
  %v1205 = vadd.f32 %v203, %v1204
  %v1206 = vpop.f32.mrb[0].mxu0
  %v1207 = vpop.f32.mrb[0].mxu0
  %1208 = vdwg.mxu0
  %1209 = vmatprep.subr.bf16.mxu0 %v659
  %1210 = vmatpush1.bf16.msra.mxu0 %v658
  %1211 = vmatprep.subr.bf16.mxu0 %v698
  %1212 = vmatpush1.bf16.msra.mxu0 %v697
  %1213 = vmatprep.subr.bf16.mxu0 %v886
  %1214 = vmatpush1.bf16.msra.mxu0 %v883
  %1215 = vmatprep.subr.bf16.mxu0 0
  %1216 = vmatpush1.bf16.msra.mxu0 0
  %1217 = vmatprep.subr.bf16.mxu0 0
  %1218 = vmatpush1.bf16.msra.mxu0 0
  %1219 = vmatprep.subr.bf16.mxu0 0
  %1220 = vmatpush1.bf16.msra.mxu0 0
  %1221 = vmatprep.subr.bf16.mxu0 0
  %1222 = vmatpush1.bf16.msra.mxu0 0
  %1223 = vmatprep.subr.bf16.mxu0 0
  %1224 = vmatpush1.bf16.msra.mxu0 0
  %1225 = vmatprep.subr.bf16.mxu0 0
  %1226 = vmatpush1.bf16.msra.mxu0 0
  %1227 = vmatprep.subr.bf16.mxu0 0
  %1228 = vmatpush1.bf16.msra.mxu0 0
  %1229 = vmatprep.subr.bf16.mxu0 0
  %1230 = vmatpush1.bf16.msra.mxu0 0
  %1231 = vmatprep.subr.bf16.mxu0 0
  %1232 = vmatpush1.bf16.msra.mxu0 0
  %1233 = vmatprep.subr.bf16.mxu0 0
  %1234 = vmatpush1.bf16.msra.mxu0 0
  %1235 = vmatprep.subr.bf16.mxu0 0
  %1236 = vmatpush1.bf16.msra.mxu0 0
  %1237 = vmatprep.subr.bf16.mxu0 0
  %1238 = vmatpush1.bf16.msra.mxu0 0
  %1239 = vmatprep.subr.bf16.mxu0 0
  %1240 = vmatpush1.bf16.msra.mxu0 0
  %1241 = vmatprep.mubr.bf16.mxu0 0
  %1242 = vmatmul.mubr.bf16.gmra.mrb[0].mxu0 %v843
  %v1243 = vpop.f32.mrb[0].mxu0
  %v1244 = vadd.f32 %v207, %v1243
  %v1245 = vpop.f32.mrb[0].mxu0
  %v1246 = vadd.f32 %v211, %v1245
  %v1247 = vpop.f32.mrb[0].mxu0
  %v1248 = vpop.f32.mrb[0].mxu0
  %1249 = vdwg.mxu0
  %1250 = vmatprep.subr.bf16.mxu0 %v661
  %1251 = vmatpush1.bf16.msra.mxu0 %v660
  %1252 = vmatprep.subr.bf16.mxu0 %v700
  %1253 = vmatpush1.bf16.msra.mxu0 %v699
  %1254 = vmatprep.subr.bf16.mxu0 %v892
  %1255 = vmatpush1.bf16.msra.mxu0 %v889
  %1256 = vmatprep.subr.bf16.mxu0 0
  %1257 = vmatpush1.bf16.msra.mxu0 0
  %1258 = vmatprep.subr.bf16.mxu0 0
  %1259 = vmatpush1.bf16.msra.mxu0 0
  %1260 = vmatprep.subr.bf16.mxu0 0
  %1261 = vmatpush1.bf16.msra.mxu0 0
  %1262 = vmatprep.subr.bf16.mxu0 0
  %1263 = vmatpush1.bf16.msra.mxu0 0
  %1264 = vmatprep.subr.bf16.mxu0 0
  %1265 = vmatpush1.bf16.msra.mxu0 0
  %1266 = vmatprep.subr.bf16.mxu0 0
  %1267 = vmatpush1.bf16.msra.mxu0 0
  %1268 = vmatprep.subr.bf16.mxu0 0
  %1269 = vmatpush1.bf16.msra.mxu0 0
  %1270 = vmatprep.subr.bf16.mxu0 0
  %1271 = vmatpush1.bf16.msra.mxu0 0
  %1272 = vmatprep.subr.bf16.mxu0 0
  %1273 = vmatpush1.bf16.msra.mxu0 0
  %1274 = vmatprep.subr.bf16.mxu0 0
  %1275 = vmatpush1.bf16.msra.mxu0 0
  %1276 = vmatprep.subr.bf16.mxu0 0
  %1277 = vmatpush1.bf16.msra.mxu0 0
  %1278 = vmatprep.subr.bf16.mxu0 0
  %1279 = vmatpush1.bf16.msra.mxu0 0
  %1280 = vmatprep.subr.bf16.mxu0 0
  %1281 = vmatpush1.bf16.msra.mxu0 0
  %1282 = vmatprep.mubr.bf16.mxu0 0
  %1283 = vmatmul.mubr.bf16.gmra.mrb[0].mxu0 %v843
  %v1284 = vpop.f32.mrb[0].mxu0
  %v1285 = vadd.f32 %v215, %v1284
  %v1286 = vpop.f32.mrb[0].mxu0
  %v1287 = vadd.f32 %v219, %v1286
  %v1288 = vpop.f32.mrb[0].mxu0
  %v1289 = vpop.f32.mrb[0].mxu0
  %1290 = vdwg.mxu0
  %1291 = vmatprep.subr.bf16.mxu0 %v663
  %1292 = vmatpush1.bf16.msra.mxu0 %v662
  %1293 = vmatprep.subr.bf16.mxu0 %v702
  %1294 = vmatpush1.bf16.msra.mxu0 %v701
  %1295 = vmatprep.subr.bf16.mxu0 %v898
  %1296 = vmatpush1.bf16.msra.mxu0 %v895
  %1297 = vmatprep.subr.bf16.mxu0 0
  %1298 = vmatpush1.bf16.msra.mxu0 0
  %1299 = vmatprep.subr.bf16.mxu0 0
  %1300 = vmatpush1.bf16.msra.mxu0 0
  %1301 = vmatprep.subr.bf16.mxu0 0
  %1302 = vmatpush1.bf16.msra.mxu0 0
  %1303 = vmatprep.subr.bf16.mxu0 0
  %1304 = vmatpush1.bf16.msra.mxu0 0
  %1305 = vmatprep.subr.bf16.mxu0 0
  %1306 = vmatpush1.bf16.msra.mxu0 0
  %1307 = vmatprep.subr.bf16.mxu0 0
  %1308 = vmatpush1.bf16.msra.mxu0 0
  %1309 = vmatprep.subr.bf16.mxu0 0
  %1310 = vmatpush1.bf16.msra.mxu0 0
  %1311 = vmatprep.subr.bf16.mxu0 0
  %1312 = vmatpush1.bf16.msra.mxu0 0
  %1313 = vmatprep.subr.bf16.mxu0 0
  %1314 = vmatpush1.bf16.msra.mxu0 0
  %1315 = vmatprep.subr.bf16.mxu0 0
  %1316 = vmatpush1.bf16.msra.mxu0 0
  %1317 = vmatprep.subr.bf16.mxu0 0
  %1318 = vmatpush1.bf16.msra.mxu0 0
  %1319 = vmatprep.subr.bf16.mxu0 0
  %1320 = vmatpush1.bf16.msra.mxu0 0
  %1321 = vmatprep.subr.bf16.mxu0 0
  %1322 = vmatpush1.bf16.msra.mxu0 0
  %1323 = vmatprep.mubr.bf16.mxu0 0
  %1324 = vmatmul.mubr.bf16.gmra.mrb[0].mxu0 %v843
  %v1325 = vpop.f32.mrb[0].mxu0
  %v1326 = vadd.f32 %v223, %v1325
  %v1327 = vpop.f32.mrb[0].mxu0
  %v1328 = vadd.f32 %v227, %v1327
  %v1329 = vpop.f32.mrb[0].mxu0
  %v1330 = vpop.f32.mrb[0].mxu0
  %1331 = vdwg.mxu0
  %1332 = vmatprep.subr.bf16.mxu0 %v665
  %1333 = vmatpush1.bf16.msra.mxu0 %v664
  %1334 = vmatprep.subr.bf16.mxu0 %v704
  %1335 = vmatpush1.bf16.msra.mxu0 %v703
  %1336 = vmatprep.subr.bf16.mxu0 %v904
  %1337 = vmatpush1.bf16.msra.mxu0 %v901
  %1338 = vmatprep.subr.bf16.mxu0 0
  %1339 = vmatpush1.bf16.msra.mxu0 0
  %1340 = vmatprep.subr.bf16.mxu0 0
  %1341 = vmatpush1.bf16.msra.mxu0 0
  %1342 = vmatprep.subr.bf16.mxu0 0
  %1343 = vmatpush1.bf16.msra.mxu0 0
  %1344 = vmatprep.subr.bf16.mxu0 0
  %1345 = vmatpush1.bf16.msra.mxu0 0
  %1346 = vmatprep.subr.bf16.mxu0 0
  %1347 = vmatpush1.bf16.msra.mxu0 0
  %1348 = vmatprep.subr.bf16.mxu0 0
  %1349 = vmatpush1.bf16.msra.mxu0 0
  %1350 = vmatprep.subr.bf16.mxu0 0
  %1351 = vmatpush1.bf16.msra.mxu0 0
  %1352 = vmatprep.subr.bf16.mxu0 0
  %1353 = vmatpush1.bf16.msra.mxu0 0
  %1354 = vmatprep.subr.bf16.mxu0 0
  %1355 = vmatpush1.bf16.msra.mxu0 0
  %1356 = vmatprep.subr.bf16.mxu0 0
  %1357 = vmatpush1.bf16.msra.mxu0 0
  %1358 = vmatprep.subr.bf16.mxu0 0
  %1359 = vmatpush1.bf16.msra.mxu0 0
  %1360 = vmatprep.subr.bf16.mxu0 0
  %1361 = vmatpush1.bf16.msra.mxu0 0
  %1362 = vmatprep.subr.bf16.mxu0 0
  %1363 = vmatpush1.bf16.msra.mxu0 0
  %1364 = vmatprep.mubr.bf16.mxu0 0
  %1365 = vmatmul.mubr.bf16.gmra.mrb[0].mxu0 %v843
  %v1366 = vpop.f32.mrb[0].mxu0
  %v1367 = vadd.f32 %v231, %v1366
  %v1368 = vpop.f32.mrb[0].mxu0
  %v1369 = vadd.f32 %v235, %v1368
  %v1370 = vpop.f32.mrb[0].mxu0
  %v1371 = vpop.f32.mrb[0].mxu0
  %1372 = vdwg.mxu0
  %1373 = vmatprep.subr.bf16.mxu0 %v667
  %1374 = vmatpush1.bf16.msra.mxu0 %v666
  %1375 = vmatprep.subr.bf16.mxu0 %v706
  %1376 = vmatpush1.bf16.msra.mxu0 %v705
  %1377 = vmatprep.subr.bf16.mxu0 %v910
  %1378 = vmatpush1.bf16.msra.mxu0 %v907
  %1379 = vmatprep.subr.bf16.mxu0 0
  %1380 = vmatpush1.bf16.msra.mxu0 0
  %1381 = vmatprep.subr.bf16.mxu0 0
  %1382 = vmatpush1.bf16.msra.mxu0 0
  %1383 = vmatprep.subr.bf16.mxu0 0
  %1384 = vmatpush1.bf16.msra.mxu0 0
  %1385 = vmatprep.subr.bf16.mxu0 0
  %1386 = vmatpush1.bf16.msra.mxu0 0
  %1387 = vmatprep.subr.bf16.mxu0 0
  %1388 = vmatpush1.bf16.msra.mxu0 0
  %1389 = vmatprep.subr.bf16.mxu0 0
  %1390 = vmatpush1.bf16.msra.mxu0 0
  %1391 = vmatprep.subr.bf16.mxu0 0
  %1392 = vmatpush1.bf16.msra.mxu0 0
  %1393 = vmatprep.subr.bf16.mxu0 0
  %1394 = vmatpush1.bf16.msra.mxu0 0
  %1395 = vmatprep.subr.bf16.mxu0 0
  %1396 = vmatpush1.bf16.msra.mxu0 0
  %1397 = vmatprep.subr.bf16.mxu0 0
  %1398 = vmatpush1.bf16.msra.mxu0 0
  %1399 = vmatprep.subr.bf16.mxu0 0
  %1400 = vmatpush1.bf16.msra.mxu0 0
  %1401 = vmatprep.subr.bf16.mxu0 0
  %1402 = vmatpush1.bf16.msra.mxu0 0
  %1403 = vmatprep.subr.bf16.mxu0 0
  %1404 = vmatpush1.bf16.msra.mxu0 0
  %1405 = vmatprep.mubr.bf16.mxu0 0
  %1406 = vmatmul.mubr.bf16.gmra.mrb[0].mxu0 %v843
  %v1407 = vpop.f32.mrb[0].mxu0
  %v1408 = vadd.f32 %v239, %v1407
  %v1409 = vpop.f32.mrb[0].mxu0
  %v1410 = vadd.f32 %v243, %v1409
  %v1411 = vpop.f32.mrb[0].mxu0
  %v1412 = vpop.f32.mrb[0].mxu0
  %1413 = vdwg.mxu0
  %1414 = vmatprep.subr.bf16.mxu0 %v669
  %1415 = vmatpush1.bf16.msra.mxu0 %v668
  %1416 = vmatprep.subr.bf16.mxu0 %v708
  %1417 = vmatpush1.bf16.msra.mxu0 %v707
  %1418 = vmatprep.subr.bf16.mxu0 %v916
  %1419 = vmatpush1.bf16.msra.mxu0 %v913
  %1420 = vmatprep.subr.bf16.mxu0 0
  %1421 = vmatpush1.bf16.msra.mxu0 0
  %1422 = vmatprep.subr.bf16.mxu0 0
  %1423 = vmatpush1.bf16.msra.mxu0 0
  %1424 = vmatprep.subr.bf16.mxu0 0
  %1425 = vmatpush1.bf16.msra.mxu0 0
  %1426 = vmatprep.subr.bf16.mxu0 0
  %1427 = vmatpush1.bf16.msra.mxu0 0
  %1428 = vmatprep.subr.bf16.mxu0 0
  %1429 = vmatpush1.bf16.msra.mxu0 0
  %1430 = vmatprep.subr.bf16.mxu0 0
  %1431 = vmatpush1.bf16.msra.mxu0 0
  %1432 = vmatprep.subr.bf16.mxu0 0
  %1433 = vmatpush1.bf16.msra.mxu0 0
  %1434 = vmatprep.subr.bf16.mxu0 0
  %1435 = vmatpush1.bf16.msra.mxu0 0
  %1436 = vmatprep.subr.bf16.mxu0 0
  %1437 = vmatpush1.bf16.msra.mxu0 0
  %1438 = vmatprep.subr.bf16.mxu0 0
  %1439 = vmatpush1.bf16.msra.mxu0 0
  %1440 = vmatprep.subr.bf16.mxu0 0
  %1441 = vmatpush1.bf16.msra.mxu0 0
  %1442 = vmatprep.subr.bf16.mxu0 0
  %1443 = vmatpush1.bf16.msra.mxu0 0
  %1444 = vmatprep.subr.bf16.mxu0 0
  %1445 = vmatpush1.bf16.msra.mxu0 0
  %1446 = vmatprep.mubr.bf16.mxu0 0
  %1447 = vmatmul.mubr.bf16.gmra.mrb[0].mxu0 %v843
  %v1448 = vpop.f32.mrb[0].mxu0
  %v1449 = vadd.f32 %v247, %v1448
  %v1450 = vpop.f32.mrb[0].mxu0
  %v1451 = vadd.f32 %v251, %v1450
  %v1452 = vpop.f32.mrb[0].mxu0
  %v1453 = vpop.f32.mrb[0].mxu0
  %1454 = vdwg.mxu0
  %1455 = vmatprep.subr.bf16.mxu0 %v671
  %1456 = vmatpush1.bf16.msra.mxu0 %v670
  %1457 = vmatprep.subr.bf16.mxu0 %v710
  %1458 = vmatpush1.bf16.msra.mxu0 %v709
  %1459 = vmatprep.subr.bf16.mxu0 %v922
  %1460 = vmatpush1.bf16.msra.mxu0 %v919
  %1461 = vmatprep.subr.bf16.mxu0 0
  %1462 = vmatpush1.bf16.msra.mxu0 0
  %1463 = vmatprep.subr.bf16.mxu0 0
  %1464 = vmatpush1.bf16.msra.mxu0 0
  %1465 = vmatprep.subr.bf16.mxu0 0
  %1466 = vmatpush1.bf16.msra.mxu0 0
  %1467 = vmatprep.subr.bf16.mxu0 0
  %1468 = vmatpush1.bf16.msra.mxu0 0
  %1469 = vmatprep.subr.bf16.mxu0 0
  %1470 = vmatpush1.bf16.msra.mxu0 0
  %1471 = vmatprep.subr.bf16.mxu0 0
  %1472 = vmatpush1.bf16.msra.mxu0 0
  %1473 = vmatprep.subr.bf16.mxu0 0
  %1474 = vmatpush1.bf16.msra.mxu0 0
  %1475 = vmatprep.subr.bf16.mxu0 0
  %1476 = vmatpush1.bf16.msra.mxu0 0
  %1477 = vmatprep.subr.bf16.mxu0 0
  %1478 = vmatpush1.bf16.msra.mxu0 0
  %1479 = vmatprep.subr.bf16.mxu0 0
  %1480 = vmatpush1.bf16.msra.mxu0 0
  %1481 = vmatprep.subr.bf16.mxu0 0
  %1482 = vmatpush1.bf16.msra.mxu0 0
  %1483 = vmatprep.subr.bf16.mxu0 0
  %1484 = vmatpush1.bf16.msra.mxu0 0
  %1485 = vmatprep.subr.bf16.mxu0 0
  %1486 = vmatpush1.bf16.msra.mxu0 0
  %1487 = vmatprep.mubr.bf16.mxu0 0
  %1488 = vmatmul.mubr.bf16.gmra.mrb[0].mxu0 %v843
  %v1489 = vpop.f32.mrb[0].mxu0
  %v1490 = vadd.f32 %v255, %v1489
  %v1491 = vpop.f32.mrb[0].mxu0
  %v1492 = vadd.f32 %v259, %v1491
  %v1493 = vpop.f32.mrb[0].mxu0
  %v1494 = vpop.f32.mrb[0].mxu0
  %1495 = vdwg.mxu0
  %1496 = vmatprep.subr.bf16.mxu0 %v673
  %1497 = vmatpush1.bf16.msra.mxu0 %v672
  %1498 = vmatprep.subr.bf16.mxu0 %v712
  %1499 = vmatpush1.bf16.msra.mxu0 %v711
  %1500 = vmatprep.subr.bf16.mxu0 %v928
  %1501 = vmatpush1.bf16.msra.mxu0 %v925
  %1502 = vmatprep.subr.bf16.mxu0 0
  %1503 = vmatpush1.bf16.msra.mxu0 0
  %1504 = vmatprep.subr.bf16.mxu0 0
  %1505 = vmatpush1.bf16.msra.mxu0 0
  %1506 = vmatprep.subr.bf16.mxu0 0
  %1507 = vmatpush1.bf16.msra.mxu0 0
  %1508 = vmatprep.subr.bf16.mxu0 0
  %1509 = vmatpush1.bf16.msra.mxu0 0
  %1510 = vmatprep.subr.bf16.mxu0 0
  %1511 = vmatpush1.bf16.msra.mxu0 0
  %1512 = vmatprep.subr.bf16.mxu0 0
  %1513 = vmatpush1.bf16.msra.mxu0 0
  %1514 = vmatprep.subr.bf16.mxu0 0
  %1515 = vmatpush1.bf16.msra.mxu0 0
  %1516 = vmatprep.subr.bf16.mxu0 0
  %1517 = vmatpush1.bf16.msra.mxu0 0
  %1518 = vmatprep.subr.bf16.mxu0 0
  %1519 = vmatpush1.bf16.msra.mxu0 0
  %1520 = vmatprep.subr.bf16.mxu0 0
  %1521 = vmatpush1.bf16.msra.mxu0 0
  %1522 = vmatprep.subr.bf16.mxu0 0
  %1523 = vmatpush1.bf16.msra.mxu0 0
  %1524 = vmatprep.subr.bf16.mxu0 0
  %1525 = vmatpush1.bf16.msra.mxu0 0
  %1526 = vmatprep.subr.bf16.mxu0 0
  %1527 = vmatpush1.bf16.msra.mxu0 0
  %1528 = vmatprep.mubr.bf16.mxu0 0
  %1529 = vmatmul.mubr.bf16.gmra.mrb[0].mxu0 %v843
  %v1530 = vpop.f32.mrb[0].mxu0
  %v1531 = vadd.f32 %v263, %v1530
  %v1532 = vpop.f32.mrb[0].mxu0
  %v1533 = vadd.f32 %v267, %v1532
  %v1534 = vpop.f32.mrb[0].mxu0
  %v1535 = vpop.f32.mrb[0].mxu0
  %1536 = vdwg.mxu0
  %1537 = vmatprep.subr.bf16.mxu0 %v675
  %1538 = vmatpush1.bf16.msra.mxu0 %v674
  %1539 = vmatprep.subr.bf16.mxu0 %v714
  %1540 = vmatpush1.bf16.msra.mxu0 %v713
  %1541 = vmatprep.subr.bf16.mxu0 %v934
  %1542 = vmatpush1.bf16.msra.mxu0 %v931
  %1543 = vmatprep.subr.bf16.mxu0 0
  %1544 = vmatpush1.bf16.msra.mxu0 0
  %1545 = vmatprep.subr.bf16.mxu0 0
  %1546 = vmatpush1.bf16.msra.mxu0 0
  %1547 = vmatprep.subr.bf16.mxu0 0
  %1548 = vmatpush1.bf16.msra.mxu0 0
  %1549 = vmatprep.subr.bf16.mxu0 0
  %1550 = vmatpush1.bf16.msra.mxu0 0
  %1551 = vmatprep.subr.bf16.mxu0 0
  %1552 = vmatpush1.bf16.msra.mxu0 0
  %1553 = vmatprep.subr.bf16.mxu0 0
  %1554 = vmatpush1.bf16.msra.mxu0 0
  %1555 = vmatprep.subr.bf16.mxu0 0
  %1556 = vmatpush1.bf16.msra.mxu0 0
  %1557 = vmatprep.subr.bf16.mxu0 0
  %1558 = vmatpush1.bf16.msra.mxu0 0
  %1559 = vmatprep.subr.bf16.mxu0 0
  %1560 = vmatpush1.bf16.msra.mxu0 0
  %1561 = vmatprep.subr.bf16.mxu0 0
  %1562 = vmatpush1.bf16.msra.mxu0 0
  %1563 = vmatprep.subr.bf16.mxu0 0
  %1564 = vmatpush1.bf16.msra.mxu0 0
  %1565 = vmatprep.subr.bf16.mxu0 0
  %1566 = vmatpush1.bf16.msra.mxu0 0
  %1567 = vmatprep.subr.bf16.mxu0 0
  %1568 = vmatpush1.bf16.msra.mxu0 0
  %1569 = vmatprep.mubr.bf16.mxu0 0
  %1570 = vmatmul.mubr.bf16.gmra.mrb[0].mxu0 %v843
  %v1571 = vpop.f32.mrb[0].mxu0
  %v1572 = vadd.f32 %v271, %v1571
  %v1573 = vpop.f32.mrb[0].mxu0
  %v1574 = vadd.f32 %v275, %v1573
  %v1575 = vpop.f32.mrb[0].mxu0
  %v1576 = vpop.f32.mrb[0].mxu0
  %1577 = vdwg.mxu0
  %1578 = vmatprep.subr.bf16.mxu0 %v677
  %1579 = vmatpush1.bf16.msra.mxu0 %v676
  %1580 = vmatprep.subr.bf16.mxu0 %v716
  %1581 = vmatpush1.bf16.msra.mxu0 %v715
  %1582 = vmatprep.subr.bf16.mxu0 %v940
  %1583 = vmatpush1.bf16.msra.mxu0 %v937
  %1584 = vmatprep.subr.bf16.mxu0 0
  %1585 = vmatpush1.bf16.msra.mxu0 0
  %1586 = vmatprep.subr.bf16.mxu0 0
  %1587 = vmatpush1.bf16.msra.mxu0 0
  %1588 = vmatprep.subr.bf16.mxu0 0
  %1589 = vmatpush1.bf16.msra.mxu0 0
  %1590 = vmatprep.subr.bf16.mxu0 0
  %1591 = vmatpush1.bf16.msra.mxu0 0
  %1592 = vmatprep.subr.bf16.mxu0 0
  %1593 = vmatpush1.bf16.msra.mxu0 0
  %1594 = vmatprep.subr.bf16.mxu0 0
  %1595 = vmatpush1.bf16.msra.mxu0 0
  %1596 = vmatprep.subr.bf16.mxu0 0
  %1597 = vmatpush1.bf16.msra.mxu0 0
  %1598 = vmatprep.subr.bf16.mxu0 0
  %1599 = vmatpush1.bf16.msra.mxu0 0
  %1600 = vmatprep.subr.bf16.mxu0 0
  %1601 = vmatpush1.bf16.msra.mxu0 0
  %1602 = vmatprep.subr.bf16.mxu0 0
  %1603 = vmatpush1.bf16.msra.mxu0 0
  %1604 = vmatprep.subr.bf16.mxu0 0
  %1605 = vmatpush1.bf16.msra.mxu0 0
  %1606 = vmatprep.subr.bf16.mxu0 0
  %1607 = vmatpush1.bf16.msra.mxu0 0
  %1608 = vmatprep.subr.bf16.mxu0 0
  %1609 = vmatpush1.bf16.msra.mxu0 0
  %1610 = vmatprep.mubr.bf16.mxu0 0
  %1611 = vmatmul.mubr.bf16.gmra.mrb[0].mxu0 %v843
  %v1612 = vpop.f32.mrb[0].mxu0
  %v1613 = vadd.f32 %v279, %v1612
  %v1614 = vpop.f32.mrb[0].mxu0
  %v1615 = vadd.f32 %v283, %v1614
  %v1616 = vpop.f32.mrb[0].mxu0
  %v1617 = vpop.f32.mrb[0].mxu0
  %1618 = vdwg.mxu0
  %1619 = vmatprep.subr.bf16.mxu0 %v679
  %1620 = vmatpush1.bf16.msra.mxu0 %v678
  %1621 = vmatprep.subr.bf16.mxu0 %v718
  %1622 = vmatpush1.bf16.msra.mxu0 %v717
  %1623 = vmatprep.subr.bf16.mxu0 %v946
  %1624 = vmatpush1.bf16.msra.mxu0 %v943
  %1625 = vmatprep.subr.bf16.mxu0 0
  %1626 = vmatpush1.bf16.msra.mxu0 0
  %1627 = vmatprep.subr.bf16.mxu0 0
  %1628 = vmatpush1.bf16.msra.mxu0 0
  %1629 = vmatprep.subr.bf16.mxu0 0
  %1630 = vmatpush1.bf16.msra.mxu0 0
  %1631 = vmatprep.subr.bf16.mxu0 0
  %1632 = vmatpush1.bf16.msra.mxu0 0
  %1633 = vmatprep.subr.bf16.mxu0 0
  %1634 = vmatpush1.bf16.msra.mxu0 0
  %1635 = vmatprep.subr.bf16.mxu0 0
  %1636 = vmatpush1.bf16.msra.mxu0 0
  %1637 = vmatprep.subr.bf16.mxu0 0
  %1638 = vmatpush1.bf16.msra.mxu0 0
  %1639 = vmatprep.subr.bf16.mxu0 0
  %1640 = vmatpush1.bf16.msra.mxu0 0
  %1641 = vmatprep.subr.bf16.mxu0 0
  %1642 = vmatpush1.bf16.msra.mxu0 0
  %1643 = vmatprep.subr.bf16.mxu0 0
  %1644 = vmatpush1.bf16.msra.mxu0 0
  %1645 = vmatprep.subr.bf16.mxu0 0
  %1646 = vmatpush1.bf16.msra.mxu0 0
  %1647 = vmatprep.subr.bf16.mxu0 0
  %1648 = vmatpush1.bf16.msra.mxu0 0
  %1649 = vmatprep.subr.bf16.mxu0 0
  %1650 = vmatpush1.bf16.msra.mxu0 0
  %1651 = vmatprep.mubr.bf16.mxu0 0
  %1652 = vmatmul.mubr.bf16.gmra.mrb[0].mxu0 %v843
  %v1653 = vpop.f32.mrb[0].mxu0
  %v1654 = vadd.f32 %v287, %v1653
  %v1655 = vpop.f32.mrb[0].mxu0
  %v1656 = vadd.f32 %v291, %v1655
  %v1657 = vpop.f32.mrb[0].mxu0
  %v1658 = vpop.f32.mrb[0].mxu0
  %1659 = vdwg.mxu0
  %1660 = vmatprep.subr.bf16.mxu0 %v681
  %1661 = vmatpush1.bf16.msra.mxu0 %v680
  %1662 = vmatprep.subr.bf16.mxu0 %v720
  %1663 = vmatpush1.bf16.msra.mxu0 %v719
  %1664 = vmatprep.subr.bf16.mxu0 %v952
  %1665 = vmatpush1.bf16.msra.mxu0 %v949
  %1666 = vmatprep.subr.bf16.mxu0 0
  %1667 = vmatpush1.bf16.msra.mxu0 0
  %1668 = vmatprep.subr.bf16.mxu0 0
  %1669 = vmatpush1.bf16.msra.mxu0 0
  %1670 = vmatprep.subr.bf16.mxu0 0
  %1671 = vmatpush1.bf16.msra.mxu0 0
  %1672 = vmatprep.subr.bf16.mxu0 0
  %1673 = vmatpush1.bf16.msra.mxu0 0
  %1674 = vmatprep.subr.bf16.mxu0 0
  %1675 = vmatpush1.bf16.msra.mxu0 0
  %1676 = vmatprep.subr.bf16.mxu0 0
  %1677 = vmatpush1.bf16.msra.mxu0 0
  %1678 = vmatprep.subr.bf16.mxu0 0
  %1679 = vmatpush1.bf16.msra.mxu0 0
  %1680 = vmatprep.subr.bf16.mxu0 0
  %1681 = vmatpush1.bf16.msra.mxu0 0
  %1682 = vmatprep.subr.bf16.mxu0 0
  %1683 = vmatpush1.bf16.msra.mxu0 0
  %1684 = vmatprep.subr.bf16.mxu0 0
  %1685 = vmatpush1.bf16.msra.mxu0 0
  %1686 = vmatprep.subr.bf16.mxu0 0
  %1687 = vmatpush1.bf16.msra.mxu0 0
  %1688 = vmatprep.subr.bf16.mxu0 0
  %1689 = vmatpush1.bf16.msra.mxu0 0
  %1690 = vmatprep.subr.bf16.mxu0 0
  %1691 = vmatpush1.bf16.msra.mxu0 0
  %1692 = vmatprep.mubr.bf16.mxu0 0
  %1693 = vmatmul.mubr.bf16.gmra.mrb[0].mxu0 %v843
  %v1694 = vpop.f32.mrb[0].mxu0
  %v1695 = vadd.f32 %v295, %v1694
  %v1696 = vpop.f32.mrb[0].mxu0
  %v1697 = vadd.f32 %v299, %v1696
  %v1698 = vpop.f32.mrb[0].mxu0
  %v1699 = vpop.f32.mrb[0].mxu0
  %1700 = vdwg.mxu0
  %1701 = vmatprep.subr.bf16.mxu0 %v683
  %1702 = vmatpush1.bf16.msra.mxu0 %v682
  %1703 = vmatprep.subr.bf16.mxu0 %v722
  %1704 = vmatpush1.bf16.msra.mxu0 %v721
  %1705 = vmatprep.subr.bf16.mxu0 %v958
  %1706 = vmatpush1.bf16.msra.mxu0 %v955
  %1707 = vmatprep.subr.bf16.mxu0 0
  %1708 = vmatpush1.bf16.msra.mxu0 0
  %1709 = vmatprep.subr.bf16.mxu0 0
  %1710 = vmatpush1.bf16.msra.mxu0 0
  %1711 = vmatprep.subr.bf16.mxu0 0
  %1712 = vmatpush1.bf16.msra.mxu0 0
  %1713 = vmatprep.subr.bf16.mxu0 0
  %1714 = vmatpush1.bf16.msra.mxu0 0
  %1715 = vmatprep.subr.bf16.mxu0 0
  %1716 = vmatpush1.bf16.msra.mxu0 0
  %1717 = vmatprep.subr.bf16.mxu0 0
  %1718 = vmatpush1.bf16.msra.mxu0 0
  %1719 = vmatprep.subr.bf16.mxu0 0
  %1720 = vmatpush1.bf16.msra.mxu0 0
  %1721 = vmatprep.subr.bf16.mxu0 0
  %1722 = vmatpush1.bf16.msra.mxu0 0
  %1723 = vmatprep.subr.bf16.mxu0 0
  %1724 = vmatpush1.bf16.msra.mxu0 0
  %1725 = vmatprep.subr.bf16.mxu0 0
  %1726 = vmatpush1.bf16.msra.mxu0 0
  %1727 = vmatprep.subr.bf16.mxu0 0
  %1728 = vmatpush1.bf16.msra.mxu0 0
  %1729 = vmatprep.subr.bf16.mxu0 0
  %1730 = vmatpush1.bf16.msra.mxu0 0
  %1731 = vmatprep.subr.bf16.mxu0 0
  %1732 = vmatpush1.bf16.msra.mxu0 0
  %1733 = vmatprep.mubr.bf16.mxu0 0
  %1734 = vmatmul.mubr.bf16.gmra.mrb[0].mxu0 %v843
  %v1735 = vpop.f32.mrb[0].mxu0
  %v1736 = vadd.f32 %v303, %v1735
  %v1737 = vpop.f32.mrb[0].mxu0
  %v1738 = vadd.f32 %v307, %v1737
  %v1739 = vpop.f32.mrb[0].mxu0
  %v1740 = vpop.f32.mrb[0].mxu0
  %1741 = vdwg.mxu0
  %1742 = vmatprep.subr.bf16.mxu0 0
  %1743 = vmatpush1.bf16.msra.mxu0 %v684
  %1744 = vmatprep.subr.bf16.mxu0 0
  %1745 = vmatpush1.bf16.msra.mxu0 %v723
  %1746 = vmatprep.subr.bf16.mxu0 0
  %1747 = vmatpush1.bf16.msra.mxu0 %v961
  %1748 = vmatprep.subr.bf16.mxu0 0
  %1749 = vmatpush1.bf16.msra.mxu0 0
  %1750 = vmatprep.subr.bf16.mxu0 0
  %1751 = vmatpush1.bf16.msra.mxu0 0
  %1752 = vmatprep.subr.bf16.mxu0 0
  %1753 = vmatpush1.bf16.msra.mxu0 0
  %1754 = vmatprep.subr.bf16.mxu0 0
  %1755 = vmatpush1.bf16.msra.mxu0 0
  %1756 = vmatprep.subr.bf16.mxu0 0
  %1757 = vmatpush1.bf16.msra.mxu0 0
  %1758 = vmatprep.subr.bf16.mxu0 0
  %1759 = vmatpush1.bf16.msra.mxu0 0
  %1760 = vmatprep.subr.bf16.mxu0 0
  %1761 = vmatpush1.bf16.msra.mxu0 0
  %1762 = vmatprep.subr.bf16.mxu0 0
  %1763 = vmatpush1.bf16.msra.mxu0 0
  %1764 = vmatprep.subr.bf16.mxu0 0
  %1765 = vmatpush1.bf16.msra.mxu0 0
  %1766 = vmatprep.subr.bf16.mxu0 0
  %1767 = vmatpush1.bf16.msra.mxu0 0
  %1768 = vmatprep.subr.bf16.mxu0 0
  %1769 = vmatpush1.bf16.msra.mxu0 0
  %1770 = vmatprep.subr.bf16.mxu0 0
  %1771 = vmatpush1.bf16.msra.mxu0 0
  %1772 = vmatprep.subr.bf16.mxu0 0
  %1773 = vmatpush1.bf16.msra.mxu0 0
  %1774 = vmatprep.mubr.bf16.mxu0 0
  %1775 = vmatmul.mubr.bf16.gmra.mrb[0].mxu0 %v843
  %v1776 = vpop.f32.mrb[0].mxu0
  %v1777 = vadd.f32 %v311, %v1776
  %v1778 = vpop.f32.mrb[0].mxu0
  %v1779 = vpop.f32.mrb[0].mxu0
  %v1780 = vpop.f32.mrb[0].mxu0
  %1781 = vdwg.mxu0
  %v1782 = vand.u32 2147450879, %v45
  %v1783 = vld [vmem:[%s3] sm:$0xf]
  %v1784 = vld [vmem:[%s3 + $0x4] sm:$0xf]
  %v1785 = vld [vmem:[%s3 + $0x8] sm:$0xf]
  %v1786 = vld [vmem:[%s3 + $0xc] sm:$0xf]
  %v1787 = vld [vmem:[%s3 + $0x10] sm:$0xf]
  %v1793 = vunpack.c.l.b16 %v1783
  %v1794 = vunpack.c.l.b16 %v1784
  %v1795 = vunpack.c.l.b16 %v1785
  %v1796 = vunpack.c.l.b16 %v1786
  %v1797 = vunpack.c.l.b16 %v1787
  %v1798 = vpack.c.b16 %v1794, %v1793
  %v1799 = vpack.c.b16 %v1796, %v1795
  %v1800 = vpack.c.b16 %v1797, %v1797
  %v1804 = vsel %vm841, %v1782, 0
  %v1807 = vsel %vm845, %v1800, 0
  %1809 = vmatprep.subr.bf16.mxu0 0
  %1810 = vmatpush1.bf16.msra.mxu0 %v1798
  %1811 = vmatprep.subr.bf16.mxu0 0
  %1812 = vmatpush1.bf16.msra.mxu0 %v1799
  %1813 = vmatprep.subr.bf16.mxu0 0
  %1814 = vmatpush1.bf16.msra.mxu0 %v1807
  %1815 = vmatprep.subr.bf16.mxu0 0
  %1816 = vmatpush1.bf16.msra.mxu0 0
  %1817 = vmatprep.subr.bf16.mxu0 0
  %1818 = vmatpush1.bf16.msra.mxu0 0
  %1819 = vmatprep.subr.bf16.mxu0 0
  %1820 = vmatpush1.bf16.msra.mxu0 0
  %1821 = vmatprep.subr.bf16.mxu0 0
  %1822 = vmatpush1.bf16.msra.mxu0 0
  %1823 = vmatprep.subr.bf16.mxu0 0
  %1824 = vmatpush1.bf16.msra.mxu0 0
  %1825 = vmatprep.subr.bf16.mxu0 0
  %1826 = vmatpush1.bf16.msra.mxu0 0
  %1827 = vmatprep.subr.bf16.mxu0 0
  %1828 = vmatpush1.bf16.msra.mxu0 0
  %1829 = vmatprep.subr.bf16.mxu0 0
  %1830 = vmatpush1.bf16.msra.mxu0 0
  %1831 = vmatprep.subr.bf16.mxu0 0
  %1832 = vmatpush1.bf16.msra.mxu0 0
  %1833 = vmatprep.subr.bf16.mxu0 0
  %1834 = vmatpush1.bf16.msra.mxu0 0
  %1835 = vmatprep.subr.bf16.mxu0 0
  %1836 = vmatpush1.bf16.msra.mxu0 0
  %1837 = vmatprep.subr.bf16.mxu0 0
  %1838 = vmatpush1.bf16.msra.mxu0 0
  %1839 = vmatprep.subr.bf16.mxu0 0
  %1840 = vmatpush1.bf16.msra.mxu0 0
  %1841 = vmatprep.mubr.bf16.mxu0 0
  %1842 = vmatmul.mubr.bf16.gmra.mrb[0].mxu0 %v1804
  %v1843 = vpop.f32.mrb[0].mxu0
  %v1844 = vadd.f32 0.0, %v1843
  %v1845 = vpop.f32.mrb[0].mxu0
  %v1846 = vpop.f32.mrb[0].mxu0
  %v1847 = vpop.f32.mrb[0].mxu0
  %1848 = vdwg.mxu0
  %vm1849 = vcmp.gt.f32.partialorder %v1844, 0.1
  %v1850 = vsel %vm1849, 1, 0
  %v1851 = vcvt.s32.f32 %v1850
  %vm1852 = vcmask 39936
  %v1853 = vsel %vm1852, %v1851, 0.0
  %1854 = vadd.xlane.f32.xlu0 %v1853
  %v1855 = vpop.xlane.xlu0 %1854
  %v1856 = vmul.f32 %v998, %v1246
  %v1857 = vmul.f32 %v1000, %v1285
  %v1858 = vmul.f32 %v1039, %v1287
  %v1859 = vmul.f32 %v1041, %v1326
  %v1860 = vmul.f32 %v1080, %v1328
  %v1861 = vmul.f32 %v1082, %v1367
  %v1862 = vmul.f32 %v1121, %v1369
  %v1863 = vmul.f32 %v1123, %v1408
  %v1864 = vmul.f32 %v1162, %v1410
  %v1865 = vmul.f32 %v1164, %v1449
  %v1866 = vmul.f32 %v1203, %v1451
  %v1867 = vmul.f32 %v1205, %v1490
  %v1868 = vmul.f32 %v1244, %v1492
  %v1869 = vpack.c.bf16 %v1856, %v1856
  %v1870 = vpack.c.bf16 %v1857, %v1857
  %v1871 = vpack.c.bf16 %v1858, %v1858
  %v1872 = vpack.c.bf16 %v1859, %v1859
  %v1873 = vpack.c.bf16 %v1860, %v1860
  %v1874 = vpack.c.bf16 %v1861, %v1861
  %v1875 = vpack.c.bf16 %v1862, %v1862
  %v1876 = vpack.c.bf16 %v1863, %v1863
  %v1877 = vpack.c.bf16 %v1864, %v1864
  %v1878 = vpack.c.bf16 %v1865, %v1865
  %v1879 = vpack.c.bf16 %v1866, %v1866
  %v1880 = vpack.c.bf16 %v1867, %v1867
  %v1881 = vpack.c.bf16 %v1868, %v1868
  %v1882 = vld [vmem:[%s4] sm:$0xf]
  %v1883 = vld [vmem:[%s4 + $0x4] sm:$0xf]
  %v1884 = vld [vmem:[%s4 + $0x8] sm:$0xf]
  %v1885 = vld [vmem:[%s4 + $0xc] sm:$0xf]
  %v1886 = vld [vmem:[%s4 + $0x10] sm:$0xf]
  %v1887 = vld [vmem:[%s4 + $0x14] sm:$0xf]
  %v1888 = vld [vmem:[%s4 + $0x18] sm:$0xf]
  %v1889 = vld [vmem:[%s4 + $0x1c] sm:$0xf]
  %v1890 = vld [vmem:[%s4 + $0x20] sm:$0xf]
  %v1891 = vld [vmem:[%s4 + $0x24] sm:$0xf]
  %v1892 = vld [vmem:[%s4 + $0x28] sm:$0xf]
  %v1893 = vld [vmem:[%s4 + $0x2c] sm:$0xf]
  %v1894 = vld [vmem:[%s4 + $0x30] sm:$0xf]
  %v1895 = vld [vmem:[%s4 + $0x34] sm:$0xf]
  %v1896 = vld [vmem:[%s4 + $0x38] sm:$0xf]
  %v1897 = vld [vmem:[%s4 + $0x3c] sm:$0xf]
  %v1898 = vld [vmem:[%s4 + $0x40] sm:$0xf]
  %v1899 = vld [vmem:[%s4 + $0x44] sm:$0xf]
  %v1900 = vld [vmem:[%s4 + $0x48] sm:$0xf]
  %v1901 = vld [vmem:[%s4 + $0x4c] sm:$0xf]
  %v1902 = vld [vmem:[%s4 + $0x50] sm:$0xf]
  %v1903 = vld [vmem:[%s4 + $0x54] sm:$0xf]
  %v1904 = vld [vmem:[%s4 + $0x58] sm:$0xf]
  %v1905 = vld [vmem:[%s4 + $0x5c] sm:$0xf]
  %v1906 = vld [vmem:[%s4 + $0x60] sm:$0xf]
  %v1907 = vld [vmem:[%s4 + $0x64] sm:$0xf]
  %v1908 = vld [vmem:[%s4 + $0x68] sm:$0xf]
  %v1909 = vld [vmem:[%s4 + $0x6c] sm:$0xf]
  %v1910 = vld [vmem:[%s4 + $0x70] sm:$0xf]
  %v1911 = vld [vmem:[%s4 + $0x74] sm:$0xf]
  %v1912 = vld [vmem:[%s4 + $0x78] sm:$0xf]
  %v1913 = vld [vmem:[%s4 + $0x7c] sm:$0xf]
  %v1914 = vld [vmem:[%s4 + $0x80] sm:$0xf]
  %v1915 = vld [vmem:[%s4 + $0x84] sm:$0xf]
  %v1916 = vld [vmem:[%s4 + $0x88] sm:$0xf]
  %v1917 = vld [vmem:[%s4 + $0x8c] sm:$0xf]
  %v1918 = vld [vmem:[%s4 + $0x90] sm:$0xf]
  %v1919 = vld [vmem:[%s4 + $0x94] sm:$0xf]
  %v1920 = vld [vmem:[%s4 + $0x98] sm:$0xf]
  %v1921 = vld [vmem:[%s4 + $0x9c] sm:$0xf]
  %v1922 = vld [vmem:[%s4 + $0xa0] sm:$0xf]
  %v1923 = vld [vmem:[%s4 + $0xa4] sm:$0xf]
  %v1924 = vld [vmem:[%s4 + $0xa8] sm:$0xf]
  %v1925 = vld [vmem:[%s4 + $0xac] sm:$0xf]
  %v1926 = vld [vmem:[%s4 + $0xb0] sm:$0xf]
  %v1927 = vld [vmem:[%s4 + $0xb4] sm:$0xf]
  %v1928 = vld [vmem:[%s4 + $0xb8] sm:$0xf]
  %v1929 = vld [vmem:[%s4 + $0xbc] sm:$0xf]
  %v1930 = vld [vmem:[%s4 + $0xc0] sm:$0xf]
  %v1931 = vld [vmem:[%s4 + $0xc4] sm:$0xf]
  %v1932 = vld [vmem:[%s4 + $0xc8] sm:$0xf]
  %v1933 = vld [vmem:[%s4 + $0xcc] sm:$0xf]
  %v1934 = vld [vmem:[%s4 + $0xd0] sm:$0xf]
  %v1935 = vld [vmem:[%s4 + $0xd4] sm:$0xf]
  %v1936 = vld [vmem:[%s4 + $0xd8] sm:$0xf]
  %v1937 = vld [vmem:[%s4 + $0xdc] sm:$0xf]
  %v1938 = vld [vmem:[%s4 + $0xe0] sm:$0xf]
  %v1939 = vld [vmem:[%s4 + $0xe4] sm:$0xf]
  %v1940 = vld [vmem:[%s4 + $0xe8] sm:$0xf]
  %v1941 = vld [vmem:[%s4 + $0xec] sm:$0xf]
  %v1942 = vld [vmem:[%s4 + $0xf0] sm:$0xf]
  %v1943 = vld [vmem:[%s4 + $0xf4] sm:$0xf]
  %v1944 = vld [vmem:[%s4 + $0xf8] sm:$0xf]
  %v1945 = vld [vmem:[%s4 + $0xfc] sm:$0xf]
  %v1946 = vld [vmem:[%s4 + $0x100] sm:$0xf]
  %v1947 = vld [vmem:[%s4 + $0x104] sm:$0xf]
  %v1948 = vld [vmem:[%s4 + $0x108] sm:$0xf]
  %v1949 = vld [vmem:[%s4 + $0x10c] sm:$0xf]
  %v1950 = vld [vmem:[%s4 + $0x110] sm:$0xf]
  %v1951 = vld [vmem:[%s4 + $0x114] sm:$0xf]
  %v1952 = vld [vmem:[%s4 + $0x118] sm:$0xf]
  %v1953 = vld [vmem:[%s4 + $0x11c] sm:$0xf]
  %v1954 = vld [vmem:[%s4 + $0x120] sm:$0xf]
  %v1955 = vld [vmem:[%s4 + $0x124] sm:$0xf]
  %v1956 = vld [vmem:[%s4 + $0x128] sm:$0xf]
  %v1957 = vld [vmem:[%s4 + $0x12c] sm:$0xf]
  %v1958 = vld [vmem:[%s4 + $0x130] sm:$0xf]
  %v1959 = vld [vmem:[%s4 + $0x134] sm:$0xf]
  %v1960 = vld [vmem:[%s4 + $0x138] sm:$0xf]
  %v1961 = vld [vmem:[%s4 + $0x13c] sm:$0xf]
  %v1962 = vld [vmem:[%s4 + $0x140] sm:$0xf]
  %v1963 = vld [vmem:[%s4 + $0x144] sm:$0xf]
  %v1964 = vld [vmem:[%s4 + $0x148] sm:$0xf]
  %v1965 = vld [vmem:[%s4 + $0x14c] sm:$0xf]
  %v1966 = vld [vmem:[%s4 + $0x150] sm:$0xf]
  %v1967 = vld [vmem:[%s4 + $0x154] sm:$0xf]
  %v1968 = vld [vmem:[%s4 + $0x158] sm:$0xf]
  %v1969 = vld [vmem:[%s4 + $0x15c] sm:$0xf]
  %v1970 = vld [vmem:[%s4 + $0x160] sm:$0xf]
  %v1971 = vld [vmem:[%s4 + $0x164] sm:$0xf]
  %v1972 = vld [vmem:[%s4 + $0x168] sm:$0xf]
  %v1973 = vld [vmem:[%s4 + $0x16c] sm:$0xf]
  %v1974 = vld [vmem:[%s4 + $0x170] sm:$0xf]
  %v1975 = vld [vmem:[%s4 + $0x174] sm:$0xf]
  %v1976 = vld [vmem:[%s4 + $0x178] sm:$0xf]
  %v1977 = vld [vmem:[%s4 + $0x17c] sm:$0xf]
  %v1978 = vld [vmem:[%s4 + $0x180] sm:$0xf]
  %v1979 = vld [vmem:[%s4 + $0x184] sm:$0xf]
  %v1980 = vld [vmem:[%s4 + $0x188] sm:$0xf]
  %v1981 = vld [vmem:[%s4 + $0x18c] sm:$0xf]
  %v1982 = vld [vmem:[%s4 + $0x190] sm:$0xf]
  %v1983 = vld [vmem:[%s4 + $0x194] sm:$0xf]
  %v1984 = vld [vmem:[%s4 + $0x198] sm:$0xf]
  %v1985 = vld [vmem:[%s4 + $0x19c] sm:$0xf]
  %v1986 = vld [vmem:[%s4 + $0x1a0] sm:$0xf]
  %v1987 = vld [vmem:[%s4 + $0x1a4] sm:$0xf]
  %v1988 = vld [vmem:[%s4 + $0x1a8] sm:$0xf]
  %v1989 = vld [vmem:[%s4 + $0x1ac] sm:$0xf]
  %v1990 = vld [vmem:[%s4 + $0x1b0] sm:$0xf]
  %v1991 = vld [vmem:[%s4 + $0x1b4] sm:$0xf]
  %v1992 = vld [vmem:[%s4 + $0x1b8] sm:$0xf]
  %v1993 = vld [vmem:[%s4 + $0x1bc] sm:$0xf]
  %v1994 = vld [vmem:[%s4 + $0x1c0] sm:$0xf]
  %v1995 = vld [vmem:[%s4 + $0x1c4] sm:$0xf]
  %v1996 = vld [vmem:[%s4 + $0x1c8] sm:$0xf]
  %v1997 = vld [vmem:[%s4 + $0x1cc] sm:$0xf]
  %v1998 = vld [vmem:[%s4 + $0x1d0] sm:$0xf]
  %v1999 = vld [vmem:[%s4 + $0x1d4] sm:$0xf]
  %v2000 = vld [vmem:[%s4 + $0x1d8] sm:$0xf]
  %v2001 = vld [vmem:[%s4 + $0x1dc] sm:$0xf]
  %v2002 = vld [vmem:[%s4 + $0x1e0] sm:$0xf]
  %v2003 = vld [vmem:[%s4 + $0x1e4] sm:$0xf]
  %v2004 = vld [vmem:[%s4 + $0x1e8] sm:$0xf]
  %v2005 = vld [vmem:[%s4 + $0x1ec] sm:$0xf]
  %v2006 = vld [vmem:[%s4 + $0x1f0] sm:$0xf]
  %v2007 = vld [vmem:[%s4 + $0x1f4] sm:$0xf]
  %v2008 = vld [vmem:[%s4 + $0x1f8] sm:$0xf]
  %v2009 = vld [vmem:[%s4 + $0x1fc] sm:$0xf]
  %v2010 = vld [vmem:[%s4 + $0x200] sm:$0xf]
  %v2011 = vld [vmem:[%s4 + $0x204] sm:$0xf]
  %v2012 = vld [vmem:[%s4 + $0x208] sm:$0xf]
  %v2013 = vld [vmem:[%s4 + $0x20c] sm:$0xf]
  %v2014 = vld [vmem:[%s4 + $0x210] sm:$0xf]
  %v2015 = vld [vmem:[%s4 + $0x214] sm:$0xf]
  %v2016 = vld [vmem:[%s4 + $0x218] sm:$0xf]
  %v2017 = vld [vmem:[%s4 + $0x21c] sm:$0xf]
  %v2018 = vld [vmem:[%s4 + $0x220] sm:$0xf]
  %v2019 = vld [vmem:[%s4 + $0x224] sm:$0xf]
  %v2020 = vld [vmem:[%s4 + $0x228] sm:$0xf]
  %v2021 = vld [vmem:[%s4 + $0x22c] sm:$0xf]
  %v2022 = vld [vmem:[%s4 + $0x230] sm:$0xf]
  %v2023 = vld [vmem:[%s4 + $0x234] sm:$0xf]
  %v2024 = vld [vmem:[%s4 + $0x238] sm:$0xf]
  %v2025 = vld [vmem:[%s4 + $0x23c] sm:$0xf]
  %v2026 = vld [vmem:[%s4 + $0x240] sm:$0xf]
  %v2027 = vld [vmem:[%s4 + $0x244] sm:$0xf]
  %v2028 = vld [vmem:[%s4 + $0x248] sm:$0xf]
  %v2029 = vld [vmem:[%s4 + $0x24c] sm:$0xf]
  %v2030 = vld [vmem:[%s4 + $0x250] sm:$0xf]
  %v2031 = vld [vmem:[%s4 + $0x254] sm:$0xf]
  %v2032 = vld [vmem:[%s4 + $0x258] sm:$0xf]
  %v2033 = vld [vmem:[%s4 + $0x25c] sm:$0xf]
  %v2034 = vld [vmem:[%s4 + $0x260] sm:$0xf]
  %v2035 = vld [vmem:[%s4 + $0x264] sm:$0xf]
  %v2036 = vld [vmem:[%s4 + $0x268] sm:$0xf]
  %v2037 = vld [vmem:[%s4 + $0x26c] sm:$0xf]
  %v2038 = vld [vmem:[%s4 + $0x270] sm:$0xf]
  %v2039 = vld [vmem:[%s4 + $0x274] sm:$0xf]
  %v2040 = vld [vmem:[%s4 + $0x278] sm:$0xf]
  %v2041 = vld [vmem:[%s4 + $0x27c] sm:$0xf]
  %v2042 = vld [vmem:[%s4 + $0x280] sm:$0xf]
  %v2043 = vld [vmem:[%s4 + $0x284] sm:$0xf]
  %v2044 = vld [vmem:[%s4 + $0x288] sm:$0xf]
  %v2045 = vld [vmem:[%s4 + $0x28c] sm:$0xf]
  %v2046 = vld [vmem:[%s4 + $0x290] sm:$0xf]
  %v2047 = vld [vmem:[%s4 + $0x294] sm:$0xf]
  %v2048 = vld [vmem:[%s4 + $0x298] sm:$0xf]
  %v2049 = vld [vmem:[%s4 + $0x29c] sm:$0xf]
  %v2050 = vld [vmem:[%s4 + $0x2a0] sm:$0xf]
  %v2051 = vld [vmem:[%s4 + $0x2a4] sm:$0xf]
  %v2052 = vld [vmem:[%s4 + $0x2a8] sm:$0xf]
  %v2053 = vld [vmem:[%s4 + $0x2ac] sm:$0xf]
  %v2054 = vld [vmem:[%s4 + $0x2b0] sm:$0xf]
  %v2055 = vld [vmem:[%s4 + $0x2b4] sm:$0xf]
  %v2056 = vld [vmem:[%s4 + $0x2b8] sm:$0xf]
  %v2057 = vld [vmem:[%s4 + $0x2bc] sm:$0xf]
  %v2058 = vld [vmem:[%s4 + $0x2c0] sm:$0xf]
  %v2059 = vld [vmem:[%s4 + $0x2c4] sm:$0xf]
  %v2060 = vld [vmem:[%s4 + $0x2c8] sm:$0xf]
  %v2061 = vld [vmem:[%s4 + $0x2cc] sm:$0xf]
  %v2062 = vld [vmem:[%s4 + $0x2d0] sm:$0xf]
  %v2063 = vld [vmem:[%s4 + $0x2d4] sm:$0xf]
  %v2064 = vld [vmem:[%s4 + $0x2d8] sm:$0xf]
  %v2065 = vld [vmem:[%s4 + $0x2dc] sm:$0xf]
  %v2066 = vld [vmem:[%s4 + $0x2e0] sm:$0xf]
  %v2067 = vld [vmem:[%s4 + $0x2e4] sm:$0xf]
  %v2068 = vld [vmem:[%s4 + $0x2e8] sm:$0xf]
  %v2069 = vld [vmem:[%s4 + $0x2ec] sm:$0xf]
  %v2070 = vld [vmem:[%s4 + $0x2f0] sm:$0xf]
  %v2071 = vld [vmem:[%s4 + $0x2f4] sm:$0xf]
  %v2072 = vld [vmem:[%s4 + $0x2f8] sm:$0xf]
  %v2073 = vld [vmem:[%s4 + $0x2fc] sm:$0xf]
  %v2074 = vld [vmem:[%s4 + $0x300] sm:$0xf]
  %v2075 = vld [vmem:[%s4 + $0x304] sm:$0xf]
  %v2076 = vld [vmem:[%s4 + $0x308] sm:$0xf]
  %v2077 = vld [vmem:[%s4 + $0x30c] sm:$0xf]
  %v2078 = vld [vmem:[%s4 + $0x310] sm:$0xf]
  %v2079 = vld [vmem:[%s4 + $0x314] sm:$0xf]
  %v2080 = vld [vmem:[%s4 + $0x318] sm:$0xf]
  %v2081 = vld [vmem:[%s4 + $0x31c] sm:$0xf]
  %v2082 = vld [vmem:[%s4 + $0x320] sm:$0xf]
  %v2083 = vld [vmem:[%s4 + $0x324] sm:$0xf]
  %v2084 = vld [vmem:[%s4 + $0x328] sm:$0xf]
  %v2085 = vld [vmem:[%s4 + $0x32c] sm:$0xf]
  %v2086 = vld [vmem:[%s4 + $0x330] sm:$0xf]
  %v2087 = vld [vmem:[%s4 + $0x334] sm:$0xf]
  %v2088 = vld [vmem:[%s4 + $0x338] sm:$0xf]
  %v2089 = vld [vmem:[%s4 + $0x33c] sm:$0xf]
  %v2298 = vunpack.c.l.b16 %v1882
  %v2299 = vunpack.c.l.b16 %v1883
  %v2300 = vunpack.c.l.b16 %v1884
  %v2301 = vunpack.c.l.b16 %v1885
  %v2302 = vunpack.c.l.b16 %v1886
  %v2303 = vunpack.c.l.b16 %v1887
  %v2304 = vunpack.c.l.b16 %v1888
  %v2305 = vunpack.c.l.b16 %v1889
  %v2306 = vunpack.c.l.b16 %v1890
  %v2307 = vunpack.c.l.b16 %v1891
  %v2308 = vunpack.c.l.b16 %v1892
  %v2309 = vunpack.c.l.b16 %v1893
  %v2310 = vunpack.c.l.b16 %v1894
  %v2311 = vunpack.c.l.b16 %v1895
  %v2312 = vunpack.c.l.b16 %v1896
  %v2313 = vunpack.c.l.b16 %v1897
  %v2314 = vunpack.c.l.b16 %v1898
  %v2315 = vunpack.c.l.b16 %v1899
  %v2316 = vunpack.c.l.b16 %v1900
  %v2317 = vunpack.c.l.b16 %v1901
  %v2318 = vunpack.c.l.b16 %v1902
  %v2319 = vunpack.c.l.b16 %v1903
  %v2320 = vunpack.c.l.b16 %v1904
  %v2321 = vunpack.c.l.b16 %v1905
  %v2322 = vunpack.c.l.b16 %v1906
  %v2323 = vunpack.c.l.b16 %v1907
  %v2324 = vunpack.c.l.b16 %v1908
  %v2325 = vunpack.c.l.b16 %v1909
  %v2326 = vunpack.c.l.b16 %v1910
  %v2327 = vunpack.c.l.b16 %v1911
  %v2328 = vunpack.c.l.b16 %v1912
  %v2329 = vunpack.c.l.b16 %v1913
  %v2330 = vunpack.c.l.b16 %v1914
  %v2331 = vunpack.c.l.b16 %v1915
  %v2332 = vunpack.c.l.b16 %v1916
  %v2333 = vunpack.c.l.b16 %v1917
  %v2334 = vunpack.c.l.b16 %v1918
  %v2335 = vunpack.c.l.b16 %v1919
  %v2336 = vunpack.c.l.b16 %v1920
  %v2337 = vunpack.c.l.b16 %v1921
  %v2338 = vunpack.c.l.b16 %v1922
  %v2339 = vunpack.c.l.b16 %v1923
  %v2340 = vunpack.c.l.b16 %v1924
  %v2341 = vunpack.c.l.b16 %v1925
  %v2342 = vunpack.c.l.b16 %v1926
  %v2343 = vunpack.c.l.b16 %v1927
  %v2344 = vunpack.c.l.b16 %v1928
  %v2345 = vunpack.c.l.b16 %v1929
  %v2346 = vunpack.c.l.b16 %v1930
  %v2347 = vunpack.c.l.b16 %v1931
  %v2348 = vunpack.c.l.b16 %v1932
  %v2349 = vunpack.c.l.b16 %v1933
  %v2350 = vunpack.c.l.b16 %v1934
  %v2351 = vunpack.c.l.b16 %v1935
  %v2352 = vunpack.c.l.b16 %v1936
  %v2353 = vunpack.c.l.b16 %v1937
  %v2354 = vunpack.c.l.b16 %v1938
  %v2355 = vunpack.c.l.b16 %v1939
  %v2356 = vunpack.c.l.b16 %v1940
  %v2357 = vunpack.c.l.b16 %v1941
  %v2358 = vunpack.c.l.b16 %v1942
  %v2359 = vunpack.c.l.b16 %v1943
  %v2360 = vunpack.c.l.b16 %v1944
  %v2361 = vunpack.c.l.b16 %v1945
  %v2362 = vunpack.c.l.b16 %v1946
  %v2363 = vunpack.c.l.b16 %v1947
  %v2364 = vunpack.c.l.b16 %v1948
  %v2365 = vunpack.c.l.b16 %v1949
  %v2366 = vunpack.c.l.b16 %v1950
  %v2367 = vunpack.c.l.b16 %v1951
  %v2368 = vunpack.c.l.b16 %v1952
  %v2369 = vunpack.c.l.b16 %v1953
  %v2370 = vunpack.c.l.b16 %v1954
  %v2371 = vunpack.c.l.b16 %v1955
  %v2372 = vunpack.c.l.b16 %v1956
  %v2373 = vunpack.c.l.b16 %v1957
  %v2374 = vunpack.c.l.b16 %v1958
  %v2375 = vunpack.c.l.b16 %v1959
  %v2376 = vunpack.c.l.b16 %v1960
  %v2377 = vunpack.c.l.b16 %v1961
  %v2378 = vunpack.c.l.b16 %v1962
  %v2379 = vunpack.c.l.b16 %v1963
  %v2380 = vunpack.c.l.b16 %v1964
  %v2381 = vunpack.c.l.b16 %v1965
  %v2382 = vunpack.c.l.b16 %v1966
  %v2383 = vunpack.c.l.b16 %v1967
  %v2384 = vunpack.c.l.b16 %v1968
  %v2385 = vunpack.c.l.b16 %v1969
  %v2386 = vunpack.c.l.b16 %v1970
  %v2387 = vunpack.c.l.b16 %v1971
  %v2388 = vunpack.c.l.b16 %v1972
  %v2389 = vunpack.c.l.b16 %v1973
  %v2390 = vunpack.c.l.b16 %v1974
  %v2391 = vunpack.c.l.b16 %v1975
  %v2392 = vunpack.c.l.b16 %v1976
  %v2393 = vunpack.c.l.b16 %v1977
  %v2394 = vunpack.c.l.b16 %v1978
  %v2395 = vunpack.c.l.b16 %v1979
  %v2396 = vunpack.c.l.b16 %v1980
  %v2397 = vunpack.c.l.b16 %v1981
  %v2398 = vunpack.c.l.b16 %v1982
  %v2399 = vunpack.c.l.b16 %v1983
  %v2400 = vunpack.c.l.b16 %v1984
  %v2401 = vunpack.c.l.b16 %v1985
  %v2402 = vunpack.c.l.b16 %v1986
  %v2403 = vunpack.c.l.b16 %v1987
  %v2404 = vunpack.c.l.b16 %v1988
  %v2405 = vunpack.c.l.b16 %v1989
  %v2406 = vunpack.c.l.b16 %v1990
  %v2407 = vunpack.c.l.b16 %v1991
  %v2408 = vunpack.c.l.b16 %v1992
  %v2409 = vunpack.c.l.b16 %v1993
  %v2410 = vunpack.c.l.b16 %v1994
  %v2411 = vunpack.c.l.b16 %v1995
  %v2412 = vunpack.c.l.b16 %v1996
  %v2413 = vunpack.c.l.b16 %v1997
  %v2414 = vunpack.c.l.b16 %v1998
  %v2415 = vunpack.c.l.b16 %v1999
  %v2416 = vunpack.c.l.b16 %v2000
  %v2417 = vunpack.c.l.b16 %v2001
  %v2418 = vunpack.c.l.b16 %v2002
  %v2419 = vunpack.c.l.b16 %v2003
  %v2420 = vunpack.c.l.b16 %v2004
  %v2421 = vunpack.c.l.b16 %v2005
  %v2422 = vunpack.c.l.b16 %v2006
  %v2423 = vunpack.c.l.b16 %v2007
  %v2424 = vunpack.c.l.b16 %v2008
  %v2425 = vunpack.c.l.b16 %v2009
  %v2426 = vunpack.c.l.b16 %v2010
  %v2427 = vunpack.c.l.b16 %v2011
  %v2428 = vunpack.c.l.b16 %v2012
  %v2429 = vunpack.c.l.b16 %v2013
  %v2430 = vunpack.c.l.b16 %v2014
  %v2431 = vunpack.c.l.b16 %v2015
  %v2432 = vunpack.c.l.b16 %v2016
  %v2433 = vunpack.c.l.b16 %v2017
  %v2434 = vunpack.c.l.b16 %v2018
  %v2435 = vunpack.c.l.b16 %v2019
  %v2436 = vunpack.c.l.b16 %v2020
  %v2437 = vunpack.c.l.b16 %v2021
  %v2438 = vunpack.c.l.b16 %v2022
  %v2439 = vunpack.c.l.b16 %v2023
  %v2440 = vunpack.c.l.b16 %v2024
  %v2441 = vunpack.c.l.b16 %v2025
  %v2442 = vunpack.c.l.b16 %v2026
  %v2443 = vunpack.c.l.b16 %v2027
  %v2444 = vunpack.c.l.b16 %v2028
  %v2445 = vunpack.c.l.b16 %v2029
  %v2446 = vunpack.c.l.b16 %v2030
  %v2447 = vunpack.c.l.b16 %v2031
  %v2448 = vunpack.c.l.b16 %v2032
  %v2449 = vunpack.c.l.b16 %v2033
  %v2450 = vunpack.c.l.b16 %v2034
  %v2451 = vunpack.c.l.b16 %v2035
  %v2452 = vunpack.c.l.b16 %v2036
  %v2453 = vunpack.c.l.b16 %v2037
  %v2454 = vunpack.c.l.b16 %v2038
  %v2455 = vunpack.c.l.b16 %v2039
  %v2456 = vunpack.c.l.b16 %v2040
  %v2457 = vunpack.c.l.b16 %v2041
  %v2458 = vunpack.c.l.b16 %v2042
  %v2459 = vunpack.c.l.b16 %v2043
  %v2460 = vunpack.c.l.b16 %v2044
  %v2461 = vunpack.c.l.b16 %v2045
  %v2462 = vunpack.c.l.b16 %v2046
  %v2463 = vunpack.c.l.b16 %v2047
  %v2464 = vunpack.c.l.b16 %v2048
  %v2465 = vunpack.c.l.b16 %v2049
  %v2466 = vunpack.c.l.b16 %v2050
  %v2467 = vunpack.c.l.b16 %v2051
  %v2468 = vunpack.c.l.b16 %v2052
  %v2469 = vunpack.c.l.b16 %v2053
  %v2470 = vunpack.c.l.b16 %v2054
  %v2471 = vunpack.c.l.b16 %v2055
  %v2472 = vunpack.c.l.b16 %v2056
  %v2473 = vunpack.c.l.b16 %v2057
  %v2474 = vunpack.c.l.b16 %v2058
  %v2475 = vunpack.c.l.b16 %v2059
  %v2476 = vunpack.c.l.b16 %v2060
  %v2477 = vunpack.c.l.b16 %v2061
  %v2478 = vunpack.c.l.b16 %v2062
  %v2479 = vunpack.c.l.b16 %v2063
  %v2480 = vunpack.c.l.b16 %v2064
  %v2481 = vunpack.c.l.b16 %v2065
  %v2482 = vunpack.c.l.b16 %v2066
  %v2483 = vunpack.c.l.b16 %v2067
  %v2484 = vunpack.c.l.b16 %v2068
  %v2485 = vunpack.c.l.b16 %v2069
  %v2486 = vunpack.c.l.b16 %v2070
  %v2487 = vunpack.c.l.b16 %v2071
  %v2488 = vunpack.c.l.b16 %v2072
  %v2489 = vunpack.c.l.b16 %v2073
  %v2490 = vunpack.c.l.b16 %v2074
  %v2491 = vunpack.c.l.b16 %v2075
  %v2492 = vunpack.c.l.b16 %v2076
  %v2493 = vunpack.c.l.b16 %v2077
  %v2494 = vunpack.c.l.b16 %v2078
  %v2495 = vunpack.c.l.b16 %v2079
  %v2496 = vunpack.c.l.b16 %v2080
  %v2497 = vunpack.c.l.b16 %v2081
  %v2498 = vunpack.c.l.b16 %v2082
  %v2499 = vunpack.c.l.b16 %v2083
  %v2500 = vunpack.c.l.b16 %v2084
  %v2501 = vunpack.c.l.b16 %v2085
  %v2502 = vunpack.c.l.b16 %v2086
  %v2503 = vunpack.c.l.b16 %v2087
  %v2504 = vunpack.c.l.b16 %v2088
  %v2505 = vunpack.c.l.b16 %v2089
  %v2506 = vpack.c.b16 %v2299, %v2298
  %v2507 = vpack.c.b16 %v2301, %v2300
  %v2508 = vpack.c.b16 %v2303, %v2302
  %v2509 = vpack.c.b16 %v2305, %v2304
  %v2510 = vpack.c.b16 %v2307, %v2306
  %v2511 = vpack.c.b16 %v2309, %v2308
  %v2512 = vpack.c.b16 %v2311, %v2310
  %v2513 = vpack.c.b16 %v2313, %v2312
  %v2514 = vpack.c.b16 %v2315, %v2314
  %v2515 = vpack.c.b16 %v2317, %v2316
  %v2516 = vpack.c.b16 %v2319, %v2318
  %v2517 = vpack.c.b16 %v2321, %v2320
  %v2518 = vpack.c.b16 %v2323, %v2322
  %v2519 = vpack.c.b16 %v2325, %v2324
  %v2520 = vpack.c.b16 %v2327, %v2326
  %v2521 = vpack.c.b16 %v2329, %v2328
  %v2522 = vpack.c.b16 %v2331, %v2330
  %v2523 = vpack.c.b16 %v2333, %v2332
  %v2524 = vpack.c.b16 %v2335, %v2334
  %v2525 = vpack.c.b16 %v2337, %v2336
  %v2526 = vpack.c.b16 %v2339, %v2338
  %v2527 = vpack.c.b16 %v2341, %v2340
  %v2528 = vpack.c.b16 %v2343, %v2342
  %v2529 = vpack.c.b16 %v2345, %v2344
  %v2530 = vpack.c.b16 %v2347, %v2346
  %v2531 = vpack.c.b16 %v2349, %v2348
  %v2532 = vpack.c.b16 %v2351, %v2350
  %v2533 = vpack.c.b16 %v2353, %v2352
  %v2534 = vpack.c.b16 %v2355, %v2354
  %v2535 = vpack.c.b16 %v2357, %v2356
  %v2536 = vpack.c.b16 %v2359, %v2358
  %v2537 = vpack.c.b16 %v2361, %v2360
  %v2538 = vpack.c.b16 %v2363, %v2362
  %v2539 = vpack.c.b16 %v2365, %v2364
  %v2540 = vpack.c.b16 %v2367, %v2366
  %v2541 = vpack.c.b16 %v2369, %v2368
  %v2542 = vpack.c.b16 %v2371, %v2370
  %v2543 = vpack.c.b16 %v2373, %v2372
  %v2544 = vpack.c.b16 %v2375, %v2374
  %v2545 = vpack.c.b16 %v2377, %v2376
  %v2546 = vpack.c.b16 %v2379, %v2378
  %v2547 = vpack.c.b16 %v2381, %v2380
  %v2548 = vpack.c.b16 %v2383, %v2382
  %v2549 = vpack.c.b16 %v2385, %v2384
  %v2550 = vpack.c.b16 %v2387, %v2386
  %v2551 = vpack.c.b16 %v2389, %v2388
  %v2552 = vpack.c.b16 %v2391, %v2390
  %v2553 = vpack.c.b16 %v2393, %v2392
  %v2554 = vpack.c.b16 %v2395, %v2394
  %v2555 = vpack.c.b16 %v2397, %v2396
  %v2556 = vpack.c.b16 %v2399, %v2398
  %v2557 = vpack.c.b16 %v2401, %v2400
  %v2558 = vpack.c.b16 %v2403, %v2402
  %v2559 = vpack.c.b16 %v2405, %v2404
  %v2560 = vpack.c.b16 %v2407, %v2406
  %v2561 = vpack.c.b16 %v2409, %v2408
  %v2562 = vpack.c.b16 %v2411, %v2410
  %v2563 = vpack.c.b16 %v2413, %v2412
  %v2564 = vpack.c.b16 %v2415, %v2414
  %v2565 = vpack.c.b16 %v2417, %v2416
  %v2566 = vpack.c.b16 %v2419, %v2418
  %v2567 = vpack.c.b16 %v2421, %v2420
  %v2568 = vpack.c.b16 %v2423, %v2422
  %v2569 = vpack.c.b16 %v2425, %v2424
  %v2570 = vpack.c.b16 %v2427, %v2426
  %v2571 = vpack.c.b16 %v2429, %v2428
  %v2572 = vpack.c.b16 %v2431, %v2430
  %v2573 = vpack.c.b16 %v2433, %v2432
  %v2574 = vpack.c.b16 %v2435, %v2434
  %v2575 = vpack.c.b16 %v2437, %v2436
  %v2576 = vpack.c.b16 %v2439, %v2438
  %v2577 = vpack.c.b16 %v2441, %v2440
  %v2578 = vpack.c.b16 %v2443, %v2442
  %v2579 = vpack.c.b16 %v2445, %v2444
  %v2580 = vpack.c.b16 %v2447, %v2446
  %v2581 = vpack.c.b16 %v2449, %v2448
  %v2582 = vpack.c.b16 %v2451, %v2450
  %v2583 = vpack.c.b16 %v2453, %v2452
  %v2584 = vpack.c.b16 %v2455, %v2454
  %v2585 = vpack.c.b16 %v2457, %v2456
  %v2586 = vpack.c.b16 %v2459, %v2458
  %v2587 = vpack.c.b16 %v2461, %v2460
  %v2588 = vpack.c.b16 %v2463, %v2462
  %v2589 = vpack.c.b16 %v2465, %v2464
  %v2590 = vpack.c.b16 %v2467, %v2466
  %v2591 = vpack.c.b16 %v2469, %v2468
  %v2592 = vpack.c.b16 %v2471, %v2470
  %v2593 = vpack.c.b16 %v2473, %v2472
  %v2594 = vpack.c.b16 %v2475, %v2474
  %v2595 = vpack.c.b16 %v2477, %v2476
  %v2596 = vpack.c.b16 %v2479, %v2478
  %v2597 = vpack.c.b16 %v2481, %v2480
  %v2598 = vpack.c.b16 %v2483, %v2482
  %v2599 = vpack.c.b16 %v2485, %v2484
  %v2600 = vpack.c.b16 %v2487, %v2486
  %v2601 = vpack.c.b16 %v2489, %v2488
  %v2602 = vpack.c.b16 %v2491, %v2490
  %v2603 = vpack.c.b16 %v2493, %v2492
  %v2604 = vpack.c.b16 %v2495, %v2494
  %v2605 = vpack.c.b16 %v2497, %v2496
  %v2606 = vpack.c.b16 %v2499, %v2498
  %v2607 = vpack.c.b16 %v2501, %v2500
  %v2608 = vpack.c.b16 %v2503, %v2502
  %v2609 = vpack.c.b16 %v2505, %v2504
  %2714 = vmatprep.subr.bf16.mxu0 0
  %2715 = vmatpush1.bf16.msra.mxu0 %v2506
  %2716 = vmatprep.subr.bf16.mxu0 0
  %2717 = vmatpush1.bf16.msra.mxu0 %v2507
  %2718 = vmatprep.subr.bf16.mxu0 0
  %2719 = vmatpush1.bf16.msra.mxu0 %v2508
  %2720 = vmatprep.subr.bf16.mxu0 0
  %2721 = vmatpush1.bf16.msra.mxu0 %v2509
  %2722 = vmatprep.subr.bf16.mxu0 0
  %2723 = vmatpush1.bf16.msra.mxu0 %v2510
  %2724 = vmatprep.subr.bf16.mxu0 0
  %2725 = vmatpush1.bf16.msra.mxu0 %v2511
  %2726 = vmatprep.subr.bf16.mxu0 0
  %2727 = vmatpush1.bf16.msra.mxu0 %v2512
  %2728 = vmatprep.subr.bf16.mxu0 0
  %2729 = vmatpush1.bf16.msra.mxu0 %v2513
  %2730 = vmatprep.subr.bf16.mxu0 0
  %2731 = vmatpush1.bf16.msra.mxu0 %v2514
  %2732 = vmatprep.subr.bf16.mxu0 0
  %2733 = vmatpush1.bf16.msra.mxu0 %v2515
  %2734 = vmatprep.subr.bf16.mxu0 0
  %2735 = vmatpush1.bf16.msra.mxu0 %v2516
  %2736 = vmatprep.subr.bf16.mxu0 0
  %2737 = vmatpush1.bf16.msra.mxu0 %v2517
  %2738 = vmatprep.subr.bf16.mxu0 0
  %2739 = vmatpush1.bf16.msra.mxu0 %v2518
  %2740 = vmatprep.subr.bf16.mxu0 0
  %2741 = vmatpush1.bf16.msra.mxu0 %v2519
  %2742 = vmatprep.subr.bf16.mxu0 0
  %2743 = vmatpush1.bf16.msra.mxu0 %v2520
  %2744 = vmatprep.subr.bf16.mxu0 0
  %2745 = vmatpush1.bf16.msra.mxu0 %v2521
  %2746 = vmatprep.mubr.bf16.mxu0 %v1870
  %2747 = vmatmul.mubr.bf16.gmra.mrb[0].mxu0 %v1869
  %v2748 = vpop.f32.mrb[0].mxu0
  %v2749 = vadd.f32 0.0, %v2748
  %v2750 = vpop.f32.mrb[0].mxu0
  %v2751 = vpop.f32.mrb[0].mxu0
  %v2752 = vpop.f32.mrb[0].mxu0
  %2753 = vdwg.mxu0
  %2754 = vmatprep.subr.bf16.mxu0 0
  %2755 = vmatpush1.bf16.msra.mxu0 %v2522
  %2756 = vmatprep.subr.bf16.mxu0 0
  %2757 = vmatpush1.bf16.msra.mxu0 %v2523
  %2758 = vmatprep.subr.bf16.mxu0 0
  %2759 = vmatpush1.bf16.msra.mxu0 %v2524
  %2760 = vmatprep.subr.bf16.mxu0 0
  %2761 = vmatpush1.bf16.msra.mxu0 %v2525
  %2762 = vmatprep.subr.bf16.mxu0 0
  %2763 = vmatpush1.bf16.msra.mxu0 %v2526
  %2764 = vmatprep.subr.bf16.mxu0 0
  %2765 = vmatpush1.bf16.msra.mxu0 %v2527
  %2766 = vmatprep.subr.bf16.mxu0 0
  %2767 = vmatpush1.bf16.msra.mxu0 %v2528
  %2768 = vmatprep.subr.bf16.mxu0 0
  %2769 = vmatpush1.bf16.msra.mxu0 %v2529
  %2770 = vmatprep.subr.bf16.mxu0 0
  %2771 = vmatpush1.bf16.msra.mxu0 %v2530
  %2772 = vmatprep.subr.bf16.mxu0 0
  %2773 = vmatpush1.bf16.msra.mxu0 %v2531
  %2774 = vmatprep.subr.bf16.mxu0 0
  %2775 = vmatpush1.bf16.msra.mxu0 %v2532
  %2776 = vmatprep.subr.bf16.mxu0 0
  %2777 = vmatpush1.bf16.msra.mxu0 %v2533
  %2778 = vmatprep.subr.bf16.mxu0 0
  %2779 = vmatpush1.bf16.msra.mxu0 %v2534
  %2780 = vmatprep.subr.bf16.mxu0 0
  %2781 = vmatpush1.bf16.msra.mxu0 %v2535
  %2782 = vmatprep.subr.bf16.mxu0 0
  %2783 = vmatpush1.bf16.msra.mxu0 %v2536
  %2784 = vmatprep.subr.bf16.mxu0 0
  %2785 = vmatpush1.bf16.msra.mxu0 %v2537
  %2786 = vmatprep.mubr.bf16.mxu0 %v1872
  %2787 = vmatmul.mubr.bf16.gmra.mrb[0].mxu0 %v1871
  %v2788 = vpop.f32.mrb[0].mxu0
  %v2789 = vadd.f32 %v2749, %v2788
  %v2790 = vpop.f32.mrb[0].mxu0
  %v2791 = vpop.f32.mrb[0].mxu0
  %v2792 = vpop.f32.mrb[0].mxu0
  %2793 = vdwg.mxu0
  %2794 = vmatprep.subr.bf16.mxu0 0
  %2795 = vmatpush1.bf16.msra.mxu0 %v2538
  %2796 = vmatprep.subr.bf16.mxu0 0
  %2797 = vmatpush1.bf16.msra.mxu0 %v2539
  %2798 = vmatprep.subr.bf16.mxu0 0
  %2799 = vmatpush1.bf16.msra.mxu0 %v2540
  %2800 = vmatprep.subr.bf16.mxu0 0
  %2801 = vmatpush1.bf16.msra.mxu0 %v2541
  %2802 = vmatprep.subr.bf16.mxu0 0
  %2803 = vmatpush1.bf16.msra.mxu0 %v2542
  %2804 = vmatprep.subr.bf16.mxu0 0
  %2805 = vmatpush1.bf16.msra.mxu0 %v2543
  %2806 = vmatprep.subr.bf16.mxu0 0
  %2807 = vmatpush1.bf16.msra.mxu0 %v2544
  %2808 = vmatprep.subr.bf16.mxu0 0
  %2809 = vmatpush1.bf16.msra.mxu0 %v2545
  %2810 = vmatprep.subr.bf16.mxu0 0
  %2811 = vmatpush1.bf16.msra.mxu0 %v2546
  %2812 = vmatprep.subr.bf16.mxu0 0
  %2813 = vmatpush1.bf16.msra.mxu0 %v2547
  %2814 = vmatprep.subr.bf16.mxu0 0
  %2815 = vmatpush1.bf16.msra.mxu0 %v2548
  %2816 = vmatprep.subr.bf16.mxu0 0
  %2817 = vmatpush1.bf16.msra.mxu0 %v2549
  %2818 = vmatprep.subr.bf16.mxu0 0
  %2819 = vmatpush1.bf16.msra.mxu0 %v2550
  %2820 = vmatprep.subr.bf16.mxu0 0
  %2821 = vmatpush1.bf16.msra.mxu0 %v2551
  %2822 = vmatprep.subr.bf16.mxu0 0
  %2823 = vmatpush1.bf16.msra.mxu0 %v2552
  %2824 = vmatprep.subr.bf16.mxu0 0
  %2825 = vmatpush1.bf16.msra.mxu0 %v2553
  %2826 = vmatprep.mubr.bf16.mxu0 %v1874
  %2827 = vmatmul.mubr.bf16.gmra.mrb[0].mxu0 %v1873
  %v2828 = vpop.f32.mrb[0].mxu0
  %v2829 = vadd.f32 %v2789, %v2828
  %v2830 = vpop.f32.mrb[0].mxu0
  %v2831 = vpop.f32.mrb[0].mxu0
  %v2832 = vpop.f32.mrb[0].mxu0
  %2833 = vdwg.mxu0
  %2834 = vmatprep.subr.bf16.mxu0 0
  %2835 = vmatpush1.bf16.msra.mxu0 %v2554
  %2836 = vmatprep.subr.bf16.mxu0 0
  %2837 = vmatpush1.bf16.msra.mxu0 %v2555
  %2838 = vmatprep.subr.bf16.mxu0 0
  %2839 = vmatpush1.bf16.msra.mxu0 %v2556
  %2840 = vmatprep.subr.bf16.mxu0 0
  %2841 = vmatpush1.bf16.msra.mxu0 %v2557
  %2842 = vmatprep.subr.bf16.mxu0 0
  %2843 = vmatpush1.bf16.msra.mxu0 %v2558
  %2844 = vmatprep.subr.bf16.mxu0 0
  %2845 = vmatpush1.bf16.msra.mxu0 %v2559
  %2846 = vmatprep.subr.bf16.mxu0 0
  %2847 = vmatpush1.bf16.msra.mxu0 %v2560
  %2848 = vmatprep.subr.bf16.mxu0 0
  %2849 = vmatpush1.bf16.msra.mxu0 %v2561
  %2850 = vmatprep.subr.bf16.mxu0 0
  %2851 = vmatpush1.bf16.msra.mxu0 %v2562
  %2852 = vmatprep.subr.bf16.mxu0 0
  %2853 = vmatpush1.bf16.msra.mxu0 %v2563
  %2854 = vmatprep.subr.bf16.mxu0 0
  %2855 = vmatpush1.bf16.msra.mxu0 %v2564
  %2856 = vmatprep.subr.bf16.mxu0 0
  %2857 = vmatpush1.bf16.msra.mxu0 %v2565
  %2858 = vmatprep.subr.bf16.mxu0 0
  %2859 = vmatpush1.bf16.msra.mxu0 %v2566
  %2860 = vmatprep.subr.bf16.mxu0 0
  %2861 = vmatpush1.bf16.msra.mxu0 %v2567
  %2862 = vmatprep.subr.bf16.mxu0 0
  %2863 = vmatpush1.bf16.msra.mxu0 %v2568
  %2864 = vmatprep.subr.bf16.mxu0 0
  %2865 = vmatpush1.bf16.msra.mxu0 %v2569
  %2866 = vmatprep.mubr.bf16.mxu0 %v1876
  %2867 = vmatmul.mubr.bf16.gmra.mrb[0].mxu0 %v1875
  %v2868 = vpop.f32.mrb[0].mxu0
  %v2869 = vadd.f32 %v2829, %v2868
  %v2870 = vpop.f32.mrb[0].mxu0
  %v2871 = vpop.f32.mrb[0].mxu0
  %v2872 = vpop.f32.mrb[0].mxu0
  %2873 = vdwg.mxu0
  %2874 = vmatprep.subr.bf16.mxu0 0
  %2875 = vmatpush1.bf16.msra.mxu0 %v2570
  %2876 = vmatprep.subr.bf16.mxu0 0
  %2877 = vmatpush1.bf16.msra.mxu0 %v2571
  %2878 = vmatprep.subr.bf16.mxu0 0
  %2879 = vmatpush1.bf16.msra.mxu0 %v2572
  %2880 = vmatprep.subr.bf16.mxu0 0
  %2881 = vmatpush1.bf16.msra.mxu0 %v2573
  %2882 = vmatprep.subr.bf16.mxu0 0
  %2883 = vmatpush1.bf16.msra.mxu0 %v2574
  %2884 = vmatprep.subr.bf16.mxu0 0
  %2885 = vmatpush1.bf16.msra.mxu0 %v2575
  %2886 = vmatprep.subr.bf16.mxu0 0
  %2887 = vmatpush1.bf16.msra.mxu0 %v2576
  %2888 = vmatprep.subr.bf16.mxu0 0
  %2889 = vmatpush1.bf16.msra.mxu0 %v2577
  %2890 = vmatprep.subr.bf16.mxu0 0
  %2891 = vmatpush1.bf16.msra.mxu0 %v2578
  %2892 = vmatprep.subr.bf16.mxu0 0
  %2893 = vmatpush1.bf16.msra.mxu0 %v2579
  %2894 = vmatprep.subr.bf16.mxu0 0
  %2895 = vmatpush1.bf16.msra.mxu0 %v2580
  %2896 = vmatprep.subr.bf16.mxu0 0
  %2897 = vmatpush1.bf16.msra.mxu0 %v2581
  %2898 = vmatprep.subr.bf16.mxu0 0
  %2899 = vmatpush1.bf16.msra.mxu0 %v2582
  %2900 = vmatprep.subr.bf16.mxu0 0
  %2901 = vmatpush1.bf16.msra.mxu0 %v2583
  %2902 = vmatprep.subr.bf16.mxu0 0
  %2903 = vmatpush1.bf16.msra.mxu0 %v2584
  %2904 = vmatprep.subr.bf16.mxu0 0
  %2905 = vmatpush1.bf16.msra.mxu0 %v2585
  %2906 = vmatprep.mubr.bf16.mxu0 %v1878
  %2907 = vmatmul.mubr.bf16.gmra.mrb[0].mxu0 %v1877
  %v2908 = vpop.f32.mrb[0].mxu0
  %v2909 = vadd.f32 %v2869, %v2908
  %v2910 = vpop.f32.mrb[0].mxu0
  %v2911 = vpop.f32.mrb[0].mxu0
  %v2912 = vpop.f32.mrb[0].mxu0
  %2913 = vdwg.mxu0
  %2914 = vmatprep.subr.bf16.mxu0 0
  %2915 = vmatpush1.bf16.msra.mxu0 %v2586
  %2916 = vmatprep.subr.bf16.mxu0 0
  %2917 = vmatpush1.bf16.msra.mxu0 %v2587
  %2918 = vmatprep.subr.bf16.mxu0 0
  %2919 = vmatpush1.bf16.msra.mxu0 %v2588
  %2920 = vmatprep.subr.bf16.mxu0 0
  %2921 = vmatpush1.bf16.msra.mxu0 %v2589
  %2922 = vmatprep.subr.bf16.mxu0 0
  %2923 = vmatpush1.bf16.msra.mxu0 %v2590
  %2924 = vmatprep.subr.bf16.mxu0 0
  %2925 = vmatpush1.bf16.msra.mxu0 %v2591
  %2926 = vmatprep.subr.bf16.mxu0 0
  %2927 = vmatpush1.bf16.msra.mxu0 %v2592
  %2928 = vmatprep.subr.bf16.mxu0 0
  %2929 = vmatpush1.bf16.msra.mxu0 %v2593
  %2930 = vmatprep.subr.bf16.mxu0 0
  %2931 = vmatpush1.bf16.msra.mxu0 %v2594
  %2932 = vmatprep.subr.bf16.mxu0 0
  %2933 = vmatpush1.bf16.msra.mxu0 %v2595
  %2934 = vmatprep.subr.bf16.mxu0 0
  %2935 = vmatpush1.bf16.msra.mxu0 %v2596
  %2936 = vmatprep.subr.bf16.mxu0 0
  %2937 = vmatpush1.bf16.msra.mxu0 %v2597
  %2938 = vmatprep.subr.bf16.mxu0 0
  %2939 = vmatpush1.bf16.msra.mxu0 %v2598
  %2940 = vmatprep.subr.bf16.mxu0 0
  %2941 = vmatpush1.bf16.msra.mxu0 %v2599
  %2942 = vmatprep.subr.bf16.mxu0 0
  %2943 = vmatpush1.bf16.msra.mxu0 %v2600
  %2944 = vmatprep.subr.bf16.mxu0 0
  %2945 = vmatpush1.bf16.msra.mxu0 %v2601
  %2946 = vmatprep.mubr.bf16.mxu0 %v1880
  %2947 = vmatmul.mubr.bf16.gmra.mrb[0].mxu0 %v1879
  %v2948 = vpop.f32.mrb[0].mxu0
  %v2949 = vadd.f32 %v2909, %v2948
  %v2950 = vpop.f32.mrb[0].mxu0
  %v2951 = vpop.f32.mrb[0].mxu0
  %v2952 = vpop.f32.mrb[0].mxu0
  %2953 = vdwg.mxu0
  %2954 = vmatprep.subr.bf16.mxu0 0
  %2955 = vmatpush1.bf16.msra.mxu0 %v2602
  %2956 = vmatprep.subr.bf16.mxu0 0
  %2957 = vmatpush1.bf16.msra.mxu0 %v2603
  %2958 = vmatprep.subr.bf16.mxu0 0
  %2959 = vmatpush1.bf16.msra.mxu0 %v2604
  %2960 = vmatprep.subr.bf16.mxu0 0
  %2961 = vmatpush1.bf16.msra.mxu0 %v2605
  %2962 = vmatprep.subr.bf16.mxu0 0
  %2963 = vmatpush1.bf16.msra.mxu0 %v2606
  %2964 = vmatprep.subr.bf16.mxu0 0
  %2965 = vmatpush1.bf16.msra.mxu0 %v2607
  %2966 = vmatprep.subr.bf16.mxu0 0
  %2967 = vmatpush1.bf16.msra.mxu0 %v2608
  %2968 = vmatprep.subr.bf16.mxu0 0
  %2969 = vmatpush1.bf16.msra.mxu0 %v2609
  %2970 = vmatprep.subr.bf16.mxu0 0
  %2971 = vmatpush1.bf16.msra.mxu0 0
  %2972 = vmatprep.subr.bf16.mxu0 0
  %2973 = vmatpush1.bf16.msra.mxu0 0
  %2974 = vmatprep.subr.bf16.mxu0 0
  %2975 = vmatpush1.bf16.msra.mxu0 0
  %2976 = vmatprep.subr.bf16.mxu0 0
  %2977 = vmatpush1.bf16.msra.mxu0 0
  %2978 = vmatprep.subr.bf16.mxu0 0
  %2979 = vmatpush1.bf16.msra.mxu0 0
  %2980 = vmatprep.subr.bf16.mxu0 0
  %2981 = vmatpush1.bf16.msra.mxu0 0
  %2982 = vmatprep.subr.bf16.mxu0 0
  %2983 = vmatpush1.bf16.msra.mxu0 0
  %2984 = vmatprep.subr.bf16.mxu0 0
  %2985 = vmatpush1.bf16.msra.mxu0 0
  %2986 = vmatprep.mubr.bf16.mxu0 0
  %2987 = vmatmul.mubr.bf16.gmra.mrb[0].mxu0 %v1881
  %v2988 = vpop.f32.mrb[0].mxu0
  %v2989 = vadd.f32 %v2949, %v2988
  %v2990 = vpop.f32.mrb[0].mxu0
  %v2991 = vpop.f32.mrb[0].mxu0
  %v2992 = vpop.f32.mrb[0].mxu0
  %2993 = vdwg.mxu0
  %vm2994 = vcmask 203776
  %v2995 = vsel %vm2994, %v2989, -inf
  %2996 = vmax.xlane.f32.xlu0 %v2995
  %v2997 = vpop.xlane.xlu0 %2996
  %v2998 = vsub.f32 %v2989, %v2997
  %v2999 = vmul.f32 %v2998, 1.442695
  %v3000 = vpow.pop %v2999
  %v3001 = vld [vmem:[%s5] sm:$0xff]
  %v3002 = vld [vmem:[%s5 + $0x8] sm:$0xff]
  %v3003 = vld [vmem:[%s5 + $0x10] sm:$0xff]
  %v3004 = vld [vmem:[%s5 + $0x18] sm:$0x1]
  %v3006 = vsel %vm2994, %v3000, 0
  %vm3008 = vcmask 1040384
  %v3010 = vsel %vm3008, %v3004, 0
  %3012 = vmatprep.subr.mxu0 0.0
  %3013 = vmatpush1.msra.mxu0 %v3001
  %3014 = vmatprep.subr.mxu0 0.0
  %3015 = vmatpush1.msra.mxu0 %v3002
  %3016 = vmatprep.subr.mxu0 0.0
  %3017 = vmatpush1.msra.mxu0 %v3003
  %3018 = vmatprep.subr.mxu0 0.0
  %3019 = vmatpush1.msra.mxu0 %v3010
  %3020 = vmatprep.subr.mxu0 0.0
  %3021 = vmatpush1.msra.mxu0 0.0
  %3022 = vmatprep.subr.mxu0 0.0
  %3023 = vmatpush1.msra.mxu0 0.0
  %3024 = vmatprep.subr.mxu0 0.0
  %3025 = vmatpush1.msra.mxu0 0.0
  %3026 = vmatprep.subr.mxu0 0.0
  %3027 = vmatpush1.msra.mxu0 0.0
  %3028 = vmatprep.subr.mxu0 0.0
  %3029 = vmatpush1.msra.mxu0 0.0
  %3030 = vmatprep.subr.mxu0 0.0
  %3031 = vmatpush1.msra.mxu0 0.0
  %3032 = vmatprep.subr.mxu0 0.0
  %3033 = vmatpush1.msra.mxu0 0.0
  %3034 = vmatprep.subr.mxu0 0.0
  %3035 = vmatpush1.msra.mxu0 0.0
  %3036 = vmatprep.subr.mxu0 0.0
  %3037 = vmatpush1.msra.mxu0 0.0
  %3038 = vmatprep.subr.mxu0 0.0
  %3039 = vmatpush1.msra.mxu0 0.0
  %3040 = vmatprep.subr.mxu0 0.0
  %3041 = vmatpush1.msra.mxu0 0.0
  %3042 = vmatprep.subr.mxu0 0.0
  %3043 = vmatpush1.msra.mxu0 0.0
  %3044 = vmatprep.subr.mxu0 0.0
  %3045 = vmatpush1.msra.mxu0 0.0
  %3046 = vmatprep.subr.mxu0 0.0
  %3047 = vmatpush1.msra.mxu0 0.0
  %3048 = vmatprep.subr.mxu0 0.0
  %3049 = vmatpush1.msra.mxu0 0.0
  %3050 = vmatprep.subr.mxu0 0.0
  %3051 = vmatpush1.msra.mxu0 0.0
  %3052 = vmatprep.subr.mxu0 0.0
  %3053 = vmatpush1.msra.mxu0 0.0
  %3054 = vmatprep.subr.mxu0 0.0
  %3055 = vmatpush1.msra.mxu0 0.0
  %3056 = vmatprep.subr.mxu0 0.0
  %3057 = vmatpush1.msra.mxu0 0.0
  %3058 = vmatprep.subr.mxu0 0.0
  %3059 = vmatpush1.msra.mxu0 0.0
  %3060 = vmatprep.subr.mxu0 0.0
  %3061 = vmatpush1.msra.mxu0 0.0
  %3062 = vmatprep.subr.mxu0 0.0
  %3063 = vmatpush1.msra.mxu0 0.0
  %3064 = vmatprep.subr.mxu0 0.0
  %3065 = vmatpush1.msra.mxu0 0.0
  %3066 = vmatprep.subr.mxu0 0.0
  %3067 = vmatpush1.msra.mxu0 0.0
  %3068 = vmatprep.subr.mxu0 0.0
  %3069 = vmatpush1.msra.mxu0 0.0
  %3070 = vmatprep.subr.mxu0 0.0
  %3071 = vmatpush1.msra.mxu0 0.0
  %3072 = vmatprep.subr.mxu0 0.0
  %3073 = vmatpush1.msra.mxu0 0.0
  %3074 = vmatprep.subr.mxu0 0.0
  %3075 = vmatpush1.msra.mxu0 0.0
  %3076 = vmatprep.mubr.f32.mxu0 0.0
  %3077 = vmatmul.mubr.f32.gmra.mrb[0].mxu0 %v3006
  %v3078 = vpop.f32.mrb[0].mxu0
  %v3079 = vadd.f32 0.0, %v3078
  %v3080 = vpop.f32.mrb[0].mxu0
  %3081 = vdwg.mxu0
  %v3082 = vrcp.pop %v3079
  %v3083 = vmul.f32 %v3000, %v3082
  %v3084 = vpack.c.bf16 %v1851, %v1851
  %v3085 = vld [vmem:[%s6] sm:$0x7]
  %v3087 = vsel %vm1852, %v3084, 0
  %vm3089 = vcmask 1041408
  %vm3090 = vcmask 1042432
  %v3091 = vsel %vm3089, 4294967295, 65535
  %v3092 = vsel %vm3090, %v3091, 0
  %v3094 = vand.u32 %v3085, %v3092
  %3096 = vmatprep.subr.bf16.mxu0 0
  %3097 = vmatpush1.bf16.msra.mxu0 %v3094
  %3098 = vmatprep.subr.bf16.mxu0 0
  %3099 = vmatpush1.bf16.msra.mxu0 0
  %3100 = vmatprep.subr.bf16.mxu0 0
  %3101 = vmatpush1.bf16.msra.mxu0 0
  %3102 = vmatprep.subr.bf16.mxu0 0
  %3103 = vmatpush1.bf16.msra.mxu0 0
  %3104 = vmatprep.subr.bf16.mxu0 0
  %3105 = vmatpush1.bf16.msra.mxu0 0
  %3106 = vmatprep.subr.bf16.mxu0 0
  %3107 = vmatpush1.bf16.msra.mxu0 0
  %3108 = vmatprep.subr.bf16.mxu0 0
  %3109 = vmatpush1.bf16.msra.mxu0 0
  %3110 = vmatprep.subr.bf16.mxu0 0
  %3111 = vmatpush1.bf16.msra.mxu0 0
  %3112 = vmatprep.subr.bf16.mxu0 0
  %3113 = vmatpush1.bf16.msra.mxu0 0
  %3114 = vmatprep.subr.bf16.mxu0 0
  %3115 = vmatpush1.bf16.msra.mxu0 0
  %3116 = vmatprep.subr.bf16.mxu0 0
  %3117 = vmatpush1.bf16.msra.mxu0 0
  %3118 = vmatprep.subr.bf16.mxu0 0
  %3119 = vmatpush1.bf16.msra.mxu0 0
  %3120 = vmatprep.subr.bf16.mxu0 0
  %3121 = vmatpush1.bf16.msra.mxu0 0
  %3122 = vmatprep.subr.bf16.mxu0 0
  %3123 = vmatpush1.bf16.msra.mxu0 0
  %3124 = vmatprep.subr.bf16.mxu0 0
  %3125 = vmatpush1.bf16.msra.mxu0 0
  %3126 = vmatprep.subr.bf16.mxu0 0
  %3127 = vmatpush1.bf16.msra.mxu0 0
  %3128 = vmatprep.mubr.bf16.mxu0 0
  %3129 = vmatmul.mubr.bf16.gmra.mrb[0].mxu0 %v3087
  %v3130 = vpop.f32.mrb[0].mxu0
  %v3131 = vadd.f32 0.0, %v3130
  %v3132 = vpop.f32.mrb[0].mxu0
  %v3133 = vpop.f32.mrb[0].mxu0
  %v3134 = vpop.f32.mrb[0].mxu0
  %3135 = vdwg.mxu0
  %v3136 = vmul.f32 %v3083, %v3131
  %v3137 = vpack.c.bf16 %v3136, %v3136
  %v3138 = vld [vmem:[%s7] sm:$0xff]
  %v3139 = vld [vmem:[%s7 + $0x8] sm:$0xff]
  %v3140 = vld [vmem:[%s7 + $0x10] sm:$0xff]
  %v3141 = vld [vmem:[%s7 + $0x18] sm:$0xff]
  %v3142 = vld [vmem:[%s7 + $0x20] sm:$0xff]
  %v3143 = vld [vmem:[%s7 + $0x28] sm:$0xff]
  %v3144 = vld [vmem:[%s7 + $0x30] sm:$0xf]
  %v3145 = vld [vmem:[%s7 + $0x34] sm:$0xff]
  %v3146 = vld [vmem:[%s7 + $0x3c] sm:$0xff]
  %v3147 = vld [vmem:[%s7 + $0x44] sm:$0xff]
  %v3148 = vld [vmem:[%s7 + $0x4c] sm:$0xff]
  %v3149 = vld [vmem:[%s7 + $0x54] sm:$0xff]
  %v3150 = vld [vmem:[%s7 + $0x5c] sm:$0xff]
  %v3151 = vld [vmem:[%s7 + $0x64] sm:$0xf]
  %v3152 = vld [vmem:[%s7 + $0x68] sm:$0xff]
  %v3153 = vld [vmem:[%s7 + $0x70] sm:$0xff]
  %v3154 = vld [vmem:[%s7 + $0x78] sm:$0xff]
  %v3155 = vld [vmem:[%s7 + $0x80] sm:$0xff]
  %v3156 = vld [vmem:[%s7 + $0x88] sm:$0xff]
  %v3157 = vld [vmem:[%s7 + $0x90] sm:$0xff]
  %v3158 = vld [vmem:[%s7 + $0x98] sm:$0xf]
  %v3159 = vld [vmem:[%s7 + $0x9c] sm:$0x11]
  %v3160 = vld [vmem:[%s7 + $0xa4] sm:$0x11]
  %v3161 = vld [vmem:[%s7 + $0xac] sm:$0x11]
  %v3162 = vld [vmem:[%s7 + $0xb4] sm:$0x11]
  %v3163 = vld [vmem:[%s7 + $0xbc] sm:$0x11]
  %v3164 = vld [vmem:[%s7 + $0xc4] sm:$0x11]
  %v3165 = vld [vmem:[%s7 + $0xcc] sm:$0x1]
  %v3194 = vunpack.c.l.b16 %v3138
  %v3195 = vunpack.c.h.b16 %v3138
  %v3196 = vunpack.c.l.b16 %v3139
  %v3197 = vunpack.c.h.b16 %v3139
  %v3198 = vunpack.c.l.b16 %v3140
  %v3199 = vunpack.c.h.b16 %v3140
  %v3200 = vunpack.c.l.b16 %v3141
  %v3201 = vunpack.c.h.b16 %v3141
  %v3202 = vunpack.c.l.b16 %v3142
  %v3203 = vunpack.c.h.b16 %v3142
  %v3204 = vunpack.c.l.b16 %v3143
  %v3205 = vunpack.c.h.b16 %v3143
  %v3206 = vunpack.c.l.b16 %v3144
  %v3207 = vunpack.c.l.b16 %v3145
  %v3208 = vunpack.c.h.b16 %v3145
  %v3209 = vunpack.c.l.b16 %v3146
  %v3210 = vunpack.c.h.b16 %v3146
  %v3211 = vunpack.c.l.b16 %v3147
  %v3212 = vunpack.c.h.b16 %v3147
  %v3213 = vunpack.c.l.b16 %v3148
  %v3214 = vunpack.c.h.b16 %v3148
  %v3215 = vunpack.c.l.b16 %v3149
  %v3216 = vunpack.c.h.b16 %v3149
  %v3217 = vunpack.c.l.b16 %v3150
  %v3218 = vunpack.c.h.b16 %v3150
  %v3219 = vunpack.c.l.b16 %v3151
  %v3220 = vunpack.c.l.b16 %v3152
  %v3221 = vunpack.c.h.b16 %v3152
  %v3222 = vunpack.c.l.b16 %v3153
  %v3223 = vunpack.c.h.b16 %v3153
  %v3224 = vunpack.c.l.b16 %v3154
  %v3225 = vunpack.c.h.b16 %v3154
  %v3226 = vunpack.c.l.b16 %v3155
  %v3227 = vunpack.c.h.b16 %v3155
  %v3228 = vunpack.c.l.b16 %v3156
  %v3229 = vunpack.c.h.b16 %v3156
  %v3230 = vunpack.c.l.b16 %v3157
  %v3231 = vunpack.c.h.b16 %v3157
  %v3232 = vunpack.c.l.b16 %v3158
  %v3233 = vunpack.c.l.b16 %v3159
  %v3234 = vunpack.c.h.b16 %v3159
  %v3235 = vunpack.c.l.b16 %v3160
  %v3236 = vunpack.c.h.b16 %v3160
  %v3237 = vunpack.c.l.b16 %v3161
  %v3238 = vunpack.c.h.b16 %v3161
  %v3239 = vunpack.c.l.b16 %v3162
  %v3240 = vunpack.c.h.b16 %v3162
  %v3241 = vunpack.c.l.b16 %v3163
  %v3242 = vunpack.c.h.b16 %v3163
  %v3243 = vunpack.c.l.b16 %v3164
  %v3244 = vunpack.c.h.b16 %v3164
  %v3245 = vunpack.c.l.b16 %v3165
  %v3246 = vpack.c.b16 %v3207, %v3194
  %v3247 = vpack.c.b16 %v3208, %v3195
  %v3248 = vpack.c.b16 %v3209, %v3196
  %v3249 = vpack.c.b16 %v3210, %v3197
  %v3250 = vpack.c.b16 %v3211, %v3198
  %v3251 = vpack.c.b16 %v3212, %v3199
  %v3252 = vpack.c.b16 %v3213, %v3200
  %v3253 = vpack.c.b16 %v3214, %v3201
  %v3254 = vpack.c.b16 %v3215, %v3202
  %v3255 = vpack.c.b16 %v3216, %v3203
  %v3256 = vpack.c.b16 %v3217, %v3204
  %v3257 = vpack.c.b16 %v3218, %v3205
  %v3258 = vpack.c.b16 %v3219, %v3206
  %v3259 = vpack.c.b16 %v3233, %v3220
  %v3260 = vpack.c.b16 %v3234, %v3221
  %v3261 = vpack.c.b16 %v3235, %v3222
  %v3262 = vpack.c.b16 %v3236, %v3223
  %v3263 = vpack.c.b16 %v3237, %v3224
  %v3264 = vpack.c.b16 %v3238, %v3225
  %v3265 = vpack.c.b16 %v3239, %v3226
  %v3266 = vpack.c.b16 %v3240, %v3227
  %v3267 = vpack.c.b16 %v3241, %v3228
  %v3268 = vpack.c.b16 %v3242, %v3229
  %v3269 = vpack.c.b16 %v3243, %v3230
  %v3270 = vpack.c.b16 %v3244, %v3231
  %v3271 = vpack.c.b16 %v3245, %v3232
  %v3286 = vsel %vm2994, %v3137, 0
  %vm3288 = vcmask 1044480
  %v3289 = vsel %vm845, 4294967295, 65535
  %v3290 = vsel %vm3288, %v3289, 0
  %v3292 = vand.u32 %v3259, %v3290
  %v3295 = vand.u32 %v3260, %v3290
  %v3298 = vand.u32 %v3261, %v3290
  %v3301 = vand.u32 %v3262, %v3290
  %v3304 = vand.u32 %v3263, %v3290
  %v3307 = vand.u32 %v3264, %v3290
  %v3310 = vand.u32 %v3265, %v3290
  %v3313 = vand.u32 %v3266, %v3290
  %v3316 = vand.u32 %v3267, %v3290
  %v3319 = vand.u32 %v3268, %v3290
  %v3322 = vand.u32 %v3269, %v3290
  %v3325 = vand.u32 %v3270, %v3290
  %v3328 = vand.u32 %v3271, %v3290
  %3330 = vmatprep.subr.bf16.mxu0 %v3247
  %3331 = vmatpush1.bf16.msra.mxu0 %v3246
  %3332 = vmatprep.subr.bf16.mxu0 %v3295
  %3333 = vmatpush1.bf16.msra.mxu0 %v3292
  %3334 = vmatprep.subr.bf16.mxu0 0
  %3335 = vmatpush1.bf16.msra.mxu0 0
  %3336 = vmatprep.subr.bf16.mxu0 0
  %3337 = vmatpush1.bf16.msra.mxu0 0
  %3338 = vmatprep.subr.bf16.mxu0 0
  %3339 = vmatpush1.bf16.msra.mxu0 0
  %3340 = vmatprep.subr.bf16.mxu0 0
  %3341 = vmatpush1.bf16.msra.mxu0 0
  %3342 = vmatprep.subr.bf16.mxu0 0
  %3343 = vmatpush1.bf16.msra.mxu0 0
  %3344 = vmatprep.subr.bf16.mxu0 0
  %3345 = vmatpush1.bf16.msra.mxu0 0
  %3346 = vmatprep.subr.bf16.mxu0 0
  %3347 = vmatpush1.bf16.msra.mxu0 0
  %3348 = vmatprep.subr.bf16.mxu0 0
  %3349 = vmatpush1.bf16.msra.mxu0 0
  %3350 = vmatprep.subr.bf16.mxu0 0
  %3351 = vmatpush1.bf16.msra.mxu0 0
  %3352 = vmatprep.subr.bf16.mxu0 0
  %3353 = vmatpush1.bf16.msra.mxu0 0
  %3354 = vmatprep.subr.bf16.mxu0 0
  %3355 = vmatpush1.bf16.msra.mxu0 0
  %3356 = vmatprep.subr.bf16.mxu0 0
  %3357 = vmatpush1.bf16.msra.mxu0 0
  %3358 = vmatprep.subr.bf16.mxu0 0
  %3359 = vmatpush1.bf16.msra.mxu0 0
  %3360 = vmatprep.subr.bf16.mxu0 0
  %3361 = vmatpush1.bf16.msra.mxu0 0
  %3362 = vmatprep.mubr.bf16.mxu0 0
  %3363 = vmatmul.mubr.bf16.gmra.mrb[0].mxu0 %v3286
  %v3364 = vpop.f32.mrb[0].mxu0
  %v3365 = vadd.f32 0.0, %v3364
  %v3366 = vpop.f32.mrb[0].mxu0
  %v3367 = vadd.f32 0.0, %v3366
  %v3368 = vpop.f32.mrb[0].mxu0
  %v3369 = vpop.f32.mrb[0].mxu0
  %3370 = vdwg.mxu0
  %3371 = vmatprep.subr.bf16.mxu0 %v3249
  %3372 = vmatpush1.bf16.msra.mxu0 %v3248
  %3373 = vmatprep.subr.bf16.mxu0 %v3301
  %3374 = vmatpush1.bf16.msra.mxu0 %v3298
  %3375 = vmatprep.subr.bf16.mxu0 0
  %3376 = vmatpush1.bf16.msra.mxu0 0
  %3377 = vmatprep.subr.bf16.mxu0 0
  %3378 = vmatpush1.bf16.msra.mxu0 0
  %3379 = vmatprep.subr.bf16.mxu0 0
  %3380 = vmatpush1.bf16.msra.mxu0 0
  %3381 = vmatprep.subr.bf16.mxu0 0
  %3382 = vmatpush1.bf16.msra.mxu0 0
  %3383 = vmatprep.subr.bf16.mxu0 0
  %3384 = vmatpush1.bf16.msra.mxu0 0
  %3385 = vmatprep.subr.bf16.mxu0 0
  %3386 = vmatpush1.bf16.msra.mxu0 0
  %3387 = vmatprep.subr.bf16.mxu0 0
  %3388 = vmatpush1.bf16.msra.mxu0 0
  %3389 = vmatprep.subr.bf16.mxu0 0
  %3390 = vmatpush1.bf16.msra.mxu0 0
  %3391 = vmatprep.subr.bf16.mxu0 0
  %3392 = vmatpush1.bf16.msra.mxu0 0
  %3393 = vmatprep.subr.bf16.mxu0 0
  %3394 = vmatpush1.bf16.msra.mxu0 0
  %3395 = vmatprep.subr.bf16.mxu0 0
  %3396 = vmatpush1.bf16.msra.mxu0 0
  %3397 = vmatprep.subr.bf16.mxu0 0
  %3398 = vmatpush1.bf16.msra.mxu0 0
  %3399 = vmatprep.subr.bf16.mxu0 0
  %3400 = vmatpush1.bf16.msra.mxu0 0
  %3401 = vmatprep.subr.bf16.mxu0 0
  %3402 = vmatpush1.bf16.msra.mxu0 0
  %3403 = vmatprep.mubr.bf16.mxu0 0
  %3404 = vmatmul.mubr.bf16.gmra.mrb[0].mxu0 %v3286
  %v3405 = vpop.f32.mrb[0].mxu0
  %v3406 = vadd.f32 0.0, %v3405
  %v3407 = vpop.f32.mrb[0].mxu0
  %v3408 = vadd.f32 0.0, %v3407
  %v3409 = vpop.f32.mrb[0].mxu0
  %v3410 = vpop.f32.mrb[0].mxu0
  %3411 = vdwg.mxu0
  %3412 = vmatprep.subr.bf16.mxu0 %v3251
  %3413 = vmatpush1.bf16.msra.mxu0 %v3250
  %3414 = vmatprep.subr.bf16.mxu0 %v3307
  %3415 = vmatpush1.bf16.msra.mxu0 %v3304
  %3416 = vmatprep.subr.bf16.mxu0 0
  %3417 = vmatpush1.bf16.msra.mxu0 0
  %3418 = vmatprep.subr.bf16.mxu0 0
  %3419 = vmatpush1.bf16.msra.mxu0 0
  %3420 = vmatprep.subr.bf16.mxu0 0
  %3421 = vmatpush1.bf16.msra.mxu0 0
  %3422 = vmatprep.subr.bf16.mxu0 0
  %3423 = vmatpush1.bf16.msra.mxu0 0
  %3424 = vmatprep.subr.bf16.mxu0 0
  %3425 = vmatpush1.bf16.msra.mxu0 0
  %3426 = vmatprep.subr.bf16.mxu0 0
  %3427 = vmatpush1.bf16.msra.mxu0 0
  %3428 = vmatprep.subr.bf16.mxu0 0
  %3429 = vmatpush1.bf16.msra.mxu0 0
  %3430 = vmatprep.subr.bf16.mxu0 0
  %3431 = vmatpush1.bf16.msra.mxu0 0
  %3432 = vmatprep.subr.bf16.mxu0 0
  %3433 = vmatpush1.bf16.msra.mxu0 0
  %3434 = vmatprep.subr.bf16.mxu0 0
  %3435 = vmatpush1.bf16.msra.mxu0 0
  %3436 = vmatprep.subr.bf16.mxu0 0
  %3437 = vmatpush1.bf16.msra.mxu0 0
  %3438 = vmatprep.subr.bf16.mxu0 0
  %3439 = vmatpush1.bf16.msra.mxu0 0
  %3440 = vmatprep.subr.bf16.mxu0 0
  %3441 = vmatpush1.bf16.msra.mxu0 0
  %3442 = vmatprep.subr.bf16.mxu0 0
  %3443 = vmatpush1.bf16.msra.mxu0 0
  %3444 = vmatprep.mubr.bf16.mxu0 0
  %3445 = vmatmul.mubr.bf16.gmra.mrb[0].mxu0 %v3286
  %v3446 = vpop.f32.mrb[0].mxu0
  %v3447 = vadd.f32 0.0, %v3446
  %v3448 = vpop.f32.mrb[0].mxu0
  %v3449 = vadd.f32 0.0, %v3448
  %v3450 = vpop.f32.mrb[0].mxu0
  %v3451 = vpop.f32.mrb[0].mxu0
  %3452 = vdwg.mxu0
  %3453 = vmatprep.subr.bf16.mxu0 %v3253
  %3454 = vmatpush1.bf16.msra.mxu0 %v3252
  %3455 = vmatprep.subr.bf16.mxu0 %v3313
  %3456 = vmatpush1.bf16.msra.mxu0 %v3310
  %3457 = vmatprep.subr.bf16.mxu0 0
  %3458 = vmatpush1.bf16.msra.mxu0 0
  %3459 = vmatprep.subr.bf16.mxu0 0
  %3460 = vmatpush1.bf16.msra.mxu0 0
  %3461 = vmatprep.subr.bf16.mxu0 0
  %3462 = vmatpush1.bf16.msra.mxu0 0
  %3463 = vmatprep.subr.bf16.mxu0 0
  %3464 = vmatpush1.bf16.msra.mxu0 0
  %3465 = vmatprep.subr.bf16.mxu0 0
  %3466 = vmatpush1.bf16.msra.mxu0 0
  %3467 = vmatprep.subr.bf16.mxu0 0
  %3468 = vmatpush1.bf16.msra.mxu0 0
  %3469 = vmatprep.subr.bf16.mxu0 0
  %3470 = vmatpush1.bf16.msra.mxu0 0
  %3471 = vmatprep.subr.bf16.mxu0 0
  %3472 = vmatpush1.bf16.msra.mxu0 0
  %3473 = vmatprep.subr.bf16.mxu0 0
  %3474 = vmatpush1.bf16.msra.mxu0 0
  %3475 = vmatprep.subr.bf16.mxu0 0
  %3476 = vmatpush1.bf16.msra.mxu0 0
  %3477 = vmatprep.subr.bf16.mxu0 0
  %3478 = vmatpush1.bf16.msra.mxu0 0
  %3479 = vmatprep.subr.bf16.mxu0 0
  %3480 = vmatpush1.bf16.msra.mxu0 0
  %3481 = vmatprep.subr.bf16.mxu0 0
  %3482 = vmatpush1.bf16.msra.mxu0 0
  %3483 = vmatprep.subr.bf16.mxu0 0
  %3484 = vmatpush1.bf16.msra.mxu0 0
  %3485 = vmatprep.mubr.bf16.mxu0 0
  %3486 = vmatmul.mubr.bf16.gmra.mrb[0].mxu0 %v3286
  %v3487 = vpop.f32.mrb[0].mxu0
  %v3488 = vadd.f32 0.0, %v3487
  %v3489 = vpop.f32.mrb[0].mxu0
  %v3490 = vadd.f32 0.0, %v3489
  %v3491 = vpop.f32.mrb[0].mxu0
  %v3492 = vpop.f32.mrb[0].mxu0
  %3493 = vdwg.mxu0
  %3494 = vmatprep.subr.bf16.mxu0 %v3255
  %3495 = vmatpush1.bf16.msra.mxu0 %v3254
  %3496 = vmatprep.subr.bf16.mxu0 %v3319
  %3497 = vmatpush1.bf16.msra.mxu0 %v3316
  %3498 = vmatprep.subr.bf16.mxu0 0
  %3499 = vmatpush1.bf16.msra.mxu0 0
  %3500 = vmatprep.subr.bf16.mxu0 0
  %3501 = vmatpush1.bf16.msra.mxu0 0
  %3502 = vmatprep.subr.bf16.mxu0 0
  %3503 = vmatpush1.bf16.msra.mxu0 0
  %3504 = vmatprep.subr.bf16.mxu0 0
  %3505 = vmatpush1.bf16.msra.mxu0 0
  %3506 = vmatprep.subr.bf16.mxu0 0
  %3507 = vmatpush1.bf16.msra.mxu0 0
  %3508 = vmatprep.subr.bf16.mxu0 0
  %3509 = vmatpush1.bf16.msra.mxu0 0
  %3510 = vmatprep.subr.bf16.mxu0 0
  %3511 = vmatpush1.bf16.msra.mxu0 0
  %3512 = vmatprep.subr.bf16.mxu0 0
  %3513 = vmatpush1.bf16.msra.mxu0 0
  %3514 = vmatprep.subr.bf16.mxu0 0
  %3515 = vmatpush1.bf16.msra.mxu0 0
  %3516 = vmatprep.subr.bf16.mxu0 0
  %3517 = vmatpush1.bf16.msra.mxu0 0
  %3518 = vmatprep.subr.bf16.mxu0 0
  %3519 = vmatpush1.bf16.msra.mxu0 0
  %3520 = vmatprep.subr.bf16.mxu0 0
  %3521 = vmatpush1.bf16.msra.mxu0 0
  %3522 = vmatprep.subr.bf16.mxu0 0
  %3523 = vmatpush1.bf16.msra.mxu0 0
  %3524 = vmatprep.subr.bf16.mxu0 0
  %3525 = vmatpush1.bf16.msra.mxu0 0
  %3526 = vmatprep.mubr.bf16.mxu0 0
  %3527 = vmatmul.mubr.bf16.gmra.mrb[0].mxu0 %v3286
  %v3528 = vpop.f32.mrb[0].mxu0
  %v3529 = vadd.f32 0.0, %v3528
  %v3530 = vpop.f32.mrb[0].mxu0
  %v3531 = vadd.f32 0.0, %v3530
  %v3532 = vpop.f32.mrb[0].mxu0
  %v3533 = vpop.f32.mrb[0].mxu0
  %3534 = vdwg.mxu0
  %3535 = vmatprep.subr.bf16.mxu0 %v3257
  %3536 = vmatpush1.bf16.msra.mxu0 %v3256
  %3537 = vmatprep.subr.bf16.mxu0 %v3325
  %3538 = vmatpush1.bf16.msra.mxu0 %v3322
  %3539 = vmatprep.subr.bf16.mxu0 0
  %3540 = vmatpush1.bf16.msra.mxu0 0
  %3541 = vmatprep.subr.bf16.mxu0 0
  %3542 = vmatpush1.bf16.msra.mxu0 0
  %3543 = vmatprep.subr.bf16.mxu0 0
  %3544 = vmatpush1.bf16.msra.mxu0 0
  %3545 = vmatprep.subr.bf16.mxu0 0
  %3546 = vmatpush1.bf16.msra.mxu0 0
  %3547 = vmatprep.subr.bf16.mxu0 0
  %3548 = vmatpush1.bf16.msra.mxu0 0
  %3549 = vmatprep.subr.bf16.mxu0 0
  %3550 = vmatpush1.bf16.msra.mxu0 0
  %3551 = vmatprep.subr.bf16.mxu0 0
  %3552 = vmatpush1.bf16.msra.mxu0 0
  %3553 = vmatprep.subr.bf16.mxu0 0
  %3554 = vmatpush1.bf16.msra.mxu0 0
  %3555 = vmatprep.subr.bf16.mxu0 0
  %3556 = vmatpush1.bf16.msra.mxu0 0
  %3557 = vmatprep.subr.bf16.mxu0 0
  %3558 = vmatpush1.bf16.msra.mxu0 0
  %3559 = vmatprep.subr.bf16.mxu0 0
  %3560 = vmatpush1.bf16.msra.mxu0 0
  %3561 = vmatprep.subr.bf16.mxu0 0
  %3562 = vmatpush1.bf16.msra.mxu0 0
  %3563 = vmatprep.subr.bf16.mxu0 0
  %3564 = vmatpush1.bf16.msra.mxu0 0
  %3565 = vmatprep.subr.bf16.mxu0 0
  %3566 = vmatpush1.bf16.msra.mxu0 0
  %3567 = vmatprep.mubr.bf16.mxu0 0
  %3568 = vmatmul.mubr.bf16.gmra.mrb[0].mxu0 %v3286
  %v3569 = vpop.f32.mrb[0].mxu0
  %v3570 = vadd.f32 0.0, %v3569
  %v3571 = vpop.f32.mrb[0].mxu0
  %v3572 = vadd.f32 0.0, %v3571
  %v3573 = vpop.f32.mrb[0].mxu0
  %v3574 = vpop.f32.mrb[0].mxu0
  %3575 = vdwg.mxu0
  %3576 = vmatprep.subr.bf16.mxu0 0
  %3577 = vmatpush1.bf16.msra.mxu0 %v3258
  %3578 = vmatprep.subr.bf16.mxu0 0
  %3579 = vmatpush1.bf16.msra.mxu0 %v3328
  %3580 = vmatprep.subr.bf16.mxu0 0
  %3581 = vmatpush1.bf16.msra.mxu0 0
  %3582 = vmatprep.subr.bf16.mxu0 0
  %3583 = vmatpush1.bf16.msra.mxu0 0
  %3584 = vmatprep.subr.bf16.mxu0 0
  %3585 = vmatpush1.bf16.msra.mxu0 0
  %3586 = vmatprep.subr.bf16.mxu0 0
  %3587 = vmatpush1.bf16.msra.mxu0 0
  %3588 = vmatprep.subr.bf16.mxu0 0
  %3589 = vmatpush1.bf16.msra.mxu0 0
  %3590 = vmatprep.subr.bf16.mxu0 0
  %3591 = vmatpush1.bf16.msra.mxu0 0
  %3592 = vmatprep.subr.bf16.mxu0 0
  %3593 = vmatpush1.bf16.msra.mxu0 0
  %3594 = vmatprep.subr.bf16.mxu0 0
  %3595 = vmatpush1.bf16.msra.mxu0 0
  %3596 = vmatprep.subr.bf16.mxu0 0
  %3597 = vmatpush1.bf16.msra.mxu0 0
  %3598 = vmatprep.subr.bf16.mxu0 0
  %3599 = vmatpush1.bf16.msra.mxu0 0
  %3600 = vmatprep.subr.bf16.mxu0 0
  %3601 = vmatpush1.bf16.msra.mxu0 0
  %3602 = vmatprep.subr.bf16.mxu0 0
  %3603 = vmatpush1.bf16.msra.mxu0 0
  %3604 = vmatprep.subr.bf16.mxu0 0
  %3605 = vmatpush1.bf16.msra.mxu0 0
  %3606 = vmatprep.subr.bf16.mxu0 0
  %3607 = vmatpush1.bf16.msra.mxu0 0
  %3608 = vmatprep.mubr.bf16.mxu0 0
  %3609 = vmatmul.mubr.bf16.gmra.mrb[0].mxu0 %v3286
  %v3610 = vpop.f32.mrb[0].mxu0
  %v3611 = vadd.f32 0.0, %v3610
  %v3612 = vpop.f32.mrb[0].mxu0
  %v3613 = vpop.f32.mrb[0].mxu0
  %v3614 = vpop.f32.mrb[0].mxu0
  %3615 = vdwg.mxu0
  %v3616 = vmul.f32 %v3365, %v1531
  %v3617 = vmul.f32 %v3367, %v1533
  %v3618 = vmul.f32 %v3406, %v1572
  %v3619 = vmul.f32 %v3408, %v1574
  %v3620 = vmul.f32 %v3447, %v1613
  %v3621 = vmul.f32 %v3449, %v1615
  %v3622 = vmul.f32 %v3488, %v1654
  %v3623 = vmul.f32 %v3490, %v1656
  %v3624 = vmul.f32 %v3529, %v1695
  %v3625 = vmul.f32 %v3531, %v1697
  %v3626 = vmul.f32 %v3570, %v1736
  %v3627 = vmul.f32 %v3572, %v1738
  %v3628 = vmul.f32 %v3611, %v1777
  %v3629 = vpack.c.bf16 %v3616, %v3616
  %v3630 = vpack.c.bf16 %v3617, %v3617
  %v3631 = vpack.c.bf16 %v3618, %v3618
  %v3632 = vpack.c.bf16 %v3619, %v3619
  %v3633 = vpack.c.bf16 %v3620, %v3620
  %v3634 = vpack.c.bf16 %v3621, %v3621
  %v3635 = vpack.c.bf16 %v3622, %v3622
  %v3636 = vpack.c.bf16 %v3623, %v3623
  %v3637 = vpack.c.bf16 %v3624, %v3624
  %v3638 = vpack.c.bf16 %v3625, %v3625
  %v3639 = vpack.c.bf16 %v3626, %v3626
  %v3640 = vpack.c.bf16 %v3627, %v3627
  %v3641 = vpack.c.bf16 %v3628, %v3628
  %v3642 = vld [vmem:[%s8] sm:$0xf]
  %v3643 = vld [vmem:[%s8 + $0x4] sm:$0xf]
  %v3644 = vld [vmem:[%s8 + $0x8] sm:$0xf]
  %v3645 = vld [vmem:[%s8 + $0xc] sm:$0xf]
  %v3646 = vld [vmem:[%s8 + $0x10] sm:$0xf]
  %v3647 = vld [vmem:[%s8 + $0x14] sm:$0xf]
  %v3648 = vld [vmem:[%s8 + $0x18] sm:$0xf]
  %v3649 = vld [vmem:[%s8 + $0x1c] sm:$0xf]
  %v3650 = vld [vmem:[%s8 + $0x20] sm:$0xf]
  %v3651 = vld [vmem:[%s8 + $0x24] sm:$0xf]
  %v3652 = vld [vmem:[%s8 + $0x28] sm:$0xf]
  %v3653 = vld [vmem:[%s8 + $0x2c] sm:$0xf]
  %v3654 = vld [vmem:[%s8 + $0x30] sm:$0xf]
  %v3655 = vld [vmem:[%s8 + $0x34] sm:$0xf]
  %v3656 = vld [vmem:[%s8 + $0x38] sm:$0xf]
  %v3657 = vld [vmem:[%s8 + $0x3c] sm:$0xf]
  %v3658 = vld [vmem:[%s8 + $0x40] sm:$0xf]
  %v3659 = vld [vmem:[%s8 + $0x44] sm:$0xf]
  %v3660 = vld [vmem:[%s8 + $0x48] sm:$0xf]
  %v3661 = vld [vmem:[%s8 + $0x4c] sm:$0xf]
  %v3662 = vld [vmem:[%s8 + $0x50] sm:$0xf]
  %v3663 = vld [vmem:[%s8 + $0x54] sm:$0xf]
  %v3664 = vld [vmem:[%s8 + $0x58] sm:$0xf]
  %v3665 = vld [vmem:[%s8 + $0x5c] sm:$0xf]
  %v3666 = vld [vmem:[%s8 + $0x60] sm:$0xf]
  %v3667 = vld [vmem:[%s8 + $0x64] sm:$0xf]
  %v3668 = vld [vmem:[%s8 + $0x68] sm:$0xf]
  %v3669 = vld [vmem:[%s8 + $0x6c] sm:$0xf]
  %v3670 = vld [vmem:[%s8 + $0x70] sm:$0xf]
  %v3671 = vld [vmem:[%s8 + $0x74] sm:$0xf]
  %v3672 = vld [vmem:[%s8 + $0x78] sm:$0xf]
  %v3673 = vld [vmem:[%s8 + $0x7c] sm:$0xf]
  %v3674 = vld [vmem:[%s8 + $0x80] sm:$0xf]
  %v3675 = vld [vmem:[%s8 + $0x84] sm:$0xf]
  %v3676 = vld [vmem:[%s8 + $0x88] sm:$0xf]
  %v3677 = vld [vmem:[%s8 + $0x8c] sm:$0xf]
  %v3678 = vld [vmem:[%s8 + $0x90] sm:$0xf]
  %v3679 = vld [vmem:[%s8 + $0x94] sm:$0xf]
  %v3680 = vld [vmem:[%s8 + $0x98] sm:$0xf]
  %v3681 = vld [vmem:[%s8 + $0x9c] sm:$0xf]
  %v3682 = vld [vmem:[%s8 + $0xa0] sm:$0xf]
  %v3683 = vld [vmem:[%s8 + $0xa4] sm:$0xf]
  %v3684 = vld [vmem:[%s8 + $0xa8] sm:$0xf]
  %v3685 = vld [vmem:[%s8 + $0xac] sm:$0xf]
  %v3686 = vld [vmem:[%s8 + $0xb0] sm:$0xf]
  %v3687 = vld [vmem:[%s8 + $0xb4] sm:$0xf]
  %v3688 = vld [vmem:[%s8 + $0xb8] sm:$0xf]
  %v3689 = vld [vmem:[%s8 + $0xbc] sm:$0xf]
  %v3690 = vld [vmem:[%s8 + $0xc0] sm:$0xf]
  %v3691 = vld [vmem:[%s8 + $0xc4] sm:$0xf]
  %v3692 = vld [vmem:[%s8 + $0xc8] sm:$0xf]
  %v3693 = vld [vmem:[%s8 + $0xcc] sm:$0xf]
  %v3694 = vld [vmem:[%s8 + $0xd0] sm:$0xf]
  %v3695 = vld [vmem:[%s8 + $0xd4] sm:$0xf]
  %v3696 = vld [vmem:[%s8 + $0xd8] sm:$0xf]
  %v3697 = vld [vmem:[%s8 + $0xdc] sm:$0xf]
  %v3698 = vld [vmem:[%s8 + $0xe0] sm:$0xf]
  %v3699 = vld [vmem:[%s8 + $0xe4] sm:$0xf]
  %v3700 = vld [vmem:[%s8 + $0xe8] sm:$0xf]
  %v3701 = vld [vmem:[%s8 + $0xec] sm:$0xf]
  %v3702 = vld [vmem:[%s8 + $0xf0] sm:$0xf]
  %v3703 = vld [vmem:[%s8 + $0xf4] sm:$0xf]
  %v3704 = vld [vmem:[%s8 + $0xf8] sm:$0xf]
  %v3705 = vld [vmem:[%s8 + $0xfc] sm:$0xf]
  %v3706 = vld [vmem:[%s8 + $0x100] sm:$0xf]
  %v3707 = vld [vmem:[%s8 + $0x104] sm:$0xf]
  %v3708 = vld [vmem:[%s8 + $0x108] sm:$0xf]
  %v3709 = vld [vmem:[%s8 + $0x10c] sm:$0xf]
  %v3710 = vld [vmem:[%s8 + $0x110] sm:$0xf]
  %v3711 = vld [vmem:[%s8 + $0x114] sm:$0xf]
  %v3712 = vld [vmem:[%s8 + $0x118] sm:$0xf]
  %v3713 = vld [vmem:[%s8 + $0x11c] sm:$0xf]
  %v3714 = vld [vmem:[%s8 + $0x120] sm:$0xf]
  %v3715 = vld [vmem:[%s8 + $0x124] sm:$0xf]
  %v3716 = vld [vmem:[%s8 + $0x128] sm:$0xf]
  %v3717 = vld [vmem:[%s8 + $0x12c] sm:$0xf]
  %v3718 = vld [vmem:[%s8 + $0x130] sm:$0xf]
  %v3719 = vld [vmem:[%s8 + $0x134] sm:$0xf]
  %v3720 = vld [vmem:[%s8 + $0x138] sm:$0xf]
  %v3721 = vld [vmem:[%s8 + $0x13c] sm:$0xf]
  %v3722 = vld [vmem:[%s8 + $0x140] sm:$0xf]
  %v3723 = vld [vmem:[%s8 + $0x144] sm:$0xf]
  %v3724 = vld [vmem:[%s8 + $0x148] sm:$0xf]
  %v3725 = vld [vmem:[%s8 + $0x14c] sm:$0xf]
  %v3726 = vld [vmem:[%s8 + $0x150] sm:$0xf]
  %v3727 = vld [vmem:[%s8 + $0x154] sm:$0xf]
  %v3728 = vld [vmem:[%s8 + $0x158] sm:$0xf]
  %v3729 = vld [vmem:[%s8 + $0x15c] sm:$0xf]
  %v3730 = vld [vmem:[%s8 + $0x160] sm:$0xf]
  %v3731 = vld [vmem:[%s8 + $0x164] sm:$0xf]
  %v3732 = vld [vmem:[%s8 + $0x168] sm:$0xf]
  %v3733 = vld [vmem:[%s8 + $0x16c] sm:$0xf]
  %v3734 = vld [vmem:[%s8 + $0x170] sm:$0xf]
  %v3735 = vld [vmem:[%s8 + $0x174] sm:$0xf]
  %v3736 = vld [vmem:[%s8 + $0x178] sm:$0xf]
  %v3737 = vld [vmem:[%s8 + $0x17c] sm:$0xf]
  %v3738 = vld [vmem:[%s8 + $0x180] sm:$0xf]
  %v3739 = vld [vmem:[%s8 + $0x184] sm:$0xf]
  %v3740 = vld [vmem:[%s8 + $0x188] sm:$0xf]
  %v3741 = vld [vmem:[%s8 + $0x18c] sm:$0xf]
  %v3742 = vld [vmem:[%s8 + $0x190] sm:$0xf]
  %v3743 = vld [vmem:[%s8 + $0x194] sm:$0xf]
  %v3744 = vld [vmem:[%s8 + $0x198] sm:$0xf]
  %v3745 = vld [vmem:[%s8 + $0x19c] sm:$0xf]
  %v3746 = vld [vmem:[%s8 + $0x1a0] sm:$0xf]
  %v3747 = vld [vmem:[%s8 + $0x1a4] sm:$0xf]
  %v3748 = vld [vmem:[%s8 + $0x1a8] sm:$0xf]
  %v3749 = vld [vmem:[%s8 + $0x1ac] sm:$0xf]
  %v3750 = vld [vmem:[%s8 + $0x1b0] sm:$0xf]
  %v3751 = vld [vmem:[%s8 + $0x1b4] sm:$0xf]
  %v3752 = vld [vmem:[%s8 + $0x1b8] sm:$0xf]
  %v3753 = vld [vmem:[%s8 + $0x1bc] sm:$0xf]
  %v3754 = vld [vmem:[%s8 + $0x1c0] sm:$0xf]
  %v3755 = vld [vmem:[%s8 + $0x1c4] sm:$0xf]
  %v3756 = vld [vmem:[%s8 + $0x1c8] sm:$0xf]
  %v3757 = vld [vmem:[%s8 + $0x1cc] sm:$0xf]
  %v3758 = vld [vmem:[%s8 + $0x1d0] sm:$0xf]
  %v3759 = vld [vmem:[%s8 + $0x1d4] sm:$0xf]
  %v3760 = vld [vmem:[%s8 + $0x1d8] sm:$0xf]
  %v3761 = vld [vmem:[%s8 + $0x1dc] sm:$0xf]
  %v3762 = vld [vmem:[%s8 + $0x1e0] sm:$0xf]
  %v3763 = vld [vmem:[%s8 + $0x1e4] sm:$0xf]
  %v3764 = vld [vmem:[%s8 + $0x1e8] sm:$0xf]
  %v3765 = vld [vmem:[%s8 + $0x1ec] sm:$0xf]
  %v3766 = vld [vmem:[%s8 + $0x1f0] sm:$0xf]
  %v3767 = vld [vmem:[%s8 + $0x1f4] sm:$0xf]
  %v3768 = vld [vmem:[%s8 + $0x1f8] sm:$0xf]
  %v3769 = vld [vmem:[%s8 + $0x1fc] sm:$0xf]
  %v3770 = vld [vmem:[%s8 + $0x200] sm:$0xf]
  %v3771 = vld [vmem:[%s8 + $0x204] sm:$0xf]
  %v3772 = vld [vmem:[%s8 + $0x208] sm:$0xf]
  %v3773 = vld [vmem:[%s8 + $0x20c] sm:$0xf]
  %v3774 = vld [vmem:[%s8 + $0x210] sm:$0xf]
  %v3775 = vld [vmem:[%s8 + $0x214] sm:$0xf]
  %v3776 = vld [vmem:[%s8 + $0x218] sm:$0xf]
  %v3777 = vld [vmem:[%s8 + $0x21c] sm:$0xf]
  %v3778 = vld [vmem:[%s8 + $0x220] sm:$0xf]
  %v3779 = vld [vmem:[%s8 + $0x224] sm:$0xf]
  %v3780 = vld [vmem:[%s8 + $0x228] sm:$0xf]
  %v3781 = vld [vmem:[%s8 + $0x22c] sm:$0xf]
  %v3782 = vld [vmem:[%s8 + $0x230] sm:$0xf]
  %v3783 = vld [vmem:[%s8 + $0x234] sm:$0xf]
  %v3784 = vld [vmem:[%s8 + $0x238] sm:$0xf]
  %v3785 = vld [vmem:[%s8 + $0x23c] sm:$0xf]
  %v3786 = vld [vmem:[%s8 + $0x240] sm:$0xf]
  %v3787 = vld [vmem:[%s8 + $0x244] sm:$0xf]
  %v3788 = vld [vmem:[%s8 + $0x248] sm:$0xf]
  %v3789 = vld [vmem:[%s8 + $0x24c] sm:$0xf]
  %v3790 = vld [vmem:[%s8 + $0x250] sm:$0xf]
  %v3791 = vld [vmem:[%s8 + $0x254] sm:$0xf]
  %v3792 = vld [vmem:[%s8 + $0x258] sm:$0xf]
  %v3793 = vld [vmem:[%s8 + $0x25c] sm:$0xf]
  %v3794 = vld [vmem:[%s8 + $0x260] sm:$0xf]
  %v3795 = vld [vmem:[%s8 + $0x264] sm:$0xf]
  %v3796 = vld [vmem:[%s8 + $0x268] sm:$0xf]
  %v3797 = vld [vmem:[%s8 + $0x26c] sm:$0xf]
  %v3798 = vld [vmem:[%s8 + $0x270] sm:$0xf]
  %v3799 = vld [vmem:[%s8 + $0x274] sm:$0xf]
  %v3800 = vld [vmem:[%s8 + $0x278] sm:$0xf]
  %v3801 = vld [vmem:[%s8 + $0x27c] sm:$0xf]
  %v3802 = vld [vmem:[%s8 + $0x280] sm:$0xf]
  %v3803 = vld [vmem:[%s8 + $0x284] sm:$0xf]
  %v3804 = vld [vmem:[%s8 + $0x288] sm:$0xf]
  %v3805 = vld [vmem:[%s8 + $0x28c] sm:$0xf]
  %v3806 = vld [vmem:[%s8 + $0x290] sm:$0xf]
  %v3807 = vld [vmem:[%s8 + $0x294] sm:$0xf]
  %v3808 = vld [vmem:[%s8 + $0x298] sm:$0xf]
  %v3809 = vld [vmem:[%s8 + $0x29c] sm:$0xf]
  %v3810 = vld [vmem:[%s8 + $0x2a0] sm:$0xf]
  %v3811 = vld [vmem:[%s8 + $0x2a4] sm:$0xf]
  %v3812 = vld [vmem:[%s8 + $0x2a8] sm:$0xf]
  %v3813 = vld [vmem:[%s8 + $0x2ac] sm:$0xf]
  %v3814 = vld [vmem:[%s8 + $0x2b0] sm:$0xf]
  %v3815 = vld [vmem:[%s8 + $0x2b4] sm:$0xf]
  %v3816 = vld [vmem:[%s8 + $0x2b8] sm:$0xf]
  %v3817 = vld [vmem:[%s8 + $0x2bc] sm:$0xf]
  %v3818 = vld [vmem:[%s8 + $0x2c0] sm:$0xf]
  %v3819 = vld [vmem:[%s8 + $0x2c4] sm:$0xf]
  %v3820 = vld [vmem:[%s8 + $0x2c8] sm:$0xf]
  %v3821 = vld [vmem:[%s8 + $0x2cc] sm:$0xf]
  %v3822 = vld [vmem:[%s8 + $0x2d0] sm:$0xf]
  %v3823 = vld [vmem:[%s8 + $0x2d4] sm:$0xf]
  %v3824 = vld [vmem:[%s8 + $0x2d8] sm:$0xf]
  %v3825 = vld [vmem:[%s8 + $0x2dc] sm:$0xf]
  %v3826 = vld [vmem:[%s8 + $0x2e0] sm:$0xf]
  %v3827 = vld [vmem:[%s8 + $0x2e4] sm:$0xf]
  %v3828 = vld [vmem:[%s8 + $0x2e8] sm:$0xf]
  %v3829 = vld [vmem:[%s8 + $0x2ec] sm:$0xf]
  %v3830 = vld [vmem:[%s8 + $0x2f0] sm:$0xf]
  %v3831 = vld [vmem:[%s8 + $0x2f4] sm:$0xf]
  %v3832 = vld [vmem:[%s8 + $0x2f8] sm:$0xf]
  %v3833 = vld [vmem:[%s8 + $0x2fc] sm:$0xf]
  %v3834 = vld [vmem:[%s8 + $0x300] sm:$0xf]
  %v3835 = vld [vmem:[%s8 + $0x304] sm:$0xf]
  %v3836 = vld [vmem:[%s8 + $0x308] sm:$0xf]
  %v3837 = vld [vmem:[%s8 + $0x30c] sm:$0xf]
  %v3838 = vld [vmem:[%s8 + $0x310] sm:$0xf]
  %v3839 = vld [vmem:[%s8 + $0x314] sm:$0xf]
  %v3840 = vld [vmem:[%s8 + $0x318] sm:$0xf]
  %v3841 = vld [vmem:[%s8 + $0x31c] sm:$0xf]
  %v3842 = vld [vmem:[%s8 + $0x320] sm:$0xf]
  %v3843 = vld [vmem:[%s8 + $0x324] sm:$0xf]
  %v3844 = vld [vmem:[%s8 + $0x328] sm:$0xf]
  %v3845 = vld [vmem:[%s8 + $0x32c] sm:$0xf]
  %v3846 = vld [vmem:[%s8 + $0x330] sm:$0xf]
  %v3847 = vld [vmem:[%s8 + $0x334] sm:$0xf]
  %v3848 = vld [vmem:[%s8 + $0x338] sm:$0xf]
  %v3849 = vld [vmem:[%s8 + $0x33c] sm:$0xf]
  %v4058 = vunpack.c.l.b16 %v3642
  %v4059 = vunpack.c.l.b16 %v3643
  %v4060 = vunpack.c.l.b16 %v3644
  %v4061 = vunpack.c.l.b16 %v3645
  %v4062 = vunpack.c.l.b16 %v3646
  %v4063 = vunpack.c.l.b16 %v3647
  %v4064 = vunpack.c.l.b16 %v3648
  %v4065 = vunpack.c.l.b16 %v3649
  %v4066 = vunpack.c.l.b16 %v3650
  %v4067 = vunpack.c.l.b16 %v3651
  %v4068 = vunpack.c.l.b16 %v3652
  %v4069 = vunpack.c.l.b16 %v3653
  %v4070 = vunpack.c.l.b16 %v3654
  %v4071 = vunpack.c.l.b16 %v3655
  %v4072 = vunpack.c.l.b16 %v3656
  %v4073 = vunpack.c.l.b16 %v3657
  %v4074 = vunpack.c.l.b16 %v3658
  %v4075 = vunpack.c.l.b16 %v3659
  %v4076 = vunpack.c.l.b16 %v3660
  %v4077 = vunpack.c.l.b16 %v3661
  %v4078 = vunpack.c.l.b16 %v3662
  %v4079 = vunpack.c.l.b16 %v3663
  %v4080 = vunpack.c.l.b16 %v3664
  %v4081 = vunpack.c.l.b16 %v3665
  %v4082 = vunpack.c.l.b16 %v3666
  %v4083 = vunpack.c.l.b16 %v3667
  %v4084 = vunpack.c.l.b16 %v3668
  %v4085 = vunpack.c.l.b16 %v3669
  %v4086 = vunpack.c.l.b16 %v3670
  %v4087 = vunpack.c.l.b16 %v3671
  %v4088 = vunpack.c.l.b16 %v3672
  %v4089 = vunpack.c.l.b16 %v3673
  %v4090 = vunpack.c.l.b16 %v3674
  %v4091 = vunpack.c.l.b16 %v3675
  %v4092 = vunpack.c.l.b16 %v3676
  %v4093 = vunpack.c.l.b16 %v3677
  %v4094 = vunpack.c.l.b16 %v3678
  %v4095 = vunpack.c.l.b16 %v3679
  %v4096 = vunpack.c.l.b16 %v3680
  %v4097 = vunpack.c.l.b16 %v3681
  %v4098 = vunpack.c.l.b16 %v3682
  %v4099 = vunpack.c.l.b16 %v3683
  %v4100 = vunpack.c.l.b16 %v3684
  %v4101 = vunpack.c.l.b16 %v3685
  %v4102 = vunpack.c.l.b16 %v3686
  %v4103 = vunpack.c.l.b16 %v3687
  %v4104 = vunpack.c.l.b16 %v3688
  %v4105 = vunpack.c.l.b16 %v3689
  %v4106 = vunpack.c.l.b16 %v3690
  %v4107 = vunpack.c.l.b16 %v3691
  %v4108 = vunpack.c.l.b16 %v3692
  %v4109 = vunpack.c.l.b16 %v3693
  %v4110 = vunpack.c.l.b16 %v3694
  %v4111 = vunpack.c.l.b16 %v3695
  %v4112 = vunpack.c.l.b16 %v3696
  %v4113 = vunpack.c.l.b16 %v3697
  %v4114 = vunpack.c.l.b16 %v3698
  %v4115 = vunpack.c.l.b16 %v3699
  %v4116 = vunpack.c.l.b16 %v3700
  %v4117 = vunpack.c.l.b16 %v3701
  %v4118 = vunpack.c.l.b16 %v3702
  %v4119 = vunpack.c.l.b16 %v3703
  %v4120 = vunpack.c.l.b16 %v3704
  %v4121 = vunpack.c.l.b16 %v3705
  %v4122 = vunpack.c.l.b16 %v3706
  %v4123 = vunpack.c.l.b16 %v3707
  %v4124 = vunpack.c.l.b16 %v3708
  %v4125 = vunpack.c.l.b16 %v3709
  %v4126 = vunpack.c.l.b16 %v3710
  %v4127 = vunpack.c.l.b16 %v3711
  %v4128 = vunpack.c.l.b16 %v3712
  %v4129 = vunpack.c.l.b16 %v3713
  %v4130 = vunpack.c.l.b16 %v3714
  %v4131 = vunpack.c.l.b16 %v3715
  %v4132 = vunpack.c.l.b16 %v3716
  %v4133 = vunpack.c.l.b16 %v3717
  %v4134 = vunpack.c.l.b16 %v3718
  %v4135 = vunpack.c.l.b16 %v3719
  %v4136 = vunpack.c.l.b16 %v3720
  %v4137 = vunpack.c.l.b16 %v3721
  %v4138 = vunpack.c.l.b16 %v3722
  %v4139 = vunpack.c.l.b16 %v3723
  %v4140 = vunpack.c.l.b16 %v3724
  %v4141 = vunpack.c.l.b16 %v3725
  %v4142 = vunpack.c.l.b16 %v3726
  %v4143 = vunpack.c.l.b16 %v3727
  %v4144 = vunpack.c.l.b16 %v3728
  %v4145 = vunpack.c.l.b16 %v3729
  %v4146 = vunpack.c.l.b16 %v3730
  %v4147 = vunpack.c.l.b16 %v3731
  %v4148 = vunpack.c.l.b16 %v3732
  %v4149 = vunpack.c.l.b16 %v3733
  %v4150 = vunpack.c.l.b16 %v3734
  %v4151 = vunpack.c.l.b16 %v3735
  %v4152 = vunpack.c.l.b16 %v3736
  %v4153 = vunpack.c.l.b16 %v3737
  %v4154 = vunpack.c.l.b16 %v3738
  %v4155 = vunpack.c.l.b16 %v3739
  %v4156 = vunpack.c.l.b16 %v3740
  %v4157 = vunpack.c.l.b16 %v3741
  %v4158 = vunpack.c.l.b16 %v3742
  %v4159 = vunpack.c.l.b16 %v3743
  %v4160 = vunpack.c.l.b16 %v3744
  %v4161 = vunpack.c.l.b16 %v3745
  %v4162 = vunpack.c.l.b16 %v3746
  %v4163 = vunpack.c.l.b16 %v3747
  %v4164 = vunpack.c.l.b16 %v3748
  %v4165 = vunpack.c.l.b16 %v3749
  %v4166 = vunpack.c.l.b16 %v3750
  %v4167 = vunpack.c.l.b16 %v3751
  %v4168 = vunpack.c.l.b16 %v3752
  %v4169 = vunpack.c.l.b16 %v3753
  %v4170 = vunpack.c.l.b16 %v3754
  %v4171 = vunpack.c.l.b16 %v3755
  %v4172 = vunpack.c.l.b16 %v3756
  %v4173 = vunpack.c.l.b16 %v3757
  %v4174 = vunpack.c.l.b16 %v3758
  %v4175 = vunpack.c.l.b16 %v3759
  %v4176 = vunpack.c.l.b16 %v3760
  %v4177 = vunpack.c.l.b16 %v3761
  %v4178 = vunpack.c.l.b16 %v3762
  %v4179 = vunpack.c.l.b16 %v3763
  %v4180 = vunpack.c.l.b16 %v3764
  %v4181 = vunpack.c.l.b16 %v3765
  %v4182 = vunpack.c.l.b16 %v3766
  %v4183 = vunpack.c.l.b16 %v3767
  %v4184 = vunpack.c.l.b16 %v3768
  %v4185 = vunpack.c.l.b16 %v3769
  %v4186 = vunpack.c.l.b16 %v3770
  %v4187 = vunpack.c.l.b16 %v3771
  %v4188 = vunpack.c.l.b16 %v3772
  %v4189 = vunpack.c.l.b16 %v3773
  %v4190 = vunpack.c.l.b16 %v3774
  %v4191 = vunpack.c.l.b16 %v3775
  %v4192 = vunpack.c.l.b16 %v3776
  %v4193 = vunpack.c.l.b16 %v3777
  %v4194 = vunpack.c.l.b16 %v3778
  %v4195 = vunpack.c.l.b16 %v3779
  %v4196 = vunpack.c.l.b16 %v3780
  %v4197 = vunpack.c.l.b16 %v3781
  %v4198 = vunpack.c.l.b16 %v3782
  %v4199 = vunpack.c.l.b16 %v3783
  %v4200 = vunpack.c.l.b16 %v3784
  %v4201 = vunpack.c.l.b16 %v3785
  %v4202 = vunpack.c.l.b16 %v3786
  %v4203 = vunpack.c.l.b16 %v3787
  %v4204 = vunpack.c.l.b16 %v3788
  %v4205 = vunpack.c.l.b16 %v3789
  %v4206 = vunpack.c.l.b16 %v3790
  %v4207 = vunpack.c.l.b16 %v3791
  %v4208 = vunpack.c.l.b16 %v3792
  %v4209 = vunpack.c.l.b16 %v3793
  %v4210 = vunpack.c.l.b16 %v3794
  %v4211 = vunpack.c.l.b16 %v3795
  %v4212 = vunpack.c.l.b16 %v3796
  %v4213 = vunpack.c.l.b16 %v3797
  %v4214 = vunpack.c.l.b16 %v3798
  %v4215 = vunpack.c.l.b16 %v3799
  %v4216 = vunpack.c.l.b16 %v3800
  %v4217 = vunpack.c.l.b16 %v3801
  %v4218 = vunpack.c.l.b16 %v3802
  %v4219 = vunpack.c.l.b16 %v3803
  %v4220 = vunpack.c.l.b16 %v3804
  %v4221 = vunpack.c.l.b16 %v3805
  %v4222 = vunpack.c.l.b16 %v3806
  %v4223 = vunpack.c.l.b16 %v3807
  %v4224 = vunpack.c.l.b16 %v3808
  %v4225 = vunpack.c.l.b16 %v3809
  %v4226 = vunpack.c.l.b16 %v3810
  %v4227 = vunpack.c.l.b16 %v3811
  %v4228 = vunpack.c.l.b16 %v3812
  %v4229 = vunpack.c.l.b16 %v3813
  %v4230 = vunpack.c.l.b16 %v3814
  %v4231 = vunpack.c.l.b16 %v3815
  %v4232 = vunpack.c.l.b16 %v3816
  %v4233 = vunpack.c.l.b16 %v3817
  %v4234 = vunpack.c.l.b16 %v3818
  %v4235 = vunpack.c.l.b16 %v3819
  %v4236 = vunpack.c.l.b16 %v3820
  %v4237 = vunpack.c.l.b16 %v3821
  %v4238 = vunpack.c.l.b16 %v3822
  %v4239 = vunpack.c.l.b16 %v3823
  %v4240 = vunpack.c.l.b16 %v3824
  %v4241 = vunpack.c.l.b16 %v3825
  %v4242 = vunpack.c.l.b16 %v3826
  %v4243 = vunpack.c.l.b16 %v3827
  %v4244 = vunpack.c.l.b16 %v3828
  %v4245 = vunpack.c.l.b16 %v3829
  %v4246 = vunpack.c.l.b16 %v3830
  %v4247 = vunpack.c.l.b16 %v3831
  %v4248 = vunpack.c.l.b16 %v3832
  %v4249 = vunpack.c.l.b16 %v3833
  %v4250 = vunpack.c.l.b16 %v3834
  %v4251 = vunpack.c.l.b16 %v3835
  %v4252 = vunpack.c.l.b16 %v3836
  %v4253 = vunpack.c.l.b16 %v3837
  %v4254 = vunpack.c.l.b16 %v3838
  %v4255 = vunpack.c.l.b16 %v3839
  %v4256 = vunpack.c.l.b16 %v3840
  %v4257 = vunpack.c.l.b16 %v3841
  %v4258 = vunpack.c.l.b16 %v3842
  %v4259 = vunpack.c.l.b16 %v3843
  %v4260 = vunpack.c.l.b16 %v3844
  %v4261 = vunpack.c.l.b16 %v3845
  %v4262 = vunpack.c.l.b16 %v3846
  %v4263 = vunpack.c.l.b16 %v3847
  %v4264 = vunpack.c.l.b16 %v3848
  %v4265 = vunpack.c.l.b16 %v3849
  %v4266 = vpack.c.b16 %v4059, %v4058
  %v4267 = vpack.c.b16 %v4061, %v4060
  %v4268 = vpack.c.b16 %v4063, %v4062
  %v4269 = vpack.c.b16 %v4065, %v4064
  %v4270 = vpack.c.b16 %v4067, %v4066
  %v4271 = vpack.c.b16 %v4069, %v4068
  %v4272 = vpack.c.b16 %v4071, %v4070
  %v4273 = vpack.c.b16 %v4073, %v4072
  %v4274 = vpack.c.b16 %v4075, %v4074
  %v4275 = vpack.c.b16 %v4077, %v4076
  %v4276 = vpack.c.b16 %v4079, %v4078
  %v4277 = vpack.c.b16 %v4081, %v4080
  %v4278 = vpack.c.b16 %v4083, %v4082
  %v4279 = vpack.c.b16 %v4085, %v4084
  %v4280 = vpack.c.b16 %v4087, %v4086
  %v4281 = vpack.c.b16 %v4089, %v4088
  %v4282 = vpack.c.b16 %v4091, %v4090
  %v4283 = vpack.c.b16 %v4093, %v4092
  %v4284 = vpack.c.b16 %v4095, %v4094
  %v4285 = vpack.c.b16 %v4097, %v4096
  %v4286 = vpack.c.b16 %v4099, %v4098
  %v4287 = vpack.c.b16 %v4101, %v4100
  %v4288 = vpack.c.b16 %v4103, %v4102
  %v4289 = vpack.c.b16 %v4105, %v4104
  %v4290 = vpack.c.b16 %v4107, %v4106
  %v4291 = vpack.c.b16 %v4109, %v4108
  %v4292 = vpack.c.b16 %v4111, %v4110
  %v4293 = vpack.c.b16 %v4113, %v4112
  %v4294 = vpack.c.b16 %v4115, %v4114
  %v4295 = vpack.c.b16 %v4117, %v4116
  %v4296 = vpack.c.b16 %v4119, %v4118
  %v4297 = vpack.c.b16 %v4121, %v4120
  %v4298 = vpack.c.b16 %v4123, %v4122
  %v4299 = vpack.c.b16 %v4125, %v4124
  %v4300 = vpack.c.b16 %v4127, %v4126
  %v4301 = vpack.c.b16 %v4129, %v4128
  %v4302 = vpack.c.b16 %v4131, %v4130
  %v4303 = vpack.c.b16 %v4133, %v4132
  %v4304 = vpack.c.b16 %v4135, %v4134
  %v4305 = vpack.c.b16 %v4137, %v4136
  %v4306 = vpack.c.b16 %v4139, %v4138
  %v4307 = vpack.c.b16 %v4141, %v4140
  %v4308 = vpack.c.b16 %v4143, %v4142
  %v4309 = vpack.c.b16 %v4145, %v4144
  %v4310 = vpack.c.b16 %v4147, %v4146
  %v4311 = vpack.c.b16 %v4149, %v4148
  %v4312 = vpack.c.b16 %v4151, %v4150
  %v4313 = vpack.c.b16 %v4153, %v4152
  %v4314 = vpack.c.b16 %v4155, %v4154
  %v4315 = vpack.c.b16 %v4157, %v4156
  %v4316 = vpack.c.b16 %v4159, %v4158
  %v4317 = vpack.c.b16 %v4161, %v4160
  %v4318 = vpack.c.b16 %v4163, %v4162
  %v4319 = vpack.c.b16 %v4165, %v4164
  %v4320 = vpack.c.b16 %v4167, %v4166
  %v4321 = vpack.c.b16 %v4169, %v4168
  %v4322 = vpack.c.b16 %v4171, %v4170
  %v4323 = vpack.c.b16 %v4173, %v4172
  %v4324 = vpack.c.b16 %v4175, %v4174
  %v4325 = vpack.c.b16 %v4177, %v4176
  %v4326 = vpack.c.b16 %v4179, %v4178
  %v4327 = vpack.c.b16 %v4181, %v4180
  %v4328 = vpack.c.b16 %v4183, %v4182
  %v4329 = vpack.c.b16 %v4185, %v4184
  %v4330 = vpack.c.b16 %v4187, %v4186
  %v4331 = vpack.c.b16 %v4189, %v4188
  %v4332 = vpack.c.b16 %v4191, %v4190
  %v4333 = vpack.c.b16 %v4193, %v4192
  %v4334 = vpack.c.b16 %v4195, %v4194
  %v4335 = vpack.c.b16 %v4197, %v4196
  %v4336 = vpack.c.b16 %v4199, %v4198
  %v4337 = vpack.c.b16 %v4201, %v4200
  %v4338 = vpack.c.b16 %v4203, %v4202
  %v4339 = vpack.c.b16 %v4205, %v4204
  %v4340 = vpack.c.b16 %v4207, %v4206
  %v4341 = vpack.c.b16 %v4209, %v4208
  %v4342 = vpack.c.b16 %v4211, %v4210
  %v4343 = vpack.c.b16 %v4213, %v4212
  %v4344 = vpack.c.b16 %v4215, %v4214
  %v4345 = vpack.c.b16 %v4217, %v4216
  %v4346 = vpack.c.b16 %v4219, %v4218
  %v4347 = vpack.c.b16 %v4221, %v4220
  %v4348 = vpack.c.b16 %v4223, %v4222
  %v4349 = vpack.c.b16 %v4225, %v4224
  %v4350 = vpack.c.b16 %v4227, %v4226
  %v4351 = vpack.c.b16 %v4229, %v4228
  %v4352 = vpack.c.b16 %v4231, %v4230
  %v4353 = vpack.c.b16 %v4233, %v4232
  %v4354 = vpack.c.b16 %v4235, %v4234
  %v4355 = vpack.c.b16 %v4237, %v4236
  %v4356 = vpack.c.b16 %v4239, %v4238
  %v4357 = vpack.c.b16 %v4241, %v4240
  %v4358 = vpack.c.b16 %v4243, %v4242
  %v4359 = vpack.c.b16 %v4245, %v4244
  %v4360 = vpack.c.b16 %v4247, %v4246
  %v4361 = vpack.c.b16 %v4249, %v4248
  %v4362 = vpack.c.b16 %v4251, %v4250
  %v4363 = vpack.c.b16 %v4253, %v4252
  %v4364 = vpack.c.b16 %v4255, %v4254
  %v4365 = vpack.c.b16 %v4257, %v4256
  %v4366 = vpack.c.b16 %v4259, %v4258
  %v4367 = vpack.c.b16 %v4261, %v4260
  %v4368 = vpack.c.b16 %v4263, %v4262
  %v4369 = vpack.c.b16 %v4265, %v4264
  %4474 = vmatprep.subr.bf16.mxu0 0
  %4475 = vmatpush1.bf16.msra.mxu0 %v4266
  %4476 = vmatprep.subr.bf16.mxu0 0
  %4477 = vmatpush1.bf16.msra.mxu0 %v4267
  %4478 = vmatprep.subr.bf16.mxu0 0
  %4479 = vmatpush1.bf16.msra.mxu0 %v4268
  %4480 = vmatprep.subr.bf16.mxu0 0
  %4481 = vmatpush1.bf16.msra.mxu0 %v4269
  %4482 = vmatprep.subr.bf16.mxu0 0
  %4483 = vmatpush1.bf16.msra.mxu0 %v4270
  %4484 = vmatprep.subr.bf16.mxu0 0
  %4485 = vmatpush1.bf16.msra.mxu0 %v4271
  %4486 = vmatprep.subr.bf16.mxu0 0
  %4487 = vmatpush1.bf16.msra.mxu0 %v4272
  %4488 = vmatprep.subr.bf16.mxu0 0
  %4489 = vmatpush1.bf16.msra.mxu0 %v4273
  %4490 = vmatprep.subr.bf16.mxu0 0
  %4491 = vmatpush1.bf16.msra.mxu0 %v4274
  %4492 = vmatprep.subr.bf16.mxu0 0
  %4493 = vmatpush1.bf16.msra.mxu0 %v4275
  %4494 = vmatprep.subr.bf16.mxu0 0
  %4495 = vmatpush1.bf16.msra.mxu0 %v4276
  %4496 = vmatprep.subr.bf16.mxu0 0
  %4497 = vmatpush1.bf16.msra.mxu0 %v4277
  %4498 = vmatprep.subr.bf16.mxu0 0
  %4499 = vmatpush1.bf16.msra.mxu0 %v4278
  %4500 = vmatprep.subr.bf16.mxu0 0
  %4501 = vmatpush1.bf16.msra.mxu0 %v4279
  %4502 = vmatprep.subr.bf16.mxu0 0
  %4503 = vmatpush1.bf16.msra.mxu0 %v4280
  %4504 = vmatprep.subr.bf16.mxu0 0
  %4505 = vmatpush1.bf16.msra.mxu0 %v4281
  %4506 = vmatprep.mubr.bf16.mxu0 %v3630
  %4507 = vmatmul.mubr.bf16.gmra.mrb[0].mxu0 %v3629
  %v4508 = vpop.f32.mrb[0].mxu0
  %v4509 = vadd.f32 0.0, %v4508
  %v4510 = vpop.f32.mrb[0].mxu0
  %v4511 = vpop.f32.mrb[0].mxu0
  %v4512 = vpop.f32.mrb[0].mxu0
  %4513 = vdwg.mxu0
  %4514 = vmatprep.subr.bf16.mxu0 0
  %4515 = vmatpush1.bf16.msra.mxu0 %v4282
  %4516 = vmatprep.subr.bf16.mxu0 0
  %4517 = vmatpush1.bf16.msra.mxu0 %v4283
  %4518 = vmatprep.subr.bf16.mxu0 0
  %4519 = vmatpush1.bf16.msra.mxu0 %v4284
  %4520 = vmatprep.subr.bf16.mxu0 0
  %4521 = vmatpush1.bf16.msra.mxu0 %v4285
  %4522 = vmatprep.subr.bf16.mxu0 0
  %4523 = vmatpush1.bf16.msra.mxu0 %v4286
  %4524 = vmatprep.subr.bf16.mxu0 0
  %4525 = vmatpush1.bf16.msra.mxu0 %v4287
  %4526 = vmatprep.subr.bf16.mxu0 0
  %4527 = vmatpush1.bf16.msra.mxu0 %v4288
  %4528 = vmatprep.subr.bf16.mxu0 0
  %4529 = vmatpush1.bf16.msra.mxu0 %v4289
  %4530 = vmatprep.subr.bf16.mxu0 0
  %4531 = vmatpush1.bf16.msra.mxu0 %v4290
  %4532 = vmatprep.subr.bf16.mxu0 0
  %4533 = vmatpush1.bf16.msra.mxu0 %v4291
  %4534 = vmatprep.subr.bf16.mxu0 0
  %4535 = vmatpush1.bf16.msra.mxu0 %v4292
  %4536 = vmatprep.subr.bf16.mxu0 0
  %4537 = vmatpush1.bf16.msra.mxu0 %v4293
  %4538 = vmatprep.subr.bf16.mxu0 0
  %4539 = vmatpush1.bf16.msra.mxu0 %v4294
  %4540 = vmatprep.subr.bf16.mxu0 0
  %4541 = vmatpush1.bf16.msra.mxu0 %v4295
  %4542 = vmatprep.subr.bf16.mxu0 0
  %4543 = vmatpush1.bf16.msra.mxu0 %v4296
  %4544 = vmatprep.subr.bf16.mxu0 0
  %4545 = vmatpush1.bf16.msra.mxu0 %v4297
  %4546 = vmatprep.mubr.bf16.mxu0 %v3632
  %4547 = vmatmul.mubr.bf16.gmra.mrb[0].mxu0 %v3631
  %v4548 = vpop.f32.mrb[0].mxu0
  %v4549 = vadd.f32 %v4509, %v4548
  %v4550 = vpop.f32.mrb[0].mxu0
  %v4551 = vpop.f32.mrb[0].mxu0
  %v4552 = vpop.f32.mrb[0].mxu0
  %4553 = vdwg.mxu0
  %4554 = vmatprep.subr.bf16.mxu0 0
  %4555 = vmatpush1.bf16.msra.mxu0 %v4298
  %4556 = vmatprep.subr.bf16.mxu0 0
  %4557 = vmatpush1.bf16.msra.mxu0 %v4299
  %4558 = vmatprep.subr.bf16.mxu0 0
  %4559 = vmatpush1.bf16.msra.mxu0 %v4300
  %4560 = vmatprep.subr.bf16.mxu0 0
  %4561 = vmatpush1.bf16.msra.mxu0 %v4301
  %4562 = vmatprep.subr.bf16.mxu0 0
  %4563 = vmatpush1.bf16.msra.mxu0 %v4302
  %4564 = vmatprep.subr.bf16.mxu0 0
  %4565 = vmatpush1.bf16.msra.mxu0 %v4303
  %4566 = vmatprep.subr.bf16.mxu0 0
  %4567 = vmatpush1.bf16.msra.mxu0 %v4304
  %4568 = vmatprep.subr.bf16.mxu0 0
  %4569 = vmatpush1.bf16.msra.mxu0 %v4305
  %4570 = vmatprep.subr.bf16.mxu0 0
  %4571 = vmatpush1.bf16.msra.mxu0 %v4306
  %4572 = vmatprep.subr.bf16.mxu0 0
  %4573 = vmatpush1.bf16.msra.mxu0 %v4307
  %4574 = vmatprep.subr.bf16.mxu0 0
  %4575 = vmatpush1.bf16.msra.mxu0 %v4308
  %4576 = vmatprep.subr.bf16.mxu0 0
  %4577 = vmatpush1.bf16.msra.mxu0 %v4309
  %4578 = vmatprep.subr.bf16.mxu0 0
  %4579 = vmatpush1.bf16.msra.mxu0 %v4310
  %4580 = vmatprep.subr.bf16.mxu0 0
  %4581 = vmatpush1.bf16.msra.mxu0 %v4311
  %4582 = vmatprep.subr.bf16.mxu0 0
  %4583 = vmatpush1.bf16.msra.mxu0 %v4312
  %4584 = vmatprep.subr.bf16.mxu0 0
  %4585 = vmatpush1.bf16.msra.mxu0 %v4313
  %4586 = vmatprep.mubr.bf16.mxu0 %v3634
  %4587 = vmatmul.mubr.bf16.gmra.mrb[0].mxu0 %v3633
  %v4588 = vpop.f32.mrb[0].mxu0
  %v4589 = vadd.f32 %v4549, %v4588
  %v4590 = vpop.f32.mrb[0].mxu0
  %v4591 = vpop.f32.mrb[0].mxu0
  %v4592 = vpop.f32.mrb[0].mxu0
  %4593 = vdwg.mxu0
  %4594 = vmatprep.subr.bf16.mxu0 0
  %4595 = vmatpush1.bf16.msra.mxu0 %v4314
  %4596 = vmatprep.subr.bf16.mxu0 0
  %4597 = vmatpush1.bf16.msra.mxu0 %v4315
  %4598 = vmatprep.subr.bf16.mxu0 0
  %4599 = vmatpush1.bf16.msra.mxu0 %v4316
  %4600 = vmatprep.subr.bf16.mxu0 0
  %4601 = vmatpush1.bf16.msra.mxu0 %v4317
  %4602 = vmatprep.subr.bf16.mxu0 0
  %4603 = vmatpush1.bf16.msra.mxu0 %v4318
  %4604 = vmatprep.subr.bf16.mxu0 0
  %4605 = vmatpush1.bf16.msra.mxu0 %v4319
  %4606 = vmatprep.subr.bf16.mxu0 0
  %4607 = vmatpush1.bf16.msra.mxu0 %v4320
  %4608 = vmatprep.subr.bf16.mxu0 0
  %4609 = vmatpush1.bf16.msra.mxu0 %v4321
  %4610 = vmatprep.subr.bf16.mxu0 0
  %4611 = vmatpush1.bf16.msra.mxu0 %v4322
  %4612 = vmatprep.subr.bf16.mxu0 0
  %4613 = vmatpush1.bf16.msra.mxu0 %v4323
  %4614 = vmatprep.subr.bf16.mxu0 0
  %4615 = vmatpush1.bf16.msra.mxu0 %v4324
  %4616 = vmatprep.subr.bf16.mxu0 0
  %4617 = vmatpush1.bf16.msra.mxu0 %v4325
  %4618 = vmatprep.subr.bf16.mxu0 0
  %4619 = vmatpush1.bf16.msra.mxu0 %v4326
  %4620 = vmatprep.subr.bf16.mxu0 0
  %4621 = vmatpush1.bf16.msra.mxu0 %v4327
  %4622 = vmatprep.subr.bf16.mxu0 0
  %4623 = vmatpush1.bf16.msra.mxu0 %v4328
  %4624 = vmatprep.subr.bf16.mxu0 0
  %4625 = vmatpush1.bf16.msra.mxu0 %v4329
  %4626 = vmatprep.mubr.bf16.mxu0 %v3636
  %4627 = vmatmul.mubr.bf16.gmra.mrb[0].mxu0 %v3635
  %v4628 = vpop.f32.mrb[0].mxu0
  %v4629 = vadd.f32 %v4589, %v4628
  %v4630 = vpop.f32.mrb[0].mxu0
  %v4631 = vpop.f32.mrb[0].mxu0
  %v4632 = vpop.f32.mrb[0].mxu0
  %4633 = vdwg.mxu0
  %4634 = vmatprep.subr.bf16.mxu0 0
  %4635 = vmatpush1.bf16.msra.mxu0 %v4330
  %4636 = vmatprep.subr.bf16.mxu0 0
  %4637 = vmatpush1.bf16.msra.mxu0 %v4331
  %4638 = vmatprep.subr.bf16.mxu0 0
  %4639 = vmatpush1.bf16.msra.mxu0 %v4332
  %4640 = vmatprep.subr.bf16.mxu0 0
  %4641 = vmatpush1.bf16.msra.mxu0 %v4333
  %4642 = vmatprep.subr.bf16.mxu0 0
  %4643 = vmatpush1.bf16.msra.mxu0 %v4334
  %4644 = vmatprep.subr.bf16.mxu0 0
  %4645 = vmatpush1.bf16.msra.mxu0 %v4335
  %4646 = vmatprep.subr.bf16.mxu0 0
  %4647 = vmatpush1.bf16.msra.mxu0 %v4336
  %4648 = vmatprep.subr.bf16.mxu0 0
  %4649 = vmatpush1.bf16.msra.mxu0 %v4337
  %4650 = vmatprep.subr.bf16.mxu0 0
  %4651 = vmatpush1.bf16.msra.mxu0 %v4338
  %4652 = vmatprep.subr.bf16.mxu0 0
  %4653 = vmatpush1.bf16.msra.mxu0 %v4339
  %4654 = vmatprep.subr.bf16.mxu0 0
  %4655 = vmatpush1.bf16.msra.mxu0 %v4340
  %4656 = vmatprep.subr.bf16.mxu0 0
  %4657 = vmatpush1.bf16.msra.mxu0 %v4341
  %4658 = vmatprep.subr.bf16.mxu0 0
  %4659 = vmatpush1.bf16.msra.mxu0 %v4342
  %4660 = vmatprep.subr.bf16.mxu0 0
  %4661 = vmatpush1.bf16.msra.mxu0 %v4343
  %4662 = vmatprep.subr.bf16.mxu0 0
  %4663 = vmatpush1.bf16.msra.mxu0 %v4344
  %4664 = vmatprep.subr.bf16.mxu0 0
  %4665 = vmatpush1.bf16.msra.mxu0 %v4345
  %4666 = vmatprep.mubr.bf16.mxu0 %v3638
  %4667 = vmatmul.mubr.bf16.gmra.mrb[0].mxu0 %v3637
  %v4668 = vpop.f32.mrb[0].mxu0
  %v4669 = vadd.f32 %v4629, %v4668
  %v4670 = vpop.f32.mrb[0].mxu0
  %v4671 = vpop.f32.mrb[0].mxu0
  %v4672 = vpop.f32.mrb[0].mxu0
  %4673 = vdwg.mxu0
  %4674 = vmatprep.subr.bf16.mxu0 0
  %4675 = vmatpush1.bf16.msra.mxu0 %v4346
  %4676 = vmatprep.subr.bf16.mxu0 0
  %4677 = vmatpush1.bf16.msra.mxu0 %v4347
  %4678 = vmatprep.subr.bf16.mxu0 0
  %4679 = vmatpush1.bf16.msra.mxu0 %v4348
  %4680 = vmatprep.subr.bf16.mxu0 0
  %4681 = vmatpush1.bf16.msra.mxu0 %v4349
  %4682 = vmatprep.subr.bf16.mxu0 0
  %4683 = vmatpush1.bf16.msra.mxu0 %v4350
  %4684 = vmatprep.subr.bf16.mxu0 0
  %4685 = vmatpush1.bf16.msra.mxu0 %v4351
  %4686 = vmatprep.subr.bf16.mxu0 0
  %4687 = vmatpush1.bf16.msra.mxu0 %v4352
  %4688 = vmatprep.subr.bf16.mxu0 0
  %4689 = vmatpush1.bf16.msra.mxu0 %v4353
  %4690 = vmatprep.subr.bf16.mxu0 0
  %4691 = vmatpush1.bf16.msra.mxu0 %v4354
  %4692 = vmatprep.subr.bf16.mxu0 0
  %4693 = vmatpush1.bf16.msra.mxu0 %v4355
  %4694 = vmatprep.subr.bf16.mxu0 0
  %4695 = vmatpush1.bf16.msra.mxu0 %v4356
  %4696 = vmatprep.subr.bf16.mxu0 0
  %4697 = vmatpush1.bf16.msra.mxu0 %v4357
  %4698 = vmatprep.subr.bf16.mxu0 0
  %4699 = vmatpush1.bf16.msra.mxu0 %v4358
  %4700 = vmatprep.subr.bf16.mxu0 0
  %4701 = vmatpush1.bf16.msra.mxu0 %v4359
  %4702 = vmatprep.subr.bf16.mxu0 0
  %4703 = vmatpush1.bf16.msra.mxu0 %v4360
  %4704 = vmatprep.subr.bf16.mxu0 0
  %4705 = vmatpush1.bf16.msra.mxu0 %v4361
  %4706 = vmatprep.mubr.bf16.mxu0 %v3640
  %4707 = vmatmul.mubr.bf16.gmra.mrb[0].mxu0 %v3639
  %v4708 = vpop.f32.mrb[0].mxu0
  %v4709 = vadd.f32 %v4669, %v4708
  %v4710 = vpop.f32.mrb[0].mxu0
  %v4711 = vpop.f32.mrb[0].mxu0
  %v4712 = vpop.f32.mrb[0].mxu0
  %4713 = vdwg.mxu0
  %4714 = vmatprep.subr.bf16.mxu0 0
  %4715 = vmatpush1.bf16.msra.mxu0 %v4362
  %4716 = vmatprep.subr.bf16.mxu0 0
  %4717 = vmatpush1.bf16.msra.mxu0 %v4363
  %4718 = vmatprep.subr.bf16.mxu0 0
  %4719 = vmatpush1.bf16.msra.mxu0 %v4364
  %4720 = vmatprep.subr.bf16.mxu0 0
  %4721 = vmatpush1.bf16.msra.mxu0 %v4365
  %4722 = vmatprep.subr.bf16.mxu0 0
  %4723 = vmatpush1.bf16.msra.mxu0 %v4366
  %4724 = vmatprep.subr.bf16.mxu0 0
  %4725 = vmatpush1.bf16.msra.mxu0 %v4367
  %4726 = vmatprep.subr.bf16.mxu0 0
  %4727 = vmatpush1.bf16.msra.mxu0 %v4368
  %4728 = vmatprep.subr.bf16.mxu0 0
  %4729 = vmatpush1.bf16.msra.mxu0 %v4369
  %4730 = vmatprep.subr.bf16.mxu0 0
  %4731 = vmatpush1.bf16.msra.mxu0 0
  %4732 = vmatprep.subr.bf16.mxu0 0
  %4733 = vmatpush1.bf16.msra.mxu0 0
  %4734 = vmatprep.subr.bf16.mxu0 0
  %4735 = vmatpush1.bf16.msra.mxu0 0
  %4736 = vmatprep.subr.bf16.mxu0 0
  %4737 = vmatpush1.bf16.msra.mxu0 0
  %4738 = vmatprep.subr.bf16.mxu0 0
  %4739 = vmatpush1.bf16.msra.mxu0 0
  %4740 = vmatprep.subr.bf16.mxu0 0
  %4741 = vmatpush1.bf16.msra.mxu0 0
  %4742 = vmatprep.subr.bf16.mxu0 0
  %4743 = vmatpush1.bf16.msra.mxu0 0
  %4744 = vmatprep.subr.bf16.mxu0 0
  %4745 = vmatpush1.bf16.msra.mxu0 0
  %4746 = vmatprep.mubr.bf16.mxu0 0
  %4747 = vmatmul.mubr.bf16.gmra.mrb[0].mxu0 %v3641
  %v4748 = vpop.f32.mrb[0].mxu0
  %v4749 = vadd.f32 %v4709, %v4748
  %v4750 = vpop.f32.mrb[0].mxu0
  %v4751 = vpop.f32.mrb[0].mxu0
  %v4752 = vpop.f32.mrb[0].mxu0
  %4753 = vdwg.mxu0
  %v4754 = vadd.f32 %v1855, 1e-08
  %v4755 = vrcp.pop %v4754
  %v4756 = vmul.f32 %v4749, %v4755
  %v4757 = vpack.c.bf16 %v4756, %v4756
  %v4758 = vld [vmem:[%s9] sm:$0xf]
  %v4759 = vld [vmem:[%s9 + $0x4] sm:$0xf]
  %v4760 = vld [vmem:[%s9 + $0x8] sm:$0xf]
  %v4761 = vld [vmem:[%s9 + $0xc] sm:$0xf]
  %v4762 = vld [vmem:[%s9 + $0x10] sm:$0xf]
  %v4763 = vld [vmem:[%s9 + $0x14] sm:$0xf]
  %v4764 = vld [vmem:[%s9 + $0x18] sm:$0xf]
  %v4765 = vld [vmem:[%s9 + $0x1c] sm:$0xf]
  %v4766 = vld [vmem:[%s10] sm:$0x1]
  %v4768 = vlaneseq
  %v4769 = vshrl.u32 %v4768, 7
  %v4770 = vsub.s32 0, %v4769
  %v4771 = vrot.slane %v4766, %v4770
  %v4781 = vunpack.c.l.b16 %v4758
  %v4782 = vunpack.c.l.b16 %v4759
  %v4783 = vunpack.c.l.b16 %v4760
  %v4784 = vunpack.c.l.b16 %v4761
  %v4785 = vunpack.c.l.b16 %v4762
  %v4786 = vunpack.c.l.b16 %v4763
  %v4787 = vunpack.c.l.b16 %v4764
  %v4788 = vunpack.c.l.b16 %v4765
  %v4789 = vpack.c.b16 %v4782, %v4781
  %v4790 = vpack.c.b16 %v4784, %v4783
  %v4791 = vpack.c.b16 %v4786, %v4785
  %v4792 = vpack.c.b16 %v4788, %v4787
  %vm4797 = vcmask 523264
  %v4799 = vsel %vm4797, %v4757, 0
  %4801 = vmatprep.subr.bf16.mxu0 0
  %4802 = vmatpush1.bf16.msra.mxu0 %v4789
  %4803 = vmatprep.subr.bf16.mxu0 0
  %4804 = vmatpush1.bf16.msra.mxu0 %v4790
  %4805 = vmatprep.subr.bf16.mxu0 0
  %4806 = vmatpush1.bf16.msra.mxu0 %v4791
  %4807 = vmatprep.subr.bf16.mxu0 0
  %4808 = vmatpush1.bf16.msra.mxu0 %v4792
  %4809 = vmatprep.subr.bf16.mxu0 0
  %4810 = vmatpush1.bf16.msra.mxu0 0
  %4811 = vmatprep.subr.bf16.mxu0 0
  %4812 = vmatpush1.bf16.msra.mxu0 0
  %4813 = vmatprep.subr.bf16.mxu0 0
  %4814 = vmatpush1.bf16.msra.mxu0 0
  %4815 = vmatprep.subr.bf16.mxu0 0
  %4816 = vmatpush1.bf16.msra.mxu0 0
  %4817 = vmatprep.subr.bf16.mxu0 0
  %4818 = vmatpush1.bf16.msra.mxu0 0
  %4819 = vmatprep.subr.bf16.mxu0 0
  %4820 = vmatpush1.bf16.msra.mxu0 0
  %4821 = vmatprep.subr.bf16.mxu0 0
  %4822 = vmatpush1.bf16.msra.mxu0 0
  %4823 = vmatprep.subr.bf16.mxu0 0
  %4824 = vmatpush1.bf16.msra.mxu0 0
  %4825 = vmatprep.subr.bf16.mxu0 0
  %4826 = vmatpush1.bf16.msra.mxu0 0
  %4827 = vmatprep.subr.bf16.mxu0 0
  %4828 = vmatpush1.bf16.msra.mxu0 0
  %4829 = vmatprep.subr.bf16.mxu0 0
  %4830 = vmatpush1.bf16.msra.mxu0 0
  %4831 = vmatprep.subr.bf16.mxu0 0
  %4832 = vmatpush1.bf16.msra.mxu0 0
  %4833 = vmatprep.mubr.bf16.mxu0 0
  %4834 = vmatmul.mubr.bf16.gmra.mrb[0].mxu0 %v4799
  %v4835 = vpop.f32.mrb[0].mxu0
  %v4836 = vadd.f32 %v4771, %v4835
  %v4837 = vpop.f32.mrb[0].mxu0
  %v4838 = vpop.f32.mrb[0].mxu0
  %v4839 = vpop.f32.mrb[0].mxu0
  %4840 = vdwg.mxu0
  %v4841 = vmul.f32 %v4836, 0.5
  %v4842 = vmul.f32 %v4836, 0.70710677
  %vm4843 = vcmp.ge.f32.partialorder %v4842, 0.0
  %v4844 = vsel %vm4843, 1.0, -1.0
  %v4845 = vand.u32 2147483647, %v4842
  %v4846 = vmul.f32 %v4845, 0.3275911
  %v4847 = vadd.f32 %v4846, 1.0
  %v4848 = vrcp.pop %v4847
  %v4849 = vmul.f32 1.0, %v4848
  %v4850 = vmul.f32 %v4849, 1.0614054
  %v4851 = vadd.f32 %v4850, -1.4531521
  %v4852 = vmul.f32 %v4851, %v4849
  %v4853 = vadd.f32 %v4852, 1.4214138
  %v4854 = vmul.f32 %v4853, %v4849
  %v4855 = vadd.f32 %v4854, -0.28449672
  %v4856 = vmul.f32 %v4855, %v4849
  %v4857 = vadd.f32 %v4856, 0.2548296
  %v4858 = vmul.f32 %v4857, %v4849
  %v4859 = vsub.f32 0.0, %v4845
  %v4860 = vmul.f32 %v4859, %v4845
  %v4861 = vmul.f32 %v4860, 1.442695
  %v4862 = vpow.pop %v4861
  %v4863 = vmul.f32 %v4858, %v4862
  %v4864 = vsub.f32 1.0, %v4863
  %v4865 = vmul.f32 %v4844, %v4864
  %v4866 = vadd.f32 %v4865, 1.0
  %v4867 = vmul.f32 %v4841, %v4866
  %v4868 = vpack.c.bf16 %v4867, %v4867
  %v4869 = vld [vmem:[%s11] sm:$0xf]
  %v4870 = vld [vmem:[%s11 + $0x4] sm:$0xf]
  %v4871 = vld [vmem:[%s11 + $0x8] sm:$0xf]
  %v4872 = vld [vmem:[%s11 + $0xc] sm:$0xf]
  %v4873 = vld [vmem:[%s11 + $0x10] sm:$0xf]
  %v4874 = vld [vmem:[%s11 + $0x14] sm:$0xf]
  %v4875 = vld [vmem:[%s11 + $0x18] sm:$0xf]
  %v4876 = vld [vmem:[%s11 + $0x1c] sm:$0xf]
  %v4877 = vld [vmem:[%s11 + $0x20] sm:$0xf]
  %v4878 = vld [vmem:[%s11 + $0x24] sm:$0xf]
  %v4879 = vld [vmem:[%s11 + $0x28] sm:$0xf]
  %v4880 = vld [vmem:[%s11 + $0x2c] sm:$0xf]
  %v4881 = vld [vmem:[%s11 + $0x30] sm:$0xf]
  %v4882 = vld [vmem:[%s11 + $0x34] sm:$0xf]
  %v4883 = vld [vmem:[%s11 + $0x38] sm:$0xf]
  %v4884 = vld [vmem:[%s11 + $0x3c] sm:$0xf]
  %v4885 = vld [vmem:[%s12] sm:$0x1]
  %v4887 = vlaneseq
  %v4888 = vshrl.u32 %v4887, 7
  %v4889 = vsub.s32 0, %v4888
  %v4890 = vrot.slane %v4885, %v4889
  %v4908 = vunpack.c.l.b16 %v4869
  %v4909 = vunpack.c.l.b16 %v4870
  %v4910 = vunpack.c.l.b16 %v4871
  %v4911 = vunpack.c.l.b16 %v4872
  %v4912 = vunpack.c.l.b16 %v4873
  %v4913 = vunpack.c.l.b16 %v4874
  %v4914 = vunpack.c.l.b16 %v4875
  %v4915 = vunpack.c.l.b16 %v4876
  %v4916 = vunpack.c.l.b16 %v4877
  %v4917 = vunpack.c.l.b16 %v4878
  %v4918 = vunpack.c.l.b16 %v4879
  %v4919 = vunpack.c.l.b16 %v4880
  %v4920 = vunpack.c.l.b16 %v4881
  %v4921 = vunpack.c.l.b16 %v4882
  %v4922 = vunpack.c.l.b16 %v4883
  %v4923 = vunpack.c.l.b16 %v4884
  %v4924 = vpack.c.b16 %v4909, %v4908
  %v4925 = vpack.c.b16 %v4911, %v4910
  %v4926 = vpack.c.b16 %v4913, %v4912
  %v4927 = vpack.c.b16 %v4915, %v4914
  %v4928 = vpack.c.b16 %v4917, %v4916
  %v4929 = vpack.c.b16 %v4919, %v4918
  %v4930 = vpack.c.b16 %v4921, %v4920
  %v4931 = vpack.c.b16 %v4923, %v4922
  %4940 = vmatprep.subr.bf16.mxu0 0
  %4941 = vmatpush1.bf16.msra.mxu0 %v4924
  %4942 = vmatprep.subr.bf16.mxu0 0
  %4943 = vmatpush1.bf16.msra.mxu0 %v4925
  %4944 = vmatprep.subr.bf16.mxu0 0
  %4945 = vmatpush1.bf16.msra.mxu0 %v4926
  %4946 = vmatprep.subr.bf16.mxu0 0
  %4947 = vmatpush1.bf16.msra.mxu0 %v4927
  %4948 = vmatprep.subr.bf16.mxu0 0
  %4949 = vmatpush1.bf16.msra.mxu0 %v4928
  %4950 = vmatprep.subr.bf16.mxu0 0
  %4951 = vmatpush1.bf16.msra.mxu0 %v4929
  %4952 = vmatprep.subr.bf16.mxu0 0
  %4953 = vmatpush1.bf16.msra.mxu0 %v4930
  %4954 = vmatprep.subr.bf16.mxu0 0
  %4955 = vmatpush1.bf16.msra.mxu0 %v4931
  %4956 = vmatprep.subr.bf16.mxu0 0
  %4957 = vmatpush1.bf16.msra.mxu0 0
  %4958 = vmatprep.subr.bf16.mxu0 0
  %4959 = vmatpush1.bf16.msra.mxu0 0
  %4960 = vmatprep.subr.bf16.mxu0 0
  %4961 = vmatpush1.bf16.msra.mxu0 0
  %4962 = vmatprep.subr.bf16.mxu0 0
  %4963 = vmatpush1.bf16.msra.mxu0 0
  %4964 = vmatprep.subr.bf16.mxu0 0
  %4965 = vmatpush1.bf16.msra.mxu0 0
  %4966 = vmatprep.subr.bf16.mxu0 0
  %4967 = vmatpush1.bf16.msra.mxu0 0
  %4968 = vmatprep.subr.bf16.mxu0 0
  %4969 = vmatpush1.bf16.msra.mxu0 0
  %4970 = vmatprep.subr.bf16.mxu0 0
  %4971 = vmatpush1.bf16.msra.mxu0 0
  %4972 = vmatprep.mubr.bf16.mxu0 0
  %4973 = vmatmul.mubr.bf16.gmra.mrb[0].mxu0 %v4868
  %v4974 = vpop.f32.mrb[0].mxu0
  %v4975 = vadd.f32 %v4890, %v4974
  %v4976 = vpop.f32.mrb[0].mxu0
  %v4977 = vpop.f32.mrb[0].mxu0
  %v4978 = vpop.f32.mrb[0].mxu0
  %4979 = vdwg.mxu0
  %v4980 = vlaneseq
  %v4981 = vand.u32 %v4980, 127
  %vm4982 = vcmp.lt.s32.totalorder %v4981, 4
  %v4983 = vsub.f32 0.0, %v4975
  %v4984 = vmul.f32 %v4983, 1.442695
  %v4985 = vpow.pop %v4984
  %v4986 = vadd.f32 %v4985, 1.0
  %v4987 = vrcp.pop %v4986
  %v4988 = vmul.f32 1.0, %v4987
  %v4989 = vmul.f32 %v4988, 0.5
  %v4990 = vadd.f32 %v4989, 0.25
  %v4991 = vsel %vm4982, %v4990, %v4975
  %4992 = vst [vmem:[%s13] sm:$0xff] %v4991
  // Predicated region
  $region54: #{light_meta_forward.1} parent=0 // pred_check
    _
  $region55: #{light_meta_forward.1} parent=0 // pred_check_branch
    %4994 = sbr.rel (0) target = $region57
  $region56: #{light_meta_forward.1} parent=0 // pred_region
    _
  $region57: #{light_meta_forward.1} parent=0 // pred_fallthru
    _
  // Predicated region
  $region58: #{light_meta_forward.1} parent=0 // pred_check
    _
  $region59: #{light_meta_forward.1} parent=0 // pred_check_branch
    %4996 = sbr.rel (0) target = $region61
  $region60: #{light_meta_forward.1} parent=0 // pred_region
    _
  $region61: #{light_meta_forward.1} parent=0 // pred_fallthru
    _

</llo_original>
